<compile_context>
chip_gen: v7x
topology: tpu7x:2x2x1
jax: 0.10.0
libtpu: 0.0.40
codegen_flags: <defaults>
</compile_context>

<pallas_src>
import functools
import numpy as np
import jax
import jax.numpy as jnp
from jax.experimental import pallas as pl
from jax.experimental.pallas import tpu as pltpu

EPS_IN = 1e-5       # nn.InstanceNorm1d default eps
EPS_NORM = 1e-12    # F.normalize eps
NEG_BIG = -1e30     # "minus infinity" for masked-out similarity entries


def _instance_norm(x, gamma, beta):
    """nn.InstanceNorm1d(1, affine=True) on (B, 1, L): per-row norm over L.

    One-pass statistics: biased var = E[x^2] - mean^2 (matches InstanceNorm1d)."""
    inv_l = 1.0 / x.shape[-1]
    mean = jnp.sum(x, axis=-1, keepdims=True) * inv_l
    mean_sq = jnp.sum(x * x, axis=-1, keepdims=True) * inv_l
    var = jnp.maximum(mean_sq - mean * mean, 0.0)
    return (x - mean) * jax.lax.rsqrt(var + EPS_IN) * gamma + beta


def _dni_mlp(x, w1_ref, b1_ref, w2_ref, b2_ref, w3_ref, b3_ref, g_ref, bt_ref):
    """dni_linear forward: IN -> Linear -> ReLU -> IN -> Linear -> ReLU -> IN -> Linear.

    Weights are bf16 (resident in VMEM), matmuls accumulate in f32,
    InstanceNorm statistics stay in f32."""
    h = _instance_norm(x, g_ref[0], bt_ref[0])
    h = jnp.dot(h.astype(jnp.bfloat16), w1_ref[...],
                preferred_element_type=jnp.float32) + b1_ref[...]
    h = jnp.maximum(h, 0.0)
    h = _instance_norm(h, g_ref[1], bt_ref[1])
    h = jnp.dot(h.astype(jnp.bfloat16), w2_ref[...],
                preferred_element_type=jnp.float32) + b2_ref[...]
    h = jnp.maximum(h, 0.0)
    h = _instance_norm(h, g_ref[2], bt_ref[2])
    return jnp.dot(h.astype(jnp.bfloat16), w3_ref[...],
                   preferred_element_type=jnp.float32) + b3_ref[...]


def ssr_kernel(fq_ref, fd_ref,
               qw1, qb1, qw2, qb2, qw3, qb3, qg, qbt,
               dw1, db1, dw2, db2, dw3, db3, dg, dbt,
               out_ref, *, k, q_steps, lr_dni):
    """Fused SSR forward: refine_feat (q_steps) + final query/database similarity."""
    n = k + 1                                   # 1 query + k database rows

    col = jax.lax.broadcasted_iota(jnp.int32, (n, n), 1)
    row = jax.lax.broadcasted_iota(jnp.int32, (n, n), 0)
    col_is0 = (col == 0).astype(jnp.float32)
    row_is0 = (row == 0).astype(jnp.float32)

    def l2_normalize(feat):
        nrm = jnp.sqrt(jnp.sum(feat * feat, axis=-1, keepdims=True))
        den = jnp.maximum(nrm, EPS_NORM)
        return feat / den, nrm, den

    def refine_grad(fq, fd, net):
        """Returns dL/dF where L = <stop_grad(DNI(inputs)), inputs> — i.e. the
        torch.autograd.grad(inputs, feat, grad_outputs=DNI(inputs)) value."""
        feat = jnp.concatenate([fq, fd], axis=0)                      # (n, D)
        nfeat, nrm, den = l2_normalize(feat)
        sim = jax.lax.dot_general(nfeat, nfeat, (((1,), (1,)), ((), ())),
                                  preferred_element_type=jnp.float32)  # (n, n)

        # subgraph_pairwise_similarity: per-row descending rank of the k
        # database similarities (torch.topk runs under no_grad -> constants).
        # The 17 DNI inputs per row i are:
        #   [ sim[i,0],  sim[i, idx_i(1..k)],  sim[0, idx_i(1..k)] ]
        # NOTE: ties are broken by lowest column index (same as lax.top_k;
        #       torch.topk may differ on exact ties).
        sim_qrow = sim[0:1, :]
        work = jnp.where(col == 0, NEG_BIG, sim)
        sel_idx, a_cols, b_cols = [], [], []
        for _ in range(k):
            m = jnp.max(work, axis=-1, keepdims=True)                  # j-th largest
            a = jnp.min(jnp.where(work == m, col, n), axis=-1, keepdims=True)
            oh = (col == a).astype(jnp.float32)                        # (n, n) one-hot
            a_cols.append(m)                                           # sim[i, idx]
            b_cols.append(jnp.sum(oh * sim_qrow, axis=-1, keepdims=True))  # sim[0, idx]
            sel_idx.append(a)
            work = jnp.where(col == a, NEG_BIG, work)
        inputs = jnp.concatenate(
            [sim[:, 0:1],
             jnp.concatenate(a_cols, axis=-1),
             jnp.concatenate(b_cols, axis=-1)], axis=-1)               # (n, 2k+1)

        # grad_logit = dni(inputs)  (cotangent for the manual VJP below)
        cot = _dni_mlp(inputs, *net)                                   # (n, 2k+1) f32

        # ---- manual VJP of inputs w.r.t. feat (top-k indices are constants) ----
        dc0 = cot[:, 0:1]
        d_a = cot[:, 1:k + 1]
        d_b = cot[:, k + 1:2 * k + 1]
        d_sim = dc0 * col_is0                                          # -> sim[i, 0]
        d_row0 = jnp.zeros((1, n), jnp.float32)
        for j in range(k):
            oh = (col == sel_idx[j]).astype(jnp.float32)
            d_sim = d_sim + d_a[:, j:j + 1] * oh                       # -> sim[i, idx]
            d_row0 = d_row0 + jnp.sum(d_b[:, j:j + 1] * oh, axis=0,
                                      keepdims=True)                   # -> sim[0, idx]
        d_sim = d_sim + row_is0 * d_row0

        # sim = N @ N.T   =>   dN = d_sim @ N + d_sim.T @ N
        d_n = (jax.lax.dot_general(d_sim, nfeat, (((1,), (0,)), ((), ())),
                                   preferred_element_type=jnp.float32) +
               jax.lax.dot_general(d_sim, nfeat, (((0,), (0,)), ((), ())),
                                   preferred_element_type=jnp.float32))

        # N = F / max(||F||, eps)   (F.normalize backward)
        inv_den = 1.0 / den
        proj = jnp.sum(d_n * feat, axis=-1, keepdims=True)
        gate = jnp.where(nrm > EPS_NORM, 1.0 / jnp.maximum(nrm, EPS_NORM), 0.0)
        return d_n * inv_den - feat * (proj * inv_den * inv_den * gate)

    q_net = (qw1, qb1, qw2, qb2, qw3, qb3, qg, qbt)
    d_net = (dw1, db1, dw2, db2, dw3, db3, dg, dbt)

    fq = fq_ref[...].astype(jnp.float32)                               # (1, D)
    fd = fd_ref[...].astype(jnp.float32)                               # (k, D)
    for _ in range(q_steps):                                           # refine_feat
        d_feat = refine_grad(fq, fd, q_net)
        fq = fq - lr_dni * d_feat[0:1, :]
        d_feat = refine_grad(fq, fd, d_net)
        fd = fd - lr_dni * d_feat[1:, :]

    # final similarity_query_database
    nq, _, _ = l2_normalize(fq)
    nd, _, _ = l2_normalize(fd)
    out_ref[...] = jax.lax.dot_general(nq, nd, (((1,), (1,)), ((), ())),
                                       preferred_element_type=jnp.float32)


def make_ssr(feat_dim, k, q_steps, lr_dni, dni_hidden_size, key):
    dni_input_dim = (k + 2) * (1 + k) // 2 - k * (k - 1) // 2
    assert dni_input_dim == 2 * k + 1

    def dni_params(subkey):
        k1, k2, k3 = jax.random.split(subkey, 3)
        d, h = dni_input_dim, dni_hidden_size
        return {
            "w1": (jax.random.normal(k1, (d, h), jnp.float32) / np.sqrt(d)).astype(jnp.bfloat16),
            "b1": jnp.zeros((1, h), jnp.float32),
            "w2": (jax.random.normal(k2, (h, h), jnp.float32) / np.sqrt(h)).astype(jnp.bfloat16),
            "b2": jnp.zeros((1, h), jnp.float32),
            "w3": (jax.random.normal(k3, (h, d), jnp.float32) / np.sqrt(h)).astype(jnp.bfloat16),
            "b3": jnp.zeros((1, d), jnp.float32),
            "in_gamma": jnp.ones((3,), jnp.float32),    # InstanceNorm1d affine weights
            "in_beta": jnp.zeros((3,), jnp.float32),    # InstanceNorm1d affine biases
        }

    kq, kd = jax.random.split(key)
    params = {
        "scale_cls": jnp.full((1,), 10.0, jnp.float32),  # unused in forward (parity)
        "dni_query": dni_params(kq),
        "dni_database": dni_params(kd),
    }

    # Size the scoped VMEM so both (bf16) DNI nets stay resident; stays under
    # v7x's 64 MiB physical VMEM at the nominal hidden=2048 config.
    dni_bytes = sum(int(np.prod(x.shape)) * x.dtype.itemsize
                    for net in ("dni_query", "dni_database")
                    for x in params[net].values())
    vmem_limit = int(min(96 * 1024 * 1024,
                         max(32 * 1024 * 1024, 2 * dni_bytes + (8 << 20))))

    vmem = pl.BlockSpec(memory_space=pltpu.MemorySpace.VMEM)
    smem = pl.BlockSpec(memory_space=pltpu.MemorySpace.SMEM)
    net_specs = [vmem] * 6 + [smem, smem]

    kernel = functools.partial(ssr_kernel, k=k, q_steps=q_steps,
                               lr_dni=float(lr_dni))

    fused_call = pl.pallas_call(
        kernel,
        out_shape=jax.ShapeDtypeStruct((1, k), jnp.float32),
        in_specs=[vmem, vmem] + net_specs + net_specs,
        out_specs=vmem,
        compiler_params=pltpu.CompilerParams(vmem_limit_bytes=vmem_limit),
    )

    def net_args(p):
        return (p["w1"], p["b1"], p["w2"], p["b2"], p["w3"], p["b3"],
                p["in_gamma"], p["in_beta"])

    def forward(p, feat_query, feat_database):
        out = fused_call(
            feat_query.reshape(-1, feat_dim).astype(jnp.float32),
            feat_database.reshape(-1, feat_dim).astype(jnp.float32),
            *net_args(p["dni_query"]), *net_args(p["dni_database"]))
        return jnp.squeeze(out, axis=0)          # similarity_query_database.squeeze()

    return params, jax.jit(forward)


if __name__ == "__main__":
    feat_dim = 32
    k = 8                  # topk retrieved images
    q_steps = 2            # number of refinement steps
    lr_dni = 1e-3
    dni_hidden_size = 256  # small stand-in for the default 2048

    key = jax.random.PRNGKey(0)
    kp, kq, kd = jax.random.split(key, 3)

    params, ssr_forward = make_ssr(feat_dim, k, q_steps, lr_dni,
                                   dni_hidden_size, kp)

    feat_query = jax.random.normal(kq, (1, feat_dim), jnp.float32)
    feat_database = jax.random.normal(kd, (k, feat_dim), jnp.float32)

    out = ssr_forward(params, feat_query, feat_database)
    jax.block_until_ready(out)
    assert out.shape == (k,), out.shape
    assert bool(jnp.all(jnp.isfinite(out)))
    print("KERNEL_OK")
</pallas_src>

<mosaic_0001>
module attributes {stable_mosaic.version = 11 : i64} {
  func.func @ssr_kernel(%arg0: memref<1x32xf32, #tpu.memory_space<vmem>>, %arg1: memref<8x32xf32, #tpu.memory_space<vmem>>, %arg2: memref<17x256xbf16, #tpu.memory_space<vmem>>, %arg3: memref<1x256xf32, #tpu.memory_space<vmem>>, %arg4: memref<256x256xbf16, #tpu.memory_space<vmem>>, %arg5: memref<1x256xf32, #tpu.memory_space<vmem>>, %arg6: memref<256x17xbf16, #tpu.memory_space<vmem>>, %arg7: memref<1x17xf32, #tpu.memory_space<vmem>>, %arg8: memref<3xf32, #tpu.memory_space<smem>>, %arg9: memref<3xf32, #tpu.memory_space<smem>>, %arg10: memref<17x256xbf16, #tpu.memory_space<vmem>>, %arg11: memref<1x256xf32, #tpu.memory_space<vmem>>, %arg12: memref<256x256xbf16, #tpu.memory_space<vmem>>, %arg13: memref<1x256xf32, #tpu.memory_space<vmem>>, %arg14: memref<256x17xbf16, #tpu.memory_space<vmem>>, %arg15: memref<1x17xf32, #tpu.memory_space<vmem>>, %arg16: memref<3xf32, #tpu.memory_space<smem>>, %arg17: memref<3xf32, #tpu.memory_space<smem>>, %arg18: memref<1x8xf32, #tpu.memory_space<vmem>>) attributes {dimension_semantics = [], scalar_prefetch = 0 : i64, scratch_operands = 0 : i64, tpu.core_type = #tpu.core_type<tc>} {
    %0 = tpu.iota {dimensions = array<i32: 1>} : vector<9x9xi32>
    %1 = tpu.iota {dimensions = array<i32: 0>} : vector<9x9xi32>
    %c0_i32 = arith.constant 0 : i32
    %2 = vector.broadcast %c0_i32 : i32 to vector<9x9xi32>
    %3 = arith.cmpi eq, %0, %2 : vector<9x9xi32>
    %4 = arith.extui %3 : vector<9x9xi1> to vector<9x9xi32>
    %5 = arith.sitofp %4 : vector<9x9xi32> to vector<9x9xf32>
    %c0_i32_0 = arith.constant 0 : i32
    %6 = vector.broadcast %c0_i32_0 : i32 to vector<9x9xi32>
    %7 = arith.cmpi eq, %1, %6 : vector<9x9xi32>
    %8 = arith.extui %7 : vector<9x9xi1> to vector<9x9xi32>
    %9 = arith.sitofp %8 : vector<9x9xi32> to vector<9x9xf32>
    %c0 = arith.constant 0 : index
    %c0_1 = arith.constant 0 : index
    %10 = vector.load %arg0[%c0, %c0_1] : memref<1x32xf32, #tpu.memory_space<vmem>>, vector<1x32xf32>
    %c0_2 = arith.constant 0 : index
    %c0_3 = arith.constant 0 : index
    %11 = vector.load %arg1[%c0_2, %c0_3] : memref<8x32xf32, #tpu.memory_space<vmem>>, vector<8x32xf32>
    %12 = tpu.concatenate %10, %11 in 0 : vector<1x32xf32>, vector<8x32xf32> -> vector<9x32xf32>
    %13 = arith.mulf %12, %12 : vector<9x32xf32>
    %cst = arith.constant dense<0.000000e+00> : vector<9xf32>
    %14 = vector.multi_reduction <add>, %13, %cst [1] : vector<9x32xf32> to vector<9xf32>
    %15 = vector.shape_cast %14 : vector<9xf32> to vector<9x1xf32>
    %16 = math.sqrt %15 : vector<9x1xf32>
    %cst_4 = arith.constant 9.99999996E-13 : f32
    %17 = vector.broadcast %cst_4 : f32 to vector<9x1xf32>
    %18 = arith.maximumf %16, %17 : vector<9x1xf32>
    %19 = vector.broadcast %18 : vector<9x1xf32> to vector<9x32xf32>
    %20 = arith.divf %12, %19 : vector<9x32xf32>
    %cst_5 = arith.constant dense<0.000000e+00> : vector<9x9xf32>
    %21 = tpu.matmul %20, %20, %cst_5 {dimension_numbers = #tpu.dot_dimension_numbers<[1], [1], [0], [0], [0, 0, 1, 0], [], []>} : vector<9x32xf32>, vector<9x32xf32>, vector<9x9xf32> -> vector<9x9xf32>
    %22 = vector.extract_strided_slice %21 {offsets = [0, 0], sizes = [1, 9], strides = [1, 1]} : vector<9x9xf32> to vector<1x9xf32>
    %c0_i32_6 = arith.constant 0 : i32
    %23 = vector.broadcast %c0_i32_6 : i32 to vector<9x9xi32>
    %24 = arith.cmpi eq, %0, %23 : vector<9x9xi32>
    %cst_7 = arith.constant -1.000000e+30 : f32
    %25 = vector.broadcast %cst_7 : f32 to vector<9x9xf32>
    %26 = arith.select %24, %25, %21 : vector<9x9xi1>, vector<9x9xf32>
    %cst_8 = arith.constant dense<0xFF800000> : vector<9xf32>
    %27 = vector.multi_reduction <maximumf>, %26, %cst_8 [1] : vector<9x9xf32> to vector<9xf32>
    %28 = vector.shape_cast %27 : vector<9xf32> to vector<9x1xf32>
    %29 = vector.broadcast %28 : vector<9x1xf32> to vector<9x9xf32>
    %30 = arith.cmpf oeq, %26, %29 : vector<9x9xf32>
    %c9_i32 = arith.constant 9 : i32
    %31 = vector.broadcast %c9_i32 : i32 to vector<9x9xi32>
    %32 = arith.select %30, %0, %31 : vector<9x9xi1>, vector<9x9xi32>
    %cst_9 = arith.constant dense<2147483647> : vector<9xi32>
    %33 = vector.multi_reduction <minsi>, %32, %cst_9 [1] : vector<9x9xi32> to vector<9xi32>
    %34 = vector.shape_cast %33 : vector<9xi32> to vector<9x1xi32>
    %35 = vector.broadcast %34 : vector<9x1xi32> to vector<9x9xi32>
    %36 = arith.cmpi eq, %0, %35 : vector<9x9xi32>
    %37 = arith.extui %36 : vector<9x9xi1> to vector<9x9xi32>
    %38 = arith.sitofp %37 : vector<9x9xi32> to vector<9x9xf32>
    %39 = vector.broadcast %22 : vector<1x9xf32> to vector<9x9xf32>
    %40 = arith.mulf %38, %39 : vector<9x9xf32>
    %cst_10 = arith.constant dense<0.000000e+00> : vector<9xf32>
    %41 = vector.multi_reduction <add>, %40, %cst_10 [1] : vector<9x9xf32> to vector<9xf32>
    %42 = vector.shape_cast %41 : vector<9xf32> to vector<9x1xf32>
    %43 = vector.broadcast %34 : vector<9x1xi32> to vector<9x9xi32>
    %44 = arith.cmpi eq, %0, %43 : vector<9x9xi32>
    %cst_11 = arith.constant -1.000000e+30 : f32
    %45 = vector.broadcast %cst_11 : f32 to vector<9x9xf32>
    %46 = arith.select %44, %45, %26 : vector<9x9xi1>, vector<9x9xf32>
    %cst_12 = arith.constant dense<0xFF800000> : vector<9xf32>
    %47 = vector.multi_reduction <maximumf>, %46, %cst_12 [1] : vector<9x9xf32> to vector<9xf32>
    %48 = vector.shape_cast %47 : vector<9xf32> to vector<9x1xf32>
    %49 = vector.broadcast %48 : vector<9x1xf32> to vector<9x9xf32>
    %50 = arith.cmpf oeq, %46, %49 : vector<9x9xf32>
    %c9_i32_13 = arith.constant 9 : i32
    %51 = vector.broadcast %c9_i32_13 : i32 to vector<9x9xi32>
    %52 = arith.select %50, %0, %51 : vector<9x9xi1>, vector<9x9xi32>
    %cst_14 = arith.constant dense<2147483647> : vector<9xi32>
    %53 = vector.multi_reduction <minsi>, %52, %cst_14 [1] : vector<9x9xi32> to vector<9xi32>
    %54 = vector.shape_cast %53 : vector<9xi32> to vector<9x1xi32>
    %55 = vector.broadcast %54 : vector<9x1xi32> to vector<9x9xi32>
    %56 = arith.cmpi eq, %0, %55 : vector<9x9xi32>
    %57 = arith.extui %56 : vector<9x9xi1> to vector<9x9xi32>
    %58 = arith.sitofp %57 : vector<9x9xi32> to vector<9x9xf32>
    %59 = vector.broadcast %22 : vector<1x9xf32> to vector<9x9xf32>
    %60 = arith.mulf %58, %59 : vector<9x9xf32>
    %cst_15 = arith.constant dense<0.000000e+00> : vector<9xf32>
    %61 = vector.multi_reduction <add>, %60, %cst_15 [1] : vector<9x9xf32> to vector<9xf32>
    %62 = vector.shape_cast %61 : vector<9xf32> to vector<9x1xf32>
    %63 = vector.broadcast %54 : vector<9x1xi32> to vector<9x9xi32>
    %64 = arith.cmpi eq, %0, %63 : vector<9x9xi32>
    %cst_16 = arith.constant -1.000000e+30 : f32
    %65 = vector.broadcast %cst_16 : f32 to vector<9x9xf32>
    %66 = arith.select %64, %65, %46 : vector<9x9xi1>, vector<9x9xf32>
    %cst_17 = arith.constant dense<0xFF800000> : vector<9xf32>
    %67 = vector.multi_reduction <maximumf>, %66, %cst_17 [1] : vector<9x9xf32> to vector<9xf32>
    %68 = vector.shape_cast %67 : vector<9xf32> to vector<9x1xf32>
    %69 = vector.broadcast %68 : vector<9x1xf32> to vector<9x9xf32>
    %70 = arith.cmpf oeq, %66, %69 : vector<9x9xf32>
    %c9_i32_18 = arith.constant 9 : i32
    %71 = vector.broadcast %c9_i32_18 : i32 to vector<9x9xi32>
    %72 = arith.select %70, %0, %71 : vector<9x9xi1>, vector<9x9xi32>
    %cst_19 = arith.constant dense<2147483647> : vector<9xi32>
    %73 = vector.multi_reduction <minsi>, %72, %cst_19 [1] : vector<9x9xi32> to vector<9xi32>
    %74 = vector.shape_cast %73 : vector<9xi32> to vector<9x1xi32>
    %75 = vector.broadcast %74 : vector<9x1xi32> to vector<9x9xi32>
    %76 = arith.cmpi eq, %0, %75 : vector<9x9xi32>
    %77 = arith.extui %76 : vector<9x9xi1> to vector<9x9xi32>
    %78 = arith.sitofp %77 : vector<9x9xi32> to vector<9x9xf32>
    %79 = vector.broadcast %22 : vector<1x9xf32> to vector<9x9xf32>
    %80 = arith.mulf %78, %79 : vector<9x9xf32>
    %cst_20 = arith.constant dense<0.000000e+00> : vector<9xf32>
    %81 = vector.multi_reduction <add>, %80, %cst_20 [1] : vector<9x9xf32> to vector<9xf32>
    %82 = vector.shape_cast %81 : vector<9xf32> to vector<9x1xf32>
    %83 = vector.broadcast %74 : vector<9x1xi32> to vector<9x9xi32>
    %84 = arith.cmpi eq, %0, %83 : vector<9x9xi32>
    %cst_21 = arith.constant -1.000000e+30 : f32
    %85 = vector.broadcast %cst_21 : f32 to vector<9x9xf32>
    %86 = arith.select %84, %85, %66 : vector<9x9xi1>, vector<9x9xf32>
    %cst_22 = arith.constant dense<0xFF800000> : vector<9xf32>
    %87 = vector.multi_reduction <maximumf>, %86, %cst_22 [1] : vector<9x9xf32> to vector<9xf32>
    %88 = vector.shape_cast %87 : vector<9xf32> to vector<9x1xf32>
    %89 = vector.broadcast %88 : vector<9x1xf32> to vector<9x9xf32>
    %90 = arith.cmpf oeq, %86, %89 : vector<9x9xf32>
    %c9_i32_23 = arith.constant 9 : i32
    %91 = vector.broadcast %c9_i32_23 : i32 to vector<9x9xi32>
    %92 = arith.select %90, %0, %91 : vector<9x9xi1>, vector<9x9xi32>
    %cst_24 = arith.constant dense<2147483647> : vector<9xi32>
    %93 = vector.multi_reduction <minsi>, %92, %cst_24 [1] : vector<9x9xi32> to vector<9xi32>
    %94 = vector.shape_cast %93 : vector<9xi32> to vector<9x1xi32>
    %95 = vector.broadcast %94 : vector<9x1xi32> to vector<9x9xi32>
    %96 = arith.cmpi eq, %0, %95 : vector<9x9xi32>
    %97 = arith.extui %96 : vector<9x9xi1> to vector<9x9xi32>
    %98 = arith.sitofp %97 : vector<9x9xi32> to vector<9x9xf32>
    %99 = vector.broadcast %22 : vector<1x9xf32> to vector<9x9xf32>
    %100 = arith.mulf %98, %99 : vector<9x9xf32>
    %cst_25 = arith.constant dense<0.000000e+00> : vector<9xf32>
    %101 = vector.multi_reduction <add>, %100, %cst_25 [1] : vector<9x9xf32> to vector<9xf32>
    %102 = vector.shape_cast %101 : vector<9xf32> to vector<9x1xf32>
    %103 = vector.broadcast %94 : vector<9x1xi32> to vector<9x9xi32>
    %104 = arith.cmpi eq, %0, %103 : vector<9x9xi32>
    %cst_26 = arith.constant -1.000000e+30 : f32
    %105 = vector.broadcast %cst_26 : f32 to vector<9x9xf32>
    %106 = arith.select %104, %105, %86 : vector<9x9xi1>, vector<9x9xf32>
    %cst_27 = arith.constant dense<0xFF800000> : vector<9xf32>
    %107 = vector.multi_reduction <maximumf>, %106, %cst_27 [1] : vector<9x9xf32> to vector<9xf32>
    %108 = vector.shape_cast %107 : vector<9xf32> to vector<9x1xf32>
    %109 = vector.broadcast %108 : vector<9x1xf32> to vector<9x9xf32>
    %110 = arith.cmpf oeq, %106, %109 : vector<9x9xf32>
    %c9_i32_28 = arith.constant 9 : i32
    %111 = vector.broadcast %c9_i32_28 : i32 to vector<9x9xi32>
    %112 = arith.select %110, %0, %111 : vector<9x9xi1>, vector<9x9xi32>
    %cst_29 = arith.constant dense<2147483647> : vector<9xi32>
    %113 = vector.multi_reduction <minsi>, %112, %cst_29 [1] : vector<9x9xi32> to vector<9xi32>
    %114 = vector.shape_cast %113 : vector<9xi32> to vector<9x1xi32>
    %115 = vector.broadcast %114 : vector<9x1xi32> to vector<9x9xi32>
    %116 = arith.cmpi eq, %0, %115 : vector<9x9xi32>
    %117 = arith.extui %116 : vector<9x9xi1> to vector<9x9xi32>
    %118 = arith.sitofp %117 : vector<9x9xi32> to vector<9x9xf32>
    %119 = vector.broadcast %22 : vector<1x9xf32> to vector<9x9xf32>
    %120 = arith.mulf %118, %119 : vector<9x9xf32>
    %cst_30 = arith.constant dense<0.000000e+00> : vector<9xf32>
    %121 = vector.multi_reduction <add>, %120, %cst_30 [1] : vector<9x9xf32> to vector<9xf32>
    %122 = vector.shape_cast %121 : vector<9xf32> to vector<9x1xf32>
    %123 = vector.broadcast %114 : vector<9x1xi32> to vector<9x9xi32>
    %124 = arith.cmpi eq, %0, %123 : vector<9x9xi32>
    %cst_31 = arith.constant -1.000000e+30 : f32
    %125 = vector.broadcast %cst_31 : f32 to vector<9x9xf32>
    %126 = arith.select %124, %125, %106 : vector<9x9xi1>, vector<9x9xf32>
    %cst_32 = arith.constant dense<0xFF800000> : vector<9xf32>
    %127 = vector.multi_reduction <maximumf>, %126, %cst_32 [1] : vector<9x9xf32> to vector<9xf32>
    %128 = vector.shape_cast %127 : vector<9xf32> to vector<9x1xf32>
    %129 = vector.broadcast %128 : vector<9x1xf32> to vector<9x9xf32>
    %130 = arith.cmpf oeq, %126, %129 : vector<9x9xf32>
    %c9_i32_33 = arith.constant 9 : i32
    %131 = vector.broadcast %c9_i32_33 : i32 to vector<9x9xi32>
    %132 = arith.select %130, %0, %131 : vector<9x9xi1>, vector<9x9xi32>
    %cst_34 = arith.constant dense<2147483647> : vector<9xi32>
    %133 = vector.multi_reduction <minsi>, %132, %cst_34 [1] : vector<9x9xi32> to vector<9xi32>
    %134 = vector.shape_cast %133 : vector<9xi32> to vector<9x1xi32>
    %135 = vector.broadcast %134 : vector<9x1xi32> to vector<9x9xi32>
    %136 = arith.cmpi eq, %0, %135 : vector<9x9xi32>
    %137 = arith.extui %136 : vector<9x9xi1> to vector<9x9xi32>
    %138 = arith.sitofp %137 : vector<9x9xi32> to vector<9x9xf32>
    %139 = vector.broadcast %22 : vector<1x9xf32> to vector<9x9xf32>
    %140 = arith.mulf %138, %139 : vector<9x9xf32>
    %cst_35 = arith.constant dense<0.000000e+00> : vector<9xf32>
    %141 = vector.multi_reduction <add>, %140, %cst_35 [1] : vector<9x9xf32> to vector<9xf32>
    %142 = vector.shape_cast %141 : vector<9xf32> to vector<9x1xf32>
    %143 = vector.broadcast %134 : vector<9x1xi32> to vector<9x9xi32>
    %144 = arith.cmpi eq, %0, %143 : vector<9x9xi32>
    %cst_36 = arith.constant -1.000000e+30 : f32
    %145 = vector.broadcast %cst_36 : f32 to vector<9x9xf32>
    %146 = arith.select %144, %145, %126 : vector<9x9xi1>, vector<9x9xf32>
    %cst_37 = arith.constant dense<0xFF800000> : vector<9xf32>
    %147 = vector.multi_reduction <maximumf>, %146, %cst_37 [1] : vector<9x9xf32> to vector<9xf32>
    %148 = vector.shape_cast %147 : vector<9xf32> to vector<9x1xf32>
    %149 = vector.broadcast %148 : vector<9x1xf32> to vector<9x9xf32>
    %150 = arith.cmpf oeq, %146, %149 : vector<9x9xf32>
    %c9_i32_38 = arith.constant 9 : i32
    %151 = vector.broadcast %c9_i32_38 : i32 to vector<9x9xi32>
    %152 = arith.select %150, %0, %151 : vector<9x9xi1>, vector<9x9xi32>
    %cst_39 = arith.constant dense<2147483647> : vector<9xi32>
    %153 = vector.multi_reduction <minsi>, %152, %cst_39 [1] : vector<9x9xi32> to vector<9xi32>
    %154 = vector.shape_cast %153 : vector<9xi32> to vector<9x1xi32>
    %155 = vector.broadcast %154 : vector<9x1xi32> to vector<9x9xi32>
    %156 = arith.cmpi eq, %0, %155 : vector<9x9xi32>
    %157 = arith.extui %156 : vector<9x9xi1> to vector<9x9xi32>
    %158 = arith.sitofp %157 : vector<9x9xi32> to vector<9x9xf32>
    %159 = vector.broadcast %22 : vector<1x9xf32> to vector<9x9xf32>
    %160 = arith.mulf %158, %159 : vector<9x9xf32>
    %cst_40 = arith.constant dense<0.000000e+00> : vector<9xf32>
    %161 = vector.multi_reduction <add>, %160, %cst_40 [1] : vector<9x9xf32> to vector<9xf32>
    %162 = vector.shape_cast %161 : vector<9xf32> to vector<9x1xf32>
    %163 = vector.broadcast %154 : vector<9x1xi32> to vector<9x9xi32>
    %164 = arith.cmpi eq, %0, %163 : vector<9x9xi32>
    %cst_41 = arith.constant -1.000000e+30 : f32
    %165 = vector.broadcast %cst_41 : f32 to vector<9x9xf32>
    %166 = arith.select %164, %165, %146 : vector<9x9xi1>, vector<9x9xf32>
    %cst_42 = arith.constant dense<0xFF800000> : vector<9xf32>
    %167 = vector.multi_reduction <maximumf>, %166, %cst_42 [1] : vector<9x9xf32> to vector<9xf32>
    %168 = vector.shape_cast %167 : vector<9xf32> to vector<9x1xf32>
    %169 = vector.broadcast %168 : vector<9x1xf32> to vector<9x9xf32>
    %170 = arith.cmpf oeq, %166, %169 : vector<9x9xf32>
    %c9_i32_43 = arith.constant 9 : i32
    %171 = vector.broadcast %c9_i32_43 : i32 to vector<9x9xi32>
    %172 = arith.select %170, %0, %171 : vector<9x9xi1>, vector<9x9xi32>
    %cst_44 = arith.constant dense<2147483647> : vector<9xi32>
    %173 = vector.multi_reduction <minsi>, %172, %cst_44 [1] : vector<9x9xi32> to vector<9xi32>
    %174 = vector.shape_cast %173 : vector<9xi32> to vector<9x1xi32>
    %175 = vector.broadcast %174 : vector<9x1xi32> to vector<9x9xi32>
    %176 = arith.cmpi eq, %0, %175 : vector<9x9xi32>
    %177 = arith.extui %176 : vector<9x9xi1> to vector<9x9xi32>
    %178 = arith.sitofp %177 : vector<9x9xi32> to vector<9x9xf32>
    %179 = vector.broadcast %22 : vector<1x9xf32> to vector<9x9xf32>
    %180 = arith.mulf %178, %179 : vector<9x9xf32>
    %cst_45 = arith.constant dense<0.000000e+00> : vector<9xf32>
    %181 = vector.multi_reduction <add>, %180, %cst_45 [1] : vector<9x9xf32> to vector<9xf32>
    %182 = vector.shape_cast %181 : vector<9xf32> to vector<9x1xf32>
    %183 = vector.extract_strided_slice %21 {offsets = [0, 0], sizes = [9, 1], strides = [1, 1]} : vector<9x9xf32> to vector<9x1xf32>
    %184 = tpu.concatenate %28, %48, %68, %88, %108, %128, %148, %168 in 1 : vector<9x1xf32>, vector<9x1xf32>, vector<9x1xf32>, vector<9x1xf32>, vector<9x1xf32>, vector<9x1xf32>, vector<9x1xf32>, vector<9x1xf32> -> vector<9x8xf32>
    %185 = tpu.concatenate %42, %62, %82, %102, %122, %142, %162, %182 in 1 : vector<9x1xf32>, vector<9x1xf32>, vector<9x1xf32>, vector<9x1xf32>, vector<9x1xf32>, vector<9x1xf32>, vector<9x1xf32>, vector<9x1xf32> -> vector<9x8xf32>
    %186 = tpu.concatenate %183, %184, %185 in 1 : vector<9x1xf32>, vector<9x8xf32>, vector<9x8xf32> -> vector<9x17xf32>
    %c0_46 = arith.constant 0 : index
    %187 = memref.load %arg8[%c0_46] : memref<3xf32, #tpu.memory_space<smem>>
    %c0_47 = arith.constant 0 : index
    %188 = memref.load %arg9[%c0_47] : memref<3xf32, #tpu.memory_space<smem>>
    %cst_48 = arith.constant dense<0.000000e+00> : vector<9xf32>
    %189 = vector.multi_reduction <add>, %186, %cst_48 [1] : vector<9x17xf32> to vector<9xf32>
    %190 = vector.shape_cast %189 : vector<9xf32> to vector<9x1xf32>
    %cst_49 = arith.constant 0.0588235296 : f32
    %191 = vector.broadcast %cst_49 : f32 to vector<9x1xf32>
    %192 = arith.mulf %190, %191 : vector<9x1xf32>
    %193 = arith.mulf %186, %186 : vector<9x17xf32>
    %cst_50 = arith.constant dense<0.000000e+00> : vector<9xf32>
    %194 = vector.multi_reduction <add>, %193, %cst_50 [1] : vector<9x17xf32> to vector<9xf32>
    %195 = vector.shape_cast %194 : vector<9xf32> to vector<9x1xf32>
    %cst_51 = arith.constant 0.0588235296 : f32
    %196 = vector.broadcast %cst_51 : f32 to vector<9x1xf32>
    %197 = arith.mulf %195, %196 : vector<9x1xf32>
    %198 = arith.mulf %192, %192 : vector<9x1xf32>
    %199 = arith.subf %197, %198 : vector<9x1xf32>
    %cst_52 = arith.constant 0.000000e+00 : f32
    %200 = vector.broadcast %cst_52 : f32 to vector<9x1xf32>
    %201 = arith.maximumf %199, %200 : vector<9x1xf32>
    %202 = vector.broadcast %192 : vector<9x1xf32> to vector<9x17xf32>
    %203 = arith.subf %186, %202 : vector<9x17xf32>
    %cst_53 = arith.constant 9.99999974E-6 : f32
    %204 = vector.broadcast %cst_53 : f32 to vector<9x1xf32>
    %205 = arith.addf %201, %204 : vector<9x1xf32>
    %206 = math.rsqrt %205 : vector<9x1xf32>
    %207 = vector.broadcast %206 : vector<9x1xf32> to vector<9x17xf32>
    %208 = arith.mulf %203, %207 : vector<9x17xf32>
    %209 = vector.broadcast %187 : f32 to vector<9x17xf32>
    %210 = arith.mulf %208, %209 : vector<9x17xf32>
    %211 = vector.broadcast %188 : f32 to vector<9x17xf32>
    %212 = arith.addf %210, %211 : vector<9x17xf32>
    %213 = arith.truncf %212 : vector<9x17xf32> to vector<9x17xbf16>
    %c0_54 = arith.constant 0 : index
    %c0_55 = arith.constant 0 : index
    %214 = vector.load %arg2[%c0_54, %c0_55] : memref<17x256xbf16, #tpu.memory_space<vmem>>, vector<17x256xbf16>
    %cst_56 = arith.constant dense<0.000000e+00> : vector<9x256xf32>
    %215 = tpu.matmul %213, %214, %cst_56 {dimension_numbers = #tpu.dot_dimension_numbers<[1], [0], [0], [1], [0, 0, 1, 1], [], []>} : vector<9x17xbf16>, vector<17x256xbf16>, vector<9x256xf32> -> vector<9x256xf32>
    %c0_57 = arith.constant 0 : index
    %c0_58 = arith.constant 0 : index
    %216 = vector.load %arg3[%c0_57, %c0_58] : memref<1x256xf32, #tpu.memory_space<vmem>>, vector<1x256xf32>
    %217 = vector.broadcast %216 : vector<1x256xf32> to vector<9x256xf32>
    %218 = arith.addf %215, %217 : vector<9x256xf32>
    %cst_59 = arith.constant 0.000000e+00 : f32
    %219 = vector.broadcast %cst_59 : f32 to vector<9x256xf32>
    %220 = arith.maximumf %218, %219 : vector<9x256xf32>
    %c1 = arith.constant 1 : index
    %221 = memref.load %arg8[%c1] : memref<3xf32, #tpu.memory_space<smem>>
    %c1_60 = arith.constant 1 : index
    %222 = memref.load %arg9[%c1_60] : memref<3xf32, #tpu.memory_space<smem>>
    %cst_61 = arith.constant dense<0.000000e+00> : vector<9xf32>
    %223 = vector.multi_reduction <add>, %220, %cst_61 [1] : vector<9x256xf32> to vector<9xf32>
    %224 = vector.shape_cast %223 : vector<9xf32> to vector<9x1xf32>
    %cst_62 = arith.constant 3.906250e-03 : f32
    %225 = vector.broadcast %cst_62 : f32 to vector<9x1xf32>
    %226 = arith.mulf %224, %225 : vector<9x1xf32>
    %227 = arith.mulf %220, %220 : vector<9x256xf32>
    %cst_63 = arith.constant dense<0.000000e+00> : vector<9xf32>
    %228 = vector.multi_reduction <add>, %227, %cst_63 [1] : vector<9x256xf32> to vector<9xf32>
    %229 = vector.shape_cast %228 : vector<9xf32> to vector<9x1xf32>
    %cst_64 = arith.constant 3.906250e-03 : f32
    %230 = vector.broadcast %cst_64 : f32 to vector<9x1xf32>
    %231 = arith.mulf %229, %230 : vector<9x1xf32>
    %232 = arith.mulf %226, %226 : vector<9x1xf32>
    %233 = arith.subf %231, %232 : vector<9x1xf32>
    %cst_65 = arith.constant 0.000000e+00 : f32
    %234 = vector.broadcast %cst_65 : f32 to vector<9x1xf32>
    %235 = arith.maximumf %233, %234 : vector<9x1xf32>
    %236 = vector.broadcast %226 : vector<9x1xf32> to vector<9x256xf32>
    %237 = arith.subf %220, %236 : vector<9x256xf32>
    %cst_66 = arith.constant 9.99999974E-6 : f32
    %238 = vector.broadcast %cst_66 : f32 to vector<9x1xf32>
    %239 = arith.addf %235, %238 : vector<9x1xf32>
    %240 = math.rsqrt %239 : vector<9x1xf32>
    %241 = vector.broadcast %240 : vector<9x1xf32> to vector<9x256xf32>
    %242 = arith.mulf %237, %241 : vector<9x256xf32>
    %243 = vector.broadcast %221 : f32 to vector<9x256xf32>
    %244 = arith.mulf %242, %243 : vector<9x256xf32>
    %245 = vector.broadcast %222 : f32 to vector<9x256xf32>
    %246 = arith.addf %244, %245 : vector<9x256xf32>
    %247 = arith.truncf %246 : vector<9x256xf32> to vector<9x256xbf16>
    %c0_67 = arith.constant 0 : index
    %c0_68 = arith.constant 0 : index
    %248 = vector.load %arg4[%c0_67, %c0_68] : memref<256x256xbf16, #tpu.memory_space<vmem>>, vector<256x256xbf16>
    %cst_69 = arith.constant dense<0.000000e+00> : vector<9x256xf32>
    %249 = tpu.matmul %247, %248, %cst_69 {dimension_numbers = #tpu.dot_dimension_numbers<[1], [0], [0], [1], [0, 0, 1, 1], [], []>} : vector<9x256xbf16>, vector<256x256xbf16>, vector<9x256xf32> -> vector<9x256xf32>
    %c0_70 = arith.constant 0 : index
    %c0_71 = arith.constant 0 : index
    %250 = vector.load %arg5[%c0_70, %c0_71] : memref<1x256xf32, #tpu.memory_space<vmem>>, vector<1x256xf32>
    %251 = vector.broadcast %250 : vector<1x256xf32> to vector<9x256xf32>
    %252 = arith.addf %249, %251 : vector<9x256xf32>
    %cst_72 = arith.constant 0.000000e+00 : f32
    %253 = vector.broadcast %cst_72 : f32 to vector<9x256xf32>
    %254 = arith.maximumf %252, %253 : vector<9x256xf32>
    %c2 = arith.constant 2 : index
    %255 = memref.load %arg8[%c2] : memref<3xf32, #tpu.memory_space<smem>>
    %c2_73 = arith.constant 2 : index
    %256 = memref.load %arg9[%c2_73] : memref<3xf32, #tpu.memory_space<smem>>
    %cst_74 = arith.constant dense<0.000000e+00> : vector<9xf32>
    %257 = vector.multi_reduction <add>, %254, %cst_74 [1] : vector<9x256xf32> to vector<9xf32>
    %258 = vector.shape_cast %257 : vector<9xf32> to vector<9x1xf32>
    %cst_75 = arith.constant 3.906250e-03 : f32
    %259 = vector.broadcast %cst_75 : f32 to vector<9x1xf32>
    %260 = arith.mulf %258, %259 : vector<9x1xf32>
    %261 = arith.mulf %254, %254 : vector<9x256xf32>
    %cst_76 = arith.constant dense<0.000000e+00> : vector<9xf32>
    %262 = vector.multi_reduction <add>, %261, %cst_76 [1] : vector<9x256xf32> to vector<9xf32>
    %263 = vector.shape_cast %262 : vector<9xf32> to vector<9x1xf32>
    %cst_77 = arith.constant 3.906250e-03 : f32
    %264 = vector.broadcast %cst_77 : f32 to vector<9x1xf32>
    %265 = arith.mulf %263, %264 : vector<9x1xf32>
    %266 = arith.mulf %260, %260 : vector<9x1xf32>
    %267 = arith.subf %265, %266 : vector<9x1xf32>
    %cst_78 = arith.constant 0.000000e+00 : f32
    %268 = vector.broadcast %cst_78 : f32 to vector<9x1xf32>
    %269 = arith.maximumf %267, %268 : vector<9x1xf32>
    %270 = vector.broadcast %260 : vector<9x1xf32> to vector<9x256xf32>
    %271 = arith.subf %254, %270 : vector<9x256xf32>
    %cst_79 = arith.constant 9.99999974E-6 : f32
    %272 = vector.broadcast %cst_79 : f32 to vector<9x1xf32>
    %273 = arith.addf %269, %272 : vector<9x1xf32>
    %274 = math.rsqrt %273 : vector<9x1xf32>
    %275 = vector.broadcast %274 : vector<9x1xf32> to vector<9x256xf32>
    %276 = arith.mulf %271, %275 : vector<9x256xf32>
    %277 = vector.broadcast %255 : f32 to vector<9x256xf32>
    %278 = arith.mulf %276, %277 : vector<9x256xf32>
    %279 = vector.broadcast %256 : f32 to vector<9x256xf32>
    %280 = arith.addf %278, %279 : vector<9x256xf32>
    %281 = arith.truncf %280 : vector<9x256xf32> to vector<9x256xbf16>
    %c0_80 = arith.constant 0 : index
    %c0_81 = arith.constant 0 : index
    %282 = vector.load %arg6[%c0_80, %c0_81] : memref<256x17xbf16, #tpu.memory_space<vmem>>, vector<256x17xbf16>
    %cst_82 = arith.constant dense<0.000000e+00> : vector<9x17xf32>
    %283 = tpu.matmul %281, %282, %cst_82 {dimension_numbers = #tpu.dot_dimension_numbers<[1], [0], [0], [1], [0, 0, 1, 1], [], []>} : vector<9x256xbf16>, vector<256x17xbf16>, vector<9x17xf32> -> vector<9x17xf32>
    %c0_83 = arith.constant 0 : index
    %c0_84 = arith.constant 0 : index
    %284 = vector.load %arg7[%c0_83, %c0_84] : memref<1x17xf32, #tpu.memory_space<vmem>>, vector<1x17xf32>
    %285 = vector.broadcast %284 : vector<1x17xf32> to vector<9x17xf32>
    %286 = arith.addf %283, %285 : vector<9x17xf32>
    %287 = vector.extract_strided_slice %286 {offsets = [0, 0], sizes = [9, 1], strides = [1, 1]} : vector<9x17xf32> to vector<9x1xf32>
    %288 = vector.extract_strided_slice %286 {offsets = [0, 1], sizes = [9, 8], strides = [1, 1]} : vector<9x17xf32> to vector<9x8xf32>
    %289 = vector.extract_strided_slice %286 {offsets = [0, 9], sizes = [9, 8], strides = [1, 1]} : vector<9x17xf32> to vector<9x8xf32>
    %290 = vector.broadcast %287 : vector<9x1xf32> to vector<9x9xf32>
    %291 = arith.mulf %290, %5 : vector<9x9xf32>
    %cst_85 = arith.constant 0.000000e+00 : f32
    %292 = vector.broadcast %cst_85 : f32 to vector<1x9xf32>
    %293 = vector.broadcast %34 : vector<9x1xi32> to vector<9x9xi32>
    %294 = arith.cmpi eq, %0, %293 : vector<9x9xi32>
    %295 = arith.extui %294 : vector<9x9xi1> to vector<9x9xi32>
    %296 = arith.sitofp %295 : vector<9x9xi32> to vector<9x9xf32>
    %297 = vector.extract_strided_slice %288 {offsets = [0, 0], sizes = [9, 1], strides = [1, 1]} : vector<9x8xf32> to vector<9x1xf32>
    %298 = vector.broadcast %297 : vector<9x1xf32> to vector<9x9xf32>
    %299 = arith.mulf %298, %296 : vector<9x9xf32>
    %300 = arith.addf %291, %299 : vector<9x9xf32>
    %301 = vector.extract_strided_slice %289 {offsets = [0, 0], sizes = [9, 1], strides = [1, 1]} : vector<9x8xf32> to vector<9x1xf32>
    %302 = vector.broadcast %301 : vector<9x1xf32> to vector<9x9xf32>
    %303 = arith.mulf %302, %296 : vector<9x9xf32>
    %cst_86 = arith.constant dense<0.000000e+00> : vector<9xf32>
    %304 = vector.multi_reduction <add>, %303, %cst_86 [0] : vector<9x9xf32> to vector<9xf32>
    %305 = vector.shape_cast %304 : vector<9xf32> to vector<1x9xf32>
    %306 = arith.addf %292, %305 : vector<1x9xf32>
    %307 = vector.broadcast %54 : vector<9x1xi32> to vector<9x9xi32>
    %308 = arith.cmpi eq, %0, %307 : vector<9x9xi32>
    %309 = arith.extui %308 : vector<9x9xi1> to vector<9x9xi32>
    %310 = arith.sitofp %309 : vector<9x9xi32> to vector<9x9xf32>
    %311 = vector.extract_strided_slice %288 {offsets = [0, 1], sizes = [9, 1], strides = [1, 1]} : vector<9x8xf32> to vector<9x1xf32>
    %312 = vector.broadcast %311 : vector<9x1xf32> to vector<9x9xf32>
    %313 = arith.mulf %312, %310 : vector<9x9xf32>
    %314 = arith.addf %300, %313 : vector<9x9xf32>
    %315 = vector.extract_strided_slice %289 {offsets = [0, 1], sizes = [9, 1], strides = [1, 1]} : vector<9x8xf32> to vector<9x1xf32>
    %316 = vector.broadcast %315 : vector<9x1xf32> to vector<9x9xf32>
    %317 = arith.mulf %316, %310 : vector<9x9xf32>
    %cst_87 = arith.constant dense<0.000000e+00> : vector<9xf32>
    %318 = vector.multi_reduction <add>, %317, %cst_87 [0] : vector<9x9xf32> to vector<9xf32>
    %319 = vector.shape_cast %318 : vector<9xf32> to vector<1x9xf32>
    %320 = arith.addf %306, %319 : vector<1x9xf32>
    %321 = vector.broadcast %74 : vector<9x1xi32> to vector<9x9xi32>
    %322 = arith.cmpi eq, %0, %321 : vector<9x9xi32>
    %323 = arith.extui %322 : vector<9x9xi1> to vector<9x9xi32>
    %324 = arith.sitofp %323 : vector<9x9xi32> to vector<9x9xf32>
    %325 = vector.extract_strided_slice %288 {offsets = [0, 2], sizes = [9, 1], strides = [1, 1]} : vector<9x8xf32> to vector<9x1xf32>
    %326 = vector.broadcast %325 : vector<9x1xf32> to vector<9x9xf32>
    %327 = arith.mulf %326, %324 : vector<9x9xf32>
    %328 = arith.addf %314, %327 : vector<9x9xf32>
    %329 = vector.extract_strided_slice %289 {offsets = [0, 2], sizes = [9, 1], strides = [1, 1]} : vector<9x8xf32> to vector<9x1xf32>
    %330 = vector.broadcast %329 : vector<9x1xf32> to vector<9x9xf32>
    %331 = arith.mulf %330, %324 : vector<9x9xf32>
    %cst_88 = arith.constant dense<0.000000e+00> : vector<9xf32>
    %332 = vector.multi_reduction <add>, %331, %cst_88 [0] : vector<9x9xf32> to vector<9xf32>
    %333 = vector.shape_cast %332 : vector<9xf32> to vector<1x9xf32>
    %334 = arith.addf %320, %333 : vector<1x9xf32>
    %335 = vector.broadcast %94 : vector<9x1xi32> to vector<9x9xi32>
    %336 = arith.cmpi eq, %0, %335 : vector<9x9xi32>
    %337 = arith.extui %336 : vector<9x9xi1> to vector<9x9xi32>
    %338 = arith.sitofp %337 : vector<9x9xi32> to vector<9x9xf32>
    %339 = vector.extract_strided_slice %288 {offsets = [0, 3], sizes = [9, 1], strides = [1, 1]} : vector<9x8xf32> to vector<9x1xf32>
    %340 = vector.broadcast %339 : vector<9x1xf32> to vector<9x9xf32>
    %341 = arith.mulf %340, %338 : vector<9x9xf32>
    %342 = arith.addf %328, %341 : vector<9x9xf32>
    %343 = vector.extract_strided_slice %289 {offsets = [0, 3], sizes = [9, 1], strides = [1, 1]} : vector<9x8xf32> to vector<9x1xf32>
    %344 = vector.broadcast %343 : vector<9x1xf32> to vector<9x9xf32>
    %345 = arith.mulf %344, %338 : vector<9x9xf32>
    %cst_89 = arith.constant dense<0.000000e+00> : vector<9xf32>
    %346 = vector.multi_reduction <add>, %345, %cst_89 [0] : vector<9x9xf32> to vector<9xf32>
    %347 = vector.shape_cast %346 : vector<9xf32> to vector<1x9xf32>
    %348 = arith.addf %334, %347 : vector<1x9xf32>
    %349 = vector.broadcast %114 : vector<9x1xi32> to vector<9x9xi32>
    %350 = arith.cmpi eq, %0, %349 : vector<9x9xi32>
    %351 = arith.extui %350 : vector<9x9xi1> to vector<9x9xi32>
    %352 = arith.sitofp %351 : vector<9x9xi32> to vector<9x9xf32>
    %353 = vector.extract_strided_slice %288 {offsets = [0, 4], sizes = [9, 1], strides = [1, 1]} : vector<9x8xf32> to vector<9x1xf32>
    %354 = vector.broadcast %353 : vector<9x1xf32> to vector<9x9xf32>
    %355 = arith.mulf %354, %352 : vector<9x9xf32>
    %356 = arith.addf %342, %355 : vector<9x9xf32>
    %357 = vector.extract_strided_slice %289 {offsets = [0, 4], sizes = [9, 1], strides = [1, 1]} : vector<9x8xf32> to vector<9x1xf32>
    %358 = vector.broadcast %357 : vector<9x1xf32> to vector<9x9xf32>
    %359 = arith.mulf %358, %352 : vector<9x9xf32>
    %cst_90 = arith.constant dense<0.000000e+00> : vector<9xf32>
    %360 = vector.multi_reduction <add>, %359, %cst_90 [0] : vector<9x9xf32> to vector<9xf32>
    %361 = vector.shape_cast %360 : vector<9xf32> to vector<1x9xf32>
    %362 = arith.addf %348, %361 : vector<1x9xf32>
    %363 = vector.broadcast %134 : vector<9x1xi32> to vector<9x9xi32>
    %364 = arith.cmpi eq, %0, %363 : vector<9x9xi32>
    %365 = arith.extui %364 : vector<9x9xi1> to vector<9x9xi32>
    %366 = arith.sitofp %365 : vector<9x9xi32> to vector<9x9xf32>
    %367 = vector.extract_strided_slice %288 {offsets = [0, 5], sizes = [9, 1], strides = [1, 1]} : vector<9x8xf32> to vector<9x1xf32>
    %368 = vector.broadcast %367 : vector<9x1xf32> to vector<9x9xf32>
    %369 = arith.mulf %368, %366 : vector<9x9xf32>
    %370 = arith.addf %356, %369 : vector<9x9xf32>
    %371 = vector.extract_strided_slice %289 {offsets = [0, 5], sizes = [9, 1], strides = [1, 1]} : vector<9x8xf32> to vector<9x1xf32>
    %372 = vector.broadcast %371 : vector<9x1xf32> to vector<9x9xf32>
    %373 = arith.mulf %372, %366 : vector<9x9xf32>
    %cst_91 = arith.constant dense<0.000000e+00> : vector<9xf32>
    %374 = vector.multi_reduction <add>, %373, %cst_91 [0] : vector<9x9xf32> to vector<9xf32>
    %375 = vector.shape_cast %374 : vector<9xf32> to vector<1x9xf32>
    %376 = arith.addf %362, %375 : vector<1x9xf32>
    %377 = vector.broadcast %154 : vector<9x1xi32> to vector<9x9xi32>
    %378 = arith.cmpi eq, %0, %377 : vector<9x9xi32>
    %379 = arith.extui %378 : vector<9x9xi1> to vector<9x9xi32>
    %380 = arith.sitofp %379 : vector<9x9xi32> to vector<9x9xf32>
    %381 = vector.extract_strided_slice %288 {offsets = [0, 6], sizes = [9, 1], strides = [1, 1]} : vector<9x8xf32> to vector<9x1xf32>
    %382 = vector.broadcast %381 : vector<9x1xf32> to vector<9x9xf32>
    %383 = arith.mulf %382, %380 : vector<9x9xf32>
    %384 = arith.addf %370, %383 : vector<9x9xf32>
    %385 = vector.extract_strided_slice %289 {offsets = [0, 6], sizes = [9, 1], strides = [1, 1]} : vector<9x8xf32> to vector<9x1xf32>
    %386 = vector.broadcast %385 : vector<9x1xf32> to vector<9x9xf32>
    %387 = arith.mulf %386, %380 : vector<9x9xf32>
    %cst_92 = arith.constant dense<0.000000e+00> : vector<9xf32>
    %388 = vector.multi_reduction <add>, %387, %cst_92 [0] : vector<9x9xf32> to vector<9xf32>
    %389 = vector.shape_cast %388 : vector<9xf32> to vector<1x9xf32>
    %390 = arith.addf %376, %389 : vector<1x9xf32>
    %391 = vector.broadcast %174 : vector<9x1xi32> to vector<9x9xi32>
    %392 = arith.cmpi eq, %0, %391 : vector<9x9xi32>
    %393 = arith.extui %392 : vector<9x9xi1> to vector<9x9xi32>
    %394 = arith.sitofp %393 : vector<9x9xi32> to vector<9x9xf32>
    %395 = vector.extract_strided_slice %288 {offsets = [0, 7], sizes = [9, 1], strides = [1, 1]} : vector<9x8xf32> to vector<9x1xf32>
    %396 = vector.broadcast %395 : vector<9x1xf32> to vector<9x9xf32>
    %397 = arith.mulf %396, %394 : vector<9x9xf32>
    %398 = arith.addf %384, %397 : vector<9x9xf32>
    %399 = vector.extract_strided_slice %289 {offsets = [0, 7], sizes = [9, 1], strides = [1, 1]} : vector<9x8xf32> to vector<9x1xf32>
    %400 = vector.broadcast %399 : vector<9x1xf32> to vector<9x9xf32>
    %401 = arith.mulf %400, %394 : vector<9x9xf32>
    %cst_93 = arith.constant dense<0.000000e+00> : vector<9xf32>
    %402 = vector.multi_reduction <add>, %401, %cst_93 [0] : vector<9x9xf32> to vector<9xf32>
    %403 = vector.shape_cast %402 : vector<9xf32> to vector<1x9xf32>
    %404 = arith.addf %390, %403 : vector<1x9xf32>
    %405 = vector.broadcast %404 : vector<1x9xf32> to vector<9x9xf32>
    %406 = arith.mulf %9, %405 : vector<9x9xf32>
    %407 = arith.addf %398, %406 : vector<9x9xf32>
    %cst_94 = arith.constant dense<0.000000e+00> : vector<9x32xf32>
    %408 = tpu.matmul %407, %20, %cst_94 {dimension_numbers = #tpu.dot_dimension_numbers<[1], [0], [0], [1], [0, 0, 1, 1], [], []>} : vector<9x9xf32>, vector<9x32xf32>, vector<9x32xf32> -> vector<9x32xf32>
    %cst_95 = arith.constant dense<0.000000e+00> : vector<9x32xf32>
    %409 = tpu.matmul %407, %20, %cst_95 {dimension_numbers = #tpu.dot_dimension_numbers<[0], [0], [1], [1], [0, 1, 1, 1], [], []>} : vector<9x9xf32>, vector<9x32xf32>, vector<9x32xf32> -> vector<9x32xf32>
    %410 = arith.addf %408, %409 : vector<9x32xf32>
    %cst_96 = arith.constant 1.000000e+00 : f32
    %411 = vector.broadcast %cst_96 : f32 to vector<9x1xf32>
    %412 = arith.divf %411, %18 : vector<9x1xf32>
    %413 = arith.mulf %410, %12 : vector<9x32xf32>
    %cst_97 = arith.constant dense<0.000000e+00> : vector<9xf32>
    %414 = vector.multi_reduction <add>, %413, %cst_97 [1] : vector<9x32xf32> to vector<9xf32>
    %415 = vector.shape_cast %414 : vector<9xf32> to vector<9x1xf32>
    %cst_98 = arith.constant 9.99999996E-13 : f32
    %416 = vector.broadcast %cst_98 : f32 to vector<9x1xf32>
    %417 = arith.cmpf ogt, %16, %416 : vector<9x1xf32>
    %cst_99 = arith.constant 9.99999996E-13 : f32
    %418 = vector.broadcast %cst_99 : f32 to vector<9x1xf32>
    %419 = arith.maximumf %16, %418 : vector<9x1xf32>
    %cst_100 = arith.constant 1.000000e+00 : f32
    %420 = vector.broadcast %cst_100 : f32 to vector<9x1xf32>
    %421 = arith.divf %420, %419 : vector<9x1xf32>
    %cst_101 = arith.constant 0.000000e+00 : f32
    %422 = vector.broadcast %cst_101 : f32 to vector<9x1xf32>
    %423 = arith.select %417, %421, %422 : vector<9x1xi1>, vector<9x1xf32>
    %424 = vector.broadcast %412 : vector<9x1xf32> to vector<9x32xf32>
    %425 = arith.mulf %410, %424 : vector<9x32xf32>
    %426 = arith.mulf %415, %412 : vector<9x1xf32>
    %427 = arith.mulf %426, %412 : vector<9x1xf32>
    %428 = arith.mulf %427, %423 : vector<9x1xf32>
    %429 = vector.broadcast %428 : vector<9x1xf32> to vector<9x32xf32>
    %430 = arith.mulf %12, %429 : vector<9x32xf32>
    %431 = arith.subf %425, %430 : vector<9x32xf32>
    %432 = vector.extract_strided_slice %431 {offsets = [0, 0], sizes = [1, 32], strides = [1, 1]} : vector<9x32xf32> to vector<1x32xf32>
    %cst_102 = arith.constant 1.000000e-03 : f32
    %433 = vector.broadcast %cst_102 : f32 to vector<1x32xf32>
    %434 = arith.mulf %433, %432 : vector<1x32xf32>
    %435 = arith.subf %10, %434 : vector<1x32xf32>
    %436 = tpu.concatenate %435, %11 in 0 : vector<1x32xf32>, vector<8x32xf32> -> vector<9x32xf32>
    %437 = arith.mulf %436, %436 : vector<9x32xf32>
    %cst_103 = arith.constant dense<0.000000e+00> : vector<9xf32>
    %438 = vector.multi_reduction <add>, %437, %cst_103 [1] : vector<9x32xf32> to vector<9xf32>
    %439 = vector.shape_cast %438 : vector<9xf32> to vector<9x1xf32>
    %440 = math.sqrt %439 : vector<9x1xf32>
    %cst_104 = arith.constant 9.99999996E-13 : f32
    %441 = vector.broadcast %cst_104 : f32 to vector<9x1xf32>
    %442 = arith.maximumf %440, %441 : vector<9x1xf32>
    %443 = vector.broadcast %442 : vector<9x1xf32> to vector<9x32xf32>
    %444 = arith.divf %436, %443 : vector<9x32xf32>
    %cst_105 = arith.constant dense<0.000000e+00> : vector<9x9xf32>
    %445 = tpu.matmul %444, %444, %cst_105 {dimension_numbers = #tpu.dot_dimension_numbers<[1], [1], [0], [0], [0, 0, 1, 0], [], []>} : vector<9x32xf32>, vector<9x32xf32>, vector<9x9xf32> -> vector<9x9xf32>
    %446 = vector.extract_strided_slice %445 {offsets = [0, 0], sizes = [1, 9], strides = [1, 1]} : vector<9x9xf32> to vector<1x9xf32>
    %c0_i32_106 = arith.constant 0 : i32
    %447 = vector.broadcast %c0_i32_106 : i32 to vector<9x9xi32>
    %448 = arith.cmpi eq, %0, %447 : vector<9x9xi32>
    %cst_107 = arith.constant -1.000000e+30 : f32
    %449 = vector.broadcast %cst_107 : f32 to vector<9x9xf32>
    %450 = arith.select %448, %449, %445 : vector<9x9xi1>, vector<9x9xf32>
    %cst_108 = arith.constant dense<0xFF800000> : vector<9xf32>
    %451 = vector.multi_reduction <maximumf>, %450, %cst_108 [1] : vector<9x9xf32> to vector<9xf32>
    %452 = vector.shape_cast %451 : vector<9xf32> to vector<9x1xf32>
    %453 = vector.broadcast %452 : vector<9x1xf32> to vector<9x9xf32>
    %454 = arith.cmpf oeq, %450, %453 : vector<9x9xf32>
    %c9_i32_109 = arith.constant 9 : i32
    %455 = vector.broadcast %c9_i32_109 : i32 to vector<9x9xi32>
    %456 = arith.select %454, %0, %455 : vector<9x9xi1>, vector<9x9xi32>
    %cst_110 = arith.constant dense<2147483647> : vector<9xi32>
    %457 = vector.multi_reduction <minsi>, %456, %cst_110 [1] : vector<9x9xi32> to vector<9xi32>
    %458 = vector.shape_cast %457 : vector<9xi32> to vector<9x1xi32>
    %459 = vector.broadcast %458 : vector<9x1xi32> to vector<9x9xi32>
    %460 = arith.cmpi eq, %0, %459 : vector<9x9xi32>
    %461 = arith.extui %460 : vector<9x9xi1> to vector<9x9xi32>
    %462 = arith.sitofp %461 : vector<9x9xi32> to vector<9x9xf32>
    %463 = vector.broadcast %446 : vector<1x9xf32> to vector<9x9xf32>
    %464 = arith.mulf %462, %463 : vector<9x9xf32>
    %cst_111 = arith.constant dense<0.000000e+00> : vector<9xf32>
    %465 = vector.multi_reduction <add>, %464, %cst_111 [1] : vector<9x9xf32> to vector<9xf32>
    %466 = vector.shape_cast %465 : vector<9xf32> to vector<9x1xf32>
    %467 = vector.broadcast %458 : vector<9x1xi32> to vector<9x9xi32>
    %468 = arith.cmpi eq, %0, %467 : vector<9x9xi32>
    %cst_112 = arith.constant -1.000000e+30 : f32
    %469 = vector.broadcast %cst_112 : f32 to vector<9x9xf32>
    %470 = arith.select %468, %469, %450 : vector<9x9xi1>, vector<9x9xf32>
    %cst_113 = arith.constant dense<0xFF800000> : vector<9xf32>
    %471 = vector.multi_reduction <maximumf>, %470, %cst_113 [1] : vector<9x9xf32> to vector<9xf32>
    %472 = vector.shape_cast %471 : vector<9xf32> to vector<9x1xf32>
    %473 = vector.broadcast %472 : vector<9x1xf32> to vector<9x9xf32>
    %474 = arith.cmpf oeq, %470, %473 : vector<9x9xf32>
    %c9_i32_114 = arith.constant 9 : i32
    %475 = vector.broadcast %c9_i32_114 : i32 to vector<9x9xi32>
    %476 = arith.select %474, %0, %475 : vector<9x9xi1>, vector<9x9xi32>
    %cst_115 = arith.constant dense<2147483647> : vector<9xi32>
    %477 = vector.multi_reduction <minsi>, %476, %cst_115 [1] : vector<9x9xi32> to vector<9xi32>
    %478 = vector.shape_cast %477 : vector<9xi32> to vector<9x1xi32>
    %479 = vector.broadcast %478 : vector<9x1xi32> to vector<9x9xi32>
    %480 = arith.cmpi eq, %0, %479 : vector<9x9xi32>
    %481 = arith.extui %480 : vector<9x9xi1> to vector<9x9xi32>
    %482 = arith.sitofp %481 : vector<9x9xi32> to vector<9x9xf32>
    %483 = vector.broadcast %446 : vector<1x9xf32> to vector<9x9xf32>
    %484 = arith.mulf %482, %483 : vector<9x9xf32>
    %cst_116 = arith.constant dense<0.000000e+00> : vector<9xf32>
    %485 = vector.multi_reduction <add>, %484, %cst_116 [1] : vector<9x9xf32> to vector<9xf32>
    %486 = vector.shape_cast %485 : vector<9xf32> to vector<9x1xf32>
    %487 = vector.broadcast %478 : vector<9x1xi32> to vector<9x9xi32>
    %488 = arith.cmpi eq, %0, %487 : vector<9x9xi32>
    %cst_117 = arith.constant -1.000000e+30 : f32
    %489 = vector.broadcast %cst_117 : f32 to vector<9x9xf32>
    %490 = arith.select %488, %489, %470 : vector<9x9xi1>, vector<9x9xf32>
    %cst_118 = arith.constant dense<0xFF800000> : vector<9xf32>
    %491 = vector.multi_reduction <maximumf>, %490, %cst_118 [1] : vector<9x9xf32> to vector<9xf32>
    %492 = vector.shape_cast %491 : vector<9xf32> to vector<9x1xf32>
    %493 = vector.broadcast %492 : vector<9x1xf32> to vector<9x9xf32>
    %494 = arith.cmpf oeq, %490, %493 : vector<9x9xf32>
    %c9_i32_119 = arith.constant 9 : i32
    %495 = vector.broadcast %c9_i32_119 : i32 to vector<9x9xi32>
    %496 = arith.select %494, %0, %495 : vector<9x9xi1>, vector<9x9xi32>
    %cst_120 = arith.constant dense<2147483647> : vector<9xi32>
    %497 = vector.multi_reduction <minsi>, %496, %cst_120 [1] : vector<9x9xi32> to vector<9xi32>
    %498 = vector.shape_cast %497 : vector<9xi32> to vector<9x1xi32>
    %499 = vector.broadcast %498 : vector<9x1xi32> to vector<9x9xi32>
    %500 = arith.cmpi eq, %0, %499 : vector<9x9xi32>
    %501 = arith.extui %500 : vector<9x9xi1> to vector<9x9xi32>
    %502 = arith.sitofp %501 : vector<9x9xi32> to vector<9x9xf32>
    %503 = vector.broadcast %446 : vector<1x9xf32> to vector<9x9xf32>
    %504 = arith.mulf %502, %503 : vector<9x9xf32>
    %cst_121 = arith.constant dense<0.000000e+00> : vector<9xf32>
    %505 = vector.multi_reduction <add>, %504, %cst_121 [1] : vector<9x9xf32> to vector<9xf32>
    %506 = vector.shape_cast %505 : vector<9xf32> to vector<9x1xf32>
    %507 = vector.broadcast %498 : vector<9x1xi32> to vector<9x9xi32>
    %508 = arith.cmpi eq, %0, %507 : vector<9x9xi32>
    %cst_122 = arith.constant -1.000000e+30 : f32
    %509 = vector.broadcast %cst_122 : f32 to vector<9x9xf32>
    %510 = arith.select %508, %509, %490 : vector<9x9xi1>, vector<9x9xf32>
    %cst_123 = arith.constant dense<0xFF800000> : vector<9xf32>
    %511 = vector.multi_reduction <maximumf>, %510, %cst_123 [1] : vector<9x9xf32> to vector<9xf32>
    %512 = vector.shape_cast %511 : vector<9xf32> to vector<9x1xf32>
    %513 = vector.broadcast %512 : vector<9x1xf32> to vector<9x9xf32>
    %514 = arith.cmpf oeq, %510, %513 : vector<9x9xf32>
    %c9_i32_124 = arith.constant 9 : i32
    %515 = vector.broadcast %c9_i32_124 : i32 to vector<9x9xi32>
    %516 = arith.select %514, %0, %515 : vector<9x9xi1>, vector<9x9xi32>
    %cst_125 = arith.constant dense<2147483647> : vector<9xi32>
    %517 = vector.multi_reduction <minsi>, %516, %cst_125 [1] : vector<9x9xi32> to vector<9xi32>
    %518 = vector.shape_cast %517 : vector<9xi32> to vector<9x1xi32>
    %519 = vector.broadcast %518 : vector<9x1xi32> to vector<9x9xi32>
    %520 = arith.cmpi eq, %0, %519 : vector<9x9xi32>
    %521 = arith.extui %520 : vector<9x9xi1> to vector<9x9xi32>
    %522 = arith.sitofp %521 : vector<9x9xi32> to vector<9x9xf32>
    %523 = vector.broadcast %446 : vector<1x9xf32> to vector<9x9xf32>
    %524 = arith.mulf %522, %523 : vector<9x9xf32>
    %cst_126 = arith.constant dense<0.000000e+00> : vector<9xf32>
    %525 = vector.multi_reduction <add>, %524, %cst_126 [1] : vector<9x9xf32> to vector<9xf32>
    %526 = vector.shape_cast %525 : vector<9xf32> to vector<9x1xf32>
    %527 = vector.broadcast %518 : vector<9x1xi32> to vector<9x9xi32>
    %528 = arith.cmpi eq, %0, %527 : vector<9x9xi32>
    %cst_127 = arith.constant -1.000000e+30 : f32
    %529 = vector.broadcast %cst_127 : f32 to vector<9x9xf32>
    %530 = arith.select %528, %529, %510 : vector<9x9xi1>, vector<9x9xf32>
    %cst_128 = arith.constant dense<0xFF800000> : vector<9xf32>
    %531 = vector.multi_reduction <maximumf>, %530, %cst_128 [1] : vector<9x9xf32> to vector<9xf32>
    %532 = vector.shape_cast %531 : vector<9xf32> to vector<9x1xf32>
    %533 = vector.broadcast %532 : vector<9x1xf32> to vector<9x9xf32>
    %534 = arith.cmpf oeq, %530, %533 : vector<9x9xf32>
    %c9_i32_129 = arith.constant 9 : i32
    %535 = vector.broadcast %c9_i32_129 : i32 to vector<9x9xi32>
    %536 = arith.select %534, %0, %535 : vector<9x9xi1>, vector<9x9xi32>
    %cst_130 = arith.constant dense<2147483647> : vector<9xi32>
    %537 = vector.multi_reduction <minsi>, %536, %cst_130 [1] : vector<9x9xi32> to vector<9xi32>
    %538 = vector.shape_cast %537 : vector<9xi32> to vector<9x1xi32>
    %539 = vector.broadcast %538 : vector<9x1xi32> to vector<9x9xi32>
    %540 = arith.cmpi eq, %0, %539 : vector<9x9xi32>
    %541 = arith.extui %540 : vector<9x9xi1> to vector<9x9xi32>
    %542 = arith.sitofp %541 : vector<9x9xi32> to vector<9x9xf32>
    %543 = vector.broadcast %446 : vector<1x9xf32> to vector<9x9xf32>
    %544 = arith.mulf %542, %543 : vector<9x9xf32>
    %cst_131 = arith.constant dense<0.000000e+00> : vector<9xf32>
    %545 = vector.multi_reduction <add>, %544, %cst_131 [1] : vector<9x9xf32> to vector<9xf32>
    %546 = vector.shape_cast %545 : vector<9xf32> to vector<9x1xf32>
    %547 = vector.broadcast %538 : vector<9x1xi32> to vector<9x9xi32>
    %548 = arith.cmpi eq, %0, %547 : vector<9x9xi32>
    %cst_132 = arith.constant -1.000000e+30 : f32
    %549 = vector.broadcast %cst_132 : f32 to vector<9x9xf32>
    %550 = arith.select %548, %549, %530 : vector<9x9xi1>, vector<9x9xf32>
    %cst_133 = arith.constant dense<0xFF800000> : vector<9xf32>
    %551 = vector.multi_reduction <maximumf>, %550, %cst_133 [1] : vector<9x9xf32> to vector<9xf32>
    %552 = vector.shape_cast %551 : vector<9xf32> to vector<9x1xf32>
    %553 = vector.broadcast %552 : vector<9x1xf32> to vector<9x9xf32>
    %554 = arith.cmpf oeq, %550, %553 : vector<9x9xf32>
    %c9_i32_134 = arith.constant 9 : i32
    %555 = vector.broadcast %c9_i32_134 : i32 to vector<9x9xi32>
    %556 = arith.select %554, %0, %555 : vector<9x9xi1>, vector<9x9xi32>
    %cst_135 = arith.constant dense<2147483647> : vector<9xi32>
    %557 = vector.multi_reduction <minsi>, %556, %cst_135 [1] : vector<9x9xi32> to vector<9xi32>
    %558 = vector.shape_cast %557 : vector<9xi32> to vector<9x1xi32>
    %559 = vector.broadcast %558 : vector<9x1xi32> to vector<9x9xi32>
    %560 = arith.cmpi eq, %0, %559 : vector<9x9xi32>
    %561 = arith.extui %560 : vector<9x9xi1> to vector<9x9xi32>
    %562 = arith.sitofp %561 : vector<9x9xi32> to vector<9x9xf32>
    %563 = vector.broadcast %446 : vector<1x9xf32> to vector<9x9xf32>
    %564 = arith.mulf %562, %563 : vector<9x9xf32>
    %cst_136 = arith.constant dense<0.000000e+00> : vector<9xf32>
    %565 = vector.multi_reduction <add>, %564, %cst_136 [1] : vector<9x9xf32> to vector<9xf32>
    %566 = vector.shape_cast %565 : vector<9xf32> to vector<9x1xf32>
    %567 = vector.broadcast %558 : vector<9x1xi32> to vector<9x9xi32>
    %568 = arith.cmpi eq, %0, %567 : vector<9x9xi32>
    %cst_137 = arith.constant -1.000000e+30 : f32
    %569 = vector.broadcast %cst_137 : f32 to vector<9x9xf32>
    %570 = arith.select %568, %569, %550 : vector<9x9xi1>, vector<9x9xf32>
    %cst_138 = arith.constant dense<0xFF800000> : vector<9xf32>
    %571 = vector.multi_reduction <maximumf>, %570, %cst_138 [1] : vector<9x9xf32> to vector<9xf32>
    %572 = vector.shape_cast %571 : vector<9xf32> to vector<9x1xf32>
    %573 = vector.broadcast %572 : vector<9x1xf32> to vector<9x9xf32>
    %574 = arith.cmpf oeq, %570, %573 : vector<9x9xf32>
    %c9_i32_139 = arith.constant 9 : i32
    %575 = vector.broadcast %c9_i32_139 : i32 to vector<9x9xi32>
    %576 = arith.select %574, %0, %575 : vector<9x9xi1>, vector<9x9xi32>
    %cst_140 = arith.constant dense<2147483647> : vector<9xi32>
    %577 = vector.multi_reduction <minsi>, %576, %cst_140 [1] : vector<9x9xi32> to vector<9xi32>
    %578 = vector.shape_cast %577 : vector<9xi32> to vector<9x1xi32>
    %579 = vector.broadcast %578 : vector<9x1xi32> to vector<9x9xi32>
    %580 = arith.cmpi eq, %0, %579 : vector<9x9xi32>
    %581 = arith.extui %580 : vector<9x9xi1> to vector<9x9xi32>
    %582 = arith.sitofp %581 : vector<9x9xi32> to vector<9x9xf32>
    %583 = vector.broadcast %446 : vector<1x9xf32> to vector<9x9xf32>
    %584 = arith.mulf %582, %583 : vector<9x9xf32>
    %cst_141 = arith.constant dense<0.000000e+00> : vector<9xf32>
    %585 = vector.multi_reduction <add>, %584, %cst_141 [1] : vector<9x9xf32> to vector<9xf32>
    %586 = vector.shape_cast %585 : vector<9xf32> to vector<9x1xf32>
    %587 = vector.broadcast %578 : vector<9x1xi32> to vector<9x9xi32>
    %588 = arith.cmpi eq, %0, %587 : vector<9x9xi32>
    %cst_142 = arith.constant -1.000000e+30 : f32
    %589 = vector.broadcast %cst_142 : f32 to vector<9x9xf32>
    %590 = arith.select %588, %589, %570 : vector<9x9xi1>, vector<9x9xf32>
    %cst_143 = arith.constant dense<0xFF800000> : vector<9xf32>
    %591 = vector.multi_reduction <maximumf>, %590, %cst_143 [1] : vector<9x9xf32> to vector<9xf32>
    %592 = vector.shape_cast %591 : vector<9xf32> to vector<9x1xf32>
    %593 = vector.broadcast %592 : vector<9x1xf32> to vector<9x9xf32>
    %594 = arith.cmpf oeq, %590, %593 : vector<9x9xf32>
    %c9_i32_144 = arith.constant 9 : i32
    %595 = vector.broadcast %c9_i32_144 : i32 to vector<9x9xi32>
    %596 = arith.select %594, %0, %595 : vector<9x9xi1>, vector<9x9xi32>
    %cst_145 = arith.constant dense<2147483647> : vector<9xi32>
    %597 = vector.multi_reduction <minsi>, %596, %cst_145 [1] : vector<9x9xi32> to vector<9xi32>
    %598 = vector.shape_cast %597 : vector<9xi32> to vector<9x1xi32>
    %599 = vector.broadcast %598 : vector<9x1xi32> to vector<9x9xi32>
    %600 = arith.cmpi eq, %0, %599 : vector<9x9xi32>
    %601 = arith.extui %600 : vector<9x9xi1> to vector<9x9xi32>
    %602 = arith.sitofp %601 : vector<9x9xi32> to vector<9x9xf32>
    %603 = vector.broadcast %446 : vector<1x9xf32> to vector<9x9xf32>
    %604 = arith.mulf %602, %603 : vector<9x9xf32>
    %cst_146 = arith.constant dense<0.000000e+00> : vector<9xf32>
    %605 = vector.multi_reduction <add>, %604, %cst_146 [1] : vector<9x9xf32> to vector<9xf32>
    %606 = vector.shape_cast %605 : vector<9xf32> to vector<9x1xf32>
    %607 = vector.extract_strided_slice %445 {offsets = [0, 0], sizes = [9, 1], strides = [1, 1]} : vector<9x9xf32> to vector<9x1xf32>
    %608 = tpu.concatenate %452, %472, %492, %512, %532, %552, %572, %592 in 1 : vector<9x1xf32>, vector<9x1xf32>, vector<9x1xf32>, vector<9x1xf32>, vector<9x1xf32>, vector<9x1xf32>, vector<9x1xf32>, vector<9x1xf32> -> vector<9x8xf32>
    %609 = tpu.concatenate %466, %486, %506, %526, %546, %566, %586, %606 in 1 : vector<9x1xf32>, vector<9x1xf32>, vector<9x1xf32>, vector<9x1xf32>, vector<9x1xf32>, vector<9x1xf32>, vector<9x1xf32>, vector<9x1xf32> -> vector<9x8xf32>
    %610 = tpu.concatenate %607, %608, %609 in 1 : vector<9x1xf32>, vector<9x8xf32>, vector<9x8xf32> -> vector<9x17xf32>
    %c0_147 = arith.constant 0 : index
    %611 = memref.load %arg16[%c0_147] : memref<3xf32, #tpu.memory_space<smem>>
    %c0_148 = arith.constant 0 : index
    %612 = memref.load %arg17[%c0_148] : memref<3xf32, #tpu.memory_space<smem>>
    %cst_149 = arith.constant dense<0.000000e+00> : vector<9xf32>
    %613 = vector.multi_reduction <add>, %610, %cst_149 [1] : vector<9x17xf32> to vector<9xf32>
    %614 = vector.shape_cast %613 : vector<9xf32> to vector<9x1xf32>
    %cst_150 = arith.constant 0.0588235296 : f32
    %615 = vector.broadcast %cst_150 : f32 to vector<9x1xf32>
    %616 = arith.mulf %614, %615 : vector<9x1xf32>
    %617 = arith.mulf %610, %610 : vector<9x17xf32>
    %cst_151 = arith.constant dense<0.000000e+00> : vector<9xf32>
    %618 = vector.multi_reduction <add>, %617, %cst_151 [1] : vector<9x17xf32> to vector<9xf32>
    %619 = vector.shape_cast %618 : vector<9xf32> to vector<9x1xf32>
    %cst_152 = arith.constant 0.0588235296 : f32
    %620 = vector.broadcast %cst_152 : f32 to vector<9x1xf32>
    %621 = arith.mulf %619, %620 : vector<9x1xf32>
    %622 = arith.mulf %616, %616 : vector<9x1xf32>
    %623 = arith.subf %621, %622 : vector<9x1xf32>
    %cst_153 = arith.constant 0.000000e+00 : f32
    %624 = vector.broadcast %cst_153 : f32 to vector<9x1xf32>
    %625 = arith.maximumf %623, %624 : vector<9x1xf32>
    %626 = vector.broadcast %616 : vector<9x1xf32> to vector<9x17xf32>
    %627 = arith.subf %610, %626 : vector<9x17xf32>
    %cst_154 = arith.constant 9.99999974E-6 : f32
    %628 = vector.broadcast %cst_154 : f32 to vector<9x1xf32>
    %629 = arith.addf %625, %628 : vector<9x1xf32>
    %630 = math.rsqrt %629 : vector<9x1xf32>
    %631 = vector.broadcast %630 : vector<9x1xf32> to vector<9x17xf32>
    %632 = arith.mulf %627, %631 : vector<9x17xf32>
    %633 = vector.broadcast %611 : f32 to vector<9x17xf32>
    %634 = arith.mulf %632, %633 : vector<9x17xf32>
    %635 = vector.broadcast %612 : f32 to vector<9x17xf32>
    %636 = arith.addf %634, %635 : vector<9x17xf32>
    %637 = arith.truncf %636 : vector<9x17xf32> to vector<9x17xbf16>
    %c0_155 = arith.constant 0 : index
    %c0_156 = arith.constant 0 : index
    %638 = vector.load %arg10[%c0_155, %c0_156] : memref<17x256xbf16, #tpu.memory_space<vmem>>, vector<17x256xbf16>
    %cst_157 = arith.constant dense<0.000000e+00> : vector<9x256xf32>
    %639 = tpu.matmul %637, %638, %cst_157 {dimension_numbers = #tpu.dot_dimension_numbers<[1], [0], [0], [1], [0, 0, 1, 1], [], []>} : vector<9x17xbf16>, vector<17x256xbf16>, vector<9x256xf32> -> vector<9x256xf32>
    %c0_158 = arith.constant 0 : index
    %c0_159 = arith.constant 0 : index
    %640 = vector.load %arg11[%c0_158, %c0_159] : memref<1x256xf32, #tpu.memory_space<vmem>>, vector<1x256xf32>
    %641 = vector.broadcast %640 : vector<1x256xf32> to vector<9x256xf32>
    %642 = arith.addf %639, %641 : vector<9x256xf32>
    %cst_160 = arith.constant 0.000000e+00 : f32
    %643 = vector.broadcast %cst_160 : f32 to vector<9x256xf32>
    %644 = arith.maximumf %642, %643 : vector<9x256xf32>
    %c1_161 = arith.constant 1 : index
    %645 = memref.load %arg16[%c1_161] : memref<3xf32, #tpu.memory_space<smem>>
    %c1_162 = arith.constant 1 : index
    %646 = memref.load %arg17[%c1_162] : memref<3xf32, #tpu.memory_space<smem>>
    %cst_163 = arith.constant dense<0.000000e+00> : vector<9xf32>
    %647 = vector.multi_reduction <add>, %644, %cst_163 [1] : vector<9x256xf32> to vector<9xf32>
    %648 = vector.shape_cast %647 : vector<9xf32> to vector<9x1xf32>
    %cst_164 = arith.constant 3.906250e-03 : f32
    %649 = vector.broadcast %cst_164 : f32 to vector<9x1xf32>
    %650 = arith.mulf %648, %649 : vector<9x1xf32>
    %651 = arith.mulf %644, %644 : vector<9x256xf32>
    %cst_165 = arith.constant dense<0.000000e+00> : vector<9xf32>
    %652 = vector.multi_reduction <add>, %651, %cst_165 [1] : vector<9x256xf32> to vector<9xf32>
    %653 = vector.shape_cast %652 : vector<9xf32> to vector<9x1xf32>
    %cst_166 = arith.constant 3.906250e-03 : f32
    %654 = vector.broadcast %cst_166 : f32 to vector<9x1xf32>
    %655 = arith.mulf %653, %654 : vector<9x1xf32>
    %656 = arith.mulf %650, %650 : vector<9x1xf32>
    %657 = arith.subf %655, %656 : vector<9x1xf32>
    %cst_167 = arith.constant 0.000000e+00 : f32
    %658 = vector.broadcast %cst_167 : f32 to vector<9x1xf32>
    %659 = arith.maximumf %657, %658 : vector<9x1xf32>
    %660 = vector.broadcast %650 : vector<9x1xf32> to vector<9x256xf32>
    %661 = arith.subf %644, %660 : vector<9x256xf32>
    %cst_168 = arith.constant 9.99999974E-6 : f32
    %662 = vector.broadcast %cst_168 : f32 to vector<9x1xf32>
    %663 = arith.addf %659, %662 : vector<9x1xf32>
    %664 = math.rsqrt %663 : vector<9x1xf32>
    %665 = vector.broadcast %664 : vector<9x1xf32> to vector<9x256xf32>
    %666 = arith.mulf %661, %665 : vector<9x256xf32>
    %667 = vector.broadcast %645 : f32 to vector<9x256xf32>
    %668 = arith.mulf %666, %667 : vector<9x256xf32>
    %669 = vector.broadcast %646 : f32 to vector<9x256xf32>
    %670 = arith.addf %668, %669 : vector<9x256xf32>
    %671 = arith.truncf %670 : vector<9x256xf32> to vector<9x256xbf16>
    %c0_169 = arith.constant 0 : index
    %c0_170 = arith.constant 0 : index
    %672 = vector.load %arg12[%c0_169, %c0_170] : memref<256x256xbf16, #tpu.memory_space<vmem>>, vector<256x256xbf16>
    %cst_171 = arith.constant dense<0.000000e+00> : vector<9x256xf32>
    %673 = tpu.matmul %671, %672, %cst_171 {dimension_numbers = #tpu.dot_dimension_numbers<[1], [0], [0], [1], [0, 0, 1, 1], [], []>} : vector<9x256xbf16>, vector<256x256xbf16>, vector<9x256xf32> -> vector<9x256xf32>
    %c0_172 = arith.constant 0 : index
    %c0_173 = arith.constant 0 : index
    %674 = vector.load %arg13[%c0_172, %c0_173] : memref<1x256xf32, #tpu.memory_space<vmem>>, vector<1x256xf32>
    %675 = vector.broadcast %674 : vector<1x256xf32> to vector<9x256xf32>
    %676 = arith.addf %673, %675 : vector<9x256xf32>
    %cst_174 = arith.constant 0.000000e+00 : f32
    %677 = vector.broadcast %cst_174 : f32 to vector<9x256xf32>
    %678 = arith.maximumf %676, %677 : vector<9x256xf32>
    %c2_175 = arith.constant 2 : index
    %679 = memref.load %arg16[%c2_175] : memref<3xf32, #tpu.memory_space<smem>>
    %c2_176 = arith.constant 2 : index
    %680 = memref.load %arg17[%c2_176] : memref<3xf32, #tpu.memory_space<smem>>
    %cst_177 = arith.constant dense<0.000000e+00> : vector<9xf32>
    %681 = vector.multi_reduction <add>, %678, %cst_177 [1] : vector<9x256xf32> to vector<9xf32>
    %682 = vector.shape_cast %681 : vector<9xf32> to vector<9x1xf32>
    %cst_178 = arith.constant 3.906250e-03 : f32
    %683 = vector.broadcast %cst_178 : f32 to vector<9x1xf32>
    %684 = arith.mulf %682, %683 : vector<9x1xf32>
    %685 = arith.mulf %678, %678 : vector<9x256xf32>
    %cst_179 = arith.constant dense<0.000000e+00> : vector<9xf32>
    %686 = vector.multi_reduction <add>, %685, %cst_179 [1] : vector<9x256xf32> to vector<9xf32>
    %687 = vector.shape_cast %686 : vector<9xf32> to vector<9x1xf32>
    %cst_180 = arith.constant 3.906250e-03 : f32
    %688 = vector.broadcast %cst_180 : f32 to vector<9x1xf32>
    %689 = arith.mulf %687, %688 : vector<9x1xf32>
    %690 = arith.mulf %684, %684 : vector<9x1xf32>
    %691 = arith.subf %689, %690 : vector<9x1xf32>
    %cst_181 = arith.constant 0.000000e+00 : f32
    %692 = vector.broadcast %cst_181 : f32 to vector<9x1xf32>
    %693 = arith.maximumf %691, %692 : vector<9x1xf32>
    %694 = vector.broadcast %684 : vector<9x1xf32> to vector<9x256xf32>
    %695 = arith.subf %678, %694 : vector<9x256xf32>
    %cst_182 = arith.constant 9.99999974E-6 : f32
    %696 = vector.broadcast %cst_182 : f32 to vector<9x1xf32>
    %697 = arith.addf %693, %696 : vector<9x1xf32>
    %698 = math.rsqrt %697 : vector<9x1xf32>
    %699 = vector.broadcast %698 : vector<9x1xf32> to vector<9x256xf32>
    %700 = arith.mulf %695, %699 : vector<9x256xf32>
    %701 = vector.broadcast %679 : f32 to vector<9x256xf32>
    %702 = arith.mulf %700, %701 : vector<9x256xf32>
    %703 = vector.broadcast %680 : f32 to vector<9x256xf32>
    %704 = arith.addf %702, %703 : vector<9x256xf32>
    %705 = arith.truncf %704 : vector<9x256xf32> to vector<9x256xbf16>
    %c0_183 = arith.constant 0 : index
    %c0_184 = arith.constant 0 : index
    %706 = vector.load %arg14[%c0_183, %c0_184] : memref<256x17xbf16, #tpu.memory_space<vmem>>, vector<256x17xbf16>
    %cst_185 = arith.constant dense<0.000000e+00> : vector<9x17xf32>
    %707 = tpu.matmul %705, %706, %cst_185 {dimension_numbers = #tpu.dot_dimension_numbers<[1], [0], [0], [1], [0, 0, 1, 1], [], []>} : vector<9x256xbf16>, vector<256x17xbf16>, vector<9x17xf32> -> vector<9x17xf32>
    %c0_186 = arith.constant 0 : index
    %c0_187 = arith.constant 0 : index
    %708 = vector.load %arg15[%c0_186, %c0_187] : memref<1x17xf32, #tpu.memory_space<vmem>>, vector<1x17xf32>
    %709 = vector.broadcast %708 : vector<1x17xf32> to vector<9x17xf32>
    %710 = arith.addf %707, %709 : vector<9x17xf32>
    %711 = vector.extract_strided_slice %710 {offsets = [0, 0], sizes = [9, 1], strides = [1, 1]} : vector<9x17xf32> to vector<9x1xf32>
    %712 = vector.extract_strided_slice %710 {offsets = [0, 1], sizes = [9, 8], strides = [1, 1]} : vector<9x17xf32> to vector<9x8xf32>
    %713 = vector.extract_strided_slice %710 {offsets = [0, 9], sizes = [9, 8], strides = [1, 1]} : vector<9x17xf32> to vector<9x8xf32>
    %714 = vector.broadcast %711 : vector<9x1xf32> to vector<9x9xf32>
    %715 = arith.mulf %714, %5 : vector<9x9xf32>
    %cst_188 = arith.constant 0.000000e+00 : f32
    %716 = vector.broadcast %cst_188 : f32 to vector<1x9xf32>
    %717 = vector.broadcast %458 : vector<9x1xi32> to vector<9x9xi32>
    %718 = arith.cmpi eq, %0, %717 : vector<9x9xi32>
    %719 = arith.extui %718 : vector<9x9xi1> to vector<9x9xi32>
    %720 = arith.sitofp %719 : vector<9x9xi32> to vector<9x9xf32>
    %721 = vector.extract_strided_slice %712 {offsets = [0, 0], sizes = [9, 1], strides = [1, 1]} : vector<9x8xf32> to vector<9x1xf32>
    %722 = vector.broadcast %721 : vector<9x1xf32> to vector<9x9xf32>
    %723 = arith.mulf %722, %720 : vector<9x9xf32>
    %724 = arith.addf %715, %723 : vector<9x9xf32>
    %725 = vector.extract_strided_slice %713 {offsets = [0, 0], sizes = [9, 1], strides = [1, 1]} : vector<9x8xf32> to vector<9x1xf32>
    %726 = vector.broadcast %725 : vector<9x1xf32> to vector<9x9xf32>
    %727 = arith.mulf %726, %720 : vector<9x9xf32>
    %cst_189 = arith.constant dense<0.000000e+00> : vector<9xf32>
    %728 = vector.multi_reduction <add>, %727, %cst_189 [0] : vector<9x9xf32> to vector<9xf32>
    %729 = vector.shape_cast %728 : vector<9xf32> to vector<1x9xf32>
    %730 = arith.addf %716, %729 : vector<1x9xf32>
    %731 = vector.broadcast %478 : vector<9x1xi32> to vector<9x9xi32>
    %732 = arith.cmpi eq, %0, %731 : vector<9x9xi32>
    %733 = arith.extui %732 : vector<9x9xi1> to vector<9x9xi32>
    %734 = arith.sitofp %733 : vector<9x9xi32> to vector<9x9xf32>
    %735 = vector.extract_strided_slice %712 {offsets = [0, 1], sizes = [9, 1], strides = [1, 1]} : vector<9x8xf32> to vector<9x1xf32>
    %736 = vector.broadcast %735 : vector<9x1xf32> to vector<9x9xf32>
    %737 = arith.mulf %736, %734 : vector<9x9xf32>
    %738 = arith.addf %724, %737 : vector<9x9xf32>
    %739 = vector.extract_strided_slice %713 {offsets = [0, 1], sizes = [9, 1], strides = [1, 1]} : vector<9x8xf32> to vector<9x1xf32>
    %740 = vector.broadcast %739 : vector<9x1xf32> to vector<9x9xf32>
    %741 = arith.mulf %740, %734 : vector<9x9xf32>
    %cst_190 = arith.constant dense<0.000000e+00> : vector<9xf32>
    %742 = vector.multi_reduction <add>, %741, %cst_190 [0] : vector<9x9xf32> to vector<9xf32>
    %743 = vector.shape_cast %742 : vector<9xf32> to vector<1x9xf32>
    %744 = arith.addf %730, %743 : vector<1x9xf32>
    %745 = vector.broadcast %498 : vector<9x1xi32> to vector<9x9xi32>
    %746 = arith.cmpi eq, %0, %745 : vector<9x9xi32>
    %747 = arith.extui %746 : vector<9x9xi1> to vector<9x9xi32>
    %748 = arith.sitofp %747 : vector<9x9xi32> to vector<9x9xf32>
    %749 = vector.extract_strided_slice %712 {offsets = [0, 2], sizes = [9, 1], strides = [1, 1]} : vector<9x8xf32> to vector<9x1xf32>
    %750 = vector.broadcast %749 : vector<9x1xf32> to vector<9x9xf32>
    %751 = arith.mulf %750, %748 : vector<9x9xf32>
    %752 = arith.addf %738, %751 : vector<9x9xf32>
    %753 = vector.extract_strided_slice %713 {offsets = [0, 2], sizes = [9, 1], strides = [1, 1]} : vector<9x8xf32> to vector<9x1xf32>
    %754 = vector.broadcast %753 : vector<9x1xf32> to vector<9x9xf32>
    %755 = arith.mulf %754, %748 : vector<9x9xf32>
    %cst_191 = arith.constant dense<0.000000e+00> : vector<9xf32>
    %756 = vector.multi_reduction <add>, %755, %cst_191 [0] : vector<9x9xf32> to vector<9xf32>
    %757 = vector.shape_cast %756 : vector<9xf32> to vector<1x9xf32>
    %758 = arith.addf %744, %757 : vector<1x9xf32>
    %759 = vector.broadcast %518 : vector<9x1xi32> to vector<9x9xi32>
    %760 = arith.cmpi eq, %0, %759 : vector<9x9xi32>
    %761 = arith.extui %760 : vector<9x9xi1> to vector<9x9xi32>
    %762 = arith.sitofp %761 : vector<9x9xi32> to vector<9x9xf32>
    %763 = vector.extract_strided_slice %712 {offsets = [0, 3], sizes = [9, 1], strides = [1, 1]} : vector<9x8xf32> to vector<9x1xf32>
    %764 = vector.broadcast %763 : vector<9x1xf32> to vector<9x9xf32>
    %765 = arith.mulf %764, %762 : vector<9x9xf32>
    %766 = arith.addf %752, %765 : vector<9x9xf32>
    %767 = vector.extract_strided_slice %713 {offsets = [0, 3], sizes = [9, 1], strides = [1, 1]} : vector<9x8xf32> to vector<9x1xf32>
    %768 = vector.broadcast %767 : vector<9x1xf32> to vector<9x9xf32>
    %769 = arith.mulf %768, %762 : vector<9x9xf32>
    %cst_192 = arith.constant dense<0.000000e+00> : vector<9xf32>
    %770 = vector.multi_reduction <add>, %769, %cst_192 [0] : vector<9x9xf32> to vector<9xf32>
    %771 = vector.shape_cast %770 : vector<9xf32> to vector<1x9xf32>
    %772 = arith.addf %758, %771 : vector<1x9xf32>
    %773 = vector.broadcast %538 : vector<9x1xi32> to vector<9x9xi32>
    %774 = arith.cmpi eq, %0, %773 : vector<9x9xi32>
    %775 = arith.extui %774 : vector<9x9xi1> to vector<9x9xi32>
    %776 = arith.sitofp %775 : vector<9x9xi32> to vector<9x9xf32>
    %777 = vector.extract_strided_slice %712 {offsets = [0, 4], sizes = [9, 1], strides = [1, 1]} : vector<9x8xf32> to vector<9x1xf32>
    %778 = vector.broadcast %777 : vector<9x1xf32> to vector<9x9xf32>
    %779 = arith.mulf %778, %776 : vector<9x9xf32>
    %780 = arith.addf %766, %779 : vector<9x9xf32>
    %781 = vector.extract_strided_slice %713 {offsets = [0, 4], sizes = [9, 1], strides = [1, 1]} : vector<9x8xf32> to vector<9x1xf32>
    %782 = vector.broadcast %781 : vector<9x1xf32> to vector<9x9xf32>
    %783 = arith.mulf %782, %776 : vector<9x9xf32>
    %cst_193 = arith.constant dense<0.000000e+00> : vector<9xf32>
    %784 = vector.multi_reduction <add>, %783, %cst_193 [0] : vector<9x9xf32> to vector<9xf32>
    %785 = vector.shape_cast %784 : vector<9xf32> to vector<1x9xf32>
    %786 = arith.addf %772, %785 : vector<1x9xf32>
    %787 = vector.broadcast %558 : vector<9x1xi32> to vector<9x9xi32>
    %788 = arith.cmpi eq, %0, %787 : vector<9x9xi32>
    %789 = arith.extui %788 : vector<9x9xi1> to vector<9x9xi32>
    %790 = arith.sitofp %789 : vector<9x9xi32> to vector<9x9xf32>
    %791 = vector.extract_strided_slice %712 {offsets = [0, 5], sizes = [9, 1], strides = [1, 1]} : vector<9x8xf32> to vector<9x1xf32>
    %792 = vector.broadcast %791 : vector<9x1xf32> to vector<9x9xf32>
    %793 = arith.mulf %792, %790 : vector<9x9xf32>
    %794 = arith.addf %780, %793 : vector<9x9xf32>
    %795 = vector.extract_strided_slice %713 {offsets = [0, 5], sizes = [9, 1], strides = [1, 1]} : vector<9x8xf32> to vector<9x1xf32>
    %796 = vector.broadcast %795 : vector<9x1xf32> to vector<9x9xf32>
    %797 = arith.mulf %796, %790 : vector<9x9xf32>
    %cst_194 = arith.constant dense<0.000000e+00> : vector<9xf32>
    %798 = vector.multi_reduction <add>, %797, %cst_194 [0] : vector<9x9xf32> to vector<9xf32>
    %799 = vector.shape_cast %798 : vector<9xf32> to vector<1x9xf32>
    %800 = arith.addf %786, %799 : vector<1x9xf32>
    %801 = vector.broadcast %578 : vector<9x1xi32> to vector<9x9xi32>
    %802 = arith.cmpi eq, %0, %801 : vector<9x9xi32>
    %803 = arith.extui %802 : vector<9x9xi1> to vector<9x9xi32>
    %804 = arith.sitofp %803 : vector<9x9xi32> to vector<9x9xf32>
    %805 = vector.extract_strided_slice %712 {offsets = [0, 6], sizes = [9, 1], strides = [1, 1]} : vector<9x8xf32> to vector<9x1xf32>
    %806 = vector.broadcast %805 : vector<9x1xf32> to vector<9x9xf32>
    %807 = arith.mulf %806, %804 : vector<9x9xf32>
    %808 = arith.addf %794, %807 : vector<9x9xf32>
    %809 = vector.extract_strided_slice %713 {offsets = [0, 6], sizes = [9, 1], strides = [1, 1]} : vector<9x8xf32> to vector<9x1xf32>
    %810 = vector.broadcast %809 : vector<9x1xf32> to vector<9x9xf32>
    %811 = arith.mulf %810, %804 : vector<9x9xf32>
    %cst_195 = arith.constant dense<0.000000e+00> : vector<9xf32>
    %812 = vector.multi_reduction <add>, %811, %cst_195 [0] : vector<9x9xf32> to vector<9xf32>
    %813 = vector.shape_cast %812 : vector<9xf32> to vector<1x9xf32>
    %814 = arith.addf %800, %813 : vector<1x9xf32>
    %815 = vector.broadcast %598 : vector<9x1xi32> to vector<9x9xi32>
    %816 = arith.cmpi eq, %0, %815 : vector<9x9xi32>
    %817 = arith.extui %816 : vector<9x9xi1> to vector<9x9xi32>
    %818 = arith.sitofp %817 : vector<9x9xi32> to vector<9x9xf32>
    %819 = vector.extract_strided_slice %712 {offsets = [0, 7], sizes = [9, 1], strides = [1, 1]} : vector<9x8xf32> to vector<9x1xf32>
    %820 = vector.broadcast %819 : vector<9x1xf32> to vector<9x9xf32>
    %821 = arith.mulf %820, %818 : vector<9x9xf32>
    %822 = arith.addf %808, %821 : vector<9x9xf32>
    %823 = vector.extract_strided_slice %713 {offsets = [0, 7], sizes = [9, 1], strides = [1, 1]} : vector<9x8xf32> to vector<9x1xf32>
    %824 = vector.broadcast %823 : vector<9x1xf32> to vector<9x9xf32>
    %825 = arith.mulf %824, %818 : vector<9x9xf32>
    %cst_196 = arith.constant dense<0.000000e+00> : vector<9xf32>
    %826 = vector.multi_reduction <add>, %825, %cst_196 [0] : vector<9x9xf32> to vector<9xf32>
    %827 = vector.shape_cast %826 : vector<9xf32> to vector<1x9xf32>
    %828 = arith.addf %814, %827 : vector<1x9xf32>
    %829 = vector.broadcast %828 : vector<1x9xf32> to vector<9x9xf32>
    %830 = arith.mulf %9, %829 : vector<9x9xf32>
    %831 = arith.addf %822, %830 : vector<9x9xf32>
    %cst_197 = arith.constant dense<0.000000e+00> : vector<9x32xf32>
    %832 = tpu.matmul %831, %444, %cst_197 {dimension_numbers = #tpu.dot_dimension_numbers<[1], [0], [0], [1], [0, 0, 1, 1], [], []>} : vector<9x9xf32>, vector<9x32xf32>, vector<9x32xf32> -> vector<9x32xf32>
    %cst_198 = arith.constant dense<0.000000e+00> : vector<9x32xf32>
    %833 = tpu.matmul %831, %444, %cst_198 {dimension_numbers = #tpu.dot_dimension_numbers<[0], [0], [1], [1], [0, 1, 1, 1], [], []>} : vector<9x9xf32>, vector<9x32xf32>, vector<9x32xf32> -> vector<9x32xf32>
    %834 = arith.addf %832, %833 : vector<9x32xf32>
    %cst_199 = arith.constant 1.000000e+00 : f32
    %835 = vector.broadcast %cst_199 : f32 to vector<9x1xf32>
    %836 = arith.divf %835, %442 : vector<9x1xf32>
    %837 = arith.mulf %834, %436 : vector<9x32xf32>
    %cst_200 = arith.constant dense<0.000000e+00> : vector<9xf32>
    %838 = vector.multi_reduction <add>, %837, %cst_200 [1] : vector<9x32xf32> to vector<9xf32>
    %839 = vector.shape_cast %838 : vector<9xf32> to vector<9x1xf32>
    %cst_201 = arith.constant 9.99999996E-13 : f32
    %840 = vector.broadcast %cst_201 : f32 to vector<9x1xf32>
    %841 = arith.cmpf ogt, %440, %840 : vector<9x1xf32>
    %cst_202 = arith.constant 9.99999996E-13 : f32
    %842 = vector.broadcast %cst_202 : f32 to vector<9x1xf32>
    %843 = arith.maximumf %440, %842 : vector<9x1xf32>
    %cst_203 = arith.constant 1.000000e+00 : f32
    %844 = vector.broadcast %cst_203 : f32 to vector<9x1xf32>
    %845 = arith.divf %844, %843 : vector<9x1xf32>
    %cst_204 = arith.constant 0.000000e+00 : f32
    %846 = vector.broadcast %cst_204 : f32 to vector<9x1xf32>
    %847 = arith.select %841, %845, %846 : vector<9x1xi1>, vector<9x1xf32>
    %848 = vector.broadcast %836 : vector<9x1xf32> to vector<9x32xf32>
    %849 = arith.mulf %834, %848 : vector<9x32xf32>
    %850 = arith.mulf %839, %836 : vector<9x1xf32>
    %851 = arith.mulf %850, %836 : vector<9x1xf32>
    %852 = arith.mulf %851, %847 : vector<9x1xf32>
    %853 = vector.broadcast %852 : vector<9x1xf32> to vector<9x32xf32>
    %854 = arith.mulf %436, %853 : vector<9x32xf32>
    %855 = arith.subf %849, %854 : vector<9x32xf32>
    %856 = vector.extract_strided_slice %855 {offsets = [1, 0], sizes = [8, 32], strides = [1, 1]} : vector<9x32xf32> to vector<8x32xf32>
    %cst_205 = arith.constant 1.000000e-03 : f32
    %857 = vector.broadcast %cst_205 : f32 to vector<8x32xf32>
    %858 = arith.mulf %857, %856 : vector<8x32xf32>
    %859 = arith.subf %11, %858 : vector<8x32xf32>
    %860 = tpu.concatenate %435, %859 in 0 : vector<1x32xf32>, vector<8x32xf32> -> vector<9x32xf32>
    %861 = arith.mulf %860, %860 : vector<9x32xf32>
    %cst_206 = arith.constant dense<0.000000e+00> : vector<9xf32>
    %862 = vector.multi_reduction <add>, %861, %cst_206 [1] : vector<9x32xf32> to vector<9xf32>
    %863 = vector.shape_cast %862 : vector<9xf32> to vector<9x1xf32>
    %864 = math.sqrt %863 : vector<9x1xf32>
    %cst_207 = arith.constant 9.99999996E-13 : f32
    %865 = vector.broadcast %cst_207 : f32 to vector<9x1xf32>
    %866 = arith.maximumf %864, %865 : vector<9x1xf32>
    %867 = vector.broadcast %866 : vector<9x1xf32> to vector<9x32xf32>
    %868 = arith.divf %860, %867 : vector<9x32xf32>
    %cst_208 = arith.constant dense<0.000000e+00> : vector<9x9xf32>
    %869 = tpu.matmul %868, %868, %cst_208 {dimension_numbers = #tpu.dot_dimension_numbers<[1], [1], [0], [0], [0, 0, 1, 0], [], []>} : vector<9x32xf32>, vector<9x32xf32>, vector<9x9xf32> -> vector<9x9xf32>
    %870 = vector.extract_strided_slice %869 {offsets = [0, 0], sizes = [1, 9], strides = [1, 1]} : vector<9x9xf32> to vector<1x9xf32>
    %c0_i32_209 = arith.constant 0 : i32
    %871 = vector.broadcast %c0_i32_209 : i32 to vector<9x9xi32>
    %872 = arith.cmpi eq, %0, %871 : vector<9x9xi32>
    %cst_210 = arith.constant -1.000000e+30 : f32
    %873 = vector.broadcast %cst_210 : f32 to vector<9x9xf32>
    %874 = arith.select %872, %873, %869 : vector<9x9xi1>, vector<9x9xf32>
    %cst_211 = arith.constant dense<0xFF800000> : vector<9xf32>
    %875 = vector.multi_reduction <maximumf>, %874, %cst_211 [1] : vector<9x9xf32> to vector<9xf32>
    %876 = vector.shape_cast %875 : vector<9xf32> to vector<9x1xf32>
    %877 = vector.broadcast %876 : vector<9x1xf32> to vector<9x9xf32>
    %878 = arith.cmpf oeq, %874, %877 : vector<9x9xf32>
    %c9_i32_212 = arith.constant 9 : i32
    %879 = vector.broadcast %c9_i32_212 : i32 to vector<9x9xi32>
    %880 = arith.select %878, %0, %879 : vector<9x9xi1>, vector<9x9xi32>
    %cst_213 = arith.constant dense<2147483647> : vector<9xi32>
    %881 = vector.multi_reduction <minsi>, %880, %cst_213 [1] : vector<9x9xi32> to vector<9xi32>
    %882 = vector.shape_cast %881 : vector<9xi32> to vector<9x1xi32>
    %883 = vector.broadcast %882 : vector<9x1xi32> to vector<9x9xi32>
    %884 = arith.cmpi eq, %0, %883 : vector<9x9xi32>
    %885 = arith.extui %884 : vector<9x9xi1> to vector<9x9xi32>
    %886 = arith.sitofp %885 : vector<9x9xi32> to vector<9x9xf32>
    %887 = vector.broadcast %870 : vector<1x9xf32> to vector<9x9xf32>
    %888 = arith.mulf %886, %887 : vector<9x9xf32>
    %cst_214 = arith.constant dense<0.000000e+00> : vector<9xf32>
    %889 = vector.multi_reduction <add>, %888, %cst_214 [1] : vector<9x9xf32> to vector<9xf32>
    %890 = vector.shape_cast %889 : vector<9xf32> to vector<9x1xf32>
    %891 = vector.broadcast %882 : vector<9x1xi32> to vector<9x9xi32>
    %892 = arith.cmpi eq, %0, %891 : vector<9x9xi32>
    %cst_215 = arith.constant -1.000000e+30 : f32
    %893 = vector.broadcast %cst_215 : f32 to vector<9x9xf32>
    %894 = arith.select %892, %893, %874 : vector<9x9xi1>, vector<9x9xf32>
    %cst_216 = arith.constant dense<0xFF800000> : vector<9xf32>
    %895 = vector.multi_reduction <maximumf>, %894, %cst_216 [1] : vector<9x9xf32> to vector<9xf32>
    %896 = vector.shape_cast %895 : vector<9xf32> to vector<9x1xf32>
    %897 = vector.broadcast %896 : vector<9x1xf32> to vector<9x9xf32>
    %898 = arith.cmpf oeq, %894, %897 : vector<9x9xf32>
    %c9_i32_217 = arith.constant 9 : i32
    %899 = vector.broadcast %c9_i32_217 : i32 to vector<9x9xi32>
    %900 = arith.select %898, %0, %899 : vector<9x9xi1>, vector<9x9xi32>
    %cst_218 = arith.constant dense<2147483647> : vector<9xi32>
    %901 = vector.multi_reduction <minsi>, %900, %cst_218 [1] : vector<9x9xi32> to vector<9xi32>
    %902 = vector.shape_cast %901 : vector<9xi32> to vector<9x1xi32>
    %903 = vector.broadcast %902 : vector<9x1xi32> to vector<9x9xi32>
    %904 = arith.cmpi eq, %0, %903 : vector<9x9xi32>
    %905 = arith.extui %904 : vector<9x9xi1> to vector<9x9xi32>
    %906 = arith.sitofp %905 : vector<9x9xi32> to vector<9x9xf32>
    %907 = vector.broadcast %870 : vector<1x9xf32> to vector<9x9xf32>
    %908 = arith.mulf %906, %907 : vector<9x9xf32>
    %cst_219 = arith.constant dense<0.000000e+00> : vector<9xf32>
    %909 = vector.multi_reduction <add>, %908, %cst_219 [1] : vector<9x9xf32> to vector<9xf32>
    %910 = vector.shape_cast %909 : vector<9xf32> to vector<9x1xf32>
    %911 = vector.broadcast %902 : vector<9x1xi32> to vector<9x9xi32>
    %912 = arith.cmpi eq, %0, %911 : vector<9x9xi32>
    %cst_220 = arith.constant -1.000000e+30 : f32
    %913 = vector.broadcast %cst_220 : f32 to vector<9x9xf32>
    %914 = arith.select %912, %913, %894 : vector<9x9xi1>, vector<9x9xf32>
    %cst_221 = arith.constant dense<0xFF800000> : vector<9xf32>
    %915 = vector.multi_reduction <maximumf>, %914, %cst_221 [1] : vector<9x9xf32> to vector<9xf32>
    %916 = vector.shape_cast %915 : vector<9xf32> to vector<9x1xf32>
    %917 = vector.broadcast %916 : vector<9x1xf32> to vector<9x9xf32>
    %918 = arith.cmpf oeq, %914, %917 : vector<9x9xf32>
    %c9_i32_222 = arith.constant 9 : i32
    %919 = vector.broadcast %c9_i32_222 : i32 to vector<9x9xi32>
    %920 = arith.select %918, %0, %919 : vector<9x9xi1>, vector<9x9xi32>
    %cst_223 = arith.constant dense<2147483647> : vector<9xi32>
    %921 = vector.multi_reduction <minsi>, %920, %cst_223 [1] : vector<9x9xi32> to vector<9xi32>
    %922 = vector.shape_cast %921 : vector<9xi32> to vector<9x1xi32>
    %923 = vector.broadcast %922 : vector<9x1xi32> to vector<9x9xi32>
    %924 = arith.cmpi eq, %0, %923 : vector<9x9xi32>
    %925 = arith.extui %924 : vector<9x9xi1> to vector<9x9xi32>
    %926 = arith.sitofp %925 : vector<9x9xi32> to vector<9x9xf32>
    %927 = vector.broadcast %870 : vector<1x9xf32> to vector<9x9xf32>
    %928 = arith.mulf %926, %927 : vector<9x9xf32>
    %cst_224 = arith.constant dense<0.000000e+00> : vector<9xf32>
    %929 = vector.multi_reduction <add>, %928, %cst_224 [1] : vector<9x9xf32> to vector<9xf32>
    %930 = vector.shape_cast %929 : vector<9xf32> to vector<9x1xf32>
    %931 = vector.broadcast %922 : vector<9x1xi32> to vector<9x9xi32>
    %932 = arith.cmpi eq, %0, %931 : vector<9x9xi32>
    %cst_225 = arith.constant -1.000000e+30 : f32
    %933 = vector.broadcast %cst_225 : f32 to vector<9x9xf32>
    %934 = arith.select %932, %933, %914 : vector<9x9xi1>, vector<9x9xf32>
    %cst_226 = arith.constant dense<0xFF800000> : vector<9xf32>
    %935 = vector.multi_reduction <maximumf>, %934, %cst_226 [1] : vector<9x9xf32> to vector<9xf32>
    %936 = vector.shape_cast %935 : vector<9xf32> to vector<9x1xf32>
    %937 = vector.broadcast %936 : vector<9x1xf32> to vector<9x9xf32>
    %938 = arith.cmpf oeq, %934, %937 : vector<9x9xf32>
    %c9_i32_227 = arith.constant 9 : i32
    %939 = vector.broadcast %c9_i32_227 : i32 to vector<9x9xi32>
    %940 = arith.select %938, %0, %939 : vector<9x9xi1>, vector<9x9xi32>
    %cst_228 = arith.constant dense<2147483647> : vector<9xi32>
    %941 = vector.multi_reduction <minsi>, %940, %cst_228 [1] : vector<9x9xi32> to vector<9xi32>
    %942 = vector.shape_cast %941 : vector<9xi32> to vector<9x1xi32>
    %943 = vector.broadcast %942 : vector<9x1xi32> to vector<9x9xi32>
    %944 = arith.cmpi eq, %0, %943 : vector<9x9xi32>
    %945 = arith.extui %944 : vector<9x9xi1> to vector<9x9xi32>
    %946 = arith.sitofp %945 : vector<9x9xi32> to vector<9x9xf32>
    %947 = vector.broadcast %870 : vector<1x9xf32> to vector<9x9xf32>
    %948 = arith.mulf %946, %947 : vector<9x9xf32>
    %cst_229 = arith.constant dense<0.000000e+00> : vector<9xf32>
    %949 = vector.multi_reduction <add>, %948, %cst_229 [1] : vector<9x9xf32> to vector<9xf32>
    %950 = vector.shape_cast %949 : vector<9xf32> to vector<9x1xf32>
    %951 = vector.broadcast %942 : vector<9x1xi32> to vector<9x9xi32>
    %952 = arith.cmpi eq, %0, %951 : vector<9x9xi32>
    %cst_230 = arith.constant -1.000000e+30 : f32
    %953 = vector.broadcast %cst_230 : f32 to vector<9x9xf32>
    %954 = arith.select %952, %953, %934 : vector<9x9xi1>, vector<9x9xf32>
    %cst_231 = arith.constant dense<0xFF800000> : vector<9xf32>
    %955 = vector.multi_reduction <maximumf>, %954, %cst_231 [1] : vector<9x9xf32> to vector<9xf32>
    %956 = vector.shape_cast %955 : vector<9xf32> to vector<9x1xf32>
    %957 = vector.broadcast %956 : vector<9x1xf32> to vector<9x9xf32>
    %958 = arith.cmpf oeq, %954, %957 : vector<9x9xf32>
    %c9_i32_232 = arith.constant 9 : i32
    %959 = vector.broadcast %c9_i32_232 : i32 to vector<9x9xi32>
    %960 = arith.select %958, %0, %959 : vector<9x9xi1>, vector<9x9xi32>
    %cst_233 = arith.constant dense<2147483647> : vector<9xi32>
    %961 = vector.multi_reduction <minsi>, %960, %cst_233 [1] : vector<9x9xi32> to vector<9xi32>
    %962 = vector.shape_cast %961 : vector<9xi32> to vector<9x1xi32>
    %963 = vector.broadcast %962 : vector<9x1xi32> to vector<9x9xi32>
    %964 = arith.cmpi eq, %0, %963 : vector<9x9xi32>
    %965 = arith.extui %964 : vector<9x9xi1> to vector<9x9xi32>
    %966 = arith.sitofp %965 : vector<9x9xi32> to vector<9x9xf32>
    %967 = vector.broadcast %870 : vector<1x9xf32> to vector<9x9xf32>
    %968 = arith.mulf %966, %967 : vector<9x9xf32>
    %cst_234 = arith.constant dense<0.000000e+00> : vector<9xf32>
    %969 = vector.multi_reduction <add>, %968, %cst_234 [1] : vector<9x9xf32> to vector<9xf32>
    %970 = vector.shape_cast %969 : vector<9xf32> to vector<9x1xf32>
    %971 = vector.broadcast %962 : vector<9x1xi32> to vector<9x9xi32>
    %972 = arith.cmpi eq, %0, %971 : vector<9x9xi32>
    %cst_235 = arith.constant -1.000000e+30 : f32
    %973 = vector.broadcast %cst_235 : f32 to vector<9x9xf32>
    %974 = arith.select %972, %973, %954 : vector<9x9xi1>, vector<9x9xf32>
    %cst_236 = arith.constant dense<0xFF800000> : vector<9xf32>
    %975 = vector.multi_reduction <maximumf>, %974, %cst_236 [1] : vector<9x9xf32> to vector<9xf32>
    %976 = vector.shape_cast %975 : vector<9xf32> to vector<9x1xf32>
    %977 = vector.broadcast %976 : vector<9x1xf32> to vector<9x9xf32>
    %978 = arith.cmpf oeq, %974, %977 : vector<9x9xf32>
    %c9_i32_237 = arith.constant 9 : i32
    %979 = vector.broadcast %c9_i32_237 : i32 to vector<9x9xi32>
    %980 = arith.select %978, %0, %979 : vector<9x9xi1>, vector<9x9xi32>
    %cst_238 = arith.constant dense<2147483647> : vector<9xi32>
    %981 = vector.multi_reduction <minsi>, %980, %cst_238 [1] : vector<9x9xi32> to vector<9xi32>
    %982 = vector.shape_cast %981 : vector<9xi32> to vector<9x1xi32>
    %983 = vector.broadcast %982 : vector<9x1xi32> to vector<9x9xi32>
    %984 = arith.cmpi eq, %0, %983 : vector<9x9xi32>
    %985 = arith.extui %984 : vector<9x9xi1> to vector<9x9xi32>
    %986 = arith.sitofp %985 : vector<9x9xi32> to vector<9x9xf32>
    %987 = vector.broadcast %870 : vector<1x9xf32> to vector<9x9xf32>
    %988 = arith.mulf %986, %987 : vector<9x9xf32>
    %cst_239 = arith.constant dense<0.000000e+00> : vector<9xf32>
    %989 = vector.multi_reduction <add>, %988, %cst_239 [1] : vector<9x9xf32> to vector<9xf32>
    %990 = vector.shape_cast %989 : vector<9xf32> to vector<9x1xf32>
    %991 = vector.broadcast %982 : vector<9x1xi32> to vector<9x9xi32>
    %992 = arith.cmpi eq, %0, %991 : vector<9x9xi32>
    %cst_240 = arith.constant -1.000000e+30 : f32
    %993 = vector.broadcast %cst_240 : f32 to vector<9x9xf32>
    %994 = arith.select %992, %993, %974 : vector<9x9xi1>, vector<9x9xf32>
    %cst_241 = arith.constant dense<0xFF800000> : vector<9xf32>
    %995 = vector.multi_reduction <maximumf>, %994, %cst_241 [1] : vector<9x9xf32> to vector<9xf32>
    %996 = vector.shape_cast %995 : vector<9xf32> to vector<9x1xf32>
    %997 = vector.broadcast %996 : vector<9x1xf32> to vector<9x9xf32>
    %998 = arith.cmpf oeq, %994, %997 : vector<9x9xf32>
    %c9_i32_242 = arith.constant 9 : i32
    %999 = vector.broadcast %c9_i32_242 : i32 to vector<9x9xi32>
    %1000 = arith.select %998, %0, %999 : vector<9x9xi1>, vector<9x9xi32>
    %cst_243 = arith.constant dense<2147483647> : vector<9xi32>
    %1001 = vector.multi_reduction <minsi>, %1000, %cst_243 [1] : vector<9x9xi32> to vector<9xi32>
    %1002 = vector.shape_cast %1001 : vector<9xi32> to vector<9x1xi32>
    %1003 = vector.broadcast %1002 : vector<9x1xi32> to vector<9x9xi32>
    %1004 = arith.cmpi eq, %0, %1003 : vector<9x9xi32>
    %1005 = arith.extui %1004 : vector<9x9xi1> to vector<9x9xi32>
    %1006 = arith.sitofp %1005 : vector<9x9xi32> to vector<9x9xf32>
    %1007 = vector.broadcast %870 : vector<1x9xf32> to vector<9x9xf32>
    %1008 = arith.mulf %1006, %1007 : vector<9x9xf32>
    %cst_244 = arith.constant dense<0.000000e+00> : vector<9xf32>
    %1009 = vector.multi_reduction <add>, %1008, %cst_244 [1] : vector<9x9xf32> to vector<9xf32>
    %1010 = vector.shape_cast %1009 : vector<9xf32> to vector<9x1xf32>
    %1011 = vector.broadcast %1002 : vector<9x1xi32> to vector<9x9xi32>
    %1012 = arith.cmpi eq, %0, %1011 : vector<9x9xi32>
    %cst_245 = arith.constant -1.000000e+30 : f32
    %1013 = vector.broadcast %cst_245 : f32 to vector<9x9xf32>
    %1014 = arith.select %1012, %1013, %994 : vector<9x9xi1>, vector<9x9xf32>
    %cst_246 = arith.constant dense<0xFF800000> : vector<9xf32>
    %1015 = vector.multi_reduction <maximumf>, %1014, %cst_246 [1] : vector<9x9xf32> to vector<9xf32>
    %1016 = vector.shape_cast %1015 : vector<9xf32> to vector<9x1xf32>
    %1017 = vector.broadcast %1016 : vector<9x1xf32> to vector<9x9xf32>
    %1018 = arith.cmpf oeq, %1014, %1017 : vector<9x9xf32>
    %c9_i32_247 = arith.constant 9 : i32
    %1019 = vector.broadcast %c9_i32_247 : i32 to vector<9x9xi32>
    %1020 = arith.select %1018, %0, %1019 : vector<9x9xi1>, vector<9x9xi32>
    %cst_248 = arith.constant dense<2147483647> : vector<9xi32>
    %1021 = vector.multi_reduction <minsi>, %1020, %cst_248 [1] : vector<9x9xi32> to vector<9xi32>
    %1022 = vector.shape_cast %1021 : vector<9xi32> to vector<9x1xi32>
    %1023 = vector.broadcast %1022 : vector<9x1xi32> to vector<9x9xi32>
    %1024 = arith.cmpi eq, %0, %1023 : vector<9x9xi32>
    %1025 = arith.extui %1024 : vector<9x9xi1> to vector<9x9xi32>
    %1026 = arith.sitofp %1025 : vector<9x9xi32> to vector<9x9xf32>
    %1027 = vector.broadcast %870 : vector<1x9xf32> to vector<9x9xf32>
    %1028 = arith.mulf %1026, %1027 : vector<9x9xf32>
    %cst_249 = arith.constant dense<0.000000e+00> : vector<9xf32>
    %1029 = vector.multi_reduction <add>, %1028, %cst_249 [1] : vector<9x9xf32> to vector<9xf32>
    %1030 = vector.shape_cast %1029 : vector<9xf32> to vector<9x1xf32>
    %1031 = vector.extract_strided_slice %869 {offsets = [0, 0], sizes = [9, 1], strides = [1, 1]} : vector<9x9xf32> to vector<9x1xf32>
    %1032 = tpu.concatenate %876, %896, %916, %936, %956, %976, %996, %1016 in 1 : vector<9x1xf32>, vector<9x1xf32>, vector<9x1xf32>, vector<9x1xf32>, vector<9x1xf32>, vector<9x1xf32>, vector<9x1xf32>, vector<9x1xf32> -> vector<9x8xf32>
    %1033 = tpu.concatenate %890, %910, %930, %950, %970, %990, %1010, %1030 in 1 : vector<9x1xf32>, vector<9x1xf32>, vector<9x1xf32>, vector<9x1xf32>, vector<9x1xf32>, vector<9x1xf32>, vector<9x1xf32>, vector<9x1xf32> -> vector<9x8xf32>
    %1034 = tpu.concatenate %1031, %1032, %1033 in 1 : vector<9x1xf32>, vector<9x8xf32>, vector<9x8xf32> -> vector<9x17xf32>
    %c0_250 = arith.constant 0 : index
    %1035 = memref.load %arg8[%c0_250] : memref<3xf32, #tpu.memory_space<smem>>
    %c0_251 = arith.constant 0 : index
    %1036 = memref.load %arg9[%c0_251] : memref<3xf32, #tpu.memory_space<smem>>
    %cst_252 = arith.constant dense<0.000000e+00> : vector<9xf32>
    %1037 = vector.multi_reduction <add>, %1034, %cst_252 [1] : vector<9x17xf32> to vector<9xf32>
    %1038 = vector.shape_cast %1037 : vector<9xf32> to vector<9x1xf32>
    %cst_253 = arith.constant 0.0588235296 : f32
    %1039 = vector.broadcast %cst_253 : f32 to vector<9x1xf32>
    %1040 = arith.mulf %1038, %1039 : vector<9x1xf32>
    %1041 = arith.mulf %1034, %1034 : vector<9x17xf32>
    %cst_254 = arith.constant dense<0.000000e+00> : vector<9xf32>
    %1042 = vector.multi_reduction <add>, %1041, %cst_254 [1] : vector<9x17xf32> to vector<9xf32>
    %1043 = vector.shape_cast %1042 : vector<9xf32> to vector<9x1xf32>
    %cst_255 = arith.constant 0.0588235296 : f32
    %1044 = vector.broadcast %cst_255 : f32 to vector<9x1xf32>
    %1045 = arith.mulf %1043, %1044 : vector<9x1xf32>
    %1046 = arith.mulf %1040, %1040 : vector<9x1xf32>
    %1047 = arith.subf %1045, %1046 : vector<9x1xf32>
    %cst_256 = arith.constant 0.000000e+00 : f32
    %1048 = vector.broadcast %cst_256 : f32 to vector<9x1xf32>
    %1049 = arith.maximumf %1047, %1048 : vector<9x1xf32>
    %1050 = vector.broadcast %1040 : vector<9x1xf32> to vector<9x17xf32>
    %1051 = arith.subf %1034, %1050 : vector<9x17xf32>
    %cst_257 = arith.constant 9.99999974E-6 : f32
    %1052 = vector.broadcast %cst_257 : f32 to vector<9x1xf32>
    %1053 = arith.addf %1049, %1052 : vector<9x1xf32>
    %1054 = math.rsqrt %1053 : vector<9x1xf32>
    %1055 = vector.broadcast %1054 : vector<9x1xf32> to vector<9x17xf32>
    %1056 = arith.mulf %1051, %1055 : vector<9x17xf32>
    %1057 = vector.broadcast %1035 : f32 to vector<9x17xf32>
    %1058 = arith.mulf %1056, %1057 : vector<9x17xf32>
    %1059 = vector.broadcast %1036 : f32 to vector<9x17xf32>
    %1060 = arith.addf %1058, %1059 : vector<9x17xf32>
    %1061 = arith.truncf %1060 : vector<9x17xf32> to vector<9x17xbf16>
    %c0_258 = arith.constant 0 : index
    %c0_259 = arith.constant 0 : index
    %1062 = vector.load %arg2[%c0_258, %c0_259] : memref<17x256xbf16, #tpu.memory_space<vmem>>, vector<17x256xbf16>
    %cst_260 = arith.constant dense<0.000000e+00> : vector<9x256xf32>
    %1063 = tpu.matmul %1061, %1062, %cst_260 {dimension_numbers = #tpu.dot_dimension_numbers<[1], [0], [0], [1], [0, 0, 1, 1], [], []>} : vector<9x17xbf16>, vector<17x256xbf16>, vector<9x256xf32> -> vector<9x256xf32>
    %c0_261 = arith.constant 0 : index
    %c0_262 = arith.constant 0 : index
    %1064 = vector.load %arg3[%c0_261, %c0_262] : memref<1x256xf32, #tpu.memory_space<vmem>>, vector<1x256xf32>
    %1065 = vector.broadcast %1064 : vector<1x256xf32> to vector<9x256xf32>
    %1066 = arith.addf %1063, %1065 : vector<9x256xf32>
    %cst_263 = arith.constant 0.000000e+00 : f32
    %1067 = vector.broadcast %cst_263 : f32 to vector<9x256xf32>
    %1068 = arith.maximumf %1066, %1067 : vector<9x256xf32>
    %c1_264 = arith.constant 1 : index
    %1069 = memref.load %arg8[%c1_264] : memref<3xf32, #tpu.memory_space<smem>>
    %c1_265 = arith.constant 1 : index
    %1070 = memref.load %arg9[%c1_265] : memref<3xf32, #tpu.memory_space<smem>>
    %cst_266 = arith.constant dense<0.000000e+00> : vector<9xf32>
    %1071 = vector.multi_reduction <add>, %1068, %cst_266 [1] : vector<9x256xf32> to vector<9xf32>
    %1072 = vector.shape_cast %1071 : vector<9xf32> to vector<9x1xf32>
    %cst_267 = arith.constant 3.906250e-03 : f32
    %1073 = vector.broadcast %cst_267 : f32 to vector<9x1xf32>
    %1074 = arith.mulf %1072, %1073 : vector<9x1xf32>
    %1075 = arith.mulf %1068, %1068 : vector<9x256xf32>
    %cst_268 = arith.constant dense<0.000000e+00> : vector<9xf32>
    %1076 = vector.multi_reduction <add>, %1075, %cst_268 [1] : vector<9x256xf32> to vector<9xf32>
    %1077 = vector.shape_cast %1076 : vector<9xf32> to vector<9x1xf32>
    %cst_269 = arith.constant 3.906250e-03 : f32
    %1078 = vector.broadcast %cst_269 : f32 to vector<9x1xf32>
    %1079 = arith.mulf %1077, %1078 : vector<9x1xf32>
    %1080 = arith.mulf %1074, %1074 : vector<9x1xf32>
    %1081 = arith.subf %1079, %1080 : vector<9x1xf32>
    %cst_270 = arith.constant 0.000000e+00 : f32
    %1082 = vector.broadcast %cst_270 : f32 to vector<9x1xf32>
    %1083 = arith.maximumf %1081, %1082 : vector<9x1xf32>
    %1084 = vector.broadcast %1074 : vector<9x1xf32> to vector<9x256xf32>
    %1085 = arith.subf %1068, %1084 : vector<9x256xf32>
    %cst_271 = arith.constant 9.99999974E-6 : f32
    %1086 = vector.broadcast %cst_271 : f32 to vector<9x1xf32>
    %1087 = arith.addf %1083, %1086 : vector<9x1xf32>
    %1088 = math.rsqrt %1087 : vector<9x1xf32>
    %1089 = vector.broadcast %1088 : vector<9x1xf32> to vector<9x256xf32>
    %1090 = arith.mulf %1085, %1089 : vector<9x256xf32>
    %1091 = vector.broadcast %1069 : f32 to vector<9x256xf32>
    %1092 = arith.mulf %1090, %1091 : vector<9x256xf32>
    %1093 = vector.broadcast %1070 : f32 to vector<9x256xf32>
    %1094 = arith.addf %1092, %1093 : vector<9x256xf32>
    %1095 = arith.truncf %1094 : vector<9x256xf32> to vector<9x256xbf16>
    %c0_272 = arith.constant 0 : index
    %c0_273 = arith.constant 0 : index
    %1096 = vector.load %arg4[%c0_272, %c0_273] : memref<256x256xbf16, #tpu.memory_space<vmem>>, vector<256x256xbf16>
    %cst_274 = arith.constant dense<0.000000e+00> : vector<9x256xf32>
    %1097 = tpu.matmul %1095, %1096, %cst_274 {dimension_numbers = #tpu.dot_dimension_numbers<[1], [0], [0], [1], [0, 0, 1, 1], [], []>} : vector<9x256xbf16>, vector<256x256xbf16>, vector<9x256xf32> -> vector<9x256xf32>
    %c0_275 = arith.constant 0 : index
    %c0_276 = arith.constant 0 : index
    %1098 = vector.load %arg5[%c0_275, %c0_276] : memref<1x256xf32, #tpu.memory_space<vmem>>, vector<1x256xf32>
    %1099 = vector.broadcast %1098 : vector<1x256xf32> to vector<9x256xf32>
    %1100 = arith.addf %1097, %1099 : vector<9x256xf32>
    %cst_277 = arith.constant 0.000000e+00 : f32
    %1101 = vector.broadcast %cst_277 : f32 to vector<9x256xf32>
    %1102 = arith.maximumf %1100, %1101 : vector<9x256xf32>
    %c2_278 = arith.constant 2 : index
    %1103 = memref.load %arg8[%c2_278] : memref<3xf32, #tpu.memory_space<smem>>
    %c2_279 = arith.constant 2 : index
    %1104 = memref.load %arg9[%c2_279] : memref<3xf32, #tpu.memory_space<smem>>
    %cst_280 = arith.constant dense<0.000000e+00> : vector<9xf32>
    %1105 = vector.multi_reduction <add>, %1102, %cst_280 [1] : vector<9x256xf32> to vector<9xf32>
    %1106 = vector.shape_cast %1105 : vector<9xf32> to vector<9x1xf32>
    %cst_281 = arith.constant 3.906250e-03 : f32
    %1107 = vector.broadcast %cst_281 : f32 to vector<9x1xf32>
    %1108 = arith.mulf %1106, %1107 : vector<9x1xf32>
    %1109 = arith.mulf %1102, %1102 : vector<9x256xf32>
    %cst_282 = arith.constant dense<0.000000e+00> : vector<9xf32>
    %1110 = vector.multi_reduction <add>, %1109, %cst_282 [1] : vector<9x256xf32> to vector<9xf32>
    %1111 = vector.shape_cast %1110 : vector<9xf32> to vector<9x1xf32>
    %cst_283 = arith.constant 3.906250e-03 : f32
    %1112 = vector.broadcast %cst_283 : f32 to vector<9x1xf32>
    %1113 = arith.mulf %1111, %1112 : vector<9x1xf32>
    %1114 = arith.mulf %1108, %1108 : vector<9x1xf32>
    %1115 = arith.subf %1113, %1114 : vector<9x1xf32>
    %cst_284 = arith.constant 0.000000e+00 : f32
    %1116 = vector.broadcast %cst_284 : f32 to vector<9x1xf32>
    %1117 = arith.maximumf %1115, %1116 : vector<9x1xf32>
    %1118 = vector.broadcast %1108 : vector<9x1xf32> to vector<9x256xf32>
    %1119 = arith.subf %1102, %1118 : vector<9x256xf32>
    %cst_285 = arith.constant 9.99999974E-6 : f32
    %1120 = vector.broadcast %cst_285 : f32 to vector<9x1xf32>
    %1121 = arith.addf %1117, %1120 : vector<9x1xf32>
    %1122 = math.rsqrt %1121 : vector<9x1xf32>
    %1123 = vector.broadcast %1122 : vector<9x1xf32> to vector<9x256xf32>
    %1124 = arith.mulf %1119, %1123 : vector<9x256xf32>
    %1125 = vector.broadcast %1103 : f32 to vector<9x256xf32>
    %1126 = arith.mulf %1124, %1125 : vector<9x256xf32>
    %1127 = vector.broadcast %1104 : f32 to vector<9x256xf32>
    %1128 = arith.addf %1126, %1127 : vector<9x256xf32>
    %1129 = arith.truncf %1128 : vector<9x256xf32> to vector<9x256xbf16>
    %c0_286 = arith.constant 0 : index
    %c0_287 = arith.constant 0 : index
    %1130 = vector.load %arg6[%c0_286, %c0_287] : memref<256x17xbf16, #tpu.memory_space<vmem>>, vector<256x17xbf16>
    %cst_288 = arith.constant dense<0.000000e+00> : vector<9x17xf32>
    %1131 = tpu.matmul %1129, %1130, %cst_288 {dimension_numbers = #tpu.dot_dimension_numbers<[1], [0], [0], [1], [0, 0, 1, 1], [], []>} : vector<9x256xbf16>, vector<256x17xbf16>, vector<9x17xf32> -> vector<9x17xf32>
    %c0_289 = arith.constant 0 : index
    %c0_290 = arith.constant 0 : index
    %1132 = vector.load %arg7[%c0_289, %c0_290] : memref<1x17xf32, #tpu.memory_space<vmem>>, vector<1x17xf32>
    %1133 = vector.broadcast %1132 : vector<1x17xf32> to vector<9x17xf32>
    %1134 = arith.addf %1131, %1133 : vector<9x17xf32>
    %1135 = vector.extract_strided_slice %1134 {offsets = [0, 0], sizes = [9, 1], strides = [1, 1]} : vector<9x17xf32> to vector<9x1xf32>
    %1136 = vector.extract_strided_slice %1134 {offsets = [0, 1], sizes = [9, 8], strides = [1, 1]} : vector<9x17xf32> to vector<9x8xf32>
    %1137 = vector.extract_strided_slice %1134 {offsets = [0, 9], sizes = [9, 8], strides = [1, 1]} : vector<9x17xf32> to vector<9x8xf32>
    %1138 = vector.broadcast %1135 : vector<9x1xf32> to vector<9x9xf32>
    %1139 = arith.mulf %1138, %5 : vector<9x9xf32>
    %cst_291 = arith.constant 0.000000e+00 : f32
    %1140 = vector.broadcast %cst_291 : f32 to vector<1x9xf32>
    %1141 = vector.broadcast %882 : vector<9x1xi32> to vector<9x9xi32>
    %1142 = arith.cmpi eq, %0, %1141 : vector<9x9xi32>
    %1143 = arith.extui %1142 : vector<9x9xi1> to vector<9x9xi32>
    %1144 = arith.sitofp %1143 : vector<9x9xi32> to vector<9x9xf32>
    %1145 = vector.extract_strided_slice %1136 {offsets = [0, 0], sizes = [9, 1], strides = [1, 1]} : vector<9x8xf32> to vector<9x1xf32>
    %1146 = vector.broadcast %1145 : vector<9x1xf32> to vector<9x9xf32>
    %1147 = arith.mulf %1146, %1144 : vector<9x9xf32>
    %1148 = arith.addf %1139, %1147 : vector<9x9xf32>
    %1149 = vector.extract_strided_slice %1137 {offsets = [0, 0], sizes = [9, 1], strides = [1, 1]} : vector<9x8xf32> to vector<9x1xf32>
    %1150 = vector.broadcast %1149 : vector<9x1xf32> to vector<9x9xf32>
    %1151 = arith.mulf %1150, %1144 : vector<9x9xf32>
    %cst_292 = arith.constant dense<0.000000e+00> : vector<9xf32>
    %1152 = vector.multi_reduction <add>, %1151, %cst_292 [0] : vector<9x9xf32> to vector<9xf32>
    %1153 = vector.shape_cast %1152 : vector<9xf32> to vector<1x9xf32>
    %1154 = arith.addf %1140, %1153 : vector<1x9xf32>
    %1155 = vector.broadcast %902 : vector<9x1xi32> to vector<9x9xi32>
    %1156 = arith.cmpi eq, %0, %1155 : vector<9x9xi32>
    %1157 = arith.extui %1156 : vector<9x9xi1> to vector<9x9xi32>
    %1158 = arith.sitofp %1157 : vector<9x9xi32> to vector<9x9xf32>
    %1159 = vector.extract_strided_slice %1136 {offsets = [0, 1], sizes = [9, 1], strides = [1, 1]} : vector<9x8xf32> to vector<9x1xf32>
    %1160 = vector.broadcast %1159 : vector<9x1xf32> to vector<9x9xf32>
    %1161 = arith.mulf %1160, %1158 : vector<9x9xf32>
    %1162 = arith.addf %1148, %1161 : vector<9x9xf32>
    %1163 = vector.extract_strided_slice %1137 {offsets = [0, 1], sizes = [9, 1], strides = [1, 1]} : vector<9x8xf32> to vector<9x1xf32>
    %1164 = vector.broadcast %1163 : vector<9x1xf32> to vector<9x9xf32>
    %1165 = arith.mulf %1164, %1158 : vector<9x9xf32>
    %cst_293 = arith.constant dense<0.000000e+00> : vector<9xf32>
    %1166 = vector.multi_reduction <add>, %1165, %cst_293 [0] : vector<9x9xf32> to vector<9xf32>
    %1167 = vector.shape_cast %1166 : vector<9xf32> to vector<1x9xf32>
    %1168 = arith.addf %1154, %1167 : vector<1x9xf32>
    %1169 = vector.broadcast %922 : vector<9x1xi32> to vector<9x9xi32>
    %1170 = arith.cmpi eq, %0, %1169 : vector<9x9xi32>
    %1171 = arith.extui %1170 : vector<9x9xi1> to vector<9x9xi32>
    %1172 = arith.sitofp %1171 : vector<9x9xi32> to vector<9x9xf32>
    %1173 = vector.extract_strided_slice %1136 {offsets = [0, 2], sizes = [9, 1], strides = [1, 1]} : vector<9x8xf32> to vector<9x1xf32>
    %1174 = vector.broadcast %1173 : vector<9x1xf32> to vector<9x9xf32>
    %1175 = arith.mulf %1174, %1172 : vector<9x9xf32>
    %1176 = arith.addf %1162, %1175 : vector<9x9xf32>
    %1177 = vector.extract_strided_slice %1137 {offsets = [0, 2], sizes = [9, 1], strides = [1, 1]} : vector<9x8xf32> to vector<9x1xf32>
    %1178 = vector.broadcast %1177 : vector<9x1xf32> to vector<9x9xf32>
    %1179 = arith.mulf %1178, %1172 : vector<9x9xf32>
    %cst_294 = arith.constant dense<0.000000e+00> : vector<9xf32>
    %1180 = vector.multi_reduction <add>, %1179, %cst_294 [0] : vector<9x9xf32> to vector<9xf32>
    %1181 = vector.shape_cast %1180 : vector<9xf32> to vector<1x9xf32>
    %1182 = arith.addf %1168, %1181 : vector<1x9xf32>
    %1183 = vector.broadcast %942 : vector<9x1xi32> to vector<9x9xi32>
    %1184 = arith.cmpi eq, %0, %1183 : vector<9x9xi32>
    %1185 = arith.extui %1184 : vector<9x9xi1> to vector<9x9xi32>
    %1186 = arith.sitofp %1185 : vector<9x9xi32> to vector<9x9xf32>
    %1187 = vector.extract_strided_slice %1136 {offsets = [0, 3], sizes = [9, 1], strides = [1, 1]} : vector<9x8xf32> to vector<9x1xf32>
    %1188 = vector.broadcast %1187 : vector<9x1xf32> to vector<9x9xf32>
    %1189 = arith.mulf %1188, %1186 : vector<9x9xf32>
    %1190 = arith.addf %1176, %1189 : vector<9x9xf32>
    %1191 = vector.extract_strided_slice %1137 {offsets = [0, 3], sizes = [9, 1], strides = [1, 1]} : vector<9x8xf32> to vector<9x1xf32>
    %1192 = vector.broadcast %1191 : vector<9x1xf32> to vector<9x9xf32>
    %1193 = arith.mulf %1192, %1186 : vector<9x9xf32>
    %cst_295 = arith.constant dense<0.000000e+00> : vector<9xf32>
    %1194 = vector.multi_reduction <add>, %1193, %cst_295 [0] : vector<9x9xf32> to vector<9xf32>
    %1195 = vector.shape_cast %1194 : vector<9xf32> to vector<1x9xf32>
    %1196 = arith.addf %1182, %1195 : vector<1x9xf32>
    %1197 = vector.broadcast %962 : vector<9x1xi32> to vector<9x9xi32>
    %1198 = arith.cmpi eq, %0, %1197 : vector<9x9xi32>
    %1199 = arith.extui %1198 : vector<9x9xi1> to vector<9x9xi32>
    %1200 = arith.sitofp %1199 : vector<9x9xi32> to vector<9x9xf32>
    %1201 = vector.extract_strided_slice %1136 {offsets = [0, 4], sizes = [9, 1], strides = [1, 1]} : vector<9x8xf32> to vector<9x1xf32>
    %1202 = vector.broadcast %1201 : vector<9x1xf32> to vector<9x9xf32>
    %1203 = arith.mulf %1202, %1200 : vector<9x9xf32>
    %1204 = arith.addf %1190, %1203 : vector<9x9xf32>
    %1205 = vector.extract_strided_slice %1137 {offsets = [0, 4], sizes = [9, 1], strides = [1, 1]} : vector<9x8xf32> to vector<9x1xf32>
    %1206 = vector.broadcast %1205 : vector<9x1xf32> to vector<9x9xf32>
    %1207 = arith.mulf %1206, %1200 : vector<9x9xf32>
    %cst_296 = arith.constant dense<0.000000e+00> : vector<9xf32>
    %1208 = vector.multi_reduction <add>, %1207, %cst_296 [0] : vector<9x9xf32> to vector<9xf32>
    %1209 = vector.shape_cast %1208 : vector<9xf32> to vector<1x9xf32>
    %1210 = arith.addf %1196, %1209 : vector<1x9xf32>
    %1211 = vector.broadcast %982 : vector<9x1xi32> to vector<9x9xi32>
    %1212 = arith.cmpi eq, %0, %1211 : vector<9x9xi32>
    %1213 = arith.extui %1212 : vector<9x9xi1> to vector<9x9xi32>
    %1214 = arith.sitofp %1213 : vector<9x9xi32> to vector<9x9xf32>
    %1215 = vector.extract_strided_slice %1136 {offsets = [0, 5], sizes = [9, 1], strides = [1, 1]} : vector<9x8xf32> to vector<9x1xf32>
    %1216 = vector.broadcast %1215 : vector<9x1xf32> to vector<9x9xf32>
    %1217 = arith.mulf %1216, %1214 : vector<9x9xf32>
    %1218 = arith.addf %1204, %1217 : vector<9x9xf32>
    %1219 = vector.extract_strided_slice %1137 {offsets = [0, 5], sizes = [9, 1], strides = [1, 1]} : vector<9x8xf32> to vector<9x1xf32>
    %1220 = vector.broadcast %1219 : vector<9x1xf32> to vector<9x9xf32>
    %1221 = arith.mulf %1220, %1214 : vector<9x9xf32>
    %cst_297 = arith.constant dense<0.000000e+00> : vector<9xf32>
    %1222 = vector.multi_reduction <add>, %1221, %cst_297 [0] : vector<9x9xf32> to vector<9xf32>
    %1223 = vector.shape_cast %1222 : vector<9xf32> to vector<1x9xf32>
    %1224 = arith.addf %1210, %1223 : vector<1x9xf32>
    %1225 = vector.broadcast %1002 : vector<9x1xi32> to vector<9x9xi32>
    %1226 = arith.cmpi eq, %0, %1225 : vector<9x9xi32>
    %1227 = arith.extui %1226 : vector<9x9xi1> to vector<9x9xi32>
    %1228 = arith.sitofp %1227 : vector<9x9xi32> to vector<9x9xf32>
    %1229 = vector.extract_strided_slice %1136 {offsets = [0, 6], sizes = [9, 1], strides = [1, 1]} : vector<9x8xf32> to vector<9x1xf32>
    %1230 = vector.broadcast %1229 : vector<9x1xf32> to vector<9x9xf32>
    %1231 = arith.mulf %1230, %1228 : vector<9x9xf32>
    %1232 = arith.addf %1218, %1231 : vector<9x9xf32>
    %1233 = vector.extract_strided_slice %1137 {offsets = [0, 6], sizes = [9, 1], strides = [1, 1]} : vector<9x8xf32> to vector<9x1xf32>
    %1234 = vector.broadcast %1233 : vector<9x1xf32> to vector<9x9xf32>
    %1235 = arith.mulf %1234, %1228 : vector<9x9xf32>
    %cst_298 = arith.constant dense<0.000000e+00> : vector<9xf32>
    %1236 = vector.multi_reduction <add>, %1235, %cst_298 [0] : vector<9x9xf32> to vector<9xf32>
    %1237 = vector.shape_cast %1236 : vector<9xf32> to vector<1x9xf32>
    %1238 = arith.addf %1224, %1237 : vector<1x9xf32>
    %1239 = vector.broadcast %1022 : vector<9x1xi32> to vector<9x9xi32>
    %1240 = arith.cmpi eq, %0, %1239 : vector<9x9xi32>
    %1241 = arith.extui %1240 : vector<9x9xi1> to vector<9x9xi32>
    %1242 = arith.sitofp %1241 : vector<9x9xi32> to vector<9x9xf32>
    %1243 = vector.extract_strided_slice %1136 {offsets = [0, 7], sizes = [9, 1], strides = [1, 1]} : vector<9x8xf32> to vector<9x1xf32>
    %1244 = vector.broadcast %1243 : vector<9x1xf32> to vector<9x9xf32>
    %1245 = arith.mulf %1244, %1242 : vector<9x9xf32>
    %1246 = arith.addf %1232, %1245 : vector<9x9xf32>
    %1247 = vector.extract_strided_slice %1137 {offsets = [0, 7], sizes = [9, 1], strides = [1, 1]} : vector<9x8xf32> to vector<9x1xf32>
    %1248 = vector.broadcast %1247 : vector<9x1xf32> to vector<9x9xf32>
    %1249 = arith.mulf %1248, %1242 : vector<9x9xf32>
    %cst_299 = arith.constant dense<0.000000e+00> : vector<9xf32>
    %1250 = vector.multi_reduction <add>, %1249, %cst_299 [0] : vector<9x9xf32> to vector<9xf32>
    %1251 = vector.shape_cast %1250 : vector<9xf32> to vector<1x9xf32>
    %1252 = arith.addf %1238, %1251 : vector<1x9xf32>
    %1253 = vector.broadcast %1252 : vector<1x9xf32> to vector<9x9xf32>
    %1254 = arith.mulf %9, %1253 : vector<9x9xf32>
    %1255 = arith.addf %1246, %1254 : vector<9x9xf32>
    %cst_300 = arith.constant dense<0.000000e+00> : vector<9x32xf32>
    %1256 = tpu.matmul %1255, %868, %cst_300 {dimension_numbers = #tpu.dot_dimension_numbers<[1], [0], [0], [1], [0, 0, 1, 1], [], []>} : vector<9x9xf32>, vector<9x32xf32>, vector<9x32xf32> -> vector<9x32xf32>
    %cst_301 = arith.constant dense<0.000000e+00> : vector<9x32xf32>
    %1257 = tpu.matmul %1255, %868, %cst_301 {dimension_numbers = #tpu.dot_dimension_numbers<[0], [0], [1], [1], [0, 1, 1, 1], [], []>} : vector<9x9xf32>, vector<9x32xf32>, vector<9x32xf32> -> vector<9x32xf32>
    %1258 = arith.addf %1256, %1257 : vector<9x32xf32>
    %cst_302 = arith.constant 1.000000e+00 : f32
    %1259 = vector.broadcast %cst_302 : f32 to vector<9x1xf32>
    %1260 = arith.divf %1259, %866 : vector<9x1xf32>
    %1261 = arith.mulf %1258, %860 : vector<9x32xf32>
    %cst_303 = arith.constant dense<0.000000e+00> : vector<9xf32>
    %1262 = vector.multi_reduction <add>, %1261, %cst_303 [1] : vector<9x32xf32> to vector<9xf32>
    %1263 = vector.shape_cast %1262 : vector<9xf32> to vector<9x1xf32>
    %cst_304 = arith.constant 9.99999996E-13 : f32
    %1264 = vector.broadcast %cst_304 : f32 to vector<9x1xf32>
    %1265 = arith.cmpf ogt, %864, %1264 : vector<9x1xf32>
    %cst_305 = arith.constant 9.99999996E-13 : f32
    %1266 = vector.broadcast %cst_305 : f32 to vector<9x1xf32>
    %1267 = arith.maximumf %864, %1266 : vector<9x1xf32>
    %cst_306 = arith.constant 1.000000e+00 : f32
    %1268 = vector.broadcast %cst_306 : f32 to vector<9x1xf32>
    %1269 = arith.divf %1268, %1267 : vector<9x1xf32>
    %cst_307 = arith.constant 0.000000e+00 : f32
    %1270 = vector.broadcast %cst_307 : f32 to vector<9x1xf32>
    %1271 = arith.select %1265, %1269, %1270 : vector<9x1xi1>, vector<9x1xf32>
    %1272 = vector.broadcast %1260 : vector<9x1xf32> to vector<9x32xf32>
    %1273 = arith.mulf %1258, %1272 : vector<9x32xf32>
    %1274 = arith.mulf %1263, %1260 : vector<9x1xf32>
    %1275 = arith.mulf %1274, %1260 : vector<9x1xf32>
    %1276 = arith.mulf %1275, %1271 : vector<9x1xf32>
    %1277 = vector.broadcast %1276 : vector<9x1xf32> to vector<9x32xf32>
    %1278 = arith.mulf %860, %1277 : vector<9x32xf32>
    %1279 = arith.subf %1273, %1278 : vector<9x32xf32>
    %1280 = vector.extract_strided_slice %1279 {offsets = [0, 0], sizes = [1, 32], strides = [1, 1]} : vector<9x32xf32> to vector<1x32xf32>
    %cst_308 = arith.constant 1.000000e-03 : f32
    %1281 = vector.broadcast %cst_308 : f32 to vector<1x32xf32>
    %1282 = arith.mulf %1281, %1280 : vector<1x32xf32>
    %1283 = arith.subf %435, %1282 : vector<1x32xf32>
    %1284 = tpu.concatenate %1283, %859 in 0 : vector<1x32xf32>, vector<8x32xf32> -> vector<9x32xf32>
    %1285 = arith.mulf %1284, %1284 : vector<9x32xf32>
    %cst_309 = arith.constant dense<0.000000e+00> : vector<9xf32>
    %1286 = vector.multi_reduction <add>, %1285, %cst_309 [1] : vector<9x32xf32> to vector<9xf32>
    %1287 = vector.shape_cast %1286 : vector<9xf32> to vector<9x1xf32>
    %1288 = math.sqrt %1287 : vector<9x1xf32>
    %cst_310 = arith.constant 9.99999996E-13 : f32
    %1289 = vector.broadcast %cst_310 : f32 to vector<9x1xf32>
    %1290 = arith.maximumf %1288, %1289 : vector<9x1xf32>
    %1291 = vector.broadcast %1290 : vector<9x1xf32> to vector<9x32xf32>
    %1292 = arith.divf %1284, %1291 : vector<9x32xf32>
    %cst_311 = arith.constant dense<0.000000e+00> : vector<9x9xf32>
    %1293 = tpu.matmul %1292, %1292, %cst_311 {dimension_numbers = #tpu.dot_dimension_numbers<[1], [1], [0], [0], [0, 0, 1, 0], [], []>} : vector<9x32xf32>, vector<9x32xf32>, vector<9x9xf32> -> vector<9x9xf32>
    %1294 = vector.extract_strided_slice %1293 {offsets = [0, 0], sizes = [1, 9], strides = [1, 1]} : vector<9x9xf32> to vector<1x9xf32>
    %c0_i32_312 = arith.constant 0 : i32
    %1295 = vector.broadcast %c0_i32_312 : i32 to vector<9x9xi32>
    %1296 = arith.cmpi eq, %0, %1295 : vector<9x9xi32>
    %cst_313 = arith.constant -1.000000e+30 : f32
    %1297 = vector.broadcast %cst_313 : f32 to vector<9x9xf32>
    %1298 = arith.select %1296, %1297, %1293 : vector<9x9xi1>, vector<9x9xf32>
    %cst_314 = arith.constant dense<0xFF800000> : vector<9xf32>
    %1299 = vector.multi_reduction <maximumf>, %1298, %cst_314 [1] : vector<9x9xf32> to vector<9xf32>
    %1300 = vector.shape_cast %1299 : vector<9xf32> to vector<9x1xf32>
    %1301 = vector.broadcast %1300 : vector<9x1xf32> to vector<9x9xf32>
    %1302 = arith.cmpf oeq, %1298, %1301 : vector<9x9xf32>
    %c9_i32_315 = arith.constant 9 : i32
    %1303 = vector.broadcast %c9_i32_315 : i32 to vector<9x9xi32>
    %1304 = arith.select %1302, %0, %1303 : vector<9x9xi1>, vector<9x9xi32>
    %cst_316 = arith.constant dense<2147483647> : vector<9xi32>
    %1305 = vector.multi_reduction <minsi>, %1304, %cst_316 [1] : vector<9x9xi32> to vector<9xi32>
    %1306 = vector.shape_cast %1305 : vector<9xi32> to vector<9x1xi32>
    %1307 = vector.broadcast %1306 : vector<9x1xi32> to vector<9x9xi32>
    %1308 = arith.cmpi eq, %0, %1307 : vector<9x9xi32>
    %1309 = arith.extui %1308 : vector<9x9xi1> to vector<9x9xi32>
    %1310 = arith.sitofp %1309 : vector<9x9xi32> to vector<9x9xf32>
    %1311 = vector.broadcast %1294 : vector<1x9xf32> to vector<9x9xf32>
    %1312 = arith.mulf %1310, %1311 : vector<9x9xf32>
    %cst_317 = arith.constant dense<0.000000e+00> : vector<9xf32>
    %1313 = vector.multi_reduction <add>, %1312, %cst_317 [1] : vector<9x9xf32> to vector<9xf32>
    %1314 = vector.shape_cast %1313 : vector<9xf32> to vector<9x1xf32>
    %1315 = vector.broadcast %1306 : vector<9x1xi32> to vector<9x9xi32>
    %1316 = arith.cmpi eq, %0, %1315 : vector<9x9xi32>
    %cst_318 = arith.constant -1.000000e+30 : f32
    %1317 = vector.broadcast %cst_318 : f32 to vector<9x9xf32>
    %1318 = arith.select %1316, %1317, %1298 : vector<9x9xi1>, vector<9x9xf32>
    %cst_319 = arith.constant dense<0xFF800000> : vector<9xf32>
    %1319 = vector.multi_reduction <maximumf>, %1318, %cst_319 [1] : vector<9x9xf32> to vector<9xf32>
    %1320 = vector.shape_cast %1319 : vector<9xf32> to vector<9x1xf32>
    %1321 = vector.broadcast %1320 : vector<9x1xf32> to vector<9x9xf32>
    %1322 = arith.cmpf oeq, %1318, %1321 : vector<9x9xf32>
    %c9_i32_320 = arith.constant 9 : i32
    %1323 = vector.broadcast %c9_i32_320 : i32 to vector<9x9xi32>
    %1324 = arith.select %1322, %0, %1323 : vector<9x9xi1>, vector<9x9xi32>
    %cst_321 = arith.constant dense<2147483647> : vector<9xi32>
    %1325 = vector.multi_reduction <minsi>, %1324, %cst_321 [1] : vector<9x9xi32> to vector<9xi32>
    %1326 = vector.shape_cast %1325 : vector<9xi32> to vector<9x1xi32>
    %1327 = vector.broadcast %1326 : vector<9x1xi32> to vector<9x9xi32>
    %1328 = arith.cmpi eq, %0, %1327 : vector<9x9xi32>
    %1329 = arith.extui %1328 : vector<9x9xi1> to vector<9x9xi32>
    %1330 = arith.sitofp %1329 : vector<9x9xi32> to vector<9x9xf32>
    %1331 = vector.broadcast %1294 : vector<1x9xf32> to vector<9x9xf32>
    %1332 = arith.mulf %1330, %1331 : vector<9x9xf32>
    %cst_322 = arith.constant dense<0.000000e+00> : vector<9xf32>
    %1333 = vector.multi_reduction <add>, %1332, %cst_322 [1] : vector<9x9xf32> to vector<9xf32>
    %1334 = vector.shape_cast %1333 : vector<9xf32> to vector<9x1xf32>
    %1335 = vector.broadcast %1326 : vector<9x1xi32> to vector<9x9xi32>
    %1336 = arith.cmpi eq, %0, %1335 : vector<9x9xi32>
    %cst_323 = arith.constant -1.000000e+30 : f32
    %1337 = vector.broadcast %cst_323 : f32 to vector<9x9xf32>
    %1338 = arith.select %1336, %1337, %1318 : vector<9x9xi1>, vector<9x9xf32>
    %cst_324 = arith.constant dense<0xFF800000> : vector<9xf32>
    %1339 = vector.multi_reduction <maximumf>, %1338, %cst_324 [1] : vector<9x9xf32> to vector<9xf32>
    %1340 = vector.shape_cast %1339 : vector<9xf32> to vector<9x1xf32>
    %1341 = vector.broadcast %1340 : vector<9x1xf32> to vector<9x9xf32>
    %1342 = arith.cmpf oeq, %1338, %1341 : vector<9x9xf32>
    %c9_i32_325 = arith.constant 9 : i32
    %1343 = vector.broadcast %c9_i32_325 : i32 to vector<9x9xi32>
    %1344 = arith.select %1342, %0, %1343 : vector<9x9xi1>, vector<9x9xi32>
    %cst_326 = arith.constant dense<2147483647> : vector<9xi32>
    %1345 = vector.multi_reduction <minsi>, %1344, %cst_326 [1] : vector<9x9xi32> to vector<9xi32>
    %1346 = vector.shape_cast %1345 : vector<9xi32> to vector<9x1xi32>
    %1347 = vector.broadcast %1346 : vector<9x1xi32> to vector<9x9xi32>
    %1348 = arith.cmpi eq, %0, %1347 : vector<9x9xi32>
    %1349 = arith.extui %1348 : vector<9x9xi1> to vector<9x9xi32>
    %1350 = arith.sitofp %1349 : vector<9x9xi32> to vector<9x9xf32>
    %1351 = vector.broadcast %1294 : vector<1x9xf32> to vector<9x9xf32>
    %1352 = arith.mulf %1350, %1351 : vector<9x9xf32>
    %cst_327 = arith.constant dense<0.000000e+00> : vector<9xf32>
    %1353 = vector.multi_reduction <add>, %1352, %cst_327 [1] : vector<9x9xf32> to vector<9xf32>
    %1354 = vector.shape_cast %1353 : vector<9xf32> to vector<9x1xf32>
    %1355 = vector.broadcast %1346 : vector<9x1xi32> to vector<9x9xi32>
    %1356 = arith.cmpi eq, %0, %1355 : vector<9x9xi32>
    %cst_328 = arith.constant -1.000000e+30 : f32
    %1357 = vector.broadcast %cst_328 : f32 to vector<9x9xf32>
    %1358 = arith.select %1356, %1357, %1338 : vector<9x9xi1>, vector<9x9xf32>
    %cst_329 = arith.constant dense<0xFF800000> : vector<9xf32>
    %1359 = vector.multi_reduction <maximumf>, %1358, %cst_329 [1] : vector<9x9xf32> to vector<9xf32>
    %1360 = vector.shape_cast %1359 : vector<9xf32> to vector<9x1xf32>
    %1361 = vector.broadcast %1360 : vector<9x1xf32> to vector<9x9xf32>
    %1362 = arith.cmpf oeq, %1358, %1361 : vector<9x9xf32>
    %c9_i32_330 = arith.constant 9 : i32
    %1363 = vector.broadcast %c9_i32_330 : i32 to vector<9x9xi32>
    %1364 = arith.select %1362, %0, %1363 : vector<9x9xi1>, vector<9x9xi32>
    %cst_331 = arith.constant dense<2147483647> : vector<9xi32>
    %1365 = vector.multi_reduction <minsi>, %1364, %cst_331 [1] : vector<9x9xi32> to vector<9xi32>
    %1366 = vector.shape_cast %1365 : vector<9xi32> to vector<9x1xi32>
    %1367 = vector.broadcast %1366 : vector<9x1xi32> to vector<9x9xi32>
    %1368 = arith.cmpi eq, %0, %1367 : vector<9x9xi32>
    %1369 = arith.extui %1368 : vector<9x9xi1> to vector<9x9xi32>
    %1370 = arith.sitofp %1369 : vector<9x9xi32> to vector<9x9xf32>
    %1371 = vector.broadcast %1294 : vector<1x9xf32> to vector<9x9xf32>
    %1372 = arith.mulf %1370, %1371 : vector<9x9xf32>
    %cst_332 = arith.constant dense<0.000000e+00> : vector<9xf32>
    %1373 = vector.multi_reduction <add>, %1372, %cst_332 [1] : vector<9x9xf32> to vector<9xf32>
    %1374 = vector.shape_cast %1373 : vector<9xf32> to vector<9x1xf32>
    %1375 = vector.broadcast %1366 : vector<9x1xi32> to vector<9x9xi32>
    %1376 = arith.cmpi eq, %0, %1375 : vector<9x9xi32>
    %cst_333 = arith.constant -1.000000e+30 : f32
    %1377 = vector.broadcast %cst_333 : f32 to vector<9x9xf32>
    %1378 = arith.select %1376, %1377, %1358 : vector<9x9xi1>, vector<9x9xf32>
    %cst_334 = arith.constant dense<0xFF800000> : vector<9xf32>
    %1379 = vector.multi_reduction <maximumf>, %1378, %cst_334 [1] : vector<9x9xf32> to vector<9xf32>
    %1380 = vector.shape_cast %1379 : vector<9xf32> to vector<9x1xf32>
    %1381 = vector.broadcast %1380 : vector<9x1xf32> to vector<9x9xf32>
    %1382 = arith.cmpf oeq, %1378, %1381 : vector<9x9xf32>
    %c9_i32_335 = arith.constant 9 : i32
    %1383 = vector.broadcast %c9_i32_335 : i32 to vector<9x9xi32>
    %1384 = arith.select %1382, %0, %1383 : vector<9x9xi1>, vector<9x9xi32>
    %cst_336 = arith.constant dense<2147483647> : vector<9xi32>
    %1385 = vector.multi_reduction <minsi>, %1384, %cst_336 [1] : vector<9x9xi32> to vector<9xi32>
    %1386 = vector.shape_cast %1385 : vector<9xi32> to vector<9x1xi32>
    %1387 = vector.broadcast %1386 : vector<9x1xi32> to vector<9x9xi32>
    %1388 = arith.cmpi eq, %0, %1387 : vector<9x9xi32>
    %1389 = arith.extui %1388 : vector<9x9xi1> to vector<9x9xi32>
    %1390 = arith.sitofp %1389 : vector<9x9xi32> to vector<9x9xf32>
    %1391 = vector.broadcast %1294 : vector<1x9xf32> to vector<9x9xf32>
    %1392 = arith.mulf %1390, %1391 : vector<9x9xf32>
    %cst_337 = arith.constant dense<0.000000e+00> : vector<9xf32>
    %1393 = vector.multi_reduction <add>, %1392, %cst_337 [1] : vector<9x9xf32> to vector<9xf32>
    %1394 = vector.shape_cast %1393 : vector<9xf32> to vector<9x1xf32>
    %1395 = vector.broadcast %1386 : vector<9x1xi32> to vector<9x9xi32>
    %1396 = arith.cmpi eq, %0, %1395 : vector<9x9xi32>
    %cst_338 = arith.constant -1.000000e+30 : f32
    %1397 = vector.broadcast %cst_338 : f32 to vector<9x9xf32>
    %1398 = arith.select %1396, %1397, %1378 : vector<9x9xi1>, vector<9x9xf32>
    %cst_339 = arith.constant dense<0xFF800000> : vector<9xf32>
    %1399 = vector.multi_reduction <maximumf>, %1398, %cst_339 [1] : vector<9x9xf32> to vector<9xf32>
    %1400 = vector.shape_cast %1399 : vector<9xf32> to vector<9x1xf32>
    %1401 = vector.broadcast %1400 : vector<9x1xf32> to vector<9x9xf32>
    %1402 = arith.cmpf oeq, %1398, %1401 : vector<9x9xf32>
    %c9_i32_340 = arith.constant 9 : i32
    %1403 = vector.broadcast %c9_i32_340 : i32 to vector<9x9xi32>
    %1404 = arith.select %1402, %0, %1403 : vector<9x9xi1>, vector<9x9xi32>
    %cst_341 = arith.constant dense<2147483647> : vector<9xi32>
    %1405 = vector.multi_reduction <minsi>, %1404, %cst_341 [1] : vector<9x9xi32> to vector<9xi32>
    %1406 = vector.shape_cast %1405 : vector<9xi32> to vector<9x1xi32>
    %1407 = vector.broadcast %1406 : vector<9x1xi32> to vector<9x9xi32>
    %1408 = arith.cmpi eq, %0, %1407 : vector<9x9xi32>
    %1409 = arith.extui %1408 : vector<9x9xi1> to vector<9x9xi32>
    %1410 = arith.sitofp %1409 : vector<9x9xi32> to vector<9x9xf32>
    %1411 = vector.broadcast %1294 : vector<1x9xf32> to vector<9x9xf32>
    %1412 = arith.mulf %1410, %1411 : vector<9x9xf32>
    %cst_342 = arith.constant dense<0.000000e+00> : vector<9xf32>
    %1413 = vector.multi_reduction <add>, %1412, %cst_342 [1] : vector<9x9xf32> to vector<9xf32>
    %1414 = vector.shape_cast %1413 : vector<9xf32> to vector<9x1xf32>
    %1415 = vector.broadcast %1406 : vector<9x1xi32> to vector<9x9xi32>
    %1416 = arith.cmpi eq, %0, %1415 : vector<9x9xi32>
    %cst_343 = arith.constant -1.000000e+30 : f32
    %1417 = vector.broadcast %cst_343 : f32 to vector<9x9xf32>
    %1418 = arith.select %1416, %1417, %1398 : vector<9x9xi1>, vector<9x9xf32>
    %cst_344 = arith.constant dense<0xFF800000> : vector<9xf32>
    %1419 = vector.multi_reduction <maximumf>, %1418, %cst_344 [1] : vector<9x9xf32> to vector<9xf32>
    %1420 = vector.shape_cast %1419 : vector<9xf32> to vector<9x1xf32>
    %1421 = vector.broadcast %1420 : vector<9x1xf32> to vector<9x9xf32>
    %1422 = arith.cmpf oeq, %1418, %1421 : vector<9x9xf32>
    %c9_i32_345 = arith.constant 9 : i32
    %1423 = vector.broadcast %c9_i32_345 : i32 to vector<9x9xi32>
    %1424 = arith.select %1422, %0, %1423 : vector<9x9xi1>, vector<9x9xi32>
    %cst_346 = arith.constant dense<2147483647> : vector<9xi32>
    %1425 = vector.multi_reduction <minsi>, %1424, %cst_346 [1] : vector<9x9xi32> to vector<9xi32>
    %1426 = vector.shape_cast %1425 : vector<9xi32> to vector<9x1xi32>
    %1427 = vector.broadcast %1426 : vector<9x1xi32> to vector<9x9xi32>
    %1428 = arith.cmpi eq, %0, %1427 : vector<9x9xi32>
    %1429 = arith.extui %1428 : vector<9x9xi1> to vector<9x9xi32>
    %1430 = arith.sitofp %1429 : vector<9x9xi32> to vector<9x9xf32>
    %1431 = vector.broadcast %1294 : vector<1x9xf32> to vector<9x9xf32>
    %1432 = arith.mulf %1430, %1431 : vector<9x9xf32>
    %cst_347 = arith.constant dense<0.000000e+00> : vector<9xf32>
    %1433 = vector.multi_reduction <add>, %1432, %cst_347 [1] : vector<9x9xf32> to vector<9xf32>
    %1434 = vector.shape_cast %1433 : vector<9xf32> to vector<9x1xf32>
    %1435 = vector.broadcast %1426 : vector<9x1xi32> to vector<9x9xi32>
    %1436 = arith.cmpi eq, %0, %1435 : vector<9x9xi32>
    %cst_348 = arith.constant -1.000000e+30 : f32
    %1437 = vector.broadcast %cst_348 : f32 to vector<9x9xf32>
    %1438 = arith.select %1436, %1437, %1418 : vector<9x9xi1>, vector<9x9xf32>
    %cst_349 = arith.constant dense<0xFF800000> : vector<9xf32>
    %1439 = vector.multi_reduction <maximumf>, %1438, %cst_349 [1] : vector<9x9xf32> to vector<9xf32>
    %1440 = vector.shape_cast %1439 : vector<9xf32> to vector<9x1xf32>
    %1441 = vector.broadcast %1440 : vector<9x1xf32> to vector<9x9xf32>
    %1442 = arith.cmpf oeq, %1438, %1441 : vector<9x9xf32>
    %c9_i32_350 = arith.constant 9 : i32
    %1443 = vector.broadcast %c9_i32_350 : i32 to vector<9x9xi32>
    %1444 = arith.select %1442, %0, %1443 : vector<9x9xi1>, vector<9x9xi32>
    %cst_351 = arith.constant dense<2147483647> : vector<9xi32>
    %1445 = vector.multi_reduction <minsi>, %1444, %cst_351 [1] : vector<9x9xi32> to vector<9xi32>
    %1446 = vector.shape_cast %1445 : vector<9xi32> to vector<9x1xi32>
    %1447 = vector.broadcast %1446 : vector<9x1xi32> to vector<9x9xi32>
    %1448 = arith.cmpi eq, %0, %1447 : vector<9x9xi32>
    %1449 = arith.extui %1448 : vector<9x9xi1> to vector<9x9xi32>
    %1450 = arith.sitofp %1449 : vector<9x9xi32> to vector<9x9xf32>
    %1451 = vector.broadcast %1294 : vector<1x9xf32> to vector<9x9xf32>
    %1452 = arith.mulf %1450, %1451 : vector<9x9xf32>
    %cst_352 = arith.constant dense<0.000000e+00> : vector<9xf32>
    %1453 = vector.multi_reduction <add>, %1452, %cst_352 [1] : vector<9x9xf32> to vector<9xf32>
    %1454 = vector.shape_cast %1453 : vector<9xf32> to vector<9x1xf32>
    %1455 = vector.extract_strided_slice %1293 {offsets = [0, 0], sizes = [9, 1], strides = [1, 1]} : vector<9x9xf32> to vector<9x1xf32>
    %1456 = tpu.concatenate %1300, %1320, %1340, %1360, %1380, %1400, %1420, %1440 in 1 : vector<9x1xf32>, vector<9x1xf32>, vector<9x1xf32>, vector<9x1xf32>, vector<9x1xf32>, vector<9x1xf32>, vector<9x1xf32>, vector<9x1xf32> -> vector<9x8xf32>
    %1457 = tpu.concatenate %1314, %1334, %1354, %1374, %1394, %1414, %1434, %1454 in 1 : vector<9x1xf32>, vector<9x1xf32>, vector<9x1xf32>, vector<9x1xf32>, vector<9x1xf32>, vector<9x1xf32>, vector<9x1xf32>, vector<9x1xf32> -> vector<9x8xf32>
    %1458 = tpu.concatenate %1455, %1456, %1457 in 1 : vector<9x1xf32>, vector<9x8xf32>, vector<9x8xf32> -> vector<9x17xf32>
    %c0_353 = arith.constant 0 : index
    %1459 = memref.load %arg16[%c0_353] : memref<3xf32, #tpu.memory_space<smem>>
    %c0_354 = arith.constant 0 : index
    %1460 = memref.load %arg17[%c0_354] : memref<3xf32, #tpu.memory_space<smem>>
    %cst_355 = arith.constant dense<0.000000e+00> : vector<9xf32>
    %1461 = vector.multi_reduction <add>, %1458, %cst_355 [1] : vector<9x17xf32> to vector<9xf32>
    %1462 = vector.shape_cast %1461 : vector<9xf32> to vector<9x1xf32>
    %cst_356 = arith.constant 0.0588235296 : f32
    %1463 = vector.broadcast %cst_356 : f32 to vector<9x1xf32>
    %1464 = arith.mulf %1462, %1463 : vector<9x1xf32>
    %1465 = arith.mulf %1458, %1458 : vector<9x17xf32>
    %cst_357 = arith.constant dense<0.000000e+00> : vector<9xf32>
    %1466 = vector.multi_reduction <add>, %1465, %cst_357 [1] : vector<9x17xf32> to vector<9xf32>
    %1467 = vector.shape_cast %1466 : vector<9xf32> to vector<9x1xf32>
    %cst_358 = arith.constant 0.0588235296 : f32
    %1468 = vector.broadcast %cst_358 : f32 to vector<9x1xf32>
    %1469 = arith.mulf %1467, %1468 : vector<9x1xf32>
    %1470 = arith.mulf %1464, %1464 : vector<9x1xf32>
    %1471 = arith.subf %1469, %1470 : vector<9x1xf32>
    %cst_359 = arith.constant 0.000000e+00 : f32
    %1472 = vector.broadcast %cst_359 : f32 to vector<9x1xf32>
    %1473 = arith.maximumf %1471, %1472 : vector<9x1xf32>
    %1474 = vector.broadcast %1464 : vector<9x1xf32> to vector<9x17xf32>
    %1475 = arith.subf %1458, %1474 : vector<9x17xf32>
    %cst_360 = arith.constant 9.99999974E-6 : f32
    %1476 = vector.broadcast %cst_360 : f32 to vector<9x1xf32>
    %1477 = arith.addf %1473, %1476 : vector<9x1xf32>
    %1478 = math.rsqrt %1477 : vector<9x1xf32>
    %1479 = vector.broadcast %1478 : vector<9x1xf32> to vector<9x17xf32>
    %1480 = arith.mulf %1475, %1479 : vector<9x17xf32>
    %1481 = vector.broadcast %1459 : f32 to vector<9x17xf32>
    %1482 = arith.mulf %1480, %1481 : vector<9x17xf32>
    %1483 = vector.broadcast %1460 : f32 to vector<9x17xf32>
    %1484 = arith.addf %1482, %1483 : vector<9x17xf32>
    %1485 = arith.truncf %1484 : vector<9x17xf32> to vector<9x17xbf16>
    %c0_361 = arith.constant 0 : index
    %c0_362 = arith.constant 0 : index
    %1486 = vector.load %arg10[%c0_361, %c0_362] : memref<17x256xbf16, #tpu.memory_space<vmem>>, vector<17x256xbf16>
    %cst_363 = arith.constant dense<0.000000e+00> : vector<9x256xf32>
    %1487 = tpu.matmul %1485, %1486, %cst_363 {dimension_numbers = #tpu.dot_dimension_numbers<[1], [0], [0], [1], [0, 0, 1, 1], [], []>} : vector<9x17xbf16>, vector<17x256xbf16>, vector<9x256xf32> -> vector<9x256xf32>
    %c0_364 = arith.constant 0 : index
    %c0_365 = arith.constant 0 : index
    %1488 = vector.load %arg11[%c0_364, %c0_365] : memref<1x256xf32, #tpu.memory_space<vmem>>, vector<1x256xf32>
    %1489 = vector.broadcast %1488 : vector<1x256xf32> to vector<9x256xf32>
    %1490 = arith.addf %1487, %1489 : vector<9x256xf32>
    %cst_366 = arith.constant 0.000000e+00 : f32
    %1491 = vector.broadcast %cst_366 : f32 to vector<9x256xf32>
    %1492 = arith.maximumf %1490, %1491 : vector<9x256xf32>
    %c1_367 = arith.constant 1 : index
    %1493 = memref.load %arg16[%c1_367] : memref<3xf32, #tpu.memory_space<smem>>
    %c1_368 = arith.constant 1 : index
    %1494 = memref.load %arg17[%c1_368] : memref<3xf32, #tpu.memory_space<smem>>
    %cst_369 = arith.constant dense<0.000000e+00> : vector<9xf32>
    %1495 = vector.multi_reduction <add>, %1492, %cst_369 [1] : vector<9x256xf32> to vector<9xf32>
    %1496 = vector.shape_cast %1495 : vector<9xf32> to vector<9x1xf32>
    %cst_370 = arith.constant 3.906250e-03 : f32
    %1497 = vector.broadcast %cst_370 : f32 to vector<9x1xf32>
    %1498 = arith.mulf %1496, %1497 : vector<9x1xf32>
    %1499 = arith.mulf %1492, %1492 : vector<9x256xf32>
    %cst_371 = arith.constant dense<0.000000e+00> : vector<9xf32>
    %1500 = vector.multi_reduction <add>, %1499, %cst_371 [1] : vector<9x256xf32> to vector<9xf32>
    %1501 = vector.shape_cast %1500 : vector<9xf32> to vector<9x1xf32>
    %cst_372 = arith.constant 3.906250e-03 : f32
    %1502 = vector.broadcast %cst_372 : f32 to vector<9x1xf32>
    %1503 = arith.mulf %1501, %1502 : vector<9x1xf32>
    %1504 = arith.mulf %1498, %1498 : vector<9x1xf32>
    %1505 = arith.subf %1503, %1504 : vector<9x1xf32>
    %cst_373 = arith.constant 0.000000e+00 : f32
    %1506 = vector.broadcast %cst_373 : f32 to vector<9x1xf32>
    %1507 = arith.maximumf %1505, %1506 : vector<9x1xf32>
    %1508 = vector.broadcast %1498 : vector<9x1xf32> to vector<9x256xf32>
    %1509 = arith.subf %1492, %1508 : vector<9x256xf32>
    %cst_374 = arith.constant 9.99999974E-6 : f32
    %1510 = vector.broadcast %cst_374 : f32 to vector<9x1xf32>
    %1511 = arith.addf %1507, %1510 : vector<9x1xf32>
    %1512 = math.rsqrt %1511 : vector<9x1xf32>
    %1513 = vector.broadcast %1512 : vector<9x1xf32> to vector<9x256xf32>
    %1514 = arith.mulf %1509, %1513 : vector<9x256xf32>
    %1515 = vector.broadcast %1493 : f32 to vector<9x256xf32>
    %1516 = arith.mulf %1514, %1515 : vector<9x256xf32>
    %1517 = vector.broadcast %1494 : f32 to vector<9x256xf32>
    %1518 = arith.addf %1516, %1517 : vector<9x256xf32>
    %1519 = arith.truncf %1518 : vector<9x256xf32> to vector<9x256xbf16>
    %c0_375 = arith.constant 0 : index
    %c0_376 = arith.constant 0 : index
    %1520 = vector.load %arg12[%c0_375, %c0_376] : memref<256x256xbf16, #tpu.memory_space<vmem>>, vector<256x256xbf16>
    %cst_377 = arith.constant dense<0.000000e+00> : vector<9x256xf32>
    %1521 = tpu.matmul %1519, %1520, %cst_377 {dimension_numbers = #tpu.dot_dimension_numbers<[1], [0], [0], [1], [0, 0, 1, 1], [], []>} : vector<9x256xbf16>, vector<256x256xbf16>, vector<9x256xf32> -> vector<9x256xf32>
    %c0_378 = arith.constant 0 : index
    %c0_379 = arith.constant 0 : index
    %1522 = vector.load %arg13[%c0_378, %c0_379] : memref<1x256xf32, #tpu.memory_space<vmem>>, vector<1x256xf32>
    %1523 = vector.broadcast %1522 : vector<1x256xf32> to vector<9x256xf32>
    %1524 = arith.addf %1521, %1523 : vector<9x256xf32>
    %cst_380 = arith.constant 0.000000e+00 : f32
    %1525 = vector.broadcast %cst_380 : f32 to vector<9x256xf32>
    %1526 = arith.maximumf %1524, %1525 : vector<9x256xf32>
    %c2_381 = arith.constant 2 : index
    %1527 = memref.load %arg16[%c2_381] : memref<3xf32, #tpu.memory_space<smem>>
    %c2_382 = arith.constant 2 : index
    %1528 = memref.load %arg17[%c2_382] : memref<3xf32, #tpu.memory_space<smem>>
    %cst_383 = arith.constant dense<0.000000e+00> : vector<9xf32>
    %1529 = vector.multi_reduction <add>, %1526, %cst_383 [1] : vector<9x256xf32> to vector<9xf32>
    %1530 = vector.shape_cast %1529 : vector<9xf32> to vector<9x1xf32>
    %cst_384 = arith.constant 3.906250e-03 : f32
    %1531 = vector.broadcast %cst_384 : f32 to vector<9x1xf32>
    %1532 = arith.mulf %1530, %1531 : vector<9x1xf32>
    %1533 = arith.mulf %1526, %1526 : vector<9x256xf32>
    %cst_385 = arith.constant dense<0.000000e+00> : vector<9xf32>
    %1534 = vector.multi_reduction <add>, %1533, %cst_385 [1] : vector<9x256xf32> to vector<9xf32>
    %1535 = vector.shape_cast %1534 : vector<9xf32> to vector<9x1xf32>
    %cst_386 = arith.constant 3.906250e-03 : f32
    %1536 = vector.broadcast %cst_386 : f32 to vector<9x1xf32>
    %1537 = arith.mulf %1535, %1536 : vector<9x1xf32>
    %1538 = arith.mulf %1532, %1532 : vector<9x1xf32>
    %1539 = arith.subf %1537, %1538 : vector<9x1xf32>
    %cst_387 = arith.constant 0.000000e+00 : f32
    %1540 = vector.broadcast %cst_387 : f32 to vector<9x1xf32>
    %1541 = arith.maximumf %1539, %1540 : vector<9x1xf32>
    %1542 = vector.broadcast %1532 : vector<9x1xf32> to vector<9x256xf32>
    %1543 = arith.subf %1526, %1542 : vector<9x256xf32>
    %cst_388 = arith.constant 9.99999974E-6 : f32
    %1544 = vector.broadcast %cst_388 : f32 to vector<9x1xf32>
    %1545 = arith.addf %1541, %1544 : vector<9x1xf32>
    %1546 = math.rsqrt %1545 : vector<9x1xf32>
    %1547 = vector.broadcast %1546 : vector<9x1xf32> to vector<9x256xf32>
    %1548 = arith.mulf %1543, %1547 : vector<9x256xf32>
    %1549 = vector.broadcast %1527 : f32 to vector<9x256xf32>
    %1550 = arith.mulf %1548, %1549 : vector<9x256xf32>
    %1551 = vector.broadcast %1528 : f32 to vector<9x256xf32>
    %1552 = arith.addf %1550, %1551 : vector<9x256xf32>
    %1553 = arith.truncf %1552 : vector<9x256xf32> to vector<9x256xbf16>
    %c0_389 = arith.constant 0 : index
    %c0_390 = arith.constant 0 : index
    %1554 = vector.load %arg14[%c0_389, %c0_390] : memref<256x17xbf16, #tpu.memory_space<vmem>>, vector<256x17xbf16>
    %cst_391 = arith.constant dense<0.000000e+00> : vector<9x17xf32>
    %1555 = tpu.matmul %1553, %1554, %cst_391 {dimension_numbers = #tpu.dot_dimension_numbers<[1], [0], [0], [1], [0, 0, 1, 1], [], []>} : vector<9x256xbf16>, vector<256x17xbf16>, vector<9x17xf32> -> vector<9x17xf32>
    %c0_392 = arith.constant 0 : index
    %c0_393 = arith.constant 0 : index
    %1556 = vector.load %arg15[%c0_392, %c0_393] : memref<1x17xf32, #tpu.memory_space<vmem>>, vector<1x17xf32>
    %1557 = vector.broadcast %1556 : vector<1x17xf32> to vector<9x17xf32>
    %1558 = arith.addf %1555, %1557 : vector<9x17xf32>
    %1559 = vector.extract_strided_slice %1558 {offsets = [0, 0], sizes = [9, 1], strides = [1, 1]} : vector<9x17xf32> to vector<9x1xf32>
    %1560 = vector.extract_strided_slice %1558 {offsets = [0, 1], sizes = [9, 8], strides = [1, 1]} : vector<9x17xf32> to vector<9x8xf32>
    %1561 = vector.extract_strided_slice %1558 {offsets = [0, 9], sizes = [9, 8], strides = [1, 1]} : vector<9x17xf32> to vector<9x8xf32>
    %1562 = vector.broadcast %1559 : vector<9x1xf32> to vector<9x9xf32>
    %1563 = arith.mulf %1562, %5 : vector<9x9xf32>
    %cst_394 = arith.constant 0.000000e+00 : f32
    %1564 = vector.broadcast %cst_394 : f32 to vector<1x9xf32>
    %1565 = vector.broadcast %1306 : vector<9x1xi32> to vector<9x9xi32>
    %1566 = arith.cmpi eq, %0, %1565 : vector<9x9xi32>
    %1567 = arith.extui %1566 : vector<9x9xi1> to vector<9x9xi32>
    %1568 = arith.sitofp %1567 : vector<9x9xi32> to vector<9x9xf32>
    %1569 = vector.extract_strided_slice %1560 {offsets = [0, 0], sizes = [9, 1], strides = [1, 1]} : vector<9x8xf32> to vector<9x1xf32>
    %1570 = vector.broadcast %1569 : vector<9x1xf32> to vector<9x9xf32>
    %1571 = arith.mulf %1570, %1568 : vector<9x9xf32>
    %1572 = arith.addf %1563, %1571 : vector<9x9xf32>
    %1573 = vector.extract_strided_slice %1561 {offsets = [0, 0], sizes = [9, 1], strides = [1, 1]} : vector<9x8xf32> to vector<9x1xf32>
    %1574 = vector.broadcast %1573 : vector<9x1xf32> to vector<9x9xf32>
    %1575 = arith.mulf %1574, %1568 : vector<9x9xf32>
    %cst_395 = arith.constant dense<0.000000e+00> : vector<9xf32>
    %1576 = vector.multi_reduction <add>, %1575, %cst_395 [0] : vector<9x9xf32> to vector<9xf32>
    %1577 = vector.shape_cast %1576 : vector<9xf32> to vector<1x9xf32>
    %1578 = arith.addf %1564, %1577 : vector<1x9xf32>
    %1579 = vector.broadcast %1326 : vector<9x1xi32> to vector<9x9xi32>
    %1580 = arith.cmpi eq, %0, %1579 : vector<9x9xi32>
    %1581 = arith.extui %1580 : vector<9x9xi1> to vector<9x9xi32>
    %1582 = arith.sitofp %1581 : vector<9x9xi32> to vector<9x9xf32>
    %1583 = vector.extract_strided_slice %1560 {offsets = [0, 1], sizes = [9, 1], strides = [1, 1]} : vector<9x8xf32> to vector<9x1xf32>
    %1584 = vector.broadcast %1583 : vector<9x1xf32> to vector<9x9xf32>
    %1585 = arith.mulf %1584, %1582 : vector<9x9xf32>
    %1586 = arith.addf %1572, %1585 : vector<9x9xf32>
    %1587 = vector.extract_strided_slice %1561 {offsets = [0, 1], sizes = [9, 1], strides = [1, 1]} : vector<9x8xf32> to vector<9x1xf32>
    %1588 = vector.broadcast %1587 : vector<9x1xf32> to vector<9x9xf32>
    %1589 = arith.mulf %1588, %1582 : vector<9x9xf32>
    %cst_396 = arith.constant dense<0.000000e+00> : vector<9xf32>
    %1590 = vector.multi_reduction <add>, %1589, %cst_396 [0] : vector<9x9xf32> to vector<9xf32>
    %1591 = vector.shape_cast %1590 : vector<9xf32> to vector<1x9xf32>
    %1592 = arith.addf %1578, %1591 : vector<1x9xf32>
    %1593 = vector.broadcast %1346 : vector<9x1xi32> to vector<9x9xi32>
    %1594 = arith.cmpi eq, %0, %1593 : vector<9x9xi32>
    %1595 = arith.extui %1594 : vector<9x9xi1> to vector<9x9xi32>
    %1596 = arith.sitofp %1595 : vector<9x9xi32> to vector<9x9xf32>
    %1597 = vector.extract_strided_slice %1560 {offsets = [0, 2], sizes = [9, 1], strides = [1, 1]} : vector<9x8xf32> to vector<9x1xf32>
    %1598 = vector.broadcast %1597 : vector<9x1xf32> to vector<9x9xf32>
    %1599 = arith.mulf %1598, %1596 : vector<9x9xf32>
    %1600 = arith.addf %1586, %1599 : vector<9x9xf32>
    %1601 = vector.extract_strided_slice %1561 {offsets = [0, 2], sizes = [9, 1], strides = [1, 1]} : vector<9x8xf32> to vector<9x1xf32>
    %1602 = vector.broadcast %1601 : vector<9x1xf32> to vector<9x9xf32>
    %1603 = arith.mulf %1602, %1596 : vector<9x9xf32>
    %cst_397 = arith.constant dense<0.000000e+00> : vector<9xf32>
    %1604 = vector.multi_reduction <add>, %1603, %cst_397 [0] : vector<9x9xf32> to vector<9xf32>
    %1605 = vector.shape_cast %1604 : vector<9xf32> to vector<1x9xf32>
    %1606 = arith.addf %1592, %1605 : vector<1x9xf32>
    %1607 = vector.broadcast %1366 : vector<9x1xi32> to vector<9x9xi32>
    %1608 = arith.cmpi eq, %0, %1607 : vector<9x9xi32>
    %1609 = arith.extui %1608 : vector<9x9xi1> to vector<9x9xi32>
    %1610 = arith.sitofp %1609 : vector<9x9xi32> to vector<9x9xf32>
    %1611 = vector.extract_strided_slice %1560 {offsets = [0, 3], sizes = [9, 1], strides = [1, 1]} : vector<9x8xf32> to vector<9x1xf32>
    %1612 = vector.broadcast %1611 : vector<9x1xf32> to vector<9x9xf32>
    %1613 = arith.mulf %1612, %1610 : vector<9x9xf32>
    %1614 = arith.addf %1600, %1613 : vector<9x9xf32>
    %1615 = vector.extract_strided_slice %1561 {offsets = [0, 3], sizes = [9, 1], strides = [1, 1]} : vector<9x8xf32> to vector<9x1xf32>
    %1616 = vector.broadcast %1615 : vector<9x1xf32> to vector<9x9xf32>
    %1617 = arith.mulf %1616, %1610 : vector<9x9xf32>
    %cst_398 = arith.constant dense<0.000000e+00> : vector<9xf32>
    %1618 = vector.multi_reduction <add>, %1617, %cst_398 [0] : vector<9x9xf32> to vector<9xf32>
    %1619 = vector.shape_cast %1618 : vector<9xf32> to vector<1x9xf32>
    %1620 = arith.addf %1606, %1619 : vector<1x9xf32>
    %1621 = vector.broadcast %1386 : vector<9x1xi32> to vector<9x9xi32>
    %1622 = arith.cmpi eq, %0, %1621 : vector<9x9xi32>
    %1623 = arith.extui %1622 : vector<9x9xi1> to vector<9x9xi32>
    %1624 = arith.sitofp %1623 : vector<9x9xi32> to vector<9x9xf32>
    %1625 = vector.extract_strided_slice %1560 {offsets = [0, 4], sizes = [9, 1], strides = [1, 1]} : vector<9x8xf32> to vector<9x1xf32>
    %1626 = vector.broadcast %1625 : vector<9x1xf32> to vector<9x9xf32>
    %1627 = arith.mulf %1626, %1624 : vector<9x9xf32>
    %1628 = arith.addf %1614, %1627 : vector<9x9xf32>
    %1629 = vector.extract_strided_slice %1561 {offsets = [0, 4], sizes = [9, 1], strides = [1, 1]} : vector<9x8xf32> to vector<9x1xf32>
    %1630 = vector.broadcast %1629 : vector<9x1xf32> to vector<9x9xf32>
    %1631 = arith.mulf %1630, %1624 : vector<9x9xf32>
    %cst_399 = arith.constant dense<0.000000e+00> : vector<9xf32>
    %1632 = vector.multi_reduction <add>, %1631, %cst_399 [0] : vector<9x9xf32> to vector<9xf32>
    %1633 = vector.shape_cast %1632 : vector<9xf32> to vector<1x9xf32>
    %1634 = arith.addf %1620, %1633 : vector<1x9xf32>
    %1635 = vector.broadcast %1406 : vector<9x1xi32> to vector<9x9xi32>
    %1636 = arith.cmpi eq, %0, %1635 : vector<9x9xi32>
    %1637 = arith.extui %1636 : vector<9x9xi1> to vector<9x9xi32>
    %1638 = arith.sitofp %1637 : vector<9x9xi32> to vector<9x9xf32>
    %1639 = vector.extract_strided_slice %1560 {offsets = [0, 5], sizes = [9, 1], strides = [1, 1]} : vector<9x8xf32> to vector<9x1xf32>
    %1640 = vector.broadcast %1639 : vector<9x1xf32> to vector<9x9xf32>
    %1641 = arith.mulf %1640, %1638 : vector<9x9xf32>
    %1642 = arith.addf %1628, %1641 : vector<9x9xf32>
    %1643 = vector.extract_strided_slice %1561 {offsets = [0, 5], sizes = [9, 1], strides = [1, 1]} : vector<9x8xf32> to vector<9x1xf32>
    %1644 = vector.broadcast %1643 : vector<9x1xf32> to vector<9x9xf32>
    %1645 = arith.mulf %1644, %1638 : vector<9x9xf32>
    %cst_400 = arith.constant dense<0.000000e+00> : vector<9xf32>
    %1646 = vector.multi_reduction <add>, %1645, %cst_400 [0] : vector<9x9xf32> to vector<9xf32>
    %1647 = vector.shape_cast %1646 : vector<9xf32> to vector<1x9xf32>
    %1648 = arith.addf %1634, %1647 : vector<1x9xf32>
    %1649 = vector.broadcast %1426 : vector<9x1xi32> to vector<9x9xi32>
    %1650 = arith.cmpi eq, %0, %1649 : vector<9x9xi32>
    %1651 = arith.extui %1650 : vector<9x9xi1> to vector<9x9xi32>
    %1652 = arith.sitofp %1651 : vector<9x9xi32> to vector<9x9xf32>
    %1653 = vector.extract_strided_slice %1560 {offsets = [0, 6], sizes = [9, 1], strides = [1, 1]} : vector<9x8xf32> to vector<9x1xf32>
    %1654 = vector.broadcast %1653 : vector<9x1xf32> to vector<9x9xf32>
    %1655 = arith.mulf %1654, %1652 : vector<9x9xf32>
    %1656 = arith.addf %1642, %1655 : vector<9x9xf32>
    %1657 = vector.extract_strided_slice %1561 {offsets = [0, 6], sizes = [9, 1], strides = [1, 1]} : vector<9x8xf32> to vector<9x1xf32>
    %1658 = vector.broadcast %1657 : vector<9x1xf32> to vector<9x9xf32>
    %1659 = arith.mulf %1658, %1652 : vector<9x9xf32>
    %cst_401 = arith.constant dense<0.000000e+00> : vector<9xf32>
    %1660 = vector.multi_reduction <add>, %1659, %cst_401 [0] : vector<9x9xf32> to vector<9xf32>
    %1661 = vector.shape_cast %1660 : vector<9xf32> to vector<1x9xf32>
    %1662 = arith.addf %1648, %1661 : vector<1x9xf32>
    %1663 = vector.broadcast %1446 : vector<9x1xi32> to vector<9x9xi32>
    %1664 = arith.cmpi eq, %0, %1663 : vector<9x9xi32>
    %1665 = arith.extui %1664 : vector<9x9xi1> to vector<9x9xi32>
    %1666 = arith.sitofp %1665 : vector<9x9xi32> to vector<9x9xf32>
    %1667 = vector.extract_strided_slice %1560 {offsets = [0, 7], sizes = [9, 1], strides = [1, 1]} : vector<9x8xf32> to vector<9x1xf32>
    %1668 = vector.broadcast %1667 : vector<9x1xf32> to vector<9x9xf32>
    %1669 = arith.mulf %1668, %1666 : vector<9x9xf32>
    %1670 = arith.addf %1656, %1669 : vector<9x9xf32>
    %1671 = vector.extract_strided_slice %1561 {offsets = [0, 7], sizes = [9, 1], strides = [1, 1]} : vector<9x8xf32> to vector<9x1xf32>
    %1672 = vector.broadcast %1671 : vector<9x1xf32> to vector<9x9xf32>
    %1673 = arith.mulf %1672, %1666 : vector<9x9xf32>
    %cst_402 = arith.constant dense<0.000000e+00> : vector<9xf32>
    %1674 = vector.multi_reduction <add>, %1673, %cst_402 [0] : vector<9x9xf32> to vector<9xf32>
    %1675 = vector.shape_cast %1674 : vector<9xf32> to vector<1x9xf32>
    %1676 = arith.addf %1662, %1675 : vector<1x9xf32>
    %1677 = vector.broadcast %1676 : vector<1x9xf32> to vector<9x9xf32>
    %1678 = arith.mulf %9, %1677 : vector<9x9xf32>
    %1679 = arith.addf %1670, %1678 : vector<9x9xf32>
    %cst_403 = arith.constant dense<0.000000e+00> : vector<9x32xf32>
    %1680 = tpu.matmul %1679, %1292, %cst_403 {dimension_numbers = #tpu.dot_dimension_numbers<[1], [0], [0], [1], [0, 0, 1, 1], [], []>} : vector<9x9xf32>, vector<9x32xf32>, vector<9x32xf32> -> vector<9x32xf32>
    %cst_404 = arith.constant dense<0.000000e+00> : vector<9x32xf32>
    %1681 = tpu.matmul %1679, %1292, %cst_404 {dimension_numbers = #tpu.dot_dimension_numbers<[0], [0], [1], [1], [0, 1, 1, 1], [], []>} : vector<9x9xf32>, vector<9x32xf32>, vector<9x32xf32> -> vector<9x32xf32>
    %1682 = arith.addf %1680, %1681 : vector<9x32xf32>
    %cst_405 = arith.constant 1.000000e+00 : f32
    %1683 = vector.broadcast %cst_405 : f32 to vector<9x1xf32>
    %1684 = arith.divf %1683, %1290 : vector<9x1xf32>
    %1685 = arith.mulf %1682, %1284 : vector<9x32xf32>
    %cst_406 = arith.constant dense<0.000000e+00> : vector<9xf32>
    %1686 = vector.multi_reduction <add>, %1685, %cst_406 [1] : vector<9x32xf32> to vector<9xf32>
    %1687 = vector.shape_cast %1686 : vector<9xf32> to vector<9x1xf32>
    %cst_407 = arith.constant 9.99999996E-13 : f32
    %1688 = vector.broadcast %cst_407 : f32 to vector<9x1xf32>
    %1689 = arith.cmpf ogt, %1288, %1688 : vector<9x1xf32>
    %cst_408 = arith.constant 9.99999996E-13 : f32
    %1690 = vector.broadcast %cst_408 : f32 to vector<9x1xf32>
    %1691 = arith.maximumf %1288, %1690 : vector<9x1xf32>
    %cst_409 = arith.constant 1.000000e+00 : f32
    %1692 = vector.broadcast %cst_409 : f32 to vector<9x1xf32>
    %1693 = arith.divf %1692, %1691 : vector<9x1xf32>
    %cst_410 = arith.constant 0.000000e+00 : f32
    %1694 = vector.broadcast %cst_410 : f32 to vector<9x1xf32>
    %1695 = arith.select %1689, %1693, %1694 : vector<9x1xi1>, vector<9x1xf32>
    %1696 = vector.broadcast %1684 : vector<9x1xf32> to vector<9x32xf32>
    %1697 = arith.mulf %1682, %1696 : vector<9x32xf32>
    %1698 = arith.mulf %1687, %1684 : vector<9x1xf32>
    %1699 = arith.mulf %1698, %1684 : vector<9x1xf32>
    %1700 = arith.mulf %1699, %1695 : vector<9x1xf32>
    %1701 = vector.broadcast %1700 : vector<9x1xf32> to vector<9x32xf32>
    %1702 = arith.mulf %1284, %1701 : vector<9x32xf32>
    %1703 = arith.subf %1697, %1702 : vector<9x32xf32>
    %1704 = vector.extract_strided_slice %1703 {offsets = [1, 0], sizes = [8, 32], strides = [1, 1]} : vector<9x32xf32> to vector<8x32xf32>
    %cst_411 = arith.constant 1.000000e-03 : f32
    %1705 = vector.broadcast %cst_411 : f32 to vector<8x32xf32>
    %1706 = arith.mulf %1705, %1704 : vector<8x32xf32>
    %1707 = arith.subf %859, %1706 : vector<8x32xf32>
    %1708 = arith.mulf %1283, %1283 : vector<1x32xf32>
    %cst_412 = arith.constant dense<0.000000e+00> : vector<1xf32>
    %1709 = vector.multi_reduction <add>, %1708, %cst_412 [1] : vector<1x32xf32> to vector<1xf32>
    %1710 = vector.shape_cast %1709 : vector<1xf32> to vector<1x1xf32>
    %1711 = math.sqrt %1710 : vector<1x1xf32>
    %cst_413 = arith.constant 9.99999996E-13 : f32
    %1712 = vector.broadcast %cst_413 : f32 to vector<1x1xf32>
    %1713 = arith.maximumf %1711, %1712 : vector<1x1xf32>
    %1714 = vector.broadcast %1713 : vector<1x1xf32> to vector<1x32xf32>
    %1715 = arith.divf %1283, %1714 : vector<1x32xf32>
    %1716 = arith.mulf %1707, %1707 : vector<8x32xf32>
    %cst_414 = arith.constant dense<0.000000e+00> : vector<8xf32>
    %1717 = vector.multi_reduction <add>, %1716, %cst_414 [1] : vector<8x32xf32> to vector<8xf32>
    %1718 = vector.shape_cast %1717 : vector<8xf32> to vector<8x1xf32>
    %1719 = math.sqrt %1718 : vector<8x1xf32>
    %cst_415 = arith.constant 9.99999996E-13 : f32
    %1720 = vector.broadcast %cst_415 : f32 to vector<8x1xf32>
    %1721 = arith.maximumf %1719, %1720 : vector<8x1xf32>
    %1722 = vector.broadcast %1721 : vector<8x1xf32> to vector<8x32xf32>
    %1723 = arith.divf %1707, %1722 : vector<8x32xf32>
    %cst_416 = arith.constant dense<0.000000e+00> : vector<1x8xf32>
    %1724 = tpu.matmul %1715, %1723, %cst_416 {dimension_numbers = #tpu.dot_dimension_numbers<[1], [1], [0], [0], [0, 0, 1, 0], [], []>} : vector<1x32xf32>, vector<8x32xf32>, vector<1x8xf32> -> vector<1x8xf32>
    %c0_417 = arith.constant 0 : index
    %c0_418 = arith.constant 0 : index
    %1725 = vector.load %arg18[%c0_417, %c0_418] : memref<1x8xf32, #tpu.memory_space<vmem>>, vector<1x8xf32>
    tpu.vector_store %arg18[%c0_417, %c0_418], %1724 {strides = array<i32>} : memref<1x8xf32, #tpu.memory_space<vmem>>, vector<1x8xf32>,
    return
  }
}

</mosaic_0001>

<llo_original>
// kernel: forward.1
$region0: #{forward.1}
  #allocation0 [shape = 'u32[]', space=smem, size = 0x4, offset = 0x4, fixed_abs, tag = 'smem constant byte address 0x4 - core index']
  #allocation1 [shape = 'u32[144,128]{1,0:T(1,128)}', space=vmem, size = 0x12000, scoped, tag = 'internal scratch']
  %s0 = inlined_call_operand.vmem [shape: f32[1,32], index: 0, kind: input, shape index: {}]
  %s1 = inlined_call_operand.vmem [shape: f32[8,32], index: 1, kind: input, shape index: {}]
  %s2 = inlined_call_operand.vmem [shape: bf16[17,256], index: 2, kind: input, shape index: {}]
  %s3 = inlined_call_operand.vmem [shape: f32[1,256], index: 3, kind: input, shape index: {}]
  %s4 = inlined_call_operand.vmem [shape: bf16[256,256], index: 4, kind: input, shape index: {}]
  %s5 = inlined_call_operand.vmem [shape: f32[1,256], index: 5, kind: input, shape index: {}]
  %s6 = inlined_call_operand.vmem [shape: bf16[256,17], index: 6, kind: input, shape index: {}]
  %s7 = inlined_call_operand.vmem [shape: f32[1,17], index: 7, kind: input, shape index: {}]
  %s8 = inlined_call_operand.vmem [shape: f32[3], index: 8, kind: input, shape index: {}]
  %s9 = inlined_call_operand.vmem [shape: f32[3], index: 9, kind: input, shape index: {}]
  %s10 = inlined_call_operand.vmem [shape: bf16[17,256], index: 10, kind: input, shape index: {}]
  %s11 = inlined_call_operand.vmem [shape: f32[1,256], index: 11, kind: input, shape index: {}]
  %s12 = inlined_call_operand.hbm [shape: bf16[256,256], index: 12, kind: input, shape index: {}]
  %s13 = inlined_call_operand.vmem [shape: f32[1,256], index: 13, kind: input, shape index: {}]
  %s14 = inlined_call_operand.vmem [shape: bf16[256,17], index: 14, kind: input, shape index: {}]
  %s15 = inlined_call_operand.vmem [shape: f32[1,17], index: 15, kind: input, shape index: {}]
  %s16 = inlined_call_operand.vmem [shape: f32[3], index: 16, kind: input, shape index: {}]
  %s17 = inlined_call_operand.vmem [shape: f32[3], index: 17, kind: input, shape index: {}]
  %s18 = inlined_call_operand.hbm [shape: f32[1,8], index: 18, kind: output, shape index: {}]
  %s19 = sld [smem:[#allocation0]]
  $region102: #{forward.1} parent=0
    _
  %s21 = ssub.s32 1, %s19
  %s22 = scalar_select 0, %s21, %s19
  $region1: #{forward.1} parent=0
    #allocation2 [shape = 'u8[512]{0}', space=smem, size = 0x200, scoped, tag = 'input window, operand 8, single buffered']
    #allocation3 [shape = 's32[1]{0}', space=sflag, size = 0x4, scoped, tag = 'scoped memory for forward.1']
    #allocation4 [shape = 's32[1]{0}', space=sflag, size = 0x4, scoped, tag = 'scoped memory for forward.1']
    #allocation5 [shape = 's32[1]{0}', space=sflag, size = 0x4, scoped, tag = 'scoped memory for forward.1']
    #allocation6 [shape = 'u8[512]{0}', space=smem, size = 0x200, scoped, tag = 'input window, operand 9, single buffered']
    #allocation7 [shape = 's32[1]{0}', space=sflag, size = 0x4, scoped, tag = 'scoped memory for forward.1']
    #allocation8 [shape = 'u8[131072]{0}', space=vmem, size = 0x20000, scoped, tag = 'input window, operand 12, single buffered']
    #allocation9 [shape = 'u8[512]{0}', space=smem, size = 0x200, scoped, tag = 'input window, operand 16, single buffered']
    #allocation10 [shape = 'u8[512]{0}', space=smem, size = 0x200, scoped, tag = 'input window, operand 17, single buffered']
    #allocation11 [shape = 's32[1]{0}', space=sflag, size = 0x4, scoped, tag = 'scoped memory for forward.1']
    #allocation12 [shape = 'u8[512]{0}', space=vmem, size = 0x400, scoped, tag = 'output window, operand 0, single buffered']
    %23 = vsyncpa [#allocation5], 0
    %24 = vsyncpa [#allocation7], 0
    %25 = vsyncpa [#allocation3], 0
    %26 = vsyncpa [#allocation11], 0
    %27 = vsyncpa [#allocation4], 0
    // Predicated region
    $region2: #{forward.1} parent=1 // pred_check
      _
    $region3: #{forward.1} parent=1 // pred_check_branch
      %29 = sbr.rel (0) target = $region5
    $region4: #{forward.1} parent=1 // pred_region
      _
    $region5: #{forward.1} parent=1 // pred_fallthru
      _
    // Predicated region
    $region6: #{forward.1} parent=1 // pred_check
      _
    $region7: #{forward.1} parent=1 // pred_check_branch
      %31 = sbr.rel (0) target = $region9
    $region8: #{forward.1} parent=1 // pred_region
      _
    $region9: #{forward.1} parent=1 // pred_fallthru
      _
    // Predicated region
    $region10: #{forward.1} parent=1 // pred_check
      _
    $region11: #{forward.1} parent=1 // pred_check_branch
      %33 = sbr.rel (0) target = $region13
    $region12: #{forward.1} parent=1 // pred_region
      _
    $region13: #{forward.1} parent=1 // pred_fallthru
      _
    // Predicated region
    $region14: #{forward.1} parent=1 // pred_check
      _
    $region15: #{forward.1} parent=1 // pred_check_branch
      %35 = sbr.rel (0) target = $region17
    $region16: #{forward.1} parent=1 // pred_region
      _
    $region17: #{forward.1} parent=1 // pred_fallthru
      _
    // Predicated region
    $region18: #{forward.1} parent=1 // pred_check
      _
    $region19: #{forward.1} parent=1 // pred_check_branch
      %37 = sbr.rel (0) target = $region21
    $region20: #{forward.1} parent=1 // pred_region
      _
    $region21: #{forward.1} parent=1 // pred_fallthru
      _
    // Predicated region
    $region22: #{forward.1} parent=1 // pred_check
      _
    $region23: #{forward.1} parent=1 // pred_check_branch
      %39 = sbr.rel (0) target = $region25
    $region24: #{forward.1} parent=1 // pred_region
      _
    $region25: #{forward.1} parent=1 // pred_fallthru
      _
    // Predicated region
    $region26: #{forward.1} parent=1 // pred_check
      _
    $region27: #{forward.1} parent=1 // pred_check_branch
      %41 = sbr.rel (0) target = $region29
    $region28: #{forward.1} parent=1 // pred_region
      _
    $region29: #{forward.1} parent=1 // pred_fallthru
      _
    // Predicated region
    $region30: #{forward.1} parent=1 // pred_check
      _
    $region31: #{forward.1} parent=1 // pred_check_branch
      %43 = sbr.rel (0) target = $region33
    $region32: #{forward.1} parent=1 // pred_region
      _
    $region33: #{forward.1} parent=1 // pred_fallthru
      _
    // Predicated region
    $region34: #{forward.1} parent=1 // pred_check
      _
    $region35: #{forward.1} parent=1 // pred_check_branch
      %45 = sbr.rel (0) target = $region37
    $region36: #{forward.1} parent=1 // pred_region
      %s47 = ssub.s32 16, 16
      %48 = vsyncadd [#allocation5], %s47
      %s50 = sshll.u32 %s8, 4
      %s51 = int_to_ptr.vmem [resolvable:$true] %s50
      %53 = dma.vmem_to_smem %s51, 16, [#allocation2], [#allocation5]
    $region37: #{forward.1} parent=1 // pred_fallthru
      _
    // Predicated region
    $region38: #{forward.1} parent=1 // pred_check
      _
    $region39: #{forward.1} parent=1 // pred_check_branch
      %55 = sbr.rel (0) target = $region41
    $region40: #{forward.1} parent=1 // pred_region
      %s57 = ssub.s32 16, 16
      %58 = vsyncadd [#allocation7], %s57
      %s60 = sshll.u32 %s9, 4
      %s61 = int_to_ptr.vmem [resolvable:$true] %s60
      %63 = dma.vmem_to_smem %s61, 16, [#allocation6], [#allocation7]
    $region41: #{forward.1} parent=1 // pred_fallthru
      _
    // Predicated region
    $region42: #{forward.1} parent=1 // pred_check
      _
    $region43: #{forward.1} parent=1 // pred_check_branch
      %65 = sbr.rel (0) target = $region45
    $region44: #{forward.1} parent=1 // pred_region
      _
    $region45: #{forward.1} parent=1 // pred_fallthru
      _
    // Predicated region
    $region46: #{forward.1} parent=1 // pred_check
      _
    $region47: #{forward.1} parent=1 // pred_check_branch
      %67 = sbr.rel (0) target = $region49
    $region48: #{forward.1} parent=1 // pred_region
      _
    $region49: #{forward.1} parent=1 // pred_fallthru
      _
    // Predicated region
    $region50: #{forward.1} parent=1 // pred_check
      _
    $region51: #{forward.1} parent=1 // pred_check_branch
      %69 = sbr.rel (0) target = $region53
    $region52: #{forward.1} parent=1 // pred_region
      %s71 = ssub.s32 4096, 4096
      %72 = vsyncadd [#allocation3], %s71
      %s73 = sshll.u32 [#allocation8], 4
      %s74 = int_to_ptr.vmem [resolvable:$true] %s73
      %79 = dma.hbm_to_vmem [thread:$0]  %s12, 4096, %s74, [#allocation3], 128, 128, 8
    $region53: #{forward.1} parent=1 // pred_fallthru
      _
    // Predicated region
    $region54: #{forward.1} parent=1 // pred_check
      _
    $region55: #{forward.1} parent=1 // pred_check_branch
      %81 = sbr.rel (0) target = $region57
    $region56: #{forward.1} parent=1 // pred_region
      _
    $region57: #{forward.1} parent=1 // pred_fallthru
      _
    // Predicated region
    $region58: #{forward.1} parent=1 // pred_check
      _
    $region59: #{forward.1} parent=1 // pred_check_branch
      %83 = sbr.rel (0) target = $region61
    $region60: #{forward.1} parent=1 // pred_region
      _
    $region61: #{forward.1} parent=1 // pred_fallthru
      _
    // Predicated region
    $region62: #{forward.1} parent=1 // pred_check
      _
    $region63: #{forward.1} parent=1 // pred_check_branch
      %85 = sbr.rel (0) target = $region65
    $region64: #{forward.1} parent=1 // pred_region
      _
    $region65: #{forward.1} parent=1 // pred_fallthru
      _
    // Predicated region
    $region66: #{forward.1} parent=1 // pred_check
      _
    $region67: #{forward.1} parent=1 // pred_check_branch
      %87 = sbr.rel (0) target = $region69
    $region68: #{forward.1} parent=1 // pred_region
      %s89 = ssub.s32 16, 16
      %90 = vsyncadd [#allocation7], %s89
      %s92 = sshll.u32 %s16, 4
      %s93 = int_to_ptr.vmem [resolvable:$true] %s92
      %95 = dma.vmem_to_smem %s93, 16, [#allocation9], [#allocation7]
    $region69: #{forward.1} parent=1 // pred_fallthru
      _
    // Predicated region
    $region70: #{forward.1} parent=1 // pred_check
      _
    $region71: #{forward.1} parent=1 // pred_check_branch
      %97 = sbr.rel (0) target = $region73
    $region72: #{forward.1} parent=1 // pred_region
      %s99 = ssub.s32 16, 16
      %100 = vsyncadd [#allocation11], %s99
      %s102 = sshll.u32 %s17, 4
      %s103 = int_to_ptr.vmem [resolvable:$true] %s102
      %105 = dma.vmem_to_smem %s103, 16, [#allocation10], [#allocation11]
    $region73: #{forward.1} parent=1 // pred_fallthru
      _
    // Predicated region
    $region74: #{forward.1} parent=1 // pred_check
      _
    $region75: #{forward.1} parent=1 // pred_check_branch
      %107 = sbr.rel (0) target = $region77
    $region76: #{forward.1} parent=1 // pred_region
      %108 = dma.done [#allocation5], 16
    $region77: #{forward.1} parent=1 // pred_fallthru
      _
    // Predicated region
    $region78: #{forward.1} parent=1 // pred_check
      _
    $region79: #{forward.1} parent=1 // pred_check_branch
      %110 = sbr.rel (0) target = $region81
    $region80: #{forward.1} parent=1 // pred_region
      %111 = dma.done [#allocation7], 16
    $region81: #{forward.1} parent=1 // pred_fallthru
      _
    // Predicated region
    $region82: #{forward.1} parent=1 // pred_check
      _
    $region83: #{forward.1} parent=1 // pred_check_branch
      %113 = sbr.rel (0) target = $region85
    $region84: #{forward.1} parent=1 // pred_region
      %114 = dma.done [#allocation3], 4096
    $region85: #{forward.1} parent=1 // pred_fallthru
      _
    // Predicated region
    $region86: #{forward.1} parent=1 // pred_check
      _
    $region87: #{forward.1} parent=1 // pred_check_branch
      %116 = sbr.rel (0) target = $region89
    $region88: #{forward.1} parent=1 // pred_region
      %117 = dma.done [#allocation7], 16
    $region89: #{forward.1} parent=1 // pred_fallthru
      _
    // Predicated region
    $region90: #{forward.1} parent=1 // pred_check
      _
    $region91: #{forward.1} parent=1 // pred_check_branch
      %119 = sbr.rel (0) target = $region93
    $region92: #{forward.1} parent=1 // pred_region
      %120 = dma.done [#allocation11], 16
    $region93: #{forward.1} parent=1 // pred_fallthru
      _
    %121 = sfence
    %v123 = vlaneseq
    %v124 = vand.u32 %v123, 127
    %v125 = vlaneseq
    %v126 = vshrl.u32 %v125, 7
    %v127 = vadd.s32 %v126, 8
    %vm128 = vcmp.eq.s32.totalorder %v124, 0
    %v129 = vsel %vm128, 1, 0
    %v130 = vcvt.s32.f32 %v129
    %vm131 = vcmp.eq.s32.totalorder %v126, 0
    %vm132 = vcmp.eq.s32.totalorder %v127, 0
    %v133 = vsel %vm131, 1, 0
    %v134 = vsel %vm132, 1, 0
    %v135 = vcvt.s32.f32 %v133
    %v136 = vcvt.s32.f32 %v134
    %v137 = vld [vmem:[%s0] sm:$0x1]
    %v138 = vld [vmem:[%s1] sm:$0xff]
    %v140 = vrot.slane %v138, 7
    %vm142 = vcmask 1040384
    %v143 = vsel %vm142, %v137, %v140
    %v144 = vmul.f32 %v143, %v143
    %v145 = vmul.f32 %v140, %v140
    %vm146 = vcmask 261120
    %v147 = vsel %vm146, %v144, 0.0
    %148 = vadd.xlane.f32.xlu0 %v147
    %v149 = vpop.xlane.xlu0 %148
    %vm150 = vcmask 253952
    %v151 = vsel %vm150, %v145, 0.0
    %152 = vadd.xlane.f32.xlu0 %v151
    %v153 = vpop.xlane.xlu0 %152
    %v154 = vrsqrt.pop %v149
    %v155 = vmul.f32 %v149, %v154
    %vm156 = vcmp.eq.f32.partialorder %v149, inf
    %v157 = vsel %vm156, %v149, %v155
    %vm158 = vcmp.eq.f32.partialorder %v149, 0.0
    %v159 = vand.u32 %v149, 2147483648
    %v160 = vsel %vm158, %v159, %v157
    %v161 = vrsqrt.pop %v153
    %v162 = vmul.f32 %v153, %v161
    %vm163 = vcmp.eq.f32.partialorder %v153, inf
    %v164 = vsel %vm163, %v153, %v162
    %vm165 = vcmp.eq.f32.partialorder %v153, 0.0
    %v166 = vand.u32 %v153, 2147483648
    %v167 = vsel %vm165, %v166, %v164
    %v168 = vmax.f32 %v160, 1e-12
    %v169 = vmax.f32 %v167, 1e-12
    %v170 = vrcp.pop %v168
    %v171 = vmul.f32 %v143, %v170
    %v172 = vrcp.pop %v169
    %v173 = vmul.f32 %v140, %v172
    %v175 = vsel %vm146, %v171, 0
    %v178 = vsel %vm146, %v173, 0
    %180 = vmatprep.subr.mxu0 0.0
    %181 = vmatpush1.xpose.msra.mxu0 %v175
    %182 = vmatprep.subr.mxu0 0.0
    %183 = vmatpush1.xpose.msra.mxu0 %v178
    %184 = vmatprep.subr.mxu0 0.0
    %185 = vmatpush1.xpose.msra.mxu0 0.0
    %186 = vmatprep.subr.mxu0 0.0
    %187 = vmatpush1.xpose.msra.mxu0 0.0
    %188 = vmatprep.subr.mxu0 0.0
    %189 = vmatpush1.xpose.msra.mxu0 0.0
    %190 = vmatprep.subr.mxu0 0.0
    %191 = vmatpush1.xpose.msra.mxu0 0.0
    %192 = vmatprep.subr.mxu0 0.0
    %193 = vmatpush1.xpose.msra.mxu0 0.0
    %194 = vmatprep.subr.mxu0 0.0
    %195 = vmatpush1.xpose.msra.mxu0 0.0
    %196 = vmatprep.subr.mxu0 0.0
    %197 = vmatpush1.xpose.msra.mxu0 0.0
    %198 = vmatprep.subr.mxu0 0.0
    %199 = vmatpush1.xpose.msra.mxu0 0.0
    %200 = vmatprep.subr.mxu0 0.0
    %201 = vmatpush1.xpose.msra.mxu0 0.0
    %202 = vmatprep.subr.mxu0 0.0
    %203 = vmatpush1.xpose.msra.mxu0 0.0
    %204 = vmatprep.subr.mxu0 0.0
    %205 = vmatpush1.xpose.msra.mxu0 0.0
    %206 = vmatprep.subr.mxu0 0.0
    %207 = vmatpush1.xpose.msra.mxu0 0.0
    %208 = vmatprep.subr.mxu0 0.0
    %209 = vmatpush1.xpose.msra.mxu0 0.0
    %210 = vmatprep.subr.mxu0 0.0
    %211 = vmatpush1.xpose.msra.mxu0 0.0
    %212 = vmatprep.subr.mxu0 0.0
    %213 = vmatpush1.xpose.msra.mxu0 0.0
    %214 = vmatprep.subr.mxu0 0.0
    %215 = vmatpush1.xpose.msra.mxu0 0.0
    %216 = vmatprep.subr.mxu0 0.0
    %217 = vmatpush1.xpose.msra.mxu0 0.0
    %218 = vmatprep.subr.mxu0 0.0
    %219 = vmatpush1.xpose.msra.mxu0 0.0
    %220 = vmatprep.subr.mxu0 0.0
    %221 = vmatpush1.xpose.msra.mxu0 0.0
    %222 = vmatprep.subr.mxu0 0.0
    %223 = vmatpush1.xpose.msra.mxu0 0.0
    %224 = vmatprep.subr.mxu0 0.0
    %225 = vmatpush1.xpose.msra.mxu0 0.0
    %226 = vmatprep.subr.mxu0 0.0
    %227 = vmatpush1.xpose.msra.mxu0 0.0
    %228 = vmatprep.subr.mxu0 0.0
    %229 = vmatpush1.xpose.msra.mxu0 0.0
    %230 = vmatprep.subr.mxu0 0.0
    %231 = vmatpush1.xpose.msra.mxu0 0.0
    %232 = vmatprep.subr.mxu0 0.0
    %233 = vmatpush1.xpose.msra.mxu0 0.0
    %234 = vmatprep.subr.mxu0 0.0
    %235 = vmatpush1.xpose.msra.mxu0 0.0
    %236 = vmatprep.subr.mxu0 0.0
    %237 = vmatpush1.xpose.msra.mxu0 0.0
    %238 = vmatprep.subr.mxu0 0.0
    %239 = vmatpush1.xpose.msra.mxu0 0.0
    %240 = vmatprep.subr.mxu0 0.0
    %241 = vmatpush1.xpose.msra.mxu0 0.0
    %242 = vmatprep.subr.mxu0 0.0
    %243 = vmatpush1.xpose.msra.mxu0 0.0
    %244 = vmatprep.mubr.f32.mxu0 0.0
    %245 = vmatmul.mubr.f32.gmra.mrb[0].mxu0 %v175
    %v246 = vpop.f32.mrb[0].mxu0
    %v247 = vadd.f32 0.0, %v246
    %v248 = vpop.f32.mrb[0].mxu0
    %249 = vmatprep.mubr.f32.mxu0 0.0
    %250 = vmatmul.mubr.f32.gmra.mrb[0].mxu0 %v178
    %v251 = vpop.f32.mrb[0].mxu0
    %v252 = vadd.f32 0.0, %v251
    %v253 = vpop.f32.mrb[0].mxu0
    %254 = vdwg.mxu0
    %v255 = vsel %vm128, -1e+30, %v247
    %v256 = vsel %vm128, -1e+30, %v252
    %vm257 = vcmask 72704
    %v258 = vsel %vm257, %v255, -inf
    %259 = vmax.xlane.f32.xlu0 %v258
    %v260 = vpop.xlane.xlu0 %259
    %vm261 = vcmask 65536
    %v262 = vsel %vm261, %v256, -inf
    %263 = vmax.xlane.f32.xlu0 %v262
    %v264 = vpop.xlane.xlu0 %263
    %vm265 = vcmp.eq.f32.partialorder %v255, %v260
    %vm266 = vcmp.eq.f32.partialorder %v256, %v264
    %v267 = vsel %vm265, %v124, 9
    %v268 = vsel %vm266, %v124, 9
    %v269 = vsel %vm257, %v267, 2147483647
    %v270 = vand.u32 %v269, 65535
    %v271 = vshra.s32 %v269, 16
    %v272 = vcvt.s32.f32 %v270
    %v273 = vcvt.s32.f32 %v271
    %274 = vmin.xlane.f32.xlu0 %v273
    %v275 = vpop.xlane.xlu0 %274
    %vm276 = vcmp.eq.f32.partialorder %v273, %v275
    %v277 = vsel %vm276, %v272, inf
    %278 = vmin.xlane.f32.xlu0 %v277
    %v279 = vpop.xlane.xlu0 %278
    %v280 = vcvt.f32.s32 %v279
    %v281 = vcvt.f32.s32 %v275
    %v282 = vshll.u32 %v281, 16
    %v283 = vadd.s32 %v282, %v280
    %v284 = vsel %vm261, %v268, 2147483647
    %v285 = vand.u32 %v284, 65535
    %v286 = vshra.s32 %v284, 16
    %v287 = vcvt.s32.f32 %v285
    %v288 = vcvt.s32.f32 %v286
    %289 = vmin.xlane.f32.xlu0 %v288
    %v290 = vpop.xlane.xlu0 %289
    %vm291 = vcmp.eq.f32.partialorder %v288, %v290
    %v292 = vsel %vm291, %v287, inf
    %293 = vmin.xlane.f32.xlu0 %v292
    %v294 = vpop.xlane.xlu0 %293
    %v295 = vcvt.f32.s32 %v294
    %v296 = vcvt.f32.s32 %v290
    %v297 = vshll.u32 %v296, 16
    %v298 = vadd.s32 %v297, %v295
    %vm299 = vcmp.eq.s32.totalorder %v124, %v283
    %vm300 = vcmp.eq.s32.totalorder %v124, %v298
    %v301 = vsel %vm299, 1, 0
    %v302 = vsel %vm300, 1, 0
    %v303 = vcvt.s32.f32 %v301
    %v304 = vcvt.s32.f32 %v302
    %v305 = vlaneseq
    %v306 = vshrl.u32 %v305, 7
    %v307 = vsub.s32 0, %v306
    %v308 = vrot.slane %v247, %v307
    %v309 = vmul.f32 %v303, %v308
    %v310 = vmul.f32 %v304, %v308
    %v311 = vsel %vm257, %v309, 0.0
    %312 = vadd.xlane.f32.xlu0 %v311
    %v313 = vpop.xlane.xlu0 %312
    %v314 = vsel %vm261, %v310, 0.0
    %315 = vadd.xlane.f32.xlu0 %v314
    %v316 = vpop.xlane.xlu0 %315
    %v317 = vsel %vm299, -1e+30, %v255
    %v318 = vsel %vm300, -1e+30, %v256
    %v319 = vsel %vm257, %v317, -inf
    %320 = vmax.xlane.f32.xlu0 %v319
    %v321 = vpop.xlane.xlu0 %320
    %v322 = vsel %vm261, %v318, -inf
    %323 = vmax.xlane.f32.xlu0 %v322
    %v324 = vpop.xlane.xlu0 %323
    %vm325 = vcmp.eq.f32.partialorder %v317, %v321
    %vm326 = vcmp.eq.f32.partialorder %v318, %v324
    %v327 = vsel %vm325, %v124, 9
    %v328 = vsel %vm326, %v124, 9
    %v329 = vsel %vm257, %v327, 2147483647
    %v330 = vand.u32 %v329, 65535
    %v331 = vshra.s32 %v329, 16
    %v332 = vcvt.s32.f32 %v330
    %v333 = vcvt.s32.f32 %v331
    %334 = vmin.xlane.f32.xlu0 %v333
    %v335 = vpop.xlane.xlu0 %334
    %vm336 = vcmp.eq.f32.partialorder %v333, %v335
    %v337 = vsel %vm336, %v332, inf
    %338 = vmin.xlane.f32.xlu0 %v337
    %v339 = vpop.xlane.xlu0 %338
    %v340 = vcvt.f32.s32 %v339
    %v341 = vcvt.f32.s32 %v335
    %v342 = vshll.u32 %v341, 16
    %v343 = vadd.s32 %v342, %v340
    %v344 = vsel %vm261, %v328, 2147483647
    %v345 = vand.u32 %v344, 65535
    %v346 = vshra.s32 %v344, 16
    %v347 = vcvt.s32.f32 %v345
    %v348 = vcvt.s32.f32 %v346
    %349 = vmin.xlane.f32.xlu0 %v348
    %v350 = vpop.xlane.xlu0 %349
    %vm351 = vcmp.eq.f32.partialorder %v348, %v350
    %v352 = vsel %vm351, %v347, inf
    %353 = vmin.xlane.f32.xlu0 %v352
    %v354 = vpop.xlane.xlu0 %353
    %v355 = vcvt.f32.s32 %v354
    %v356 = vcvt.f32.s32 %v350
    %v357 = vshll.u32 %v356, 16
    %v358 = vadd.s32 %v357, %v355
    %vm359 = vcmp.eq.s32.totalorder %v124, %v343
    %vm360 = vcmp.eq.s32.totalorder %v124, %v358
    %v361 = vsel %vm359, 1, 0
    %v362 = vsel %vm360, 1, 0
    %v363 = vcvt.s32.f32 %v361
    %v364 = vcvt.s32.f32 %v362
    %v365 = vmul.f32 %v363, %v308
    %v366 = vmul.f32 %v364, %v308
    %v367 = vsel %vm257, %v365, 0.0
    %368 = vadd.xlane.f32.xlu0 %v367
    %v369 = vpop.xlane.xlu0 %368
    %v370 = vsel %vm261, %v366, 0.0
    %371 = vadd.xlane.f32.xlu0 %v370
    %v372 = vpop.xlane.xlu0 %371
    %v373 = vsel %vm359, -1e+30, %v317
    %v374 = vsel %vm360, -1e+30, %v318
    %v375 = vsel %vm257, %v373, -inf
    %376 = vmax.xlane.f32.xlu0 %v375
    %v377 = vpop.xlane.xlu0 %376
    %v378 = vsel %vm261, %v374, -inf
    %379 = vmax.xlane.f32.xlu0 %v378
    %v380 = vpop.xlane.xlu0 %379
    %vm381 = vcmp.eq.f32.partialorder %v373, %v377
    %vm382 = vcmp.eq.f32.partialorder %v374, %v380
    %v383 = vsel %vm381, %v124, 9
    %v384 = vsel %vm382, %v124, 9
    %v385 = vsel %vm257, %v383, 2147483647
    %v386 = vand.u32 %v385, 65535
    %v387 = vshra.s32 %v385, 16
    %v388 = vcvt.s32.f32 %v386
    %v389 = vcvt.s32.f32 %v387
    %390 = vmin.xlane.f32.xlu0 %v389
    %v391 = vpop.xlane.xlu0 %390
    %vm392 = vcmp.eq.f32.partialorder %v389, %v391
    %v393 = vsel %vm392, %v388, inf
    %394 = vmin.xlane.f32.xlu0 %v393
    %v395 = vpop.xlane.xlu0 %394
    %v396 = vcvt.f32.s32 %v395
    %v397 = vcvt.f32.s32 %v391
    %v398 = vshll.u32 %v397, 16
    %v399 = vadd.s32 %v398, %v396
    %v400 = vsel %vm261, %v384, 2147483647
    %v401 = vand.u32 %v400, 65535
    %v402 = vshra.s32 %v400, 16
    %v403 = vcvt.s32.f32 %v401
    %v404 = vcvt.s32.f32 %v402
    %405 = vmin.xlane.f32.xlu0 %v404
    %v406 = vpop.xlane.xlu0 %405
    %vm407 = vcmp.eq.f32.partialorder %v404, %v406
    %v408 = vsel %vm407, %v403, inf
    %409 = vmin.xlane.f32.xlu0 %v408
    %v410 = vpop.xlane.xlu0 %409
    %v411 = vcvt.f32.s32 %v410
    %v412 = vcvt.f32.s32 %v406
    %v413 = vshll.u32 %v412, 16
    %v414 = vadd.s32 %v413, %v411
    %vm415 = vcmp.eq.s32.totalorder %v124, %v399
    %vm416 = vcmp.eq.s32.totalorder %v124, %v414
    %v417 = vsel %vm415, 1, 0
    %v418 = vsel %vm416, 1, 0
    %v419 = vcvt.s32.f32 %v417
    %v420 = vcvt.s32.f32 %v418
    %v421 = vmul.f32 %v419, %v308
    %v422 = vmul.f32 %v420, %v308
    %v423 = vsel %vm257, %v421, 0.0
    %424 = vadd.xlane.f32.xlu0 %v423
    %v425 = vpop.xlane.xlu0 %424
    %v426 = vsel %vm261, %v422, 0.0
    %427 = vadd.xlane.f32.xlu0 %v426
    %v428 = vpop.xlane.xlu0 %427
    %v429 = vsel %vm415, -1e+30, %v373
    %v430 = vsel %vm416, -1e+30, %v374
    %v431 = vsel %vm257, %v429, -inf
    %432 = vmax.xlane.f32.xlu0 %v431
    %v433 = vpop.xlane.xlu0 %432
    %v434 = vsel %vm261, %v430, -inf
    %435 = vmax.xlane.f32.xlu0 %v434
    %v436 = vpop.xlane.xlu0 %435
    %vm437 = vcmp.eq.f32.partialorder %v429, %v433
    %vm438 = vcmp.eq.f32.partialorder %v430, %v436
    %v439 = vsel %vm437, %v124, 9
    %v440 = vsel %vm438, %v124, 9
    %v441 = vsel %vm257, %v439, 2147483647
    %v442 = vand.u32 %v441, 65535
    %v443 = vshra.s32 %v441, 16
    %v444 = vcvt.s32.f32 %v442
    %v445 = vcvt.s32.f32 %v443
    %446 = vmin.xlane.f32.xlu0 %v445
    %v447 = vpop.xlane.xlu0 %446
    %vm448 = vcmp.eq.f32.partialorder %v445, %v447
    %v449 = vsel %vm448, %v444, inf
    %450 = vmin.xlane.f32.xlu0 %v449
    %v451 = vpop.xlane.xlu0 %450
    %v452 = vcvt.f32.s32 %v451
    %v453 = vcvt.f32.s32 %v447
    %v454 = vshll.u32 %v453, 16
    %v455 = vadd.s32 %v454, %v452
    %v456 = vsel %vm261, %v440, 2147483647
    %v457 = vand.u32 %v456, 65535
    %v458 = vshra.s32 %v456, 16
    %v459 = vcvt.s32.f32 %v457
    %v460 = vcvt.s32.f32 %v458
    %461 = vmin.xlane.f32.xlu0 %v460
    %v462 = vpop.xlane.xlu0 %461
    %vm463 = vcmp.eq.f32.partialorder %v460, %v462
    %v464 = vsel %vm463, %v459, inf
    %465 = vmin.xlane.f32.xlu0 %v464
    %v466 = vpop.xlane.xlu0 %465
    %v467 = vcvt.f32.s32 %v466
    %v468 = vcvt.f32.s32 %v462
    %v469 = vshll.u32 %v468, 16
    %v470 = vadd.s32 %v469, %v467
    %vm471 = vcmp.eq.s32.totalorder %v124, %v455
    %vm472 = vcmp.eq.s32.totalorder %v124, %v470
    %v473 = vsel %vm471, 1, 0
    %v474 = vsel %vm472, 1, 0
    %v475 = vcvt.s32.f32 %v473
    %v476 = vcvt.s32.f32 %v474
    %v477 = vmul.f32 %v475, %v308
    %v478 = vmul.f32 %v476, %v308
    %v479 = vsel %vm257, %v477, 0.0
    %480 = vadd.xlane.f32.xlu0 %v479
    %v481 = vpop.xlane.xlu0 %480
    %v482 = vsel %vm261, %v478, 0.0
    %483 = vadd.xlane.f32.xlu0 %v482
    %v484 = vpop.xlane.xlu0 %483
    %v485 = vsel %vm471, -1e+30, %v429
    %v486 = vsel %vm472, -1e+30, %v430
    %v487 = vsel %vm257, %v485, -inf
    %488 = vmax.xlane.f32.xlu0 %v487
    %v489 = vpop.xlane.xlu0 %488
    %v490 = vsel %vm261, %v486, -inf
    %491 = vmax.xlane.f32.xlu0 %v490
    %v492 = vpop.xlane.xlu0 %491
    %vm493 = vcmp.eq.f32.partialorder %v485, %v489
    %vm494 = vcmp.eq.f32.partialorder %v486, %v492
    %v495 = vsel %vm493, %v124, 9
    %v496 = vsel %vm494, %v124, 9
    %v497 = vsel %vm257, %v495, 2147483647
    %v498 = vand.u32 %v497, 65535
    %v499 = vshra.s32 %v497, 16
    %v500 = vcvt.s32.f32 %v498
    %v501 = vcvt.s32.f32 %v499
    %502 = vmin.xlane.f32.xlu0 %v501
    %v503 = vpop.xlane.xlu0 %502
    %vm504 = vcmp.eq.f32.partialorder %v501, %v503
    %v505 = vsel %vm504, %v500, inf
    %506 = vmin.xlane.f32.xlu0 %v505
    %v507 = vpop.xlane.xlu0 %506
    %v508 = vcvt.f32.s32 %v507
    %v509 = vcvt.f32.s32 %v503
    %v510 = vshll.u32 %v509, 16
    %v511 = vadd.s32 %v510, %v508
    %v512 = vsel %vm261, %v496, 2147483647
    %v513 = vand.u32 %v512, 65535
    %v514 = vshra.s32 %v512, 16
    %v515 = vcvt.s32.f32 %v513
    %v516 = vcvt.s32.f32 %v514
    %517 = vmin.xlane.f32.xlu0 %v516
    %v518 = vpop.xlane.xlu0 %517
    %vm519 = vcmp.eq.f32.partialorder %v516, %v518
    %v520 = vsel %vm519, %v515, inf
    %521 = vmin.xlane.f32.xlu0 %v520
    %v522 = vpop.xlane.xlu0 %521
    %v523 = vcvt.f32.s32 %v522
    %v524 = vcvt.f32.s32 %v518
    %v525 = vshll.u32 %v524, 16
    %v526 = vadd.s32 %v525, %v523
    %vm527 = vcmp.eq.s32.totalorder %v124, %v511
    %vm528 = vcmp.eq.s32.totalorder %v124, %v526
    %v529 = vsel %vm527, 1, 0
    %v530 = vsel %vm528, 1, 0
    %v531 = vcvt.s32.f32 %v529
    %v532 = vcvt.s32.f32 %v530
    %v533 = vmul.f32 %v531, %v308
    %v534 = vmul.f32 %v532, %v308
    %v535 = vsel %vm257, %v533, 0.0
    %536 = vadd.xlane.f32.xlu0 %v535
    %v537 = vpop.xlane.xlu0 %536
    %v538 = vsel %vm261, %v534, 0.0
    %539 = vadd.xlane.f32.xlu0 %v538
    %v540 = vpop.xlane.xlu0 %539
    %v541 = vsel %vm527, -1e+30, %v485
    %v542 = vsel %vm528, -1e+30, %v486
    %v543 = vsel %vm257, %v541, -inf
    %544 = vmax.xlane.f32.xlu0 %v543
    %v545 = vpop.xlane.xlu0 %544
    %v546 = vsel %vm261, %v542, -inf
    %547 = vmax.xlane.f32.xlu0 %v546
    %v548 = vpop.xlane.xlu0 %547
    %vm549 = vcmp.eq.f32.partialorder %v541, %v545
    %vm550 = vcmp.eq.f32.partialorder %v542, %v548
    %v551 = vsel %vm549, %v124, 9
    %v552 = vsel %vm550, %v124, 9
    %v553 = vsel %vm257, %v551, 2147483647
    %v554 = vand.u32 %v553, 65535
    %v555 = vshra.s32 %v553, 16
    %v556 = vcvt.s32.f32 %v554
    %v557 = vcvt.s32.f32 %v555
    %558 = vmin.xlane.f32.xlu0 %v557
    %v559 = vpop.xlane.xlu0 %558
    %vm560 = vcmp.eq.f32.partialorder %v557, %v559
    %v561 = vsel %vm560, %v556, inf
    %562 = vmin.xlane.f32.xlu0 %v561
    %v563 = vpop.xlane.xlu0 %562
    %v564 = vcvt.f32.s32 %v563
    %v565 = vcvt.f32.s32 %v559
    %v566 = vshll.u32 %v565, 16
    %v567 = vadd.s32 %v566, %v564
    %v568 = vsel %vm261, %v552, 2147483647
    %v569 = vand.u32 %v568, 65535
    %v570 = vshra.s32 %v568, 16
    %v571 = vcvt.s32.f32 %v569
    %v572 = vcvt.s32.f32 %v570
    %573 = vmin.xlane.f32.xlu0 %v572
    %v574 = vpop.xlane.xlu0 %573
    %vm575 = vcmp.eq.f32.partialorder %v572, %v574
    %v576 = vsel %vm575, %v571, inf
    %577 = vmin.xlane.f32.xlu0 %v576
    %v578 = vpop.xlane.xlu0 %577
    %v579 = vcvt.f32.s32 %v578
    %v580 = vcvt.f32.s32 %v574
    %v581 = vshll.u32 %v580, 16
    %v582 = vadd.s32 %v581, %v579
    %vm583 = vcmp.eq.s32.totalorder %v124, %v567
    %vm584 = vcmp.eq.s32.totalorder %v124, %v582
    %v585 = vsel %vm583, 1, 0
    %v586 = vsel %vm584, 1, 0
    %v587 = vcvt.s32.f32 %v585
    %v588 = vcvt.s32.f32 %v586
    %v589 = vmul.f32 %v587, %v308
    %v590 = vmul.f32 %v588, %v308
    %v591 = vsel %vm257, %v589, 0.0
    %592 = vadd.xlane.f32.xlu0 %v591
    %v593 = vpop.xlane.xlu0 %592
    %v594 = vsel %vm261, %v590, 0.0
    %595 = vadd.xlane.f32.xlu0 %v594
    %v596 = vpop.xlane.xlu0 %595
    %v597 = vsel %vm583, -1e+30, %v541
    %v598 = vsel %vm584, -1e+30, %v542
    %v599 = vsel %vm257, %v597, -inf
    %600 = vmax.xlane.f32.xlu0 %v599
    %v601 = vpop.xlane.xlu0 %600
    %v602 = vsel %vm261, %v598, -inf
    %603 = vmax.xlane.f32.xlu0 %v602
    %v604 = vpop.xlane.xlu0 %603
    %vm605 = vcmp.eq.f32.partialorder %v597, %v601
    %vm606 = vcmp.eq.f32.partialorder %v598, %v604
    %v607 = vsel %vm605, %v124, 9
    %v608 = vsel %vm606, %v124, 9
    %v609 = vsel %vm257, %v607, 2147483647
    %v610 = vand.u32 %v609, 65535
    %v611 = vshra.s32 %v609, 16
    %v612 = vcvt.s32.f32 %v610
    %v613 = vcvt.s32.f32 %v611
    %614 = vmin.xlane.f32.xlu0 %v613
    %v615 = vpop.xlane.xlu0 %614
    %vm616 = vcmp.eq.f32.partialorder %v613, %v615
    %v617 = vsel %vm616, %v612, inf
    %618 = vmin.xlane.f32.xlu0 %v617
    %v619 = vpop.xlane.xlu0 %618
    %v620 = vcvt.f32.s32 %v619
    %v621 = vcvt.f32.s32 %v615
    %v622 = vshll.u32 %v621, 16
    %v623 = vadd.s32 %v622, %v620
    %v624 = vsel %vm261, %v608, 2147483647
    %v625 = vand.u32 %v624, 65535
    %v626 = vshra.s32 %v624, 16
    %v627 = vcvt.s32.f32 %v625
    %v628 = vcvt.s32.f32 %v626
    %629 = vmin.xlane.f32.xlu0 %v628
    %v630 = vpop.xlane.xlu0 %629
    %vm631 = vcmp.eq.f32.partialorder %v628, %v630
    %v632 = vsel %vm631, %v627, inf
    %633 = vmin.xlane.f32.xlu0 %v632
    %v634 = vpop.xlane.xlu0 %633
    %v635 = vcvt.f32.s32 %v634
    %v636 = vcvt.f32.s32 %v630
    %v637 = vshll.u32 %v636, 16
    %v638 = vadd.s32 %v637, %v635
    %vm639 = vcmp.eq.s32.totalorder %v124, %v623
    %vm640 = vcmp.eq.s32.totalorder %v124, %v638
    %v641 = vsel %vm639, 1, 0
    %v642 = vsel %vm640, 1, 0
    %v643 = vcvt.s32.f32 %v641
    %v644 = vcvt.s32.f32 %v642
    %v645 = vmul.f32 %v643, %v308
    %v646 = vmul.f32 %v644, %v308
    %v647 = vsel %vm257, %v645, 0.0
    %648 = vadd.xlane.f32.xlu0 %v647
    %v649 = vpop.xlane.xlu0 %648
    %v650 = vsel %vm261, %v646, 0.0
    %651 = vadd.xlane.f32.xlu0 %v650
    %v652 = vpop.xlane.xlu0 %651
    %v653 = vsel %vm639, -1e+30, %v597
    %v654 = vsel %vm640, -1e+30, %v598
    %v655 = vsel %vm257, %v653, -inf
    %656 = vmax.xlane.f32.xlu0 %v655
    %v657 = vpop.xlane.xlu0 %656
    %v658 = vsel %vm261, %v654, -inf
    %659 = vmax.xlane.f32.xlu0 %v658
    %v660 = vpop.xlane.xlu0 %659
    %vm661 = vcmp.eq.f32.partialorder %v653, %v657
    %vm662 = vcmp.eq.f32.partialorder %v654, %v660
    %v663 = vsel %vm661, %v124, 9
    %v664 = vsel %vm662, %v124, 9
    %v665 = vsel %vm257, %v663, 2147483647
    %v666 = vand.u32 %v665, 65535
    %v667 = vshra.s32 %v665, 16
    %v668 = vcvt.s32.f32 %v666
    %v669 = vcvt.s32.f32 %v667
    %670 = vmin.xlane.f32.xlu0 %v669
    %v671 = vpop.xlane.xlu0 %670
    %vm672 = vcmp.eq.f32.partialorder %v669, %v671
    %v673 = vsel %vm672, %v668, inf
    %674 = vmin.xlane.f32.xlu0 %v673
    %v675 = vpop.xlane.xlu0 %674
    %v676 = vcvt.f32.s32 %v675
    %v677 = vcvt.f32.s32 %v671
    %v678 = vshll.u32 %v677, 16
    %v679 = vadd.s32 %v678, %v676
    %v680 = vsel %vm261, %v664, 2147483647
    %v681 = vand.u32 %v680, 65535
    %v682 = vshra.s32 %v680, 16
    %v683 = vcvt.s32.f32 %v681
    %v684 = vcvt.s32.f32 %v682
    %685 = vmin.xlane.f32.xlu0 %v684
    %v686 = vpop.xlane.xlu0 %685
    %vm687 = vcmp.eq.f32.partialorder %v684, %v686
    %v688 = vsel %vm687, %v683, inf
    %689 = vmin.xlane.f32.xlu0 %v688
    %v690 = vpop.xlane.xlu0 %689
    %v691 = vcvt.f32.s32 %v690
    %v692 = vcvt.f32.s32 %v686
    %v693 = vshll.u32 %v692, 16
    %v694 = vadd.s32 %v693, %v691
    %vm695 = vcmp.eq.s32.totalorder %v124, %v679
    %vm696 = vcmp.eq.s32.totalorder %v124, %v694
    %v697 = vsel %vm695, 1, 0
    %v698 = vsel %vm696, 1, 0
    %v699 = vcvt.s32.f32 %v697
    %v700 = vcvt.s32.f32 %v698
    %v701 = vmul.f32 %v699, %v308
    %v702 = vmul.f32 %v700, %v308
    %v703 = vsel %vm257, %v701, 0.0
    %704 = vadd.xlane.f32.xlu0 %v703
    %v705 = vpop.xlane.xlu0 %704
    %v706 = vsel %vm261, %v702, 0.0
    %707 = vadd.xlane.f32.xlu0 %v706
    %v708 = vpop.xlane.xlu0 %707
    %vm709 = vcmask 7168
    %v710 = vsel %vm709, %v260, %v321
    %v711 = vsel %vm709, %v264, %v324
    %vm712 = vcmask 15360
    %v713 = vsel %vm712, %v710, %v377
    %v714 = vsel %vm712, %v711, %v380
    %vm715 = vcmask 23552
    %v716 = vsel %vm715, %v713, %v433
    %v717 = vsel %vm715, %v714, %v436
    %vm718 = vcmask 31744
    %v719 = vsel %vm718, %v716, %v489
    %v720 = vsel %vm718, %v717, %v492
    %vm721 = vcmask 39936
    %v722 = vsel %vm721, %v719, %v545
    %v723 = vsel %vm721, %v720, %v548
    %vm724 = vcmask 48128
    %v725 = vsel %vm724, %v722, %v601
    %v726 = vsel %vm724, %v723, %v604
    %vm727 = vcmask 56320
    %v728 = vsel %vm727, %v725, %v657
    %v729 = vsel %vm727, %v726, %v660
    %v730 = vsel %vm709, %v313, %v369
    %v731 = vsel %vm709, %v316, %v372
    %v732 = vsel %vm712, %v730, %v425
    %v733 = vsel %vm712, %v731, %v428
    %v734 = vsel %vm715, %v732, %v481
    %v735 = vsel %vm715, %v733, %v484
    %v736 = vsel %vm718, %v734, %v537
    %v737 = vsel %vm718, %v735, %v540
    %v738 = vsel %vm721, %v736, %v593
    %v739 = vsel %vm721, %v737, %v596
    %v740 = vsel %vm724, %v738, %v649
    %v741 = vsel %vm724, %v739, %v652
    %v742 = vsel %vm727, %v740, %v705
    %v743 = vsel %vm727, %v741, %v708
    %746 = vrot.lane.b32.xlu0 %v728, 1
    %v747 = vpop.permute.xlu0 %746
    %748 = vrot.lane.b32.xlu0 %v729, 1
    %v749 = vpop.permute.xlu0 %748
    %754 = vrot.lane.b32.xlu0 %v742, 9
    %v755 = vpop.permute.xlu0 %754
    %756 = vrot.lane.b32.xlu0 %v743, 9
    %v757 = vpop.permute.xlu0 %756
    %v760 = vsel %vm709, %v247, %v747
    %v761 = vsel %vm709, %v252, %v749
    %v762 = vsel %vm257, %v760, %v755
    %v763 = vsel %vm257, %v761, %v757
    %s764 = sld [smem:[#allocation2]]
    %s765 = sld [smem:[#allocation6]]
    %vm766 = vcmask 138240
    %v767 = vsel %vm766, %v762, 0.0
    %768 = vadd.xlane.f32.xlu0 %v767
    %v769 = vpop.xlane.xlu0 %768
    %vm770 = vcmask 131072
    %v771 = vsel %vm770, %v763, 0.0
    %772 = vadd.xlane.f32.xlu0 %v771
    %v773 = vpop.xlane.xlu0 %772
    %v774 = vmul.f32 %v769, 0.05882353
    %v775 = vmul.f32 %v773, 0.05882353
    %v776 = vmul.f32 %v762, %v762
    %v777 = vmul.f32 %v763, %v763
    %v778 = vsel %vm766, %v776, 0.0
    %779 = vadd.xlane.f32.xlu0 %v778
    %v780 = vpop.xlane.xlu0 %779
    %v781 = vsel %vm770, %v777, 0.0
    %782 = vadd.xlane.f32.xlu0 %v781
    %v783 = vpop.xlane.xlu0 %782
    %v784 = vmul.f32 %v780, 0.05882353
    %v785 = vmul.f32 %v783, 0.05882353
    %v786 = vmul.f32 %v774, %v774
    %v787 = vmul.f32 %v775, %v775
    %v788 = vsub.f32 %v784, %v786
    %v789 = vsub.f32 %v785, %v787
    %v790 = vmax.f32 %v788, 0.0
    %v791 = vmax.f32 %v789, 0.0
    %v792 = vsub.f32 %v762, %v774
    %v793 = vsub.f32 %v763, %v775
    %v794 = vadd.f32 %v790, 1e-05
    %v795 = vadd.f32 %v791, 1e-05
    %v796 = vrsqrt.pop %v794
    %v797 = vrsqrt.pop %v795
    %v798 = vmul.f32 %v792, %v796
    %v799 = vmul.f32 %v793, %v797
    %v800 = vstv %s764
    %v801 = vmul.f32 %v798, %v800
    %v802 = vmul.f32 %v799, %v800
    %v803 = vstv %s765
    %v804 = vadd.f32 %v801, %v803
    %v805 = vadd.f32 %v802, %v803
    %v806 = vpack.c.bf16 %v805, %v804
    %v807 = vld [vmem:[%s2] sm:$0xff]
    %v808 = vld [vmem:[%s2 + $0x8] sm:$0xff]
    %v809 = vld [vmem:[%s2 + $0x10] sm:$0x11]
    %v810 = vld [vmem:[%s3] sm:$0x3]
    %v812 = vlaneseq
    %v813 = vshrl.u32 %v812, 7
    %v814 = vsub.s32 0, %v813
    %v815 = vrot.slane %v810, %v814
    %v816 = vlaneseq
    %v817 = vshrl.u32 %v816, 7
    %v818 = vsub.s32 1, %v817
    %v819 = vrot.slane %v810, %v818
    %v825 = vunpack.c.l.b16 %v807
    %v826 = vunpack.c.h.b16 %v807
    %v827 = vunpack.c.l.b16 %v808
    %v828 = vunpack.c.h.b16 %v808
    %v829 = vunpack.c.l.b16 %v809
    %v830 = vunpack.c.h.b16 %v809
    %v831 = vpack.c.b16 %v827, %v825
    %v832 = vpack.c.b16 %v828, %v826
    %v833 = vpack.c.b16 %v829, %v829
    %v834 = vpack.c.b16 %v830, %v830
    %v838 = vsel %vm766, %v806, 0
    %v840 = vsel 0, 4294967295, 65535
    %v841 = vsel %vm142, %v840, 0
    %v843 = vand.u32 %v833, %v841
    %v846 = vand.u32 %v834, %v841
    %848 = vmatprep.subr.bf16.mxu0 %v832
    %849 = vmatpush1.bf16.msra.mxu0 %v831
    %850 = vmatprep.subr.bf16.mxu0 %v846
    %851 = vmatpush1.bf16.msra.mxu0 %v843
    %852 = vmatprep.subr.bf16.mxu0 0
    %853 = vmatpush1.bf16.msra.mxu0 0
    %854 = vmatprep.subr.bf16.mxu0 0
    %855 = vmatpush1.bf16.msra.mxu0 0
    %856 = vmatprep.subr.bf16.mxu0 0
    %857 = vmatpush1.bf16.msra.mxu0 0
    %858 = vmatprep.subr.bf16.mxu0 0
    %859 = vmatpush1.bf16.msra.mxu0 0
    %860 = vmatprep.subr.bf16.mxu0 0
    %861 = vmatpush1.bf16.msra.mxu0 0
    %862 = vmatprep.subr.bf16.mxu0 0
    %863 = vmatpush1.bf16.msra.mxu0 0
    %864 = vmatprep.subr.bf16.mxu0 0
    %865 = vmatpush1.bf16.msra.mxu0 0
    %866 = vmatprep.subr.bf16.mxu0 0
    %867 = vmatpush1.bf16.msra.mxu0 0
    %868 = vmatprep.subr.bf16.mxu0 0
    %869 = vmatpush1.bf16.msra.mxu0 0
    %870 = vmatprep.subr.bf16.mxu0 0
    %871 = vmatpush1.bf16.msra.mxu0 0
    %872 = vmatprep.subr.bf16.mxu0 0
    %873 = vmatpush1.bf16.msra.mxu0 0
    %874 = vmatprep.subr.bf16.mxu0 0
    %875 = vmatpush1.bf16.msra.mxu0 0
    %876 = vmatprep.subr.bf16.mxu0 0
    %877 = vmatpush1.bf16.msra.mxu0 0
    %878 = vmatprep.subr.bf16.mxu0 0
    %879 = vmatpush1.bf16.msra.mxu0 0
    %880 = vmatprep.mubr.bf16.mxu0 0
    %881 = vmatmul.mubr.bf16.gmra.mrb[0].mxu0 %v838
    %v882 = vpop.f32.mrb[0].mxu0
    %v883 = vadd.f32 %v815, %v882
    %v884 = vpop.f32.mrb[0].mxu0
    %v885 = vadd.f32 %v819, %v884
    %v886 = vpop.f32.mrb[0].mxu0
    %v887 = vadd.f32 %v815, %v886
    %v888 = vpop.f32.mrb[0].mxu0
    %v889 = vadd.f32 %v819, %v888
    %890 = vdwg.mxu0
    %v891 = vmax.f32 %v883, 0.0
    %v892 = vmax.f32 %v885, 0.0
    %v893 = vmax.f32 %v887, 0.0
    %v894 = vmax.f32 %v889, 0.0
    %s895 = sld [smem:[#allocation2 + $0x1]]
    %s896 = sld [smem:[#allocation6 + $0x1]]
    %v897 = vadd.f32 %v891, %v892
    %898 = vadd.xlane.f32.xlu0 %v897
    %v899 = vpop.xlane.xlu0 %898
    %v900 = vsel %vm142, %v893, 0.0
    %v901 = vsel %vm142, %v894, 0.0
    %v902 = vadd.f32 %v900, %v901
    %903 = vadd.xlane.f32.xlu0 %v902
    %v904 = vpop.xlane.xlu0 %903
    %v905 = vmul.f32 %v899, 0.00390625
    %v906 = vmul.f32 %v904, 0.00390625
    %v907 = vmul.f32 %v891, %v891
    %v908 = vmul.f32 %v892, %v892
    %v909 = vmul.f32 %v893, %v893
    %v910 = vmul.f32 %v894, %v894
    %v911 = vadd.f32 %v907, %v908
    %912 = vadd.xlane.f32.xlu0 %v911
    %v913 = vpop.xlane.xlu0 %912
    %v914 = vsel %vm142, %v909, 0.0
    %v915 = vsel %vm142, %v910, 0.0
    %v916 = vadd.f32 %v914, %v915
    %917 = vadd.xlane.f32.xlu0 %v916
    %v918 = vpop.xlane.xlu0 %917
    %v919 = vmul.f32 %v913, 0.00390625
    %v920 = vmul.f32 %v918, 0.00390625
    %v921 = vmul.f32 %v905, %v905
    %v922 = vmul.f32 %v906, %v906
    %v923 = vsub.f32 %v919, %v921
    %v924 = vsub.f32 %v920, %v922
    %v925 = vmax.f32 %v923, 0.0
    %v926 = vmax.f32 %v924, 0.0
    %v927 = vsub.f32 %v891, %v905
    %v928 = vsub.f32 %v892, %v905
    %v929 = vsub.f32 %v893, %v906
    %v930 = vsub.f32 %v894, %v906
    %v931 = vadd.f32 %v925, 1e-05
    %v932 = vadd.f32 %v926, 1e-05
    %v933 = vrsqrt.pop %v931
    %v934 = vrsqrt.pop %v932
    %v935 = vmul.f32 %v927, %v933
    %v936 = vmul.f32 %v928, %v933
    %v937 = vmul.f32 %v929, %v934
    %v938 = vmul.f32 %v930, %v934
    %v939 = vstv %s895
    %v940 = vmul.f32 %v935, %v939
    %v941 = vmul.f32 %v936, %v939
    %v942 = vmul.f32 %v937, %v939
    %v943 = vmul.f32 %v938, %v939
    %v944 = vstv %s896
    %v945 = vadd.f32 %v940, %v944
    %v946 = vadd.f32 %v941, %v944
    %v947 = vadd.f32 %v942, %v944
    %v948 = vadd.f32 %v943, %v944
    %v949 = vpack.c.bf16 %v947, %v945
    %v950 = vpack.c.bf16 %v948, %v946
    %v951 = vld [vmem:[%s4] sm:$0xff]
    %v952 = vld [vmem:[%s4 + $0x8] sm:$0xff]
    %v953 = vld [vmem:[%s4 + $0x10] sm:$0xff]
    %v954 = vld [vmem:[%s4 + $0x18] sm:$0xff]
    %v955 = vld [vmem:[%s4 + $0x20] sm:$0xff]
    %v956 = vld [vmem:[%s4 + $0x28] sm:$0xff]
    %v957 = vld [vmem:[%s4 + $0x30] sm:$0xff]
    %v958 = vld [vmem:[%s4 + $0x38] sm:$0xff]
    %v959 = vld [vmem:[%s4 + $0x40] sm:$0xff]
    %v960 = vld [vmem:[%s4 + $0x48] sm:$0xff]
    %v961 = vld [vmem:[%s4 + $0x50] sm:$0xff]
    %v962 = vld [vmem:[%s4 + $0x58] sm:$0xff]
    %v963 = vld [vmem:[%s4 + $0x60] sm:$0xff]
    %v964 = vld [vmem:[%s4 + $0x68] sm:$0xff]
    %v965 = vld [vmem:[%s4 + $0x70] sm:$0xff]
    %v966 = vld [vmem:[%s4 + $0x78] sm:$0xff]
    %v967 = vld [vmem:[%s4 + $0x80] sm:$0xff]
    %v968 = vld [vmem:[%s4 + $0x88] sm:$0xff]
    %v969 = vld [vmem:[%s4 + $0x90] sm:$0xff]
    %v970 = vld [vmem:[%s4 + $0x98] sm:$0xff]
    %v971 = vld [vmem:[%s4 + $0xa0] sm:$0xff]
    %v972 = vld [vmem:[%s4 + $0xa8] sm:$0xff]
    %v973 = vld [vmem:[%s4 + $0xb0] sm:$0xff]
    %v974 = vld [vmem:[%s4 + $0xb8] sm:$0xff]
    %v975 = vld [vmem:[%s4 + $0xc0] sm:$0xff]
    %v976 = vld [vmem:[%s4 + $0xc8] sm:$0xff]
    %v977 = vld [vmem:[%s4 + $0xd0] sm:$0xff]
    %v978 = vld [vmem:[%s4 + $0xd8] sm:$0xff]
    %v979 = vld [vmem:[%s4 + $0xe0] sm:$0xff]
    %v980 = vld [vmem:[%s4 + $0xe8] sm:$0xff]
    %v981 = vld [vmem:[%s4 + $0xf0] sm:$0xff]
    %v982 = vld [vmem:[%s4 + $0xf8] sm:$0xff]
    %v983 = vld [vmem:[%s5] sm:$0x3]
    %v985 = vlaneseq
    %v986 = vshrl.u32 %v985, 7
    %v987 = vsub.s32 0, %v986
    %v988 = vrot.slane %v983, %v987
    %v989 = vlaneseq
    %v990 = vshrl.u32 %v989, 7
    %v991 = vsub.s32 1, %v990
    %v992 = vrot.slane %v983, %v991
    %v1027 = vunpack.c.l.b16 %v951
    %v1028 = vunpack.c.h.b16 %v951
    %v1029 = vunpack.c.l.b16 %v952
    %v1030 = vunpack.c.h.b16 %v952
    %v1031 = vunpack.c.l.b16 %v953
    %v1032 = vunpack.c.h.b16 %v953
    %v1033 = vunpack.c.l.b16 %v954
    %v1034 = vunpack.c.h.b16 %v954
    %v1035 = vunpack.c.l.b16 %v955
    %v1036 = vunpack.c.h.b16 %v955
    %v1037 = vunpack.c.l.b16 %v956
    %v1038 = vunpack.c.h.b16 %v956
    %v1039 = vunpack.c.l.b16 %v957
    %v1040 = vunpack.c.h.b16 %v957
    %v1041 = vunpack.c.l.b16 %v958
    %v1042 = vunpack.c.h.b16 %v958
    %v1043 = vunpack.c.l.b16 %v959
    %v1044 = vunpack.c.h.b16 %v959
    %v1045 = vunpack.c.l.b16 %v960
    %v1046 = vunpack.c.h.b16 %v960
    %v1047 = vunpack.c.l.b16 %v961
    %v1048 = vunpack.c.h.b16 %v961
    %v1049 = vunpack.c.l.b16 %v962
    %v1050 = vunpack.c.h.b16 %v962
    %v1051 = vunpack.c.l.b16 %v963
    %v1052 = vunpack.c.h.b16 %v963
    %v1053 = vunpack.c.l.b16 %v964
    %v1054 = vunpack.c.h.b16 %v964
    %v1055 = vunpack.c.l.b16 %v965
    %v1056 = vunpack.c.h.b16 %v965
    %v1057 = vunpack.c.l.b16 %v966
    %v1058 = vunpack.c.h.b16 %v966
    %v1059 = vunpack.c.l.b16 %v967
    %v1060 = vunpack.c.h.b16 %v967
    %v1061 = vunpack.c.l.b16 %v968
    %v1062 = vunpack.c.h.b16 %v968
    %v1063 = vunpack.c.l.b16 %v969
    %v1064 = vunpack.c.h.b16 %v969
    %v1065 = vunpack.c.l.b16 %v970
    %v1066 = vunpack.c.h.b16 %v970
    %v1067 = vunpack.c.l.b16 %v971
    %v1068 = vunpack.c.h.b16 %v971
    %v1069 = vunpack.c.l.b16 %v972
    %v1070 = vunpack.c.h.b16 %v972
    %v1071 = vunpack.c.l.b16 %v973
    %v1072 = vunpack.c.h.b16 %v973
    %v1073 = vunpack.c.l.b16 %v974
    %v1074 = vunpack.c.h.b16 %v974
    %v1075 = vunpack.c.l.b16 %v975
    %v1076 = vunpack.c.h.b16 %v975
    %v1077 = vunpack.c.l.b16 %v976
    %v1078 = vunpack.c.h.b16 %v976
    %v1079 = vunpack.c.l.b16 %v977
    %v1080 = vunpack.c.h.b16 %v977
    %v1081 = vunpack.c.l.b16 %v978
    %v1082 = vunpack.c.h.b16 %v978
    %v1083 = vunpack.c.l.b16 %v979
    %v1084 = vunpack.c.h.b16 %v979
    %v1085 = vunpack.c.l.b16 %v980
    %v1086 = vunpack.c.h.b16 %v980
    %v1087 = vunpack.c.l.b16 %v981
    %v1088 = vunpack.c.h.b16 %v981
    %v1089 = vunpack.c.l.b16 %v982
    %v1090 = vunpack.c.h.b16 %v982
    %v1091 = vpack.c.b16 %v1029, %v1027
    %v1092 = vpack.c.b16 %v1030, %v1028
    %v1093 = vpack.c.b16 %v1033, %v1031
    %v1094 = vpack.c.b16 %v1034, %v1032
    %v1095 = vpack.c.b16 %v1037, %v1035
    %v1096 = vpack.c.b16 %v1038, %v1036
    %v1097 = vpack.c.b16 %v1041, %v1039
    %v1098 = vpack.c.b16 %v1042, %v1040
    %v1099 = vpack.c.b16 %v1045, %v1043
    %v1100 = vpack.c.b16 %v1046, %v1044
    %v1101 = vpack.c.b16 %v1049, %v1047
    %v1102 = vpack.c.b16 %v1050, %v1048
    %v1103 = vpack.c.b16 %v1053, %v1051
    %v1104 = vpack.c.b16 %v1054, %v1052
    %v1105 = vpack.c.b16 %v1057, %v1055
    %v1106 = vpack.c.b16 %v1058, %v1056
    %v1107 = vpack.c.b16 %v1061, %v1059
    %v1108 = vpack.c.b16 %v1062, %v1060
    %v1109 = vpack.c.b16 %v1065, %v1063
    %v1110 = vpack.c.b16 %v1066, %v1064
    %v1111 = vpack.c.b16 %v1069, %v1067
    %v1112 = vpack.c.b16 %v1070, %v1068
    %v1113 = vpack.c.b16 %v1073, %v1071
    %v1114 = vpack.c.b16 %v1074, %v1072
    %v1115 = vpack.c.b16 %v1077, %v1075
    %v1116 = vpack.c.b16 %v1078, %v1076
    %v1117 = vpack.c.b16 %v1081, %v1079
    %v1118 = vpack.c.b16 %v1082, %v1080
    %v1119 = vpack.c.b16 %v1085, %v1083
    %v1120 = vpack.c.b16 %v1086, %v1084
    %v1121 = vpack.c.b16 %v1089, %v1087
    %v1122 = vpack.c.b16 %v1090, %v1088
    %1155 = vmatprep.subr.bf16.mxu0 %v1092
    %1156 = vmatpush1.bf16.msra.mxu0 %v1091
    %1157 = vmatprep.subr.bf16.mxu0 %v1094
    %1158 = vmatpush1.bf16.msra.mxu0 %v1093
    %1159 = vmatprep.subr.bf16.mxu0 %v1096
    %1160 = vmatpush1.bf16.msra.mxu0 %v1095
    %1161 = vmatprep.subr.bf16.mxu0 %v1098
    %1162 = vmatpush1.bf16.msra.mxu0 %v1097
    %1163 = vmatprep.subr.bf16.mxu0 %v1100
    %1164 = vmatpush1.bf16.msra.mxu0 %v1099
    %1165 = vmatprep.subr.bf16.mxu0 %v1102
    %1166 = vmatpush1.bf16.msra.mxu0 %v1101
    %1167 = vmatprep.subr.bf16.mxu0 %v1104
    %1168 = vmatpush1.bf16.msra.mxu0 %v1103
    %1169 = vmatprep.subr.bf16.mxu0 %v1106
    %1170 = vmatpush1.bf16.msra.mxu0 %v1105
    %1171 = vmatprep.subr.bf16.mxu0 %v1108
    %1172 = vmatpush1.bf16.msra.mxu0 %v1107
    %1173 = vmatprep.subr.bf16.mxu0 %v1110
    %1174 = vmatpush1.bf16.msra.mxu0 %v1109
    %1175 = vmatprep.subr.bf16.mxu0 %v1112
    %1176 = vmatpush1.bf16.msra.mxu0 %v1111
    %1177 = vmatprep.subr.bf16.mxu0 %v1114
    %1178 = vmatpush1.bf16.msra.mxu0 %v1113
    %1179 = vmatprep.subr.bf16.mxu0 %v1116
    %1180 = vmatpush1.bf16.msra.mxu0 %v1115
    %1181 = vmatprep.subr.bf16.mxu0 %v1118
    %1182 = vmatpush1.bf16.msra.mxu0 %v1117
    %1183 = vmatprep.subr.bf16.mxu0 %v1120
    %1184 = vmatpush1.bf16.msra.mxu0 %v1119
    %1185 = vmatprep.subr.bf16.mxu0 %v1122
    %1186 = vmatpush1.bf16.msra.mxu0 %v1121
    %1187 = vmatprep.mubr.bf16.mxu0 %v950
    %1188 = vmatmul.mubr.bf16.gmra.mrb[0].mxu0 %v949
    %v1189 = vpop.f32.mrb[0].mxu0
    %v1190 = vadd.f32 %v988, %v1189
    %v1191 = vpop.f32.mrb[0].mxu0
    %v1192 = vadd.f32 %v992, %v1191
    %v1193 = vpop.f32.mrb[0].mxu0
    %v1194 = vadd.f32 %v988, %v1193
    %v1195 = vpop.f32.mrb[0].mxu0
    %v1196 = vadd.f32 %v992, %v1195
    %1197 = vdwg.mxu0
    %v1198 = vmax.f32 %v1190, 0.0
    %v1199 = vmax.f32 %v1192, 0.0
    %v1200 = vmax.f32 %v1194, 0.0
    %v1201 = vmax.f32 %v1196, 0.0
    %s1202 = sld [smem:[#allocation2 + $0x2]]
    %s1203 = sld [smem:[#allocation6 + $0x2]]
    %v1204 = vadd.f32 %v1198, %v1199
    %1205 = vadd.xlane.f32.xlu0 %v1204
    %v1206 = vpop.xlane.xlu0 %1205
    %v1207 = vsel %vm142, %v1200, 0.0
    %v1208 = vsel %vm142, %v1201, 0.0
    %v1209 = vadd.f32 %v1207, %v1208
    %1210 = vadd.xlane.f32.xlu0 %v1209
    %v1211 = vpop.xlane.xlu0 %1210
    %v1212 = vmul.f32 %v1206, 0.00390625
    %v1213 = vmul.f32 %v1211, 0.00390625
    %v1214 = vmul.f32 %v1198, %v1198
    %v1215 = vmul.f32 %v1199, %v1199
    %v1216 = vmul.f32 %v1200, %v1200
    %v1217 = vmul.f32 %v1201, %v1201
    %v1218 = vadd.f32 %v1214, %v1215
    %1219 = vadd.xlane.f32.xlu0 %v1218
    %v1220 = vpop.xlane.xlu0 %1219
    %v1221 = vsel %vm142, %v1216, 0.0
    %v1222 = vsel %vm142, %v1217, 0.0
    %v1223 = vadd.f32 %v1221, %v1222
    %1224 = vadd.xlane.f32.xlu0 %v1223
    %v1225 = vpop.xlane.xlu0 %1224
    %v1226 = vmul.f32 %v1220, 0.00390625
    %v1227 = vmul.f32 %v1225, 0.00390625
    %v1228 = vmul.f32 %v1212, %v1212
    %v1229 = vmul.f32 %v1213, %v1213
    %v1230 = vsub.f32 %v1226, %v1228
    %v1231 = vsub.f32 %v1227, %v1229
    %v1232 = vmax.f32 %v1230, 0.0
    %v1233 = vmax.f32 %v1231, 0.0
    %v1234 = vsub.f32 %v1198, %v1212
    %v1235 = vsub.f32 %v1199, %v1212
    %v1236 = vsub.f32 %v1200, %v1213
    %v1237 = vsub.f32 %v1201, %v1213
    %v1238 = vadd.f32 %v1232, 1e-05
    %v1239 = vadd.f32 %v1233, 1e-05
    %v1240 = vrsqrt.pop %v1238
    %v1241 = vrsqrt.pop %v1239
    %v1242 = vmul.f32 %v1234, %v1240
    %v1243 = vmul.f32 %v1235, %v1240
    %v1244 = vmul.f32 %v1236, %v1241
    %v1245 = vmul.f32 %v1237, %v1241
    %v1246 = vstv %s1202
    %v1247 = vmul.f32 %v1242, %v1246
    %v1248 = vmul.f32 %v1243, %v1246
    %v1249 = vmul.f32 %v1244, %v1246
    %v1250 = vmul.f32 %v1245, %v1246
    %v1251 = vstv %s1203
    %v1252 = vadd.f32 %v1247, %v1251
    %v1253 = vadd.f32 %v1248, %v1251
    %v1254 = vadd.f32 %v1249, %v1251
    %v1255 = vadd.f32 %v1250, %v1251
    %v1256 = vpack.c.bf16 %v1254, %v1252
    %v1257 = vpack.c.bf16 %v1255, %v1253
    %v1258 = vld [vmem:[%s6] sm:$0xf]
    %v1259 = vld [vmem:[%s6 + $0x4] sm:$0xf]
    %v1260 = vld [vmem:[%s6 + $0x8] sm:$0xf]
    %v1261 = vld [vmem:[%s6 + $0xc] sm:$0xf]
    %v1262 = vld [vmem:[%s6 + $0x10] sm:$0xf]
    %v1263 = vld [vmem:[%s6 + $0x14] sm:$0xf]
    %v1264 = vld [vmem:[%s6 + $0x18] sm:$0xf]
    %v1265 = vld [vmem:[%s6 + $0x1c] sm:$0xf]
    %v1266 = vld [vmem:[%s6 + $0x20] sm:$0xf]
    %v1267 = vld [vmem:[%s6 + $0x24] sm:$0xf]
    %v1268 = vld [vmem:[%s6 + $0x28] sm:$0xf]
    %v1269 = vld [vmem:[%s6 + $0x2c] sm:$0xf]
    %v1270 = vld [vmem:[%s6 + $0x30] sm:$0xf]
    %v1271 = vld [vmem:[%s6 + $0x34] sm:$0xf]
    %v1272 = vld [vmem:[%s6 + $0x38] sm:$0xf]
    %v1273 = vld [vmem:[%s6 + $0x3c] sm:$0xf]
    %v1274 = vld [vmem:[%s6 + $0x40] sm:$0xf]
    %v1275 = vld [vmem:[%s6 + $0x44] sm:$0xf]
    %v1276 = vld [vmem:[%s6 + $0x48] sm:$0xf]
    %v1277 = vld [vmem:[%s6 + $0x4c] sm:$0xf]
    %v1278 = vld [vmem:[%s6 + $0x50] sm:$0xf]
    %v1279 = vld [vmem:[%s6 + $0x54] sm:$0xf]
    %v1280 = vld [vmem:[%s6 + $0x58] sm:$0xf]
    %v1281 = vld [vmem:[%s6 + $0x5c] sm:$0xf]
    %v1282 = vld [vmem:[%s6 + $0x60] sm:$0xf]
    %v1283 = vld [vmem:[%s6 + $0x64] sm:$0xf]
    %v1284 = vld [vmem:[%s6 + $0x68] sm:$0xf]
    %v1285 = vld [vmem:[%s6 + $0x6c] sm:$0xf]
    %v1286 = vld [vmem:[%s6 + $0x70] sm:$0xf]
    %v1287 = vld [vmem:[%s6 + $0x74] sm:$0xf]
    %v1288 = vld [vmem:[%s6 + $0x78] sm:$0xf]
    %v1289 = vld [vmem:[%s6 + $0x7c] sm:$0xf]
    %v1290 = vld [vmem:[%s7] sm:$0x1]
    %v1292 = vlaneseq
    %v1293 = vshrl.u32 %v1292, 7
    %v1294 = vsub.s32 0, %v1293
    %v1295 = vrot.slane %v1290, %v1294
    %v1329 = vunpack.c.l.b16 %v1258
    %v1330 = vunpack.c.l.b16 %v1259
    %v1331 = vunpack.c.l.b16 %v1260
    %v1332 = vunpack.c.l.b16 %v1261
    %v1333 = vunpack.c.l.b16 %v1262
    %v1334 = vunpack.c.l.b16 %v1263
    %v1335 = vunpack.c.l.b16 %v1264
    %v1336 = vunpack.c.l.b16 %v1265
    %v1337 = vunpack.c.l.b16 %v1266
    %v1338 = vunpack.c.l.b16 %v1267
    %v1339 = vunpack.c.l.b16 %v1268
    %v1340 = vunpack.c.l.b16 %v1269
    %v1341 = vunpack.c.l.b16 %v1270
    %v1342 = vunpack.c.l.b16 %v1271
    %v1343 = vunpack.c.l.b16 %v1272
    %v1344 = vunpack.c.l.b16 %v1273
    %v1345 = vunpack.c.l.b16 %v1274
    %v1346 = vunpack.c.l.b16 %v1275
    %v1347 = vunpack.c.l.b16 %v1276
    %v1348 = vunpack.c.l.b16 %v1277
    %v1349 = vunpack.c.l.b16 %v1278
    %v1350 = vunpack.c.l.b16 %v1279
    %v1351 = vunpack.c.l.b16 %v1280
    %v1352 = vunpack.c.l.b16 %v1281
    %v1353 = vunpack.c.l.b16 %v1282
    %v1354 = vunpack.c.l.b16 %v1283
    %v1355 = vunpack.c.l.b16 %v1284
    %v1356 = vunpack.c.l.b16 %v1285
    %v1357 = vunpack.c.l.b16 %v1286
    %v1358 = vunpack.c.l.b16 %v1287
    %v1359 = vunpack.c.l.b16 %v1288
    %v1360 = vunpack.c.l.b16 %v1289
    %v1361 = vpack.c.b16 %v1330, %v1329
    %v1362 = vpack.c.b16 %v1332, %v1331
    %v1363 = vpack.c.b16 %v1334, %v1333
    %v1364 = vpack.c.b16 %v1336, %v1335
    %v1365 = vpack.c.b16 %v1338, %v1337
    %v1366 = vpack.c.b16 %v1340, %v1339
    %v1367 = vpack.c.b16 %v1342, %v1341
    %v1368 = vpack.c.b16 %v1344, %v1343
    %v1369 = vpack.c.b16 %v1346, %v1345
    %v1370 = vpack.c.b16 %v1348, %v1347
    %v1371 = vpack.c.b16 %v1350, %v1349
    %v1372 = vpack.c.b16 %v1352, %v1351
    %v1373 = vpack.c.b16 %v1354, %v1353
    %v1374 = vpack.c.b16 %v1356, %v1355
    %v1375 = vpack.c.b16 %v1358, %v1357
    %v1376 = vpack.c.b16 %v1360, %v1359
    %1393 = vmatprep.subr.bf16.mxu0 0
    %1394 = vmatpush1.bf16.msra.mxu0 %v1361
    %1395 = vmatprep.subr.bf16.mxu0 0
    %1396 = vmatpush1.bf16.msra.mxu0 %v1362
    %1397 = vmatprep.subr.bf16.mxu0 0
    %1398 = vmatpush1.bf16.msra.mxu0 %v1363
    %1399 = vmatprep.subr.bf16.mxu0 0
    %1400 = vmatpush1.bf16.msra.mxu0 %v1364
    %1401 = vmatprep.subr.bf16.mxu0 0
    %1402 = vmatpush1.bf16.msra.mxu0 %v1365
    %1403 = vmatprep.subr.bf16.mxu0 0
    %1404 = vmatpush1.bf16.msra.mxu0 %v1366
    %1405 = vmatprep.subr.bf16.mxu0 0
    %1406 = vmatpush1.bf16.msra.mxu0 %v1367
    %1407 = vmatprep.subr.bf16.mxu0 0
    %1408 = vmatpush1.bf16.msra.mxu0 %v1368
    %1409 = vmatprep.subr.bf16.mxu0 0
    %1410 = vmatpush1.bf16.msra.mxu0 %v1369
    %1411 = vmatprep.subr.bf16.mxu0 0
    %1412 = vmatpush1.bf16.msra.mxu0 %v1370
    %1413 = vmatprep.subr.bf16.mxu0 0
    %1414 = vmatpush1.bf16.msra.mxu0 %v1371
    %1415 = vmatprep.subr.bf16.mxu0 0
    %1416 = vmatpush1.bf16.msra.mxu0 %v1372
    %1417 = vmatprep.subr.bf16.mxu0 0
    %1418 = vmatpush1.bf16.msra.mxu0 %v1373
    %1419 = vmatprep.subr.bf16.mxu0 0
    %1420 = vmatpush1.bf16.msra.mxu0 %v1374
    %1421 = vmatprep.subr.bf16.mxu0 0
    %1422 = vmatpush1.bf16.msra.mxu0 %v1375
    %1423 = vmatprep.subr.bf16.mxu0 0
    %1424 = vmatpush1.bf16.msra.mxu0 %v1376
    %1425 = vmatprep.mubr.bf16.mxu0 %v1257
    %1426 = vmatmul.mubr.bf16.gmra.mrb[0].mxu0 %v1256
    %v1427 = vpop.f32.mrb[0].mxu0
    %v1428 = vadd.f32 %v1295, %v1427
    %v1429 = vpop.f32.mrb[0].mxu0
    %v1430 = vpop.f32.mrb[0].mxu0
    %v1431 = vadd.f32 %v1295, %v1430
    %v1432 = vpop.f32.mrb[0].mxu0
    %1433 = vdwg.mxu0
    %1435 = vset.pattern.permute.xlu0 0
    %1436 = vperm.xlu0 %1435, %v1428
    %v1437 = vpop.permute.xlu0 %1436
    %1440 = vset.pattern.permute.xlu0 0
    %1441 = vperm.xlu0 %1440, %v1431
    %v1442 = vpop.permute.xlu0 %1441
    %v1444 = vmul.f32 %v1437, %v130
    %v1445 = vmul.f32 %v1442, %v130
    %1446 = vset.pattern.permute.xlu0 1
    %1447 = vperm.xlu0 %1446, %v1428
    %v1448 = vpop.permute.xlu0 %1447
    %1450 = vset.pattern.permute.xlu0 1
    %1451 = vperm.xlu0 %1450, %v1431
    %v1452 = vpop.permute.xlu0 %1451
    %v1454 = vmul.f32 %v1448, %v303
    %v1455 = vmul.f32 %v1452, %v304
    %v1456 = vadd.f32 %v1444, %v1454
    %v1457 = vadd.f32 %v1445, %v1455
    %1458 = vset.pattern.permute.xlu0 9
    %1459 = vperm.xlu0 %1458, %v1428
    %v1460 = vpop.permute.xlu0 %1459
    %1462 = vset.pattern.permute.xlu0 9
    %1463 = vperm.xlu0 %1462, %v1431
    %v1464 = vpop.permute.xlu0 %1463
    %v1466 = vmul.f32 %v1460, %v303
    %v1467 = vmul.f32 %v1464, %v304
    %v1468 = vsel %vm257, %v1466, 0.0
    %v1469 = vsel %vm261, %v1467, 0.0
    %v1470 = vadd.f32 %v1468, %v1469
    %v1471 = vrot.slane %v1470, 4
    %v1472 = vadd.f32 %v1470, %v1471
    %v1473 = vrot.slane %v1472, 2
    %v1474 = vadd.f32 %v1472, %v1473
    %v1475 = vrot.slane %v1474, 1
    %v1476 = vadd.f32 %v1474, %v1475
    %v1477 = vadd.f32 %v1476, 0.0
    %1478 = vset.pattern.permute.xlu0 2
    %1479 = vperm.xlu0 %1478, %v1428
    %v1480 = vpop.permute.xlu0 %1479
    %1482 = vset.pattern.permute.xlu0 2
    %1483 = vperm.xlu0 %1482, %v1431
    %v1484 = vpop.permute.xlu0 %1483
    %v1486 = vmul.f32 %v1480, %v363
    %v1487 = vmul.f32 %v1484, %v364
    %v1488 = vadd.f32 %v1456, %v1486
    %v1489 = vadd.f32 %v1457, %v1487
    %1490 = vset.pattern.permute.xlu0 10
    %1491 = vperm.xlu0 %1490, %v1428
    %v1492 = vpop.permute.xlu0 %1491
    %1494 = vset.pattern.permute.xlu0 10
    %1495 = vperm.xlu0 %1494, %v1431
    %v1496 = vpop.permute.xlu0 %1495
    %v1498 = vmul.f32 %v1492, %v363
    %v1499 = vmul.f32 %v1496, %v364
    %v1500 = vsel %vm257, %v1498, 0.0
    %v1501 = vsel %vm261, %v1499, 0.0
    %v1502 = vadd.f32 %v1500, %v1501
    %v1503 = vrot.slane %v1502, 4
    %v1504 = vadd.f32 %v1502, %v1503
    %v1505 = vrot.slane %v1504, 2
    %v1506 = vadd.f32 %v1504, %v1505
    %v1507 = vrot.slane %v1506, 1
    %v1508 = vadd.f32 %v1506, %v1507
    %v1509 = vadd.f32 %v1477, %v1508
    %1510 = vset.pattern.permute.xlu0 3
    %1511 = vperm.xlu0 %1510, %v1428
    %v1512 = vpop.permute.xlu0 %1511
    %1514 = vset.pattern.permute.xlu0 3
    %1515 = vperm.xlu0 %1514, %v1431
    %v1516 = vpop.permute.xlu0 %1515
    %v1518 = vmul.f32 %v1512, %v419
    %v1519 = vmul.f32 %v1516, %v420
    %v1520 = vadd.f32 %v1488, %v1518
    %v1521 = vadd.f32 %v1489, %v1519
    %1522 = vset.pattern.permute.xlu0 11
    %1523 = vperm.xlu0 %1522, %v1428
    %v1524 = vpop.permute.xlu0 %1523
    %1526 = vset.pattern.permute.xlu0 11
    %1527 = vperm.xlu0 %1526, %v1431
    %v1528 = vpop.permute.xlu0 %1527
    %v1530 = vmul.f32 %v1524, %v419
    %v1531 = vmul.f32 %v1528, %v420
    %v1532 = vsel %vm257, %v1530, 0.0
    %v1533 = vsel %vm261, %v1531, 0.0
    %v1534 = vadd.f32 %v1532, %v1533
    %v1535 = vrot.slane %v1534, 4
    %v1536 = vadd.f32 %v1534, %v1535
    %v1537 = vrot.slane %v1536, 2
    %v1538 = vadd.f32 %v1536, %v1537
    %v1539 = vrot.slane %v1538, 1
    %v1540 = vadd.f32 %v1538, %v1539
    %v1541 = vadd.f32 %v1509, %v1540
    %1542 = vset.pattern.permute.xlu0 4
    %1543 = vperm.xlu0 %1542, %v1428
    %v1544 = vpop.permute.xlu0 %1543
    %1546 = vset.pattern.permute.xlu0 4
    %1547 = vperm.xlu0 %1546, %v1431
    %v1548 = vpop.permute.xlu0 %1547
    %v1550 = vmul.f32 %v1544, %v475
    %v1551 = vmul.f32 %v1548, %v476
    %v1552 = vadd.f32 %v1520, %v1550
    %v1553 = vadd.f32 %v1521, %v1551
    %1554 = vset.pattern.permute.xlu0 12
    %1555 = vperm.xlu0 %1554, %v1428
    %v1556 = vpop.permute.xlu0 %1555
    %1558 = vset.pattern.permute.xlu0 12
    %1559 = vperm.xlu0 %1558, %v1431
    %v1560 = vpop.permute.xlu0 %1559
    %v1562 = vmul.f32 %v1556, %v475
    %v1563 = vmul.f32 %v1560, %v476
    %v1564 = vsel %vm257, %v1562, 0.0
    %v1565 = vsel %vm261, %v1563, 0.0
    %v1566 = vadd.f32 %v1564, %v1565
    %v1567 = vrot.slane %v1566, 4
    %v1568 = vadd.f32 %v1566, %v1567
    %v1569 = vrot.slane %v1568, 2
    %v1570 = vadd.f32 %v1568, %v1569
    %v1571 = vrot.slane %v1570, 1
    %v1572 = vadd.f32 %v1570, %v1571
    %v1573 = vadd.f32 %v1541, %v1572
    %1574 = vset.pattern.permute.xlu0 5
    %1575 = vperm.xlu0 %1574, %v1428
    %v1576 = vpop.permute.xlu0 %1575
    %1578 = vset.pattern.permute.xlu0 5
    %1579 = vperm.xlu0 %1578, %v1431
    %v1580 = vpop.permute.xlu0 %1579
    %v1582 = vmul.f32 %v1576, %v531
    %v1583 = vmul.f32 %v1580, %v532
    %v1584 = vadd.f32 %v1552, %v1582
    %v1585 = vadd.f32 %v1553, %v1583
    %1586 = vset.pattern.permute.xlu0 13
    %1587 = vperm.xlu0 %1586, %v1428
    %v1588 = vpop.permute.xlu0 %1587
    %1590 = vset.pattern.permute.xlu0 13
    %1591 = vperm.xlu0 %1590, %v1431
    %v1592 = vpop.permute.xlu0 %1591
    %v1594 = vmul.f32 %v1588, %v531
    %v1595 = vmul.f32 %v1592, %v532
    %v1596 = vsel %vm257, %v1594, 0.0
    %v1597 = vsel %vm261, %v1595, 0.0
    %v1598 = vadd.f32 %v1596, %v1597
    %v1599 = vrot.slane %v1598, 4
    %v1600 = vadd.f32 %v1598, %v1599
    %v1601 = vrot.slane %v1600, 2
    %v1602 = vadd.f32 %v1600, %v1601
    %v1603 = vrot.slane %v1602, 1
    %v1604 = vadd.f32 %v1602, %v1603
    %v1605 = vadd.f32 %v1573, %v1604
    %1606 = vset.pattern.permute.xlu0 6
    %1607 = vperm.xlu0 %1606, %v1428
    %v1608 = vpop.permute.xlu0 %1607
    %1610 = vset.pattern.permute.xlu0 6
    %1611 = vperm.xlu0 %1610, %v1431
    %v1612 = vpop.permute.xlu0 %1611
    %v1614 = vmul.f32 %v1608, %v587
    %v1615 = vmul.f32 %v1612, %v588
    %v1616 = vadd.f32 %v1584, %v1614
    %v1617 = vadd.f32 %v1585, %v1615
    %1618 = vset.pattern.permute.xlu0 14
    %1619 = vperm.xlu0 %1618, %v1428
    %v1620 = vpop.permute.xlu0 %1619
    %1622 = vset.pattern.permute.xlu0 14
    %1623 = vperm.xlu0 %1622, %v1431
    %v1624 = vpop.permute.xlu0 %1623
    %v1626 = vmul.f32 %v1620, %v587
    %v1627 = vmul.f32 %v1624, %v588
    %v1628 = vsel %vm257, %v1626, 0.0
    %v1629 = vsel %vm261, %v1627, 0.0
    %v1630 = vadd.f32 %v1628, %v1629
    %v1631 = vrot.slane %v1630, 4
    %v1632 = vadd.f32 %v1630, %v1631
    %v1633 = vrot.slane %v1632, 2
    %v1634 = vadd.f32 %v1632, %v1633
    %v1635 = vrot.slane %v1634, 1
    %v1636 = vadd.f32 %v1634, %v1635
    %v1637 = vadd.f32 %v1605, %v1636
    %1638 = vset.pattern.permute.xlu0 7
    %1639 = vperm.xlu0 %1638, %v1428
    %v1640 = vpop.permute.xlu0 %1639
    %1642 = vset.pattern.permute.xlu0 7
    %1643 = vperm.xlu0 %1642, %v1431
    %v1644 = vpop.permute.xlu0 %1643
    %v1646 = vmul.f32 %v1640, %v643
    %v1647 = vmul.f32 %v1644, %v644
    %v1648 = vadd.f32 %v1616, %v1646
    %v1649 = vadd.f32 %v1617, %v1647
    %1650 = vset.pattern.permute.xlu0 15
    %1651 = vperm.xlu0 %1650, %v1428
    %v1652 = vpop.permute.xlu0 %1651
    %1654 = vset.pattern.permute.xlu0 15
    %1655 = vperm.xlu0 %1654, %v1431
    %v1656 = vpop.permute.xlu0 %1655
    %v1658 = vmul.f32 %v1652, %v643
    %v1659 = vmul.f32 %v1656, %v644
    %v1660 = vsel %vm257, %v1658, 0.0
    %v1661 = vsel %vm261, %v1659, 0.0
    %v1662 = vadd.f32 %v1660, %v1661
    %v1663 = vrot.slane %v1662, 4
    %v1664 = vadd.f32 %v1662, %v1663
    %v1665 = vrot.slane %v1664, 2
    %v1666 = vadd.f32 %v1664, %v1665
    %v1667 = vrot.slane %v1666, 1
    %v1668 = vadd.f32 %v1666, %v1667
    %v1669 = vadd.f32 %v1637, %v1668
    %1670 = vset.pattern.permute.xlu0 8
    %1671 = vperm.xlu0 %1670, %v1428
    %v1672 = vpop.permute.xlu0 %1671
    %1674 = vset.pattern.permute.xlu0 8
    %1675 = vperm.xlu0 %1674, %v1431
    %v1676 = vpop.permute.xlu0 %1675
    %v1678 = vmul.f32 %v1672, %v699
    %v1679 = vmul.f32 %v1676, %v700
    %v1680 = vadd.f32 %v1648, %v1678
    %v1681 = vadd.f32 %v1649, %v1679
    %1682 = vset.pattern.permute.xlu0 16
    %1683 = vperm.xlu0 %1682, %v1428
    %v1684 = vpop.permute.xlu0 %1683
    %1686 = vset.pattern.permute.xlu0 16
    %1687 = vperm.xlu0 %1686, %v1431
    %v1688 = vpop.permute.xlu0 %1687
    %v1690 = vmul.f32 %v1684, %v699
    %v1691 = vmul.f32 %v1688, %v700
    %v1692 = vsel %vm257, %v1690, 0.0
    %v1693 = vsel %vm261, %v1691, 0.0
    %v1694 = vadd.f32 %v1692, %v1693
    %v1695 = vrot.slane %v1694, 4
    %v1696 = vadd.f32 %v1694, %v1695
    %v1697 = vrot.slane %v1696, 2
    %v1698 = vadd.f32 %v1696, %v1697
    %v1699 = vrot.slane %v1698, 1
    %v1700 = vadd.f32 %v1698, %v1699
    %v1701 = vadd.f32 %v1669, %v1700
    %v1702 = vmul.f32 %v135, %v1701
    %v1703 = vmul.f32 %v136, %v1701
    %v1704 = vadd.f32 %v1680, %v1702
    %v1705 = vadd.f32 %v1681, %v1703
    %1706 = vxpose.xlu0.b32.start [1/16] %v1704, 128
    %1707 = vxpose.xlu0.b32.cont [2/16] %v1705, 128
    %1708 = vxpose.xlu0.b32.cont [3/16] 0.0, 128
    %1709 = vxpose.xlu0.b32.cont [4/16] 0.0, 128
    %1710 = vxpose.xlu0.b32.cont [5/16] 0.0, 128
    %1711 = vxpose.xlu0.b32.cont [6/16] 0.0, 128
    %1712 = vxpose.xlu0.b32.cont [7/16] 0.0, 128
    %1713 = vxpose.xlu0.b32.cont [8/16] 0.0, 128
    %1714 = vxpose.xlu0.b32.cont [9/16] 0.0, 128
    %1715 = vxpose.xlu0.b32.cont [10/16] 0.0, 128
    %1716 = vxpose.xlu0.b32.cont [11/16] 0.0, 128
    %1717 = vxpose.xlu0.b32.cont [12/16] 0.0, 128
    %1718 = vxpose.xlu0.b32.cont [13/16] 0.0, 128
    %1719 = vxpose.xlu0.b32.cont [14/16] 0.0, 128
    %1720 = vxpose.xlu0.b32.cont [15/16] 0.0, 128
    %1721 = vxpose.xlu0.b32.end [16/16] 0.0, 128
    %v1722 = vpop.trf.xlu0
    %v1723 = vpop.trf.xlu0
    %v1724 = vpop.trf.xlu0
    %v1725 = vpop.trf.xlu0
    %v1726 = vpop.trf.xlu0
    %v1727 = vpop.trf.xlu0
    %v1728 = vpop.trf.xlu0
    %v1729 = vpop.trf.xlu0
    %v1730 = vpop.trf.xlu0
    %v1731 = vpop.trf.xlu0
    %v1732 = vpop.trf.xlu0
    %v1733 = vpop.trf.xlu0
    %v1734 = vpop.trf.xlu0
    %v1735 = vpop.trf.xlu0
    %v1736 = vpop.trf.xlu0
    %v1737 = vpop.trf.xlu0
    %v1739 = vsel %vm257, %v1722, 0
    %v1742 = vsel %vm257, %v1723, 0
    %v1744 = vsel %vm142, %v173, 0
    %1746 = vmatprep.subr.mxu0 0.0
    %1747 = vmatpush1.msra.mxu0 %v171
    %1748 = vmatprep.subr.mxu0 0.0
    %1749 = vmatpush1.msra.mxu0 %v1744
    %1750 = vmatprep.subr.mxu0 0.0
    %1751 = vmatpush1.msra.mxu0 0.0
    %1752 = vmatprep.subr.mxu0 0.0
    %1753 = vmatpush1.msra.mxu0 0.0
    %1754 = vmatprep.subr.mxu0 0.0
    %1755 = vmatpush1.msra.mxu0 0.0
    %1756 = vmatprep.subr.mxu0 0.0
    %1757 = vmatpush1.msra.mxu0 0.0
    %1758 = vmatprep.subr.mxu0 0.0
    %1759 = vmatpush1.msra.mxu0 0.0
    %1760 = vmatprep.subr.mxu0 0.0
    %1761 = vmatpush1.msra.mxu0 0.0
    %1762 = vmatprep.subr.mxu0 0.0
    %1763 = vmatpush1.msra.mxu0 0.0
    %1764 = vmatprep.subr.mxu0 0.0
    %1765 = vmatpush1.msra.mxu0 0.0
    %1766 = vmatprep.subr.mxu0 0.0
    %1767 = vmatpush1.msra.mxu0 0.0
    %1768 = vmatprep.subr.mxu0 0.0
    %1769 = vmatpush1.msra.mxu0 0.0
    %1770 = vmatprep.subr.mxu0 0.0
    %1771 = vmatpush1.msra.mxu0 0.0
    %1772 = vmatprep.subr.mxu0 0.0
    %1773 = vmatpush1.msra.mxu0 0.0
    %1774 = vmatprep.subr.mxu0 0.0
    %1775 = vmatpush1.msra.mxu0 0.0
    %1776 = vmatprep.subr.mxu0 0.0
    %1777 = vmatpush1.msra.mxu0 0.0
    %1778 = vmatprep.subr.mxu0 0.0
    %1779 = vmatpush1.msra.mxu0 0.0
    %1780 = vmatprep.subr.mxu0 0.0
    %1781 = vmatpush1.msra.mxu0 0.0
    %1782 = vmatprep.subr.mxu0 0.0
    %1783 = vmatpush1.msra.mxu0 0.0
    %1784 = vmatprep.subr.mxu0 0.0
    %1785 = vmatpush1.msra.mxu0 0.0
    %1786 = vmatprep.subr.mxu0 0.0
    %1787 = vmatpush1.msra.mxu0 0.0
    %1788 = vmatprep.subr.mxu0 0.0
    %1789 = vmatpush1.msra.mxu0 0.0
    %1790 = vmatprep.subr.mxu0 0.0
    %1791 = vmatpush1.msra.mxu0 0.0
    %1792 = vmatprep.subr.mxu0 0.0
    %1793 = vmatpush1.msra.mxu0 0.0
    %1794 = vmatprep.subr.mxu0 0.0
    %1795 = vmatpush1.msra.mxu0 0.0
    %1796 = vmatprep.subr.mxu0 0.0
    %1797 = vmatpush1.msra.mxu0 0.0
    %1798 = vmatprep.subr.mxu0 0.0
    %1799 = vmatpush1.msra.mxu0 0.0
    %1800 = vmatprep.subr.mxu0 0.0
    %1801 = vmatpush1.msra.mxu0 0.0
    %1802 = vmatprep.subr.mxu0 0.0
    %1803 = vmatpush1.msra.mxu0 0.0
    %1804 = vmatprep.subr.mxu0 0.0
    %1805 = vmatpush1.msra.mxu0 0.0
    %1806 = vmatprep.subr.mxu0 0.0
    %1807 = vmatpush1.msra.mxu0 0.0
    %1808 = vmatprep.subr.mxu0 0.0
    %1809 = vmatpush1.msra.mxu0 0.0
    %1810 = vmatprep.mubr.f32.mxu0 0.0
    %1811 = vmatmul.mubr.f32.gmra.mrb[0].mxu0 %v1739
    %v1812 = vpop.f32.mrb[0].mxu0
    %v1813 = vadd.f32 0.0, %v1812
    %v1814 = vpop.f32.mrb[0].mxu0
    %1815 = vmatprep.mubr.f32.mxu0 0.0
    %1816 = vmatmul.mubr.f32.gmra.mrb[0].mxu0 %v1742
    %v1817 = vpop.f32.mrb[0].mxu0
    %v1818 = vpop.f32.mrb[0].mxu0
    %1819 = vdwg.mxu0
    %v1821 = vsel %vm257, %v1704, 0
    %v1824 = vsel %vm257, %v1705, 0
    %1826 = vmatprep.subr.mxu0 0.0
    %1827 = vmatpush1.msra.mxu0 %v171
    %1828 = vmatprep.subr.mxu0 0.0
    %1829 = vmatpush1.msra.mxu0 %v1744
    %1830 = vmatprep.subr.mxu0 0.0
    %1831 = vmatpush1.msra.mxu0 0.0
    %1832 = vmatprep.subr.mxu0 0.0
    %1833 = vmatpush1.msra.mxu0 0.0
    %1834 = vmatprep.subr.mxu0 0.0
    %1835 = vmatpush1.msra.mxu0 0.0
    %1836 = vmatprep.subr.mxu0 0.0
    %1837 = vmatpush1.msra.mxu0 0.0
    %1838 = vmatprep.subr.mxu0 0.0
    %1839 = vmatpush1.msra.mxu0 0.0
    %1840 = vmatprep.subr.mxu0 0.0
    %1841 = vmatpush1.msra.mxu0 0.0
    %1842 = vmatprep.subr.mxu0 0.0
    %1843 = vmatpush1.msra.mxu0 0.0
    %1844 = vmatprep.subr.mxu0 0.0
    %1845 = vmatpush1.msra.mxu0 0.0
    %1846 = vmatprep.subr.mxu0 0.0
    %1847 = vmatpush1.msra.mxu0 0.0
    %1848 = vmatprep.subr.mxu0 0.0
    %1849 = vmatpush1.msra.mxu0 0.0
    %1850 = vmatprep.subr.mxu0 0.0
    %1851 = vmatpush1.msra.mxu0 0.0
    %1852 = vmatprep.subr.mxu0 0.0
    %1853 = vmatpush1.msra.mxu0 0.0
    %1854 = vmatprep.subr.mxu0 0.0
    %1855 = vmatpush1.msra.mxu0 0.0
    %1856 = vmatprep.subr.mxu0 0.0
    %1857 = vmatpush1.msra.mxu0 0.0
    %1858 = vmatprep.subr.mxu0 0.0
    %1859 = vmatpush1.msra.mxu0 0.0
    %1860 = vmatprep.subr.mxu0 0.0
    %1861 = vmatpush1.msra.mxu0 0.0
    %1862 = vmatprep.subr.mxu0 0.0
    %1863 = vmatpush1.msra.mxu0 0.0
    %1864 = vmatprep.subr.mxu0 0.0
    %1865 = vmatpush1.msra.mxu0 0.0
    %1866 = vmatprep.subr.mxu0 0.0
    %1867 = vmatpush1.msra.mxu0 0.0
    %1868 = vmatprep.subr.mxu0 0.0
    %1869 = vmatpush1.msra.mxu0 0.0
    %1870 = vmatprep.subr.mxu0 0.0
    %1871 = vmatpush1.msra.mxu0 0.0
    %1872 = vmatprep.subr.mxu0 0.0
    %1873 = vmatpush1.msra.mxu0 0.0
    %1874 = vmatprep.subr.mxu0 0.0
    %1875 = vmatpush1.msra.mxu0 0.0
    %1876 = vmatprep.subr.mxu0 0.0
    %1877 = vmatpush1.msra.mxu0 0.0
    %1878 = vmatprep.subr.mxu0 0.0
    %1879 = vmatpush1.msra.mxu0 0.0
    %1880 = vmatprep.subr.mxu0 0.0
    %1881 = vmatpush1.msra.mxu0 0.0
    %1882 = vmatprep.subr.mxu0 0.0
    %1883 = vmatpush1.msra.mxu0 0.0
    %1884 = vmatprep.subr.mxu0 0.0
    %1885 = vmatpush1.msra.mxu0 0.0
    %1886 = vmatprep.subr.mxu0 0.0
    %1887 = vmatpush1.msra.mxu0 0.0
    %1888 = vmatprep.subr.mxu0 0.0
    %1889 = vmatpush1.msra.mxu0 0.0
    %1890 = vmatprep.mubr.f32.mxu0 0.0
    %1891 = vmatmul.mubr.f32.gmra.mrb[0].mxu0 %v1821
    %v1892 = vpop.f32.mrb[0].mxu0
    %v1893 = vadd.f32 %v1813, %v1892
    %v1894 = vpop.f32.mrb[0].mxu0
    %1895 = vmatprep.mubr.f32.mxu0 0.0
    %1896 = vmatmul.mubr.f32.gmra.mrb[0].mxu0 %v1824
    %v1897 = vpop.f32.mrb[0].mxu0
    %v1898 = vpop.f32.mrb[0].mxu0
    %1899 = vdwg.mxu0
    %v1900 = vmul.f32 1.0, %v170
    %v1901 = vmul.f32 %v1893, %v143
    %v1902 = vsel %vm146, %v1901, 0.0
    %1903 = vadd.xlane.f32.xlu0 %v1902
    %v1904 = vpop.xlane.xlu0 %1903
    %vm1905 = vcmp.gt.f32.partialorder %v160, 1e-12
    %v1906 = vsel %vm1905, %v1900, 0.0
    %v1907 = vmul.f32 %v1893, %v1900
    %v1908 = vmul.f32 %v1904, %v1900
    %v1909 = vmul.f32 %v1908, %v1900
    %v1910 = vmul.f32 %v1909, %v1906
    %v1911 = vmul.f32 %v143, %v1910
    %v1912 = vsub.f32 %v1907, %v1911
    %v1913 = vmul.f32 %v1912, 0.001
    %v1914 = vsub.f32 %v137, %v1913
    %v1915 = vsel %vm142, %v1914, %v140
    %v1916 = vmul.f32 %v1915, %v1915
    %v1917 = vsel %vm146, %v1916, 0.0
    %1918 = vadd.xlane.f32.xlu0 %v1917
    %v1919 = vpop.xlane.xlu0 %1918
    %v1920 = vrsqrt.pop %v1919
    %v1921 = vmul.f32 %v1919, %v1920
    %vm1922 = vcmp.eq.f32.partialorder %v1919, inf
    %v1923 = vsel %vm1922, %v1919, %v1921
    %vm1924 = vcmp.eq.f32.partialorder %v1919, 0.0
    %v1925 = vand.u32 %v1919, 2147483648
    %v1926 = vsel %vm1924, %v1925, %v1923
    %v1927 = vmax.f32 %v1926, 1e-12
    %v1928 = vrcp.pop %v1927
    %v1929 = vmul.f32 %v1915, %v1928
    %v1931 = vsel %vm146, %v1929, 0
    %1933 = vmatprep.subr.mxu0 0.0
    %1934 = vmatpush1.xpose.msra.mxu0 %v1931
    %1935 = vmatprep.subr.mxu0 0.0
    %1936 = vmatpush1.xpose.msra.mxu0 %v178
    %1937 = vmatprep.subr.mxu0 0.0
    %1938 = vmatpush1.xpose.msra.mxu0 0.0
    %1939 = vmatprep.subr.mxu0 0.0
    %1940 = vmatpush1.xpose.msra.mxu0 0.0
    %1941 = vmatprep.subr.mxu0 0.0
    %1942 = vmatpush1.xpose.msra.mxu0 0.0
    %1943 = vmatprep.subr.mxu0 0.0
    %1944 = vmatpush1.xpose.msra.mxu0 0.0
    %1945 = vmatprep.subr.mxu0 0.0
    %1946 = vmatpush1.xpose.msra.mxu0 0.0
    %1947 = vmatprep.subr.mxu0 0.0
    %1948 = vmatpush1.xpose.msra.mxu0 0.0
    %1949 = vmatprep.subr.mxu0 0.0
    %1950 = vmatpush1.xpose.msra.mxu0 0.0
    %1951 = vmatprep.subr.mxu0 0.0
    %1952 = vmatpush1.xpose.msra.mxu0 0.0
    %1953 = vmatprep.subr.mxu0 0.0
    %1954 = vmatpush1.xpose.msra.mxu0 0.0
    %1955 = vmatprep.subr.mxu0 0.0
    %1956 = vmatpush1.xpose.msra.mxu0 0.0
    %1957 = vmatprep.subr.mxu0 0.0
    %1958 = vmatpush1.xpose.msra.mxu0 0.0
    %1959 = vmatprep.subr.mxu0 0.0
    %1960 = vmatpush1.xpose.msra.mxu0 0.0
    %1961 = vmatprep.subr.mxu0 0.0
    %1962 = vmatpush1.xpose.msra.mxu0 0.0
    %1963 = vmatprep.subr.mxu0 0.0
    %1964 = vmatpush1.xpose.msra.mxu0 0.0
    %1965 = vmatprep.subr.mxu0 0.0
    %1966 = vmatpush1.xpose.msra.mxu0 0.0
    %1967 = vmatprep.subr.mxu0 0.0
    %1968 = vmatpush1.xpose.msra.mxu0 0.0
    %1969 = vmatprep.subr.mxu0 0.0
    %1970 = vmatpush1.xpose.msra.mxu0 0.0
    %1971 = vmatprep.subr.mxu0 0.0
    %1972 = vmatpush1.xpose.msra.mxu0 0.0
    %1973 = vmatprep.subr.mxu0 0.0
    %1974 = vmatpush1.xpose.msra.mxu0 0.0
    %1975 = vmatprep.subr.mxu0 0.0
    %1976 = vmatpush1.xpose.msra.mxu0 0.0
    %1977 = vmatprep.subr.mxu0 0.0
    %1978 = vmatpush1.xpose.msra.mxu0 0.0
    %1979 = vmatprep.subr.mxu0 0.0
    %1980 = vmatpush1.xpose.msra.mxu0 0.0
    %1981 = vmatprep.subr.mxu0 0.0
    %1982 = vmatpush1.xpose.msra.mxu0 0.0
    %1983 = vmatprep.subr.mxu0 0.0
    %1984 = vmatpush1.xpose.msra.mxu0 0.0
    %1985 = vmatprep.subr.mxu0 0.0
    %1986 = vmatpush1.xpose.msra.mxu0 0.0
    %1987 = vmatprep.subr.mxu0 0.0
    %1988 = vmatpush1.xpose.msra.mxu0 0.0
    %1989 = vmatprep.subr.mxu0 0.0
    %1990 = vmatpush1.xpose.msra.mxu0 0.0
    %1991 = vmatprep.subr.mxu0 0.0
    %1992 = vmatpush1.xpose.msra.mxu0 0.0
    %1993 = vmatprep.subr.mxu0 0.0
    %1994 = vmatpush1.xpose.msra.mxu0 0.0
    %1995 = vmatprep.subr.mxu0 0.0
    %1996 = vmatpush1.xpose.msra.mxu0 0.0
    %1997 = vmatprep.mubr.f32.mxu0 0.0
    %1998 = vmatmul.mubr.f32.gmra.mrb[0].mxu0 %v1931
    %v1999 = vpop.f32.mrb[0].mxu0
    %v2000 = vadd.f32 0.0, %v1999
    %v2001 = vpop.f32.mrb[0].mxu0
    %2002 = vmatprep.mubr.f32.mxu0 0.0
    %2003 = vmatmul.mubr.f32.gmra.mrb[0].mxu0 %v178
    %v2004 = vpop.f32.mrb[0].mxu0
    %v2005 = vadd.f32 0.0, %v2004
    %v2006 = vpop.f32.mrb[0].mxu0
    %2007 = vdwg.mxu0
    %v2008 = vsel %vm128, -1e+30, %v2000
    %v2009 = vsel %vm128, -1e+30, %v2005
    %v2010 = vsel %vm257, %v2008, -inf
    %2011 = vmax.xlane.f32.xlu0 %v2010
    %v2012 = vpop.xlane.xlu0 %2011
    %v2013 = vsel %vm261, %v2009, -inf
    %2014 = vmax.xlane.f32.xlu0 %v2013
    %v2015 = vpop.xlane.xlu0 %2014
    %vm2016 = vcmp.eq.f32.partialorder %v2008, %v2012
    %vm2017 = vcmp.eq.f32.partialorder %v2009, %v2015
    %v2018 = vsel %vm2016, %v124, 9
    %v2019 = vsel %vm2017, %v124, 9
    %v2020 = vsel %vm257, %v2018, 2147483647
    %v2021 = vand.u32 %v2020, 65535
    %v2022 = vshra.s32 %v2020, 16
    %v2023 = vcvt.s32.f32 %v2021
    %v2024 = vcvt.s32.f32 %v2022
    %2025 = vmin.xlane.f32.xlu0 %v2024
    %v2026 = vpop.xlane.xlu0 %2025
    %vm2027 = vcmp.eq.f32.partialorder %v2024, %v2026
    %v2028 = vsel %vm2027, %v2023, inf
    %2029 = vmin.xlane.f32.xlu0 %v2028
    %v2030 = vpop.xlane.xlu0 %2029
    %v2031 = vcvt.f32.s32 %v2030
    %v2032 = vcvt.f32.s32 %v2026
    %v2033 = vshll.u32 %v2032, 16
    %v2034 = vadd.s32 %v2033, %v2031
    %v2035 = vsel %vm261, %v2019, 2147483647
    %v2036 = vand.u32 %v2035, 65535
    %v2037 = vshra.s32 %v2035, 16
    %v2038 = vcvt.s32.f32 %v2036
    %v2039 = vcvt.s32.f32 %v2037
    %2040 = vmin.xlane.f32.xlu0 %v2039
    %v2041 = vpop.xlane.xlu0 %2040
    %vm2042 = vcmp.eq.f32.partialorder %v2039, %v2041
    %v2043 = vsel %vm2042, %v2038, inf
    %2044 = vmin.xlane.f32.xlu0 %v2043
    %v2045 = vpop.xlane.xlu0 %2044
    %v2046 = vcvt.f32.s32 %v2045
    %v2047 = vcvt.f32.s32 %v2041
    %v2048 = vshll.u32 %v2047, 16
    %v2049 = vadd.s32 %v2048, %v2046
    %vm2050 = vcmp.eq.s32.totalorder %v124, %v2034
    %vm2051 = vcmp.eq.s32.totalorder %v124, %v2049
    %v2052 = vsel %vm2050, 1, 0
    %v2053 = vsel %vm2051, 1, 0
    %v2054 = vcvt.s32.f32 %v2052
    %v2055 = vcvt.s32.f32 %v2053
    %v2056 = vlaneseq
    %v2057 = vshrl.u32 %v2056, 7
    %v2058 = vsub.s32 0, %v2057
    %v2059 = vrot.slane %v2000, %v2058
    %v2060 = vmul.f32 %v2054, %v2059
    %v2061 = vmul.f32 %v2055, %v2059
    %v2062 = vsel %vm257, %v2060, 0.0
    %2063 = vadd.xlane.f32.xlu0 %v2062
    %v2064 = vpop.xlane.xlu0 %2063
    %v2065 = vsel %vm261, %v2061, 0.0
    %2066 = vadd.xlane.f32.xlu0 %v2065
    %v2067 = vpop.xlane.xlu0 %2066
    %v2068 = vsel %vm2050, -1e+30, %v2008
    %v2069 = vsel %vm2051, -1e+30, %v2009
    %v2070 = vsel %vm257, %v2068, -inf
    %2071 = vmax.xlane.f32.xlu0 %v2070
    %v2072 = vpop.xlane.xlu0 %2071
    %v2073 = vsel %vm261, %v2069, -inf
    %2074 = vmax.xlane.f32.xlu0 %v2073
    %v2075 = vpop.xlane.xlu0 %2074
    %vm2076 = vcmp.eq.f32.partialorder %v2068, %v2072
    %vm2077 = vcmp.eq.f32.partialorder %v2069, %v2075
    %v2078 = vsel %vm2076, %v124, 9
    %v2079 = vsel %vm2077, %v124, 9
    %v2080 = vsel %vm257, %v2078, 2147483647
    %v2081 = vand.u32 %v2080, 65535
    %v2082 = vshra.s32 %v2080, 16
    %v2083 = vcvt.s32.f32 %v2081
    %v2084 = vcvt.s32.f32 %v2082
    %2085 = vmin.xlane.f32.xlu0 %v2084
    %v2086 = vpop.xlane.xlu0 %2085
    %vm2087 = vcmp.eq.f32.partialorder %v2084, %v2086
    %v2088 = vsel %vm2087, %v2083, inf
    %2089 = vmin.xlane.f32.xlu0 %v2088
    %v2090 = vpop.xlane.xlu0 %2089
    %v2091 = vcvt.f32.s32 %v2090
    %v2092 = vcvt.f32.s32 %v2086
    %v2093 = vshll.u32 %v2092, 16
    %v2094 = vadd.s32 %v2093, %v2091
    %v2095 = vsel %vm261, %v2079, 2147483647
    %v2096 = vand.u32 %v2095, 65535
    %v2097 = vshra.s32 %v2095, 16
    %v2098 = vcvt.s32.f32 %v2096
    %v2099 = vcvt.s32.f32 %v2097
    %2100 = vmin.xlane.f32.xlu0 %v2099
    %v2101 = vpop.xlane.xlu0 %2100
    %vm2102 = vcmp.eq.f32.partialorder %v2099, %v2101
    %v2103 = vsel %vm2102, %v2098, inf
    %2104 = vmin.xlane.f32.xlu0 %v2103
    %v2105 = vpop.xlane.xlu0 %2104
    %v2106 = vcvt.f32.s32 %v2105
    %v2107 = vcvt.f32.s32 %v2101
    %v2108 = vshll.u32 %v2107, 16
    %v2109 = vadd.s32 %v2108, %v2106
    %vm2110 = vcmp.eq.s32.totalorder %v124, %v2094
    %vm2111 = vcmp.eq.s32.totalorder %v124, %v2109
    %v2112 = vsel %vm2110, 1, 0
    %v2113 = vsel %vm2111, 1, 0
    %v2114 = vcvt.s32.f32 %v2112
    %v2115 = vcvt.s32.f32 %v2113
    %v2116 = vmul.f32 %v2114, %v2059
    %v2117 = vmul.f32 %v2115, %v2059
    %v2118 = vsel %vm257, %v2116, 0.0
    %2119 = vadd.xlane.f32.xlu0 %v2118
    %v2120 = vpop.xlane.xlu0 %2119
    %v2121 = vsel %vm261, %v2117, 0.0
    %2122 = vadd.xlane.f32.xlu0 %v2121
    %v2123 = vpop.xlane.xlu0 %2122
    %v2124 = vsel %vm2110, -1e+30, %v2068
    %v2125 = vsel %vm2111, -1e+30, %v2069
    %v2126 = vsel %vm257, %v2124, -inf
    %2127 = vmax.xlane.f32.xlu0 %v2126
    %v2128 = vpop.xlane.xlu0 %2127
    %v2129 = vsel %vm261, %v2125, -inf
    %2130 = vmax.xlane.f32.xlu0 %v2129
    %v2131 = vpop.xlane.xlu0 %2130
    %vm2132 = vcmp.eq.f32.partialorder %v2124, %v2128
    %vm2133 = vcmp.eq.f32.partialorder %v2125, %v2131
    %v2134 = vsel %vm2132, %v124, 9
    %v2135 = vsel %vm2133, %v124, 9
    %v2136 = vsel %vm257, %v2134, 2147483647
    %v2137 = vand.u32 %v2136, 65535
    %v2138 = vshra.s32 %v2136, 16
    %v2139 = vcvt.s32.f32 %v2137
    %v2140 = vcvt.s32.f32 %v2138
    %2141 = vmin.xlane.f32.xlu0 %v2140
    %v2142 = vpop.xlane.xlu0 %2141
    %vm2143 = vcmp.eq.f32.partialorder %v2140, %v2142
    %v2144 = vsel %vm2143, %v2139, inf
    %2145 = vmin.xlane.f32.xlu0 %v2144
    %v2146 = vpop.xlane.xlu0 %2145
    %v2147 = vcvt.f32.s32 %v2146
    %v2148 = vcvt.f32.s32 %v2142
    %v2149 = vshll.u32 %v2148, 16
    %v2150 = vadd.s32 %v2149, %v2147
    %v2151 = vsel %vm261, %v2135, 2147483647
    %v2152 = vand.u32 %v2151, 65535
    %v2153 = vshra.s32 %v2151, 16
    %v2154 = vcvt.s32.f32 %v2152
    %v2155 = vcvt.s32.f32 %v2153
    %2156 = vmin.xlane.f32.xlu0 %v2155
    %v2157 = vpop.xlane.xlu0 %2156
    %vm2158 = vcmp.eq.f32.partialorder %v2155, %v2157
    %v2159 = vsel %vm2158, %v2154, inf
    %2160 = vmin.xlane.f32.xlu0 %v2159
    %v2161 = vpop.xlane.xlu0 %2160
    %v2162 = vcvt.f32.s32 %v2161
    %v2163 = vcvt.f32.s32 %v2157
    %v2164 = vshll.u32 %v2163, 16
    %v2165 = vadd.s32 %v2164, %v2162
    %vm2166 = vcmp.eq.s32.totalorder %v124, %v2150
    %vm2167 = vcmp.eq.s32.totalorder %v124, %v2165
    %v2168 = vsel %vm2166, 1, 0
    %v2169 = vsel %vm2167, 1, 0
    %v2170 = vcvt.s32.f32 %v2168
    %v2171 = vcvt.s32.f32 %v2169
    %v2172 = vmul.f32 %v2170, %v2059
    %v2173 = vmul.f32 %v2171, %v2059
    %v2174 = vsel %vm257, %v2172, 0.0
    %2175 = vadd.xlane.f32.xlu0 %v2174
    %v2176 = vpop.xlane.xlu0 %2175
    %v2177 = vsel %vm261, %v2173, 0.0
    %2178 = vadd.xlane.f32.xlu0 %v2177
    %v2179 = vpop.xlane.xlu0 %2178
    %v2180 = vsel %vm2166, -1e+30, %v2124
    %v2181 = vsel %vm2167, -1e+30, %v2125
    %v2182 = vsel %vm257, %v2180, -inf
    %2183 = vmax.xlane.f32.xlu0 %v2182
    %v2184 = vpop.xlane.xlu0 %2183
    %v2185 = vsel %vm261, %v2181, -inf
    %2186 = vmax.xlane.f32.xlu0 %v2185
    %v2187 = vpop.xlane.xlu0 %2186
    %vm2188 = vcmp.eq.f32.partialorder %v2180, %v2184
    %vm2189 = vcmp.eq.f32.partialorder %v2181, %v2187
    %v2190 = vsel %vm2188, %v124, 9
    %v2191 = vsel %vm2189, %v124, 9
    %v2192 = vsel %vm257, %v2190, 2147483647
    %v2193 = vand.u32 %v2192, 65535
    %v2194 = vshra.s32 %v2192, 16
    %v2195 = vcvt.s32.f32 %v2193
    %v2196 = vcvt.s32.f32 %v2194
    %2197 = vmin.xlane.f32.xlu0 %v2196
    %v2198 = vpop.xlane.xlu0 %2197
    %vm2199 = vcmp.eq.f32.partialorder %v2196, %v2198
    %v2200 = vsel %vm2199, %v2195, inf
    %2201 = vmin.xlane.f32.xlu0 %v2200
    %v2202 = vpop.xlane.xlu0 %2201
    %v2203 = vcvt.f32.s32 %v2202
    %v2204 = vcvt.f32.s32 %v2198
    %v2205 = vshll.u32 %v2204, 16
    %v2206 = vadd.s32 %v2205, %v2203
    %v2207 = vsel %vm261, %v2191, 2147483647
    %v2208 = vand.u32 %v2207, 65535
    %v2209 = vshra.s32 %v2207, 16
    %v2210 = vcvt.s32.f32 %v2208
    %v2211 = vcvt.s32.f32 %v2209
    %2212 = vmin.xlane.f32.xlu0 %v2211
    %v2213 = vpop.xlane.xlu0 %2212
    %vm2214 = vcmp.eq.f32.partialorder %v2211, %v2213
    %v2215 = vsel %vm2214, %v2210, inf
    %2216 = vmin.xlane.f32.xlu0 %v2215
    %v2217 = vpop.xlane.xlu0 %2216
    %v2218 = vcvt.f32.s32 %v2217
    %v2219 = vcvt.f32.s32 %v2213
    %v2220 = vshll.u32 %v2219, 16
    %v2221 = vadd.s32 %v2220, %v2218
    %vm2222 = vcmp.eq.s32.totalorder %v124, %v2206
    %vm2223 = vcmp.eq.s32.totalorder %v124, %v2221
    %v2224 = vsel %vm2222, 1, 0
    %v2225 = vsel %vm2223, 1, 0
    %v2226 = vcvt.s32.f32 %v2224
    %v2227 = vcvt.s32.f32 %v2225
    %v2228 = vmul.f32 %v2226, %v2059
    %v2229 = vmul.f32 %v2227, %v2059
    %v2230 = vsel %vm257, %v2228, 0.0
    %2231 = vadd.xlane.f32.xlu0 %v2230
    %v2232 = vpop.xlane.xlu0 %2231
    %v2233 = vsel %vm261, %v2229, 0.0
    %2234 = vadd.xlane.f32.xlu0 %v2233
    %v2235 = vpop.xlane.xlu0 %2234
    %v2236 = vsel %vm2222, -1e+30, %v2180
    %v2237 = vsel %vm2223, -1e+30, %v2181
    %v2238 = vsel %vm257, %v2236, -inf
    %2239 = vmax.xlane.f32.xlu0 %v2238
    %v2240 = vpop.xlane.xlu0 %2239
    %v2241 = vsel %vm261, %v2237, -inf
    %2242 = vmax.xlane.f32.xlu0 %v2241
    %v2243 = vpop.xlane.xlu0 %2242
    %vm2244 = vcmp.eq.f32.partialorder %v2236, %v2240
    %vm2245 = vcmp.eq.f32.partialorder %v2237, %v2243
    %v2246 = vsel %vm2244, %v124, 9
    %v2247 = vsel %vm2245, %v124, 9
    %v2248 = vsel %vm257, %v2246, 2147483647
    %v2249 = vand.u32 %v2248, 65535
    %v2250 = vshra.s32 %v2248, 16
    %v2251 = vcvt.s32.f32 %v2249
    %v2252 = vcvt.s32.f32 %v2250
    %2253 = vmin.xlane.f32.xlu0 %v2252
    %v2254 = vpop.xlane.xlu0 %2253
    %vm2255 = vcmp.eq.f32.partialorder %v2252, %v2254
    %v2256 = vsel %vm2255, %v2251, inf
    %2257 = vmin.xlane.f32.xlu0 %v2256
    %v2258 = vpop.xlane.xlu0 %2257
    %v2259 = vcvt.f32.s32 %v2258
    %v2260 = vcvt.f32.s32 %v2254
    %v2261 = vshll.u32 %v2260, 16
    %v2262 = vadd.s32 %v2261, %v2259
    %v2263 = vsel %vm261, %v2247, 2147483647
    %v2264 = vand.u32 %v2263, 65535
    %v2265 = vshra.s32 %v2263, 16
    %v2266 = vcvt.s32.f32 %v2264
    %v2267 = vcvt.s32.f32 %v2265
    %2268 = vmin.xlane.f32.xlu0 %v2267
    %v2269 = vpop.xlane.xlu0 %2268
    %vm2270 = vcmp.eq.f32.partialorder %v2267, %v2269
    %v2271 = vsel %vm2270, %v2266, inf
    %2272 = vmin.xlane.f32.xlu0 %v2271
    %v2273 = vpop.xlane.xlu0 %2272
    %v2274 = vcvt.f32.s32 %v2273
    %v2275 = vcvt.f32.s32 %v2269
    %v2276 = vshll.u32 %v2275, 16
    %v2277 = vadd.s32 %v2276, %v2274
    %vm2278 = vcmp.eq.s32.totalorder %v124, %v2262
    %vm2279 = vcmp.eq.s32.totalorder %v124, %v2277
    %v2280 = vsel %vm2278, 1, 0
    %v2281 = vsel %vm2279, 1, 0
    %v2282 = vcvt.s32.f32 %v2280
    %v2283 = vcvt.s32.f32 %v2281
    %v2284 = vmul.f32 %v2282, %v2059
    %v2285 = vmul.f32 %v2283, %v2059
    %v2286 = vsel %vm257, %v2284, 0.0
    %2287 = vadd.xlane.f32.xlu0 %v2286
    %v2288 = vpop.xlane.xlu0 %2287
    %v2289 = vsel %vm261, %v2285, 0.0
    %2290 = vadd.xlane.f32.xlu0 %v2289
    %v2291 = vpop.xlane.xlu0 %2290
    %v2292 = vsel %vm2278, -1e+30, %v2236
    %v2293 = vsel %vm2279, -1e+30, %v2237
    %v2294 = vsel %vm257, %v2292, -inf
    %2295 = vmax.xlane.f32.xlu0 %v2294
    %v2296 = vpop.xlane.xlu0 %2295
    %v2297 = vsel %vm261, %v2293, -inf
    %2298 = vmax.xlane.f32.xlu0 %v2297
    %v2299 = vpop.xlane.xlu0 %2298
    %vm2300 = vcmp.eq.f32.partialorder %v2292, %v2296
    %vm2301 = vcmp.eq.f32.partialorder %v2293, %v2299
    %v2302 = vsel %vm2300, %v124, 9
    %v2303 = vsel %vm2301, %v124, 9
    %v2304 = vsel %vm257, %v2302, 2147483647
    %v2305 = vand.u32 %v2304, 65535
    %v2306 = vshra.s32 %v2304, 16
    %v2307 = vcvt.s32.f32 %v2305
    %v2308 = vcvt.s32.f32 %v2306
    %2309 = vmin.xlane.f32.xlu0 %v2308
    %v2310 = vpop.xlane.xlu0 %2309
    %vm2311 = vcmp.eq.f32.partialorder %v2308, %v2310
    %v2312 = vsel %vm2311, %v2307, inf
    %2313 = vmin.xlane.f32.xlu0 %v2312
    %v2314 = vpop.xlane.xlu0 %2313
    %v2315 = vcvt.f32.s32 %v2314
    %v2316 = vcvt.f32.s32 %v2310
    %v2317 = vshll.u32 %v2316, 16
    %v2318 = vadd.s32 %v2317, %v2315
    %v2319 = vsel %vm261, %v2303, 2147483647
    %v2320 = vand.u32 %v2319, 65535
    %v2321 = vshra.s32 %v2319, 16
    %v2322 = vcvt.s32.f32 %v2320
    %v2323 = vcvt.s32.f32 %v2321
    %2324 = vmin.xlane.f32.xlu0 %v2323
    %v2325 = vpop.xlane.xlu0 %2324
    %vm2326 = vcmp.eq.f32.partialorder %v2323, %v2325
    %v2327 = vsel %vm2326, %v2322, inf
    %2328 = vmin.xlane.f32.xlu0 %v2327
    %v2329 = vpop.xlane.xlu0 %2328
    %v2330 = vcvt.f32.s32 %v2329
    %v2331 = vcvt.f32.s32 %v2325
    %v2332 = vshll.u32 %v2331, 16
    %v2333 = vadd.s32 %v2332, %v2330
    %vm2334 = vcmp.eq.s32.totalorder %v124, %v2318
    %vm2335 = vcmp.eq.s32.totalorder %v124, %v2333
    %v2336 = vsel %vm2334, 1, 0
    %v2337 = vsel %vm2335, 1, 0
    %v2338 = vcvt.s32.f32 %v2336
    %v2339 = vcvt.s32.f32 %v2337
    %v2340 = vmul.f32 %v2338, %v2059
    %v2341 = vmul.f32 %v2339, %v2059
    %v2342 = vsel %vm257, %v2340, 0.0
    %2343 = vadd.xlane.f32.xlu0 %v2342
    %v2344 = vpop.xlane.xlu0 %2343
    %v2345 = vsel %vm261, %v2341, 0.0
    %2346 = vadd.xlane.f32.xlu0 %v2345
    %v2347 = vpop.xlane.xlu0 %2346
    %v2348 = vsel %vm2334, -1e+30, %v2292
    %v2349 = vsel %vm2335, -1e+30, %v2293
    %v2350 = vsel %vm257, %v2348, -inf
    %2351 = vmax.xlane.f32.xlu0 %v2350
    %v2352 = vpop.xlane.xlu0 %2351
    %v2353 = vsel %vm261, %v2349, -inf
    %2354 = vmax.xlane.f32.xlu0 %v2353
    %v2355 = vpop.xlane.xlu0 %2354
    %vm2356 = vcmp.eq.f32.partialorder %v2348, %v2352
    %vm2357 = vcmp.eq.f32.partialorder %v2349, %v2355
    %v2358 = vsel %vm2356, %v124, 9
    %v2359 = vsel %vm2357, %v124, 9
    %v2360 = vsel %vm257, %v2358, 2147483647
    %v2361 = vand.u32 %v2360, 65535
    %v2362 = vshra.s32 %v2360, 16
    %v2363 = vcvt.s32.f32 %v2361
    %v2364 = vcvt.s32.f32 %v2362
    %2365 = vmin.xlane.f32.xlu0 %v2364
    %v2366 = vpop.xlane.xlu0 %2365
    %vm2367 = vcmp.eq.f32.partialorder %v2364, %v2366
    %v2368 = vsel %vm2367, %v2363, inf
    %2369 = vmin.xlane.f32.xlu0 %v2368
    %v2370 = vpop.xlane.xlu0 %2369
    %v2371 = vcvt.f32.s32 %v2370
    %v2372 = vcvt.f32.s32 %v2366
    %v2373 = vshll.u32 %v2372, 16
    %v2374 = vadd.s32 %v2373, %v2371
    %v2375 = vsel %vm261, %v2359, 2147483647
    %v2376 = vand.u32 %v2375, 65535
    %v2377 = vshra.s32 %v2375, 16
    %v2378 = vcvt.s32.f32 %v2376
    %v2379 = vcvt.s32.f32 %v2377
    %2380 = vmin.xlane.f32.xlu0 %v2379
    %v2381 = vpop.xlane.xlu0 %2380
    %vm2382 = vcmp.eq.f32.partialorder %v2379, %v2381
    %v2383 = vsel %vm2382, %v2378, inf
    %2384 = vmin.xlane.f32.xlu0 %v2383
    %v2385 = vpop.xlane.xlu0 %2384
    %v2386 = vcvt.f32.s32 %v2385
    %v2387 = vcvt.f32.s32 %v2381
    %v2388 = vshll.u32 %v2387, 16
    %v2389 = vadd.s32 %v2388, %v2386
    %vm2390 = vcmp.eq.s32.totalorder %v124, %v2374
    %vm2391 = vcmp.eq.s32.totalorder %v124, %v2389
    %v2392 = vsel %vm2390, 1, 0
    %v2393 = vsel %vm2391, 1, 0
    %v2394 = vcvt.s32.f32 %v2392
    %v2395 = vcvt.s32.f32 %v2393
    %v2396 = vmul.f32 %v2394, %v2059
    %v2397 = vmul.f32 %v2395, %v2059
    %v2398 = vsel %vm257, %v2396, 0.0
    %2399 = vadd.xlane.f32.xlu0 %v2398
    %v2400 = vpop.xlane.xlu0 %2399
    %v2401 = vsel %vm261, %v2397, 0.0
    %2402 = vadd.xlane.f32.xlu0 %v2401
    %v2403 = vpop.xlane.xlu0 %2402
    %v2404 = vsel %vm2390, -1e+30, %v2348
    %v2405 = vsel %vm2391, -1e+30, %v2349
    %v2406 = vsel %vm257, %v2404, -inf
    %2407 = vmax.xlane.f32.xlu0 %v2406
    %v2408 = vpop.xlane.xlu0 %2407
    %v2409 = vsel %vm261, %v2405, -inf
    %2410 = vmax.xlane.f32.xlu0 %v2409
    %v2411 = vpop.xlane.xlu0 %2410
    %vm2412 = vcmp.eq.f32.partialorder %v2404, %v2408
    %vm2413 = vcmp.eq.f32.partialorder %v2405, %v2411
    %v2414 = vsel %vm2412, %v124, 9
    %v2415 = vsel %vm2413, %v124, 9
    %v2416 = vsel %vm257, %v2414, 2147483647
    %v2417 = vand.u32 %v2416, 65535
    %v2418 = vshra.s32 %v2416, 16
    %v2419 = vcvt.s32.f32 %v2417
    %v2420 = vcvt.s32.f32 %v2418
    %2421 = vmin.xlane.f32.xlu0 %v2420
    %v2422 = vpop.xlane.xlu0 %2421
    %vm2423 = vcmp.eq.f32.partialorder %v2420, %v2422
    %v2424 = vsel %vm2423, %v2419, inf
    %2425 = vmin.xlane.f32.xlu0 %v2424
    %v2426 = vpop.xlane.xlu0 %2425
    %v2427 = vcvt.f32.s32 %v2426
    %v2428 = vcvt.f32.s32 %v2422
    %v2429 = vshll.u32 %v2428, 16
    %v2430 = vadd.s32 %v2429, %v2427
    %v2431 = vsel %vm261, %v2415, 2147483647
    %v2432 = vand.u32 %v2431, 65535
    %v2433 = vshra.s32 %v2431, 16
    %v2434 = vcvt.s32.f32 %v2432
    %v2435 = vcvt.s32.f32 %v2433
    %2436 = vmin.xlane.f32.xlu0 %v2435
    %v2437 = vpop.xlane.xlu0 %2436
    %vm2438 = vcmp.eq.f32.partialorder %v2435, %v2437
    %v2439 = vsel %vm2438, %v2434, inf
    %2440 = vmin.xlane.f32.xlu0 %v2439
    %v2441 = vpop.xlane.xlu0 %2440
    %v2442 = vcvt.f32.s32 %v2441
    %v2443 = vcvt.f32.s32 %v2437
    %v2444 = vshll.u32 %v2443, 16
    %v2445 = vadd.s32 %v2444, %v2442
    %vm2446 = vcmp.eq.s32.totalorder %v124, %v2430
    %vm2447 = vcmp.eq.s32.totalorder %v124, %v2445
    %v2448 = vsel %vm2446, 1, 0
    %v2449 = vsel %vm2447, 1, 0
    %v2450 = vcvt.s32.f32 %v2448
    %v2451 = vcvt.s32.f32 %v2449
    %v2452 = vmul.f32 %v2450, %v2059
    %v2453 = vmul.f32 %v2451, %v2059
    %v2454 = vsel %vm257, %v2452, 0.0
    %2455 = vadd.xlane.f32.xlu0 %v2454
    %v2456 = vpop.xlane.xlu0 %2455
    %v2457 = vsel %vm261, %v2453, 0.0
    %2458 = vadd.xlane.f32.xlu0 %v2457
    %v2459 = vpop.xlane.xlu0 %2458
    %v2460 = vsel %vm709, %v2012, %v2072
    %v2461 = vsel %vm709, %v2015, %v2075
    %v2462 = vsel %vm712, %v2460, %v2128
    %v2463 = vsel %vm712, %v2461, %v2131
    %v2464 = vsel %vm715, %v2462, %v2184
    %v2465 = vsel %vm715, %v2463, %v2187
    %v2466 = vsel %vm718, %v2464, %v2240
    %v2467 = vsel %vm718, %v2465, %v2243
    %v2468 = vsel %vm721, %v2466, %v2296
    %v2469 = vsel %vm721, %v2467, %v2299
    %v2470 = vsel %vm724, %v2468, %v2352
    %v2471 = vsel %vm724, %v2469, %v2355
    %v2472 = vsel %vm727, %v2470, %v2408
    %v2473 = vsel %vm727, %v2471, %v2411
    %v2474 = vsel %vm709, %v2064, %v2120
    %v2475 = vsel %vm709, %v2067, %v2123
    %v2476 = vsel %vm712, %v2474, %v2176
    %v2477 = vsel %vm712, %v2475, %v2179
    %v2478 = vsel %vm715, %v2476, %v2232
    %v2479 = vsel %vm715, %v2477, %v2235
    %v2480 = vsel %vm718, %v2478, %v2288
    %v2481 = vsel %vm718, %v2479, %v2291
    %v2482 = vsel %vm721, %v2480, %v2344
    %v2483 = vsel %vm721, %v2481, %v2347
    %v2484 = vsel %vm724, %v2482, %v2400
    %v2485 = vsel %vm724, %v2483, %v2403
    %v2486 = vsel %vm727, %v2484, %v2456
    %v2487 = vsel %vm727, %v2485, %v2459
    %2490 = vrot.lane.b32.xlu0 %v2472, 1
    %v2491 = vpop.permute.xlu0 %2490
    %2492 = vrot.lane.b32.xlu0 %v2473, 1
    %v2493 = vpop.permute.xlu0 %2492
    %2498 = vrot.lane.b32.xlu0 %v2486, 9
    %v2499 = vpop.permute.xlu0 %2498
    %2500 = vrot.lane.b32.xlu0 %v2487, 9
    %v2501 = vpop.permute.xlu0 %2500
    %v2504 = vsel %vm709, %v2000, %v2491
    %v2505 = vsel %vm709, %v2005, %v2493
    %v2506 = vsel %vm257, %v2504, %v2499
    %v2507 = vsel %vm257, %v2505, %v2501
    %s2508 = sld [smem:[#allocation9]]
    %s2509 = sld [smem:[#allocation10]]
    %v2510 = vsel %vm766, %v2506, 0.0
    %2511 = vadd.xlane.f32.xlu0 %v2510
    %v2512 = vpop.xlane.xlu0 %2511
    %v2513 = vsel %vm770, %v2507, 0.0
    %2514 = vadd.xlane.f32.xlu0 %v2513
    %v2515 = vpop.xlane.xlu0 %2514
    %v2516 = vmul.f32 %v2512, 0.05882353
    %v2517 = vmul.f32 %v2515, 0.05882353
    %v2518 = vmul.f32 %v2506, %v2506
    %v2519 = vmul.f32 %v2507, %v2507
    %v2520 = vsel %vm766, %v2518, 0.0
    %2521 = vadd.xlane.f32.xlu0 %v2520
    %v2522 = vpop.xlane.xlu0 %2521
    %v2523 = vsel %vm770, %v2519, 0.0
    %2524 = vadd.xlane.f32.xlu0 %v2523
    %v2525 = vpop.xlane.xlu0 %2524
    %v2526 = vmul.f32 %v2522, 0.05882353
    %v2527 = vmul.f32 %v2525, 0.05882353
    %v2528 = vmul.f32 %v2516, %v2516
    %v2529 = vmul.f32 %v2517, %v2517
    %v2530 = vsub.f32 %v2526, %v2528
    %v2531 = vsub.f32 %v2527, %v2529
    %v2532 = vmax.f32 %v2530, 0.0
    %v2533 = vmax.f32 %v2531, 0.0
    %v2534 = vsub.f32 %v2506, %v2516
    %v2535 = vsub.f32 %v2507, %v2517
    %v2536 = vadd.f32 %v2532, 1e-05
    %v2537 = vadd.f32 %v2533, 1e-05
    %v2538 = vrsqrt.pop %v2536
    %v2539 = vrsqrt.pop %v2537
    %v2540 = vmul.f32 %v2534, %v2538
    %v2541 = vmul.f32 %v2535, %v2539
    %v2542 = vstv %s2508
    %v2543 = vmul.f32 %v2540, %v2542
    %v2544 = vmul.f32 %v2541, %v2542
    %v2545 = vstv %s2509
    %v2546 = vadd.f32 %v2543, %v2545
    %v2547 = vadd.f32 %v2544, %v2545
    %v2548 = vpack.c.bf16 %v2547, %v2546
    %v2549 = vld [vmem:[%s10] sm:$0xff]
    %v2550 = vld [vmem:[%s10 + $0x8] sm:$0xff]
    %v2551 = vld [vmem:[%s10 + $0x10] sm:$0x11]
    %v2552 = vld [vmem:[%s11] sm:$0x3]
    %v2554 = vlaneseq
    %v2555 = vshrl.u32 %v2554, 7
    %v2556 = vsub.s32 0, %v2555
    %v2557 = vrot.slane %v2552, %v2556
    %v2558 = vlaneseq
    %v2559 = vshrl.u32 %v2558, 7
    %v2560 = vsub.s32 1, %v2559
    %v2561 = vrot.slane %v2552, %v2560
    %v2567 = vunpack.c.l.b16 %v2549
    %v2568 = vunpack.c.h.b16 %v2549
    %v2569 = vunpack.c.l.b16 %v2550
    %v2570 = vunpack.c.h.b16 %v2550
    %v2571 = vunpack.c.l.b16 %v2551
    %v2572 = vunpack.c.h.b16 %v2551
    %v2573 = vpack.c.b16 %v2569, %v2567
    %v2574 = vpack.c.b16 %v2570, %v2568
    %v2575 = vpack.c.b16 %v2571, %v2571
    %v2576 = vpack.c.b16 %v2572, %v2572
    %v2580 = vsel %vm766, %v2548, 0
    %v2583 = vand.u32 %v2575, %v841
    %v2586 = vand.u32 %v2576, %v841
    %2588 = vmatprep.subr.bf16.mxu0 %v2574
    %2589 = vmatpush1.bf16.msra.mxu0 %v2573
    %2590 = vmatprep.subr.bf16.mxu0 %v2586
    %2591 = vmatpush1.bf16.msra.mxu0 %v2583
    %2592 = vmatprep.subr.bf16.mxu0 0
    %2593 = vmatpush1.bf16.msra.mxu0 0
    %2594 = vmatprep.subr.bf16.mxu0 0
    %2595 = vmatpush1.bf16.msra.mxu0 0
    %2596 = vmatprep.subr.bf16.mxu0 0
    %2597 = vmatpush1.bf16.msra.mxu0 0
    %2598 = vmatprep.subr.bf16.mxu0 0
    %2599 = vmatpush1.bf16.msra.mxu0 0
    %2600 = vmatprep.subr.bf16.mxu0 0
    %2601 = vmatpush1.bf16.msra.mxu0 0
    %2602 = vmatprep.subr.bf16.mxu0 0
    %2603 = vmatpush1.bf16.msra.mxu0 0
    %2604 = vmatprep.subr.bf16.mxu0 0
    %2605 = vmatpush1.bf16.msra.mxu0 0
    %2606 = vmatprep.subr.bf16.mxu0 0
    %2607 = vmatpush1.bf16.msra.mxu0 0
    %2608 = vmatprep.subr.bf16.mxu0 0
    %2609 = vmatpush1.bf16.msra.mxu0 0
    %2610 = vmatprep.subr.bf16.mxu0 0
    %2611 = vmatpush1.bf16.msra.mxu0 0
    %2612 = vmatprep.subr.bf16.mxu0 0
    %2613 = vmatpush1.bf16.msra.mxu0 0
    %2614 = vmatprep.subr.bf16.mxu0 0
    %2615 = vmatpush1.bf16.msra.mxu0 0
    %2616 = vmatprep.subr.bf16.mxu0 0
    %2617 = vmatpush1.bf16.msra.mxu0 0
    %2618 = vmatprep.subr.bf16.mxu0 0
    %2619 = vmatpush1.bf16.msra.mxu0 0
    %2620 = vmatprep.mubr.bf16.mxu0 0
    %2621 = vmatmul.mubr.bf16.gmra.mrb[0].mxu0 %v2580
    %v2622 = vpop.f32.mrb[0].mxu0
    %v2623 = vadd.f32 %v2557, %v2622
    %v2624 = vpop.f32.mrb[0].mxu0
    %v2625 = vadd.f32 %v2561, %v2624
    %v2626 = vpop.f32.mrb[0].mxu0
    %v2627 = vadd.f32 %v2557, %v2626
    %v2628 = vpop.f32.mrb[0].mxu0
    %v2629 = vadd.f32 %v2561, %v2628
    %2630 = vdwg.mxu0
    %v2631 = vmax.f32 %v2623, 0.0
    %v2632 = vmax.f32 %v2625, 0.0
    %v2633 = vmax.f32 %v2627, 0.0
    %v2634 = vmax.f32 %v2629, 0.0
    %s2635 = sld [smem:[#allocation9 + $0x1]]
    %s2636 = sld [smem:[#allocation10 + $0x1]]
    %v2637 = vadd.f32 %v2631, %v2632
    %2638 = vadd.xlane.f32.xlu0 %v2637
    %v2639 = vpop.xlane.xlu0 %2638
    %v2640 = vsel %vm142, %v2633, 0.0
    %v2641 = vsel %vm142, %v2634, 0.0
    %v2642 = vadd.f32 %v2640, %v2641
    %2643 = vadd.xlane.f32.xlu0 %v2642
    %v2644 = vpop.xlane.xlu0 %2643
    %v2645 = vmul.f32 %v2639, 0.00390625
    %v2646 = vmul.f32 %v2644, 0.00390625
    %v2647 = vmul.f32 %v2631, %v2631
    %v2648 = vmul.f32 %v2632, %v2632
    %v2649 = vmul.f32 %v2633, %v2633
    %v2650 = vmul.f32 %v2634, %v2634
    %v2651 = vadd.f32 %v2647, %v2648
    %2652 = vadd.xlane.f32.xlu0 %v2651
    %v2653 = vpop.xlane.xlu0 %2652
    %v2654 = vsel %vm142, %v2649, 0.0
    %v2655 = vsel %vm142, %v2650, 0.0
    %v2656 = vadd.f32 %v2654, %v2655
    %2657 = vadd.xlane.f32.xlu0 %v2656
    %v2658 = vpop.xlane.xlu0 %2657
    %v2659 = vmul.f32 %v2653, 0.00390625
    %v2660 = vmul.f32 %v2658, 0.00390625
    %v2661 = vmul.f32 %v2645, %v2645
    %v2662 = vmul.f32 %v2646, %v2646
    %v2663 = vsub.f32 %v2659, %v2661
    %v2664 = vsub.f32 %v2660, %v2662
    %v2665 = vmax.f32 %v2663, 0.0
    %v2666 = vmax.f32 %v2664, 0.0
    %v2667 = vsub.f32 %v2631, %v2645
    %v2668 = vsub.f32 %v2632, %v2645
    %v2669 = vsub.f32 %v2633, %v2646
    %v2670 = vsub.f32 %v2634, %v2646
    %v2671 = vadd.f32 %v2665, 1e-05
    %v2672 = vadd.f32 %v2666, 1e-05
    %v2673 = vrsqrt.pop %v2671
    %v2674 = vrsqrt.pop %v2672
    %v2675 = vmul.f32 %v2667, %v2673
    %v2676 = vmul.f32 %v2668, %v2673
    %v2677 = vmul.f32 %v2669, %v2674
    %v2678 = vmul.f32 %v2670, %v2674
    %v2679 = vstv %s2635
    %v2680 = vmul.f32 %v2675, %v2679
    %v2681 = vmul.f32 %v2676, %v2679
    %v2682 = vmul.f32 %v2677, %v2679
    %v2683 = vmul.f32 %v2678, %v2679
    %v2684 = vstv %s2636
    %v2685 = vadd.f32 %v2680, %v2684
    %v2686 = vadd.f32 %v2681, %v2684
    %v2687 = vadd.f32 %v2682, %v2684
    %v2688 = vadd.f32 %v2683, %v2684
    %v2689 = vpack.c.bf16 %v2687, %v2685
    %v2690 = vpack.c.bf16 %v2688, %v2686
    %v2691 = vld [vmem:[#allocation8] sm:$0xff]
    %v2692 = vld [vmem:[#allocation8 + $0x8] sm:$0xff]
    %v2693 = vld [vmem:[#allocation8 + $0x10] sm:$0xff]
    %v2694 = vld [vmem:[#allocation8 + $0x18] sm:$0xff]
    %v2695 = vld [vmem:[#allocation8 + $0x20] sm:$0xff]
    %v2696 = vld [vmem:[#allocation8 + $0x28] sm:$0xff]
    %v2697 = vld [vmem:[#allocation8 + $0x30] sm:$0xff]
    %v2698 = vld [vmem:[#allocation8 + $0x38] sm:$0xff]
    %v2699 = vld [vmem:[#allocation8 + $0x40] sm:$0xff]
    %v2700 = vld [vmem:[#allocation8 + $0x48] sm:$0xff]
    %v2701 = vld [vmem:[#allocation8 + $0x50] sm:$0xff]
    %v2702 = vld [vmem:[#allocation8 + $0x58] sm:$0xff]
    %v2703 = vld [vmem:[#allocation8 + $0x60] sm:$0xff]
    %v2704 = vld [vmem:[#allocation8 + $0x68] sm:$0xff]
    %v2705 = vld [vmem:[#allocation8 + $0x70] sm:$0xff]
    %v2706 = vld [vmem:[#allocation8 + $0x78] sm:$0xff]
    %v2707 = vld [vmem:[#allocation8 + $0x80] sm:$0xff]
    %v2708 = vld [vmem:[#allocation8 + $0x88] sm:$0xff]
    %v2709 = vld [vmem:[#allocation8 + $0x90] sm:$0xff]
    %v2710 = vld [vmem:[#allocation8 + $0x98] sm:$0xff]
    %v2711 = vld [vmem:[#allocation8 + $0xa0] sm:$0xff]
    %v2712 = vld [vmem:[#allocation8 + $0xa8] sm:$0xff]
    %v2713 = vld [vmem:[#allocation8 + $0xb0] sm:$0xff]
    %v2714 = vld [vmem:[#allocation8 + $0xb8] sm:$0xff]
    %v2715 = vld [vmem:[#allocation8 + $0xc0] sm:$0xff]
    %v2716 = vld [vmem:[#allocation8 + $0xc8] sm:$0xff]
    %v2717 = vld [vmem:[#allocation8 + $0xd0] sm:$0xff]
    %v2718 = vld [vmem:[#allocation8 + $0xd8] sm:$0xff]
    %v2719 = vld [vmem:[#allocation8 + $0xe0] sm:$0xff]
    %v2720 = vld [vmem:[#allocation8 + $0xe8] sm:$0xff]
    %v2721 = vld [vmem:[#allocation8 + $0xf0] sm:$0xff]
    %v2722 = vld [vmem:[#allocation8 + $0xf8] sm:$0xff]
    %v2723 = vld [vmem:[%s13] sm:$0x3]
    %v2725 = vlaneseq
    %v2726 = vshrl.u32 %v2725, 7
    %v2727 = vsub.s32 0, %v2726
    %v2728 = vrot.slane %v2723, %v2727
    %v2729 = vlaneseq
    %v2730 = vshrl.u32 %v2729, 7
    %v2731 = vsub.s32 1, %v2730
    %v2732 = vrot.slane %v2723, %v2731
    %v2767 = vunpack.c.l.b16 %v2691
    %v2768 = vunpack.c.h.b16 %v2691
    %v2769 = vunpack.c.l.b16 %v2692
    %v2770 = vunpack.c.h.b16 %v2692
    %v2771 = vunpack.c.l.b16 %v2693
    %v2772 = vunpack.c.h.b16 %v2693
    %v2773 = vunpack.c.l.b16 %v2694
    %v2774 = vunpack.c.h.b16 %v2694
    %v2775 = vunpack.c.l.b16 %v2695
    %v2776 = vunpack.c.h.b16 %v2695
    %v2777 = vunpack.c.l.b16 %v2696
    %v2778 = vunpack.c.h.b16 %v2696
    %v2779 = vunpack.c.l.b16 %v2697
    %v2780 = vunpack.c.h.b16 %v2697
    %v2781 = vunpack.c.l.b16 %v2698
    %v2782 = vunpack.c.h.b16 %v2698
    %v2783 = vunpack.c.l.b16 %v2699
    %v2784 = vunpack.c.h.b16 %v2699
    %v2785 = vunpack.c.l.b16 %v2700
    %v2786 = vunpack.c.h.b16 %v2700
    %v2787 = vunpack.c.l.b16 %v2701
    %v2788 = vunpack.c.h.b16 %v2701
    %v2789 = vunpack.c.l.b16 %v2702
    %v2790 = vunpack.c.h.b16 %v2702
    %v2791 = vunpack.c.l.b16 %v2703
    %v2792 = vunpack.c.h.b16 %v2703
    %v2793 = vunpack.c.l.b16 %v2704
    %v2794 = vunpack.c.h.b16 %v2704
    %v2795 = vunpack.c.l.b16 %v2705
    %v2796 = vunpack.c.h.b16 %v2705
    %v2797 = vunpack.c.l.b16 %v2706
    %v2798 = vunpack.c.h.b16 %v2706
    %v2799 = vunpack.c.l.b16 %v2707
    %v2800 = vunpack.c.h.b16 %v2707
    %v2801 = vunpack.c.l.b16 %v2708
    %v2802 = vunpack.c.h.b16 %v2708
    %v2803 = vunpack.c.l.b16 %v2709
    %v2804 = vunpack.c.h.b16 %v2709
    %v2805 = vunpack.c.l.b16 %v2710
    %v2806 = vunpack.c.h.b16 %v2710
    %v2807 = vunpack.c.l.b16 %v2711
    %v2808 = vunpack.c.h.b16 %v2711
    %v2809 = vunpack.c.l.b16 %v2712
    %v2810 = vunpack.c.h.b16 %v2712
    %v2811 = vunpack.c.l.b16 %v2713
    %v2812 = vunpack.c.h.b16 %v2713
    %v2813 = vunpack.c.l.b16 %v2714
    %v2814 = vunpack.c.h.b16 %v2714
    %v2815 = vunpack.c.l.b16 %v2715
    %v2816 = vunpack.c.h.b16 %v2715
    %v2817 = vunpack.c.l.b16 %v2716
    %v2818 = vunpack.c.h.b16 %v2716
    %v2819 = vunpack.c.l.b16 %v2717
    %v2820 = vunpack.c.h.b16 %v2717
    %v2821 = vunpack.c.l.b16 %v2718
    %v2822 = vunpack.c.h.b16 %v2718
    %v2823 = vunpack.c.l.b16 %v2719
    %v2824 = vunpack.c.h.b16 %v2719
    %v2825 = vunpack.c.l.b16 %v2720
    %v2826 = vunpack.c.h.b16 %v2720
    %v2827 = vunpack.c.l.b16 %v2721
    %v2828 = vunpack.c.h.b16 %v2721
    %v2829 = vunpack.c.l.b16 %v2722
    %v2830 = vunpack.c.h.b16 %v2722
    %v2831 = vpack.c.b16 %v2769, %v2767
    %v2832 = vpack.c.b16 %v2770, %v2768
    %v2833 = vpack.c.b16 %v2773, %v2771
    %v2834 = vpack.c.b16 %v2774, %v2772
    %v2835 = vpack.c.b16 %v2777, %v2775
    %v2836 = vpack.c.b16 %v2778, %v2776
    %v2837 = vpack.c.b16 %v2781, %v2779
    %v2838 = vpack.c.b16 %v2782, %v2780
    %v2839 = vpack.c.b16 %v2785, %v2783
    %v2840 = vpack.c.b16 %v2786, %v2784
    %v2841 = vpack.c.b16 %v2789, %v2787
    %v2842 = vpack.c.b16 %v2790, %v2788
    %v2843 = vpack.c.b16 %v2793, %v2791
    %v2844 = vpack.c.b16 %v2794, %v2792
    %v2845 = vpack.c.b16 %v2797, %v2795
    %v2846 = vpack.c.b16 %v2798, %v2796
    %v2847 = vpack.c.b16 %v2801, %v2799
    %v2848 = vpack.c.b16 %v2802, %v2800
    %v2849 = vpack.c.b16 %v2805, %v2803
    %v2850 = vpack.c.b16 %v2806, %v2804
    %v2851 = vpack.c.b16 %v2809, %v2807
    %v2852 = vpack.c.b16 %v2810, %v2808
    %v2853 = vpack.c.b16 %v2813, %v2811
    %v2854 = vpack.c.b16 %v2814, %v2812
    %v2855 = vpack.c.b16 %v2817, %v2815
    %v2856 = vpack.c.b16 %v2818, %v2816
    %v2857 = vpack.c.b16 %v2821, %v2819
    %v2858 = vpack.c.b16 %v2822, %v2820
    %v2859 = vpack.c.b16 %v2825, %v2823
    %v2860 = vpack.c.b16 %v2826, %v2824
    %v2861 = vpack.c.b16 %v2829, %v2827
    %v2862 = vpack.c.b16 %v2830, %v2828
    %2895 = vmatprep.subr.bf16.mxu0 %v2832
    %2896 = vmatpush1.bf16.msra.mxu0 %v2831
    %2897 = vmatprep.subr.bf16.mxu0 %v2834
    %2898 = vmatpush1.bf16.msra.mxu0 %v2833
    %2899 = vmatprep.subr.bf16.mxu0 %v2836
    %2900 = vmatpush1.bf16.msra.mxu0 %v2835
    %2901 = vmatprep.subr.bf16.mxu0 %v2838
    %2902 = vmatpush1.bf16.msra.mxu0 %v2837
    %2903 = vmatprep.subr.bf16.mxu0 %v2840
    %2904 = vmatpush1.bf16.msra.mxu0 %v2839
    %2905 = vmatprep.subr.bf16.mxu0 %v2842
    %2906 = vmatpush1.bf16.msra.mxu0 %v2841
    %2907 = vmatprep.subr.bf16.mxu0 %v2844
    %2908 = vmatpush1.bf16.msra.mxu0 %v2843
    %2909 = vmatprep.subr.bf16.mxu0 %v2846
    %2910 = vmatpush1.bf16.msra.mxu0 %v2845
    %2911 = vmatprep.subr.bf16.mxu0 %v2848
    %2912 = vmatpush1.bf16.msra.mxu0 %v2847
    %2913 = vmatprep.subr.bf16.mxu0 %v2850
    %2914 = vmatpush1.bf16.msra.mxu0 %v2849
    %2915 = vmatprep.subr.bf16.mxu0 %v2852
    %2916 = vmatpush1.bf16.msra.mxu0 %v2851
    %2917 = vmatprep.subr.bf16.mxu0 %v2854
    %2918 = vmatpush1.bf16.msra.mxu0 %v2853
    %2919 = vmatprep.subr.bf16.mxu0 %v2856
    %2920 = vmatpush1.bf16.msra.mxu0 %v2855
    %2921 = vmatprep.subr.bf16.mxu0 %v2858
    %2922 = vmatpush1.bf16.msra.mxu0 %v2857
    %2923 = vmatprep.subr.bf16.mxu0 %v2860
    %2924 = vmatpush1.bf16.msra.mxu0 %v2859
    %2925 = vmatprep.subr.bf16.mxu0 %v2862
    %2926 = vmatpush1.bf16.msra.mxu0 %v2861
    %2927 = vmatprep.mubr.bf16.mxu0 %v2690
    %2928 = vmatmul.mubr.bf16.gmra.mrb[0].mxu0 %v2689
    %v2929 = vpop.f32.mrb[0].mxu0
    %v2930 = vadd.f32 %v2728, %v2929
    %v2931 = vpop.f32.mrb[0].mxu0
    %v2932 = vadd.f32 %v2732, %v2931
    %v2933 = vpop.f32.mrb[0].mxu0
    %v2934 = vadd.f32 %v2728, %v2933
    %v2935 = vpop.f32.mrb[0].mxu0
    %v2936 = vadd.f32 %v2732, %v2935
    %2937 = vdwg.mxu0
    %v2938 = vmax.f32 %v2930, 0.0
    %v2939 = vmax.f32 %v2932, 0.0
    %v2940 = vmax.f32 %v2934, 0.0
    %v2941 = vmax.f32 %v2936, 0.0
    %s2942 = sld [smem:[#allocation9 + $0x2]]
    %s2943 = sld [smem:[#allocation10 + $0x2]]
    %v2944 = vadd.f32 %v2938, %v2939
    %2945 = vadd.xlane.f32.xlu0 %v2944
    %v2946 = vpop.xlane.xlu0 %2945
    %v2947 = vsel %vm142, %v2940, 0.0
    %v2948 = vsel %vm142, %v2941, 0.0
    %v2949 = vadd.f32 %v2947, %v2948
    %2950 = vadd.xlane.f32.xlu0 %v2949
    %v2951 = vpop.xlane.xlu0 %2950
    %v2952 = vmul.f32 %v2946, 0.00390625
    %v2953 = vmul.f32 %v2951, 0.00390625
    %v2954 = vmul.f32 %v2938, %v2938
    %v2955 = vmul.f32 %v2939, %v2939
    %v2956 = vmul.f32 %v2940, %v2940
    %v2957 = vmul.f32 %v2941, %v2941
    %v2958 = vadd.f32 %v2954, %v2955
    %2959 = vadd.xlane.f32.xlu0 %v2958
    %v2960 = vpop.xlane.xlu0 %2959
    %v2961 = vsel %vm142, %v2956, 0.0
    %v2962 = vsel %vm142, %v2957, 0.0
    %v2963 = vadd.f32 %v2961, %v2962
    %2964 = vadd.xlane.f32.xlu0 %v2963
    %v2965 = vpop.xlane.xlu0 %2964
    %v2966 = vmul.f32 %v2960, 0.00390625
    %v2967 = vmul.f32 %v2965, 0.00390625
    %v2968 = vmul.f32 %v2952, %v2952
    %v2969 = vmul.f32 %v2953, %v2953
    %v2970 = vsub.f32 %v2966, %v2968
    %v2971 = vsub.f32 %v2967, %v2969
    %v2972 = vmax.f32 %v2970, 0.0
    %v2973 = vmax.f32 %v2971, 0.0
    %v2974 = vsub.f32 %v2938, %v2952
    %v2975 = vsub.f32 %v2939, %v2952
    %v2976 = vsub.f32 %v2940, %v2953
    %v2977 = vsub.f32 %v2941, %v2953
    %v2978 = vadd.f32 %v2972, 1e-05
    %v2979 = vadd.f32 %v2973, 1e-05
    %v2980 = vrsqrt.pop %v2978
    %v2981 = vrsqrt.pop %v2979
    %v2982 = vmul.f32 %v2974, %v2980
    %v2983 = vmul.f32 %v2975, %v2980
    %v2984 = vmul.f32 %v2976, %v2981
    %v2985 = vmul.f32 %v2977, %v2981
    %v2986 = vstv %s2942
    %v2987 = vmul.f32 %v2982, %v2986
    %v2988 = vmul.f32 %v2983, %v2986
    %v2989 = vmul.f32 %v2984, %v2986
    %v2990 = vmul.f32 %v2985, %v2986
    %v2991 = vstv %s2943
    %v2992 = vadd.f32 %v2987, %v2991
    %v2993 = vadd.f32 %v2988, %v2991
    %v2994 = vadd.f32 %v2989, %v2991
    %v2995 = vadd.f32 %v2990, %v2991
    %v2996 = vpack.c.bf16 %v2994, %v2992
    %v2997 = vpack.c.bf16 %v2995, %v2993
    %v2998 = vld [vmem:[%s14] sm:$0xf]
    %v2999 = vld [vmem:[%s14 + $0x4] sm:$0xf]
    %v3000 = vld [vmem:[%s14 + $0x8] sm:$0xf]
    %v3001 = vld [vmem:[%s14 + $0xc] sm:$0xf]
    %v3002 = vld [vmem:[%s14 + $0x10] sm:$0xf]
    %v3003 = vld [vmem:[%s14 + $0x14] sm:$0xf]
    %v3004 = vld [vmem:[%s14 + $0x18] sm:$0xf]
    %v3005 = vld [vmem:[%s14 + $0x1c] sm:$0xf]
    %v3006 = vld [vmem:[%s14 + $0x20] sm:$0xf]
    %v3007 = vld [vmem:[%s14 + $0x24] sm:$0xf]
    %v3008 = vld [vmem:[%s14 + $0x28] sm:$0xf]
    %v3009 = vld [vmem:[%s14 + $0x2c] sm:$0xf]
    %v3010 = vld [vmem:[%s14 + $0x30] sm:$0xf]
    %v3011 = vld [vmem:[%s14 + $0x34] sm:$0xf]
    %v3012 = vld [vmem:[%s14 + $0x38] sm:$0xf]
    %v3013 = vld [vmem:[%s14 + $0x3c] sm:$0xf]
    %v3014 = vld [vmem:[%s14 + $0x40] sm:$0xf]
    %v3015 = vld [vmem:[%s14 + $0x44] sm:$0xf]
    %v3016 = vld [vmem:[%s14 + $0x48] sm:$0xf]
    %v3017 = vld [vmem:[%s14 + $0x4c] sm:$0xf]
    %v3018 = vld [vmem:[%s14 + $0x50] sm:$0xf]
    %v3019 = vld [vmem:[%s14 + $0x54] sm:$0xf]
    %v3020 = vld [vmem:[%s14 + $0x58] sm:$0xf]
    %v3021 = vld [vmem:[%s14 + $0x5c] sm:$0xf]
    %v3022 = vld [vmem:[%s14 + $0x60] sm:$0xf]
    %v3023 = vld [vmem:[%s14 + $0x64] sm:$0xf]
    %v3024 = vld [vmem:[%s14 + $0x68] sm:$0xf]
    %v3025 = vld [vmem:[%s14 + $0x6c] sm:$0xf]
    %v3026 = vld [vmem:[%s14 + $0x70] sm:$0xf]
    %v3027 = vld [vmem:[%s14 + $0x74] sm:$0xf]
    %v3028 = vld [vmem:[%s14 + $0x78] sm:$0xf]
    %v3029 = vld [vmem:[%s14 + $0x7c] sm:$0xf]
    %v3030 = vld [vmem:[%s15] sm:$0x1]
    %v3032 = vlaneseq
    %v3033 = vshrl.u32 %v3032, 7
    %v3034 = vsub.s32 0, %v3033
    %v3035 = vrot.slane %v3030, %v3034
    %v3069 = vunpack.c.l.b16 %v2998
    %v3070 = vunpack.c.l.b16 %v2999
    %v3071 = vunpack.c.l.b16 %v3000
    %v3072 = vunpack.c.l.b16 %v3001
    %v3073 = vunpack.c.l.b16 %v3002
    %v3074 = vunpack.c.l.b16 %v3003
    %v3075 = vunpack.c.l.b16 %v3004
    %v3076 = vunpack.c.l.b16 %v3005
    %v3077 = vunpack.c.l.b16 %v3006
    %v3078 = vunpack.c.l.b16 %v3007
    %v3079 = vunpack.c.l.b16 %v3008
    %v3080 = vunpack.c.l.b16 %v3009
    %v3081 = vunpack.c.l.b16 %v3010
    %v3082 = vunpack.c.l.b16 %v3011
    %v3083 = vunpack.c.l.b16 %v3012
    %v3084 = vunpack.c.l.b16 %v3013
    %v3085 = vunpack.c.l.b16 %v3014
    %v3086 = vunpack.c.l.b16 %v3015
    %v3087 = vunpack.c.l.b16 %v3016
    %v3088 = vunpack.c.l.b16 %v3017
    %v3089 = vunpack.c.l.b16 %v3018
    %v3090 = vunpack.c.l.b16 %v3019
    %v3091 = vunpack.c.l.b16 %v3020
    %v3092 = vunpack.c.l.b16 %v3021
    %v3093 = vunpack.c.l.b16 %v3022
    %v3094 = vunpack.c.l.b16 %v3023
    %v3095 = vunpack.c.l.b16 %v3024
    %v3096 = vunpack.c.l.b16 %v3025
    %v3097 = vunpack.c.l.b16 %v3026
    %v3098 = vunpack.c.l.b16 %v3027
    %v3099 = vunpack.c.l.b16 %v3028
    %v3100 = vunpack.c.l.b16 %v3029
    %v3101 = vpack.c.b16 %v3070, %v3069
    %v3102 = vpack.c.b16 %v3072, %v3071
    %v3103 = vpack.c.b16 %v3074, %v3073
    %v3104 = vpack.c.b16 %v3076, %v3075
    %v3105 = vpack.c.b16 %v3078, %v3077
    %v3106 = vpack.c.b16 %v3080, %v3079
    %v3107 = vpack.c.b16 %v3082, %v3081
    %v3108 = vpack.c.b16 %v3084, %v3083
    %v3109 = vpack.c.b16 %v3086, %v3085
    %v3110 = vpack.c.b16 %v3088, %v3087
    %v3111 = vpack.c.b16 %v3090, %v3089
    %v3112 = vpack.c.b16 %v3092, %v3091
    %v3113 = vpack.c.b16 %v3094, %v3093
    %v3114 = vpack.c.b16 %v3096, %v3095
    %v3115 = vpack.c.b16 %v3098, %v3097
    %v3116 = vpack.c.b16 %v3100, %v3099
    %3133 = vmatprep.subr.bf16.mxu0 0
    %3134 = vmatpush1.bf16.msra.mxu0 %v3101
    %3135 = vmatprep.subr.bf16.mxu0 0
    %3136 = vmatpush1.bf16.msra.mxu0 %v3102
    %3137 = vmatprep.subr.bf16.mxu0 0
    %3138 = vmatpush1.bf16.msra.mxu0 %v3103
    %3139 = vmatprep.subr.bf16.mxu0 0
    %3140 = vmatpush1.bf16.msra.mxu0 %v3104
    %3141 = vmatprep.subr.bf16.mxu0 0
    %3142 = vmatpush1.bf16.msra.mxu0 %v3105
    %3143 = vmatprep.subr.bf16.mxu0 0
    %3144 = vmatpush1.bf16.msra.mxu0 %v3106
    %3145 = vmatprep.subr.bf16.mxu0 0
    %3146 = vmatpush1.bf16.msra.mxu0 %v3107
    %3147 = vmatprep.subr.bf16.mxu0 0
    %3148 = vmatpush1.bf16.msra.mxu0 %v3108
    %3149 = vmatprep.subr.bf16.mxu0 0
    %3150 = vmatpush1.bf16.msra.mxu0 %v3109
    %3151 = vmatprep.subr.bf16.mxu0 0
    %3152 = vmatpush1.bf16.msra.mxu0 %v3110
    %3153 = vmatprep.subr.bf16.mxu0 0
    %3154 = vmatpush1.bf16.msra.mxu0 %v3111
    %3155 = vmatprep.subr.bf16.mxu0 0
    %3156 = vmatpush1.bf16.msra.mxu0 %v3112
    %3157 = vmatprep.subr.bf16.mxu0 0
    %3158 = vmatpush1.bf16.msra.mxu0 %v3113
    %3159 = vmatprep.subr.bf16.mxu0 0
    %3160 = vmatpush1.bf16.msra.mxu0 %v3114
    %3161 = vmatprep.subr.bf16.mxu0 0
    %3162 = vmatpush1.bf16.msra.mxu0 %v3115
    %3163 = vmatprep.subr.bf16.mxu0 0
    %3164 = vmatpush1.bf16.msra.mxu0 %v3116
    %3165 = vmatprep.mubr.bf16.mxu0 %v2997
    %3166 = vmatmul.mubr.bf16.gmra.mrb[0].mxu0 %v2996
    %v3167 = vpop.f32.mrb[0].mxu0
    %v3168 = vadd.f32 %v3035, %v3167
    %v3169 = vpop.f32.mrb[0].mxu0
    %v3170 = vpop.f32.mrb[0].mxu0
    %v3171 = vadd.f32 %v3035, %v3170
    %v3172 = vpop.f32.mrb[0].mxu0
    %3173 = vdwg.mxu0
    %3175 = vset.pattern.permute.xlu0 0
    %3176 = vperm.xlu0 %3175, %v3168
    %v3177 = vpop.permute.xlu0 %3176
    %3180 = vset.pattern.permute.xlu0 0
    %3181 = vperm.xlu0 %3180, %v3171
    %v3182 = vpop.permute.xlu0 %3181
    %v3184 = vmul.f32 %v3177, %v130
    %v3185 = vmul.f32 %v3182, %v130
    %3186 = vset.pattern.permute.xlu0 1
    %3187 = vperm.xlu0 %3186, %v3168
    %v3188 = vpop.permute.xlu0 %3187
    %3190 = vset.pattern.permute.xlu0 1
    %3191 = vperm.xlu0 %3190, %v3171
    %v3192 = vpop.permute.xlu0 %3191
    %v3194 = vmul.f32 %v3188, %v2054
    %v3195 = vmul.f32 %v3192, %v2055
    %v3196 = vadd.f32 %v3184, %v3194
    %v3197 = vadd.f32 %v3185, %v3195
    %3198 = vset.pattern.permute.xlu0 9
    %3199 = vperm.xlu0 %3198, %v3168
    %v3200 = vpop.permute.xlu0 %3199
    %3202 = vset.pattern.permute.xlu0 9
    %3203 = vperm.xlu0 %3202, %v3171
    %v3204 = vpop.permute.xlu0 %3203
    %v3206 = vmul.f32 %v3200, %v2054
    %v3207 = vmul.f32 %v3204, %v2055
    %v3208 = vsel %vm257, %v3206, 0.0
    %v3209 = vsel %vm261, %v3207, 0.0
    %v3210 = vadd.f32 %v3208, %v3209
    %v3211 = vrot.slane %v3210, 4
    %v3212 = vadd.f32 %v3210, %v3211
    %v3213 = vrot.slane %v3212, 2
    %v3214 = vadd.f32 %v3212, %v3213
    %v3215 = vrot.slane %v3214, 1
    %v3216 = vadd.f32 %v3214, %v3215
    %v3217 = vadd.f32 %v3216, 0.0
    %3218 = vset.pattern.permute.xlu0 2
    %3219 = vperm.xlu0 %3218, %v3168
    %v3220 = vpop.permute.xlu0 %3219
    %3222 = vset.pattern.permute.xlu0 2
    %3223 = vperm.xlu0 %3222, %v3171
    %v3224 = vpop.permute.xlu0 %3223
    %v3226 = vmul.f32 %v3220, %v2114
    %v3227 = vmul.f32 %v3224, %v2115
    %v3228 = vadd.f32 %v3196, %v3226
    %v3229 = vadd.f32 %v3197, %v3227
    %3230 = vset.pattern.permute.xlu0 10
    %3231 = vperm.xlu0 %3230, %v3168
    %v3232 = vpop.permute.xlu0 %3231
    %3234 = vset.pattern.permute.xlu0 10
    %3235 = vperm.xlu0 %3234, %v3171
    %v3236 = vpop.permute.xlu0 %3235
    %v3238 = vmul.f32 %v3232, %v2114
    %v3239 = vmul.f32 %v3236, %v2115
    %v3240 = vsel %vm257, %v3238, 0.0
    %v3241 = vsel %vm261, %v3239, 0.0
    %v3242 = vadd.f32 %v3240, %v3241
    %v3243 = vrot.slane %v3242, 4
    %v3244 = vadd.f32 %v3242, %v3243
    %v3245 = vrot.slane %v3244, 2
    %v3246 = vadd.f32 %v3244, %v3245
    %v3247 = vrot.slane %v3246, 1
    %v3248 = vadd.f32 %v3246, %v3247
    %v3249 = vadd.f32 %v3217, %v3248
    %3250 = vset.pattern.permute.xlu0 3
    %3251 = vperm.xlu0 %3250, %v3168
    %v3252 = vpop.permute.xlu0 %3251
    %3254 = vset.pattern.permute.xlu0 3
    %3255 = vperm.xlu0 %3254, %v3171
    %v3256 = vpop.permute.xlu0 %3255
    %v3258 = vmul.f32 %v3252, %v2170
    %v3259 = vmul.f32 %v3256, %v2171
    %v3260 = vadd.f32 %v3228, %v3258
    %v3261 = vadd.f32 %v3229, %v3259
    %3262 = vset.pattern.permute.xlu0 11
    %3263 = vperm.xlu0 %3262, %v3168
    %v3264 = vpop.permute.xlu0 %3263
    %3266 = vset.pattern.permute.xlu0 11
    %3267 = vperm.xlu0 %3266, %v3171
    %v3268 = vpop.permute.xlu0 %3267
    %v3270 = vmul.f32 %v3264, %v2170
    %v3271 = vmul.f32 %v3268, %v2171
    %v3272 = vsel %vm257, %v3270, 0.0
    %v3273 = vsel %vm261, %v3271, 0.0
    %v3274 = vadd.f32 %v3272, %v3273
    %v3275 = vrot.slane %v3274, 4
    %v3276 = vadd.f32 %v3274, %v3275
    %v3277 = vrot.slane %v3276, 2
    %v3278 = vadd.f32 %v3276, %v3277
    %v3279 = vrot.slane %v3278, 1
    %v3280 = vadd.f32 %v3278, %v3279
    %v3281 = vadd.f32 %v3249, %v3280
    %3282 = vset.pattern.permute.xlu0 4
    %3283 = vperm.xlu0 %3282, %v3168
    %v3284 = vpop.permute.xlu0 %3283
    %3286 = vset.pattern.permute.xlu0 4
    %3287 = vperm.xlu0 %3286, %v3171
    %v3288 = vpop.permute.xlu0 %3287
    %v3290 = vmul.f32 %v3284, %v2226
    %v3291 = vmul.f32 %v3288, %v2227
    %v3292 = vadd.f32 %v3260, %v3290
    %v3293 = vadd.f32 %v3261, %v3291
    %3294 = vset.pattern.permute.xlu0 12
    %3295 = vperm.xlu0 %3294, %v3168
    %v3296 = vpop.permute.xlu0 %3295
    %3298 = vset.pattern.permute.xlu0 12
    %3299 = vperm.xlu0 %3298, %v3171
    %v3300 = vpop.permute.xlu0 %3299
    %v3302 = vmul.f32 %v3296, %v2226
    %v3303 = vmul.f32 %v3300, %v2227
    %v3304 = vsel %vm257, %v3302, 0.0
    %v3305 = vsel %vm261, %v3303, 0.0
    %v3306 = vadd.f32 %v3304, %v3305
    %v3307 = vrot.slane %v3306, 4
    %v3308 = vadd.f32 %v3306, %v3307
    %v3309 = vrot.slane %v3308, 2
    %v3310 = vadd.f32 %v3308, %v3309
    %v3311 = vrot.slane %v3310, 1
    %v3312 = vadd.f32 %v3310, %v3311
    %v3313 = vadd.f32 %v3281, %v3312
    %3314 = vset.pattern.permute.xlu0 5
    %3315 = vperm.xlu0 %3314, %v3168
    %v3316 = vpop.permute.xlu0 %3315
    %3318 = vset.pattern.permute.xlu0 5
    %3319 = vperm.xlu0 %3318, %v3171
    %v3320 = vpop.permute.xlu0 %3319
    %v3322 = vmul.f32 %v3316, %v2282
    %v3323 = vmul.f32 %v3320, %v2283
    %v3324 = vadd.f32 %v3292, %v3322
    %v3325 = vadd.f32 %v3293, %v3323
    %3326 = vset.pattern.permute.xlu0 13
    %3327 = vperm.xlu0 %3326, %v3168
    %v3328 = vpop.permute.xlu0 %3327
    %3330 = vset.pattern.permute.xlu0 13
    %3331 = vperm.xlu0 %3330, %v3171
    %v3332 = vpop.permute.xlu0 %3331
    %v3334 = vmul.f32 %v3328, %v2282
    %v3335 = vmul.f32 %v3332, %v2283
    %v3336 = vsel %vm257, %v3334, 0.0
    %v3337 = vsel %vm261, %v3335, 0.0
    %v3338 = vadd.f32 %v3336, %v3337
    %v3339 = vrot.slane %v3338, 4
    %v3340 = vadd.f32 %v3338, %v3339
    %v3341 = vrot.slane %v3340, 2
    %v3342 = vadd.f32 %v3340, %v3341
    %v3343 = vrot.slane %v3342, 1
    %v3344 = vadd.f32 %v3342, %v3343
    %v3345 = vadd.f32 %v3313, %v3344
    %3346 = vset.pattern.permute.xlu0 6
    %3347 = vperm.xlu0 %3346, %v3168
    %v3348 = vpop.permute.xlu0 %3347
    %3350 = vset.pattern.permute.xlu0 6
    %3351 = vperm.xlu0 %3350, %v3171
    %v3352 = vpop.permute.xlu0 %3351
    %v3354 = vmul.f32 %v3348, %v2338
    %v3355 = vmul.f32 %v3352, %v2339
    %v3356 = vadd.f32 %v3324, %v3354
    %v3357 = vadd.f32 %v3325, %v3355
    %3358 = vset.pattern.permute.xlu0 14
    %3359 = vperm.xlu0 %3358, %v3168
    %v3360 = vpop.permute.xlu0 %3359
    %3362 = vset.pattern.permute.xlu0 14
    %3363 = vperm.xlu0 %3362, %v3171
    %v3364 = vpop.permute.xlu0 %3363
    %v3366 = vmul.f32 %v3360, %v2338
    %v3367 = vmul.f32 %v3364, %v2339
    %v3368 = vsel %vm257, %v3366, 0.0
    %v3369 = vsel %vm261, %v3367, 0.0
    %v3370 = vadd.f32 %v3368, %v3369
    %v3371 = vrot.slane %v3370, 4
    %v3372 = vadd.f32 %v3370, %v3371
    %v3373 = vrot.slane %v3372, 2
    %v3374 = vadd.f32 %v3372, %v3373
    %v3375 = vrot.slane %v3374, 1
    %v3376 = vadd.f32 %v3374, %v3375
    %v3377 = vadd.f32 %v3345, %v3376
    %3378 = vset.pattern.permute.xlu0 7
    %3379 = vperm.xlu0 %3378, %v3168
    %v3380 = vpop.permute.xlu0 %3379
    %3382 = vset.pattern.permute.xlu0 7
    %3383 = vperm.xlu0 %3382, %v3171
    %v3384 = vpop.permute.xlu0 %3383
    %v3386 = vmul.f32 %v3380, %v2394
    %v3387 = vmul.f32 %v3384, %v2395
    %v3388 = vadd.f32 %v3356, %v3386
    %v3389 = vadd.f32 %v3357, %v3387
    %3390 = vset.pattern.permute.xlu0 15
    %3391 = vperm.xlu0 %3390, %v3168
    %v3392 = vpop.permute.xlu0 %3391
    %3394 = vset.pattern.permute.xlu0 15
    %3395 = vperm.xlu0 %3394, %v3171
    %v3396 = vpop.permute.xlu0 %3395
    %v3398 = vmul.f32 %v3392, %v2394
    %v3399 = vmul.f32 %v3396, %v2395
    %v3400 = vsel %vm257, %v3398, 0.0
    %v3401 = vsel %vm261, %v3399, 0.0
    %v3402 = vadd.f32 %v3400, %v3401
    %v3403 = vrot.slane %v3402, 4
    %v3404 = vadd.f32 %v3402, %v3403
    %v3405 = vrot.slane %v3404, 2
    %v3406 = vadd.f32 %v3404, %v3405
    %v3407 = vrot.slane %v3406, 1
    %v3408 = vadd.f32 %v3406, %v3407
    %v3409 = vadd.f32 %v3377, %v3408
    %3410 = vset.pattern.permute.xlu0 8
    %3411 = vperm.xlu0 %3410, %v3168
    %v3412 = vpop.permute.xlu0 %3411
    %3414 = vset.pattern.permute.xlu0 8
    %3415 = vperm.xlu0 %3414, %v3171
    %v3416 = vpop.permute.xlu0 %3415
    %v3418 = vmul.f32 %v3412, %v2450
    %v3419 = vmul.f32 %v3416, %v2451
    %v3420 = vadd.f32 %v3388, %v3418
    %v3421 = vadd.f32 %v3389, %v3419
    %3422 = vset.pattern.permute.xlu0 16
    %3423 = vperm.xlu0 %3422, %v3168
    %v3424 = vpop.permute.xlu0 %3423
    %3426 = vset.pattern.permute.xlu0 16
    %3427 = vperm.xlu0 %3426, %v3171
    %v3428 = vpop.permute.xlu0 %3427
    %v3430 = vmul.f32 %v3424, %v2450
    %v3431 = vmul.f32 %v3428, %v2451
    %v3432 = vsel %vm257, %v3430, 0.0
    %v3433 = vsel %vm261, %v3431, 0.0
    %v3434 = vadd.f32 %v3432, %v3433
    %v3435 = vrot.slane %v3434, 4
    %v3436 = vadd.f32 %v3434, %v3435
    %v3437 = vrot.slane %v3436, 2
    %v3438 = vadd.f32 %v3436, %v3437
    %v3439 = vrot.slane %v3438, 1
    %v3440 = vadd.f32 %v3438, %v3439
    %v3441 = vadd.f32 %v3409, %v3440
    %v3442 = vmul.f32 %v135, %v3441
    %v3443 = vmul.f32 %v136, %v3441
    %v3444 = vadd.f32 %v3420, %v3442
    %v3445 = vadd.f32 %v3421, %v3443
    %3446 = vxpose.xlu0.b32.start [1/16] %v3444, 128
    %3447 = vxpose.xlu0.b32.cont [2/16] %v3445, 128
    %3448 = vxpose.xlu0.b32.cont [3/16] 0.0, 128
    %3449 = vxpose.xlu0.b32.cont [4/16] 0.0, 128
    %3450 = vxpose.xlu0.b32.cont [5/16] 0.0, 128
    %3451 = vxpose.xlu0.b32.cont [6/16] 0.0, 128
    %3452 = vxpose.xlu0.b32.cont [7/16] 0.0, 128
    %3453 = vxpose.xlu0.b32.cont [8/16] 0.0, 128
    %3454 = vxpose.xlu0.b32.cont [9/16] 0.0, 128
    %3455 = vxpose.xlu0.b32.cont [10/16] 0.0, 128
    %3456 = vxpose.xlu0.b32.cont [11/16] 0.0, 128
    %3457 = vxpose.xlu0.b32.cont [12/16] 0.0, 128
    %3458 = vxpose.xlu0.b32.cont [13/16] 0.0, 128
    %3459 = vxpose.xlu0.b32.cont [14/16] 0.0, 128
    %3460 = vxpose.xlu0.b32.cont [15/16] 0.0, 128
    %3461 = vxpose.xlu0.b32.end [16/16] 0.0, 128
    %v3462 = vpop.trf.xlu0
    %v3463 = vpop.trf.xlu0
    %v3464 = vpop.trf.xlu0
    %v3465 = vpop.trf.xlu0
    %v3466 = vpop.trf.xlu0
    %v3467 = vpop.trf.xlu0
    %v3468 = vpop.trf.xlu0
    %v3469 = vpop.trf.xlu0
    %v3470 = vpop.trf.xlu0
    %v3471 = vpop.trf.xlu0
    %v3472 = vpop.trf.xlu0
    %v3473 = vpop.trf.xlu0
    %v3474 = vpop.trf.xlu0
    %v3475 = vpop.trf.xlu0
    %v3476 = vpop.trf.xlu0
    %v3477 = vpop.trf.xlu0
    %v3479 = vsel %vm257, %v3462, 0
    %v3482 = vsel %vm257, %v3463, 0
    %3484 = vmatprep.subr.mxu0 0.0
    %3485 = vmatpush1.msra.mxu0 %v1929
    %3486 = vmatprep.subr.mxu0 0.0
    %3487 = vmatpush1.msra.mxu0 %v1744
    %3488 = vmatprep.subr.mxu0 0.0
    %3489 = vmatpush1.msra.mxu0 0.0
    %3490 = vmatprep.subr.mxu0 0.0
    %3491 = vmatpush1.msra.mxu0 0.0
    %3492 = vmatprep.subr.mxu0 0.0
    %3493 = vmatpush1.msra.mxu0 0.0
    %3494 = vmatprep.subr.mxu0 0.0
    %3495 = vmatpush1.msra.mxu0 0.0
    %3496 = vmatprep.subr.mxu0 0.0
    %3497 = vmatpush1.msra.mxu0 0.0
    %3498 = vmatprep.subr.mxu0 0.0
    %3499 = vmatpush1.msra.mxu0 0.0
    %3500 = vmatprep.subr.mxu0 0.0
    %3501 = vmatpush1.msra.mxu0 0.0
    %3502 = vmatprep.subr.mxu0 0.0
    %3503 = vmatpush1.msra.mxu0 0.0
    %3504 = vmatprep.subr.mxu0 0.0
    %3505 = vmatpush1.msra.mxu0 0.0
    %3506 = vmatprep.subr.mxu0 0.0
    %3507 = vmatpush1.msra.mxu0 0.0
    %3508 = vmatprep.subr.mxu0 0.0
    %3509 = vmatpush1.msra.mxu0 0.0
    %3510 = vmatprep.subr.mxu0 0.0
    %3511 = vmatpush1.msra.mxu0 0.0
    %3512 = vmatprep.subr.mxu0 0.0
    %3513 = vmatpush1.msra.mxu0 0.0
    %3514 = vmatprep.subr.mxu0 0.0
    %3515 = vmatpush1.msra.mxu0 0.0
    %3516 = vmatprep.subr.mxu0 0.0
    %3517 = vmatpush1.msra.mxu0 0.0
    %3518 = vmatprep.subr.mxu0 0.0
    %3519 = vmatpush1.msra.mxu0 0.0
    %3520 = vmatprep.subr.mxu0 0.0
    %3521 = vmatpush1.msra.mxu0 0.0
    %3522 = vmatprep.subr.mxu0 0.0
    %3523 = vmatpush1.msra.mxu0 0.0
    %3524 = vmatprep.subr.mxu0 0.0
    %3525 = vmatpush1.msra.mxu0 0.0
    %3526 = vmatprep.subr.mxu0 0.0
    %3527 = vmatpush1.msra.mxu0 0.0
    %3528 = vmatprep.subr.mxu0 0.0
    %3529 = vmatpush1.msra.mxu0 0.0
    %3530 = vmatprep.subr.mxu0 0.0
    %3531 = vmatpush1.msra.mxu0 0.0
    %3532 = vmatprep.subr.mxu0 0.0
    %3533 = vmatpush1.msra.mxu0 0.0
    %3534 = vmatprep.subr.mxu0 0.0
    %3535 = vmatpush1.msra.mxu0 0.0
    %3536 = vmatprep.subr.mxu0 0.0
    %3537 = vmatpush1.msra.mxu0 0.0
    %3538 = vmatprep.subr.mxu0 0.0
    %3539 = vmatpush1.msra.mxu0 0.0
    %3540 = vmatprep.subr.mxu0 0.0
    %3541 = vmatpush1.msra.mxu0 0.0
    %3542 = vmatprep.subr.mxu0 0.0
    %3543 = vmatpush1.msra.mxu0 0.0
    %3544 = vmatprep.subr.mxu0 0.0
    %3545 = vmatpush1.msra.mxu0 0.0
    %3546 = vmatprep.subr.mxu0 0.0
    %3547 = vmatpush1.msra.mxu0 0.0
    %3548 = vmatprep.mubr.f32.mxu0 0.0
    %3549 = vmatmul.mubr.f32.gmra.mrb[0].mxu0 %v3479
    %v3550 = vpop.f32.mrb[0].mxu0
    %v3551 = vadd.f32 0.0, %v3550
    %v3552 = vpop.f32.mrb[0].mxu0
    %3553 = vmatprep.mubr.f32.mxu0 0.0
    %3554 = vmatmul.mubr.f32.gmra.mrb[0].mxu0 %v3482
    %v3555 = vpop.f32.mrb[0].mxu0
    %v3556 = vadd.f32 0.0, %v3555
    %v3557 = vpop.f32.mrb[0].mxu0
    %3558 = vdwg.mxu0
    %v3560 = vsel %vm257, %v3444, 0
    %v3563 = vsel %vm257, %v3445, 0
    %3565 = vmatprep.subr.mxu0 0.0
    %3566 = vmatpush1.msra.mxu0 %v1929
    %3567 = vmatprep.subr.mxu0 0.0
    %3568 = vmatpush1.msra.mxu0 %v1744
    %3569 = vmatprep.subr.mxu0 0.0
    %3570 = vmatpush1.msra.mxu0 0.0
    %3571 = vmatprep.subr.mxu0 0.0
    %3572 = vmatpush1.msra.mxu0 0.0
    %3573 = vmatprep.subr.mxu0 0.0
    %3574 = vmatpush1.msra.mxu0 0.0
    %3575 = vmatprep.subr.mxu0 0.0
    %3576 = vmatpush1.msra.mxu0 0.0
    %3577 = vmatprep.subr.mxu0 0.0
    %3578 = vmatpush1.msra.mxu0 0.0
    %3579 = vmatprep.subr.mxu0 0.0
    %3580 = vmatpush1.msra.mxu0 0.0
    %3581 = vmatprep.subr.mxu0 0.0
    %3582 = vmatpush1.msra.mxu0 0.0
    %3583 = vmatprep.subr.mxu0 0.0
    %3584 = vmatpush1.msra.mxu0 0.0
    %3585 = vmatprep.subr.mxu0 0.0
    %3586 = vmatpush1.msra.mxu0 0.0
    %3587 = vmatprep.subr.mxu0 0.0
    %3588 = vmatpush1.msra.mxu0 0.0
    %3589 = vmatprep.subr.mxu0 0.0
    %3590 = vmatpush1.msra.mxu0 0.0
    %3591 = vmatprep.subr.mxu0 0.0
    %3592 = vmatpush1.msra.mxu0 0.0
    %3593 = vmatprep.subr.mxu0 0.0
    %3594 = vmatpush1.msra.mxu0 0.0
    %3595 = vmatprep.subr.mxu0 0.0
    %3596 = vmatpush1.msra.mxu0 0.0
    %3597 = vmatprep.subr.mxu0 0.0
    %3598 = vmatpush1.msra.mxu0 0.0
    %3599 = vmatprep.subr.mxu0 0.0
    %3600 = vmatpush1.msra.mxu0 0.0
    %3601 = vmatprep.subr.mxu0 0.0
    %3602 = vmatpush1.msra.mxu0 0.0
    %3603 = vmatprep.subr.mxu0 0.0
    %3604 = vmatpush1.msra.mxu0 0.0
    %3605 = vmatprep.subr.mxu0 0.0
    %3606 = vmatpush1.msra.mxu0 0.0
    %3607 = vmatprep.subr.mxu0 0.0
    %3608 = vmatpush1.msra.mxu0 0.0
    %3609 = vmatprep.subr.mxu0 0.0
    %3610 = vmatpush1.msra.mxu0 0.0
    %3611 = vmatprep.subr.mxu0 0.0
    %3612 = vmatpush1.msra.mxu0 0.0
    %3613 = vmatprep.subr.mxu0 0.0
    %3614 = vmatpush1.msra.mxu0 0.0
    %3615 = vmatprep.subr.mxu0 0.0
    %3616 = vmatpush1.msra.mxu0 0.0
    %3617 = vmatprep.subr.mxu0 0.0
    %3618 = vmatpush1.msra.mxu0 0.0
    %3619 = vmatprep.subr.mxu0 0.0
    %3620 = vmatpush1.msra.mxu0 0.0
    %3621 = vmatprep.subr.mxu0 0.0
    %3622 = vmatpush1.msra.mxu0 0.0
    %3623 = vmatprep.subr.mxu0 0.0
    %3624 = vmatpush1.msra.mxu0 0.0
    %3625 = vmatprep.subr.mxu0 0.0
    %3626 = vmatpush1.msra.mxu0 0.0
    %3627 = vmatprep.subr.mxu0 0.0
    %3628 = vmatpush1.msra.mxu0 0.0
    %3629 = vmatprep.mubr.f32.mxu0 0.0
    %3630 = vmatmul.mubr.f32.gmra.mrb[0].mxu0 %v3560
    %v3631 = vpop.f32.mrb[0].mxu0
    %v3632 = vadd.f32 %v3551, %v3631
    %v3633 = vpop.f32.mrb[0].mxu0
    %3634 = vmatprep.mubr.f32.mxu0 0.0
    %3635 = vmatmul.mubr.f32.gmra.mrb[0].mxu0 %v3563
    %v3636 = vpop.f32.mrb[0].mxu0
    %v3637 = vadd.f32 %v3556, %v3636
    %v3638 = vpop.f32.mrb[0].mxu0
    %3639 = vdwg.mxu0
    %v3640 = vmul.f32 1.0, %v1928
    %v3641 = vmul.f32 1.0, %v172
    %v3642 = vmul.f32 %v3632, %v1915
    %v3643 = vmul.f32 %v3637, %v140
    %v3644 = vsel %vm146, %v3642, 0.0
    %3645 = vadd.xlane.f32.xlu0 %v3644
    %v3646 = vpop.xlane.xlu0 %3645
    %v3647 = vsel %vm150, %v3643, 0.0
    %3648 = vadd.xlane.f32.xlu0 %v3647
    %v3649 = vpop.xlane.xlu0 %3648
    %vm3650 = vcmp.gt.f32.partialorder %v1926, 1e-12
    %vm3651 = vcmp.gt.f32.partialorder %v167, 1e-12
    %v3652 = vsel %vm3650, %v3640, 0.0
    %v3653 = vsel %vm3651, %v3641, 0.0
    %v3654 = vmul.f32 %v3632, %v3640
    %v3655 = vmul.f32 %v3637, %v3641
    %v3656 = vmul.f32 %v3646, %v3640
    %v3657 = vmul.f32 %v3649, %v3641
    %v3658 = vmul.f32 %v3656, %v3640
    %v3659 = vmul.f32 %v3657, %v3641
    %v3660 = vmul.f32 %v3658, %v3652
    %v3661 = vmul.f32 %v3659, %v3653
    %v3662 = vmul.f32 %v1915, %v3660
    %v3663 = vmul.f32 %v140, %v3661
    %v3664 = vsub.f32 %v3654, %v3662
    %v3665 = vsub.f32 %v3655, %v3663
    %v3666 = vmul.f32 %v3664, 0.001
    %v3667 = vmul.f32 %v3665, 0.001
    %vm3670 = vcmask 1046528
    %v3671 = vrot.slane %v3666, 1
    %v3672 = vrot.slane %v3667, 1
    %v3673 = vsel %vm3670, %v3671, %v3672
    %v3675 = vsub.f32 %v138, %v3673
    %v3677 = vrot.slane %v3675, 7
    %v3679 = vsel %vm142, %v1914, %v3677
    %v3680 = vmul.f32 %v3679, %v3679
    %v3681 = vmul.f32 %v3677, %v3677
    %v3682 = vsel %vm146, %v3680, 0.0
    %3683 = vadd.xlane.f32.xlu0 %v3682
    %v3684 = vpop.xlane.xlu0 %3683
    %v3685 = vsel %vm150, %v3681, 0.0
    %3686 = vadd.xlane.f32.xlu0 %v3685
    %v3687 = vpop.xlane.xlu0 %3686
    %v3688 = vrsqrt.pop %v3684
    %v3689 = vmul.f32 %v3684, %v3688
    %vm3690 = vcmp.eq.f32.partialorder %v3684, inf
    %v3691 = vsel %vm3690, %v3684, %v3689
    %vm3692 = vcmp.eq.f32.partialorder %v3684, 0.0
    %v3693 = vand.u32 %v3684, 2147483648
    %v3694 = vsel %vm3692, %v3693, %v3691
    %v3695 = vrsqrt.pop %v3687
    %v3696 = vmul.f32 %v3687, %v3695
    %vm3697 = vcmp.eq.f32.partialorder %v3687, inf
    %v3698 = vsel %vm3697, %v3687, %v3696
    %vm3699 = vcmp.eq.f32.partialorder %v3687, 0.0
    %v3700 = vand.u32 %v3687, 2147483648
    %v3701 = vsel %vm3699, %v3700, %v3698
    %v3702 = vmax.f32 %v3694, 1e-12
    %v3703 = vmax.f32 %v3701, 1e-12
    %v3704 = vrcp.pop %v3702
    %v3705 = vmul.f32 %v3679, %v3704
    %v3706 = vrcp.pop %v3703
    %v3707 = vmul.f32 %v3677, %v3706
    %v3709 = vsel %vm146, %v3705, 0
    %v3712 = vsel %vm146, %v3707, 0
    %3714 = vmatprep.subr.mxu0 0.0
    %3715 = vmatpush1.xpose.msra.mxu0 %v3709
    %3716 = vmatprep.subr.mxu0 0.0
    %3717 = vmatpush1.xpose.msra.mxu0 %v3712
    %3718 = vmatprep.subr.mxu0 0.0
    %3719 = vmatpush1.xpose.msra.mxu0 0.0
    %3720 = vmatprep.subr.mxu0 0.0
    %3721 = vmatpush1.xpose.msra.mxu0 0.0
    %3722 = vmatprep.subr.mxu0 0.0
    %3723 = vmatpush1.xpose.msra.mxu0 0.0
    %3724 = vmatprep.subr.mxu0 0.0
    %3725 = vmatpush1.xpose.msra.mxu0 0.0
    %3726 = vmatprep.subr.mxu0 0.0
    %3727 = vmatpush1.xpose.msra.mxu0 0.0
    %3728 = vmatprep.subr.mxu0 0.0
    %3729 = vmatpush1.xpose.msra.mxu0 0.0
    %3730 = vmatprep.subr.mxu0 0.0
    %3731 = vmatpush1.xpose.msra.mxu0 0.0
    %3732 = vmatprep.subr.mxu0 0.0
    %3733 = vmatpush1.xpose.msra.mxu0 0.0
    %3734 = vmatprep.subr.mxu0 0.0
    %3735 = vmatpush1.xpose.msra.mxu0 0.0
    %3736 = vmatprep.subr.mxu0 0.0
    %3737 = vmatpush1.xpose.msra.mxu0 0.0
    %3738 = vmatprep.subr.mxu0 0.0
    %3739 = vmatpush1.xpose.msra.mxu0 0.0
    %3740 = vmatprep.subr.mxu0 0.0
    %3741 = vmatpush1.xpose.msra.mxu0 0.0
    %3742 = vmatprep.subr.mxu0 0.0
    %3743 = vmatpush1.xpose.msra.mxu0 0.0
    %3744 = vmatprep.subr.mxu0 0.0
    %3745 = vmatpush1.xpose.msra.mxu0 0.0
    %3746 = vmatprep.subr.mxu0 0.0
    %3747 = vmatpush1.xpose.msra.mxu0 0.0
    %3748 = vmatprep.subr.mxu0 0.0
    %3749 = vmatpush1.xpose.msra.mxu0 0.0
    %3750 = vmatprep.subr.mxu0 0.0
    %3751 = vmatpush1.xpose.msra.mxu0 0.0
    %3752 = vmatprep.subr.mxu0 0.0
    %3753 = vmatpush1.xpose.msra.mxu0 0.0
    %3754 = vmatprep.subr.mxu0 0.0
    %3755 = vmatpush1.xpose.msra.mxu0 0.0
    %3756 = vmatprep.subr.mxu0 0.0
    %3757 = vmatpush1.xpose.msra.mxu0 0.0
    %3758 = vmatprep.subr.mxu0 0.0
    %3759 = vmatpush1.xpose.msra.mxu0 0.0
    %3760 = vmatprep.subr.mxu0 0.0
    %3761 = vmatpush1.xpose.msra.mxu0 0.0
    %3762 = vmatprep.subr.mxu0 0.0
    %3763 = vmatpush1.xpose.msra.mxu0 0.0
    %3764 = vmatprep.subr.mxu0 0.0
    %3765 = vmatpush1.xpose.msra.mxu0 0.0
    %3766 = vmatprep.subr.mxu0 0.0
    %3767 = vmatpush1.xpose.msra.mxu0 0.0
    %3768 = vmatprep.subr.mxu0 0.0
    %3769 = vmatpush1.xpose.msra.mxu0 0.0
    %3770 = vmatprep.subr.mxu0 0.0
    %3771 = vmatpush1.xpose.msra.mxu0 0.0
    %3772 = vmatprep.subr.mxu0 0.0
    %3773 = vmatpush1.xpose.msra.mxu0 0.0
    %3774 = vmatprep.subr.mxu0 0.0
    %3775 = vmatpush1.xpose.msra.mxu0 0.0
    %3776 = vmatprep.subr.mxu0 0.0
    %3777 = vmatpush1.xpose.msra.mxu0 0.0
    %3778 = vmatprep.mubr.f32.mxu0 0.0
    %3779 = vmatmul.mubr.f32.gmra.mrb[0].mxu0 %v3709
    %v3780 = vpop.f32.mrb[0].mxu0
    %v3781 = vadd.f32 0.0, %v3780
    %v3782 = vpop.f32.mrb[0].mxu0
    %3783 = vmatprep.mubr.f32.mxu0 0.0
    %3784 = vmatmul.mubr.f32.gmra.mrb[0].mxu0 %v3712
    %v3785 = vpop.f32.mrb[0].mxu0
    %v3786 = vadd.f32 0.0, %v3785
    %v3787 = vpop.f32.mrb[0].mxu0
    %3788 = vdwg.mxu0
    %v3789 = vsel %vm128, -1e+30, %v3781
    %v3790 = vsel %vm128, -1e+30, %v3786
    %v3791 = vsel %vm257, %v3789, -inf
    %3792 = vmax.xlane.f32.xlu0 %v3791
    %v3793 = vpop.xlane.xlu0 %3792
    %v3794 = vsel %vm261, %v3790, -inf
    %3795 = vmax.xlane.f32.xlu0 %v3794
    %v3796 = vpop.xlane.xlu0 %3795
    %vm3797 = vcmp.eq.f32.partialorder %v3789, %v3793
    %vm3798 = vcmp.eq.f32.partialorder %v3790, %v3796
    %v3799 = vsel %vm3797, %v124, 9
    %v3800 = vsel %vm3798, %v124, 9
    %v3801 = vsel %vm257, %v3799, 2147483647
    %v3802 = vand.u32 %v3801, 65535
    %v3803 = vshra.s32 %v3801, 16
    %v3804 = vcvt.s32.f32 %v3802
    %v3805 = vcvt.s32.f32 %v3803
    %3806 = vmin.xlane.f32.xlu0 %v3805
    %v3807 = vpop.xlane.xlu0 %3806
    %vm3808 = vcmp.eq.f32.partialorder %v3805, %v3807
    %v3809 = vsel %vm3808, %v3804, inf
    %3810 = vmin.xlane.f32.xlu0 %v3809
    %v3811 = vpop.xlane.xlu0 %3810
    %v3812 = vcvt.f32.s32 %v3811
    %v3813 = vcvt.f32.s32 %v3807
    %v3814 = vshll.u32 %v3813, 16
    %v3815 = vadd.s32 %v3814, %v3812
    %v3816 = vsel %vm261, %v3800, 2147483647
    %v3817 = vand.u32 %v3816, 65535
    %v3818 = vshra.s32 %v3816, 16
    %v3819 = vcvt.s32.f32 %v3817
    %v3820 = vcvt.s32.f32 %v3818
    %3821 = vmin.xlane.f32.xlu0 %v3820
    %v3822 = vpop.xlane.xlu0 %3821
    %vm3823 = vcmp.eq.f32.partialorder %v3820, %v3822
    %v3824 = vsel %vm3823, %v3819, inf
    %3825 = vmin.xlane.f32.xlu0 %v3824
    %v3826 = vpop.xlane.xlu0 %3825
    %v3827 = vcvt.f32.s32 %v3826
    %v3828 = vcvt.f32.s32 %v3822
    %v3829 = vshll.u32 %v3828, 16
    %v3830 = vadd.s32 %v3829, %v3827
    %vm3831 = vcmp.eq.s32.totalorder %v124, %v3815
    %vm3832 = vcmp.eq.s32.totalorder %v124, %v3830
    %v3833 = vsel %vm3831, 1, 0
    %v3834 = vsel %vm3832, 1, 0
    %v3835 = vcvt.s32.f32 %v3833
    %v3836 = vcvt.s32.f32 %v3834
    %v3837 = vlaneseq
    %v3838 = vshrl.u32 %v3837, 7
    %v3839 = vsub.s32 0, %v3838
    %v3840 = vrot.slane %v3781, %v3839
    %v3841 = vmul.f32 %v3835, %v3840
    %v3842 = vmul.f32 %v3836, %v3840
    %v3843 = vsel %vm257, %v3841, 0.0
    %3844 = vadd.xlane.f32.xlu0 %v3843
    %v3845 = vpop.xlane.xlu0 %3844
    %v3846 = vsel %vm261, %v3842, 0.0
    %3847 = vadd.xlane.f32.xlu0 %v3846
    %v3848 = vpop.xlane.xlu0 %3847
    %v3849 = vsel %vm3831, -1e+30, %v3789
    %v3850 = vsel %vm3832, -1e+30, %v3790
    %v3851 = vsel %vm257, %v3849, -inf
    %3852 = vmax.xlane.f32.xlu0 %v3851
    %v3853 = vpop.xlane.xlu0 %3852
    %v3854 = vsel %vm261, %v3850, -inf
    %3855 = vmax.xlane.f32.xlu0 %v3854
    %v3856 = vpop.xlane.xlu0 %3855
    %vm3857 = vcmp.eq.f32.partialorder %v3849, %v3853
    %vm3858 = vcmp.eq.f32.partialorder %v3850, %v3856
    %v3859 = vsel %vm3857, %v124, 9
    %v3860 = vsel %vm3858, %v124, 9
    %v3861 = vsel %vm257, %v3859, 2147483647
    %v3862 = vand.u32 %v3861, 65535
    %v3863 = vshra.s32 %v3861, 16
    %v3864 = vcvt.s32.f32 %v3862
    %v3865 = vcvt.s32.f32 %v3863
    %3866 = vmin.xlane.f32.xlu0 %v3865
    %v3867 = vpop.xlane.xlu0 %3866
    %vm3868 = vcmp.eq.f32.partialorder %v3865, %v3867
    %v3869 = vsel %vm3868, %v3864, inf
    %3870 = vmin.xlane.f32.xlu0 %v3869
    %v3871 = vpop.xlane.xlu0 %3870
    %v3872 = vcvt.f32.s32 %v3871
    %v3873 = vcvt.f32.s32 %v3867
    %v3874 = vshll.u32 %v3873, 16
    %v3875 = vadd.s32 %v3874, %v3872
    %v3876 = vsel %vm261, %v3860, 2147483647
    %v3877 = vand.u32 %v3876, 65535
    %v3878 = vshra.s32 %v3876, 16
    %v3879 = vcvt.s32.f32 %v3877
    %v3880 = vcvt.s32.f32 %v3878
    %3881 = vmin.xlane.f32.xlu0 %v3880
    %v3882 = vpop.xlane.xlu0 %3881
    %vm3883 = vcmp.eq.f32.partialorder %v3880, %v3882
    %v3884 = vsel %vm3883, %v3879, inf
    %3885 = vmin.xlane.f32.xlu0 %v3884
    %v3886 = vpop.xlane.xlu0 %3885
    %v3887 = vcvt.f32.s32 %v3886
    %v3888 = vcvt.f32.s32 %v3882
    %v3889 = vshll.u32 %v3888, 16
    %v3890 = vadd.s32 %v3889, %v3887
    %vm3891 = vcmp.eq.s32.totalorder %v124, %v3875
    %vm3892 = vcmp.eq.s32.totalorder %v124, %v3890
    %v3893 = vsel %vm3891, 1, 0
    %v3894 = vsel %vm3892, 1, 0
    %v3895 = vcvt.s32.f32 %v3893
    %v3896 = vcvt.s32.f32 %v3894
    %v3897 = vmul.f32 %v3895, %v3840
    %v3898 = vmul.f32 %v3896, %v3840
    %v3899 = vsel %vm257, %v3897, 0.0
    %3900 = vadd.xlane.f32.xlu0 %v3899
    %v3901 = vpop.xlane.xlu0 %3900
    %v3902 = vsel %vm261, %v3898, 0.0
    %3903 = vadd.xlane.f32.xlu0 %v3902
    %v3904 = vpop.xlane.xlu0 %3903
    %v3905 = vsel %vm3891, -1e+30, %v3849
    %v3906 = vsel %vm3892, -1e+30, %v3850
    %v3907 = vsel %vm257, %v3905, -inf
    %3908 = vmax.xlane.f32.xlu0 %v3907
    %v3909 = vpop.xlane.xlu0 %3908
    %v3910 = vsel %vm261, %v3906, -inf
    %3911 = vmax.xlane.f32.xlu0 %v3910
    %v3912 = vpop.xlane.xlu0 %3911
    %vm3913 = vcmp.eq.f32.partialorder %v3905, %v3909
    %vm3914 = vcmp.eq.f32.partialorder %v3906, %v3912
    %v3915 = vsel %vm3913, %v124, 9
    %v3916 = vsel %vm3914, %v124, 9
    %v3917 = vsel %vm257, %v3915, 2147483647
    %v3918 = vand.u32 %v3917, 65535
    %v3919 = vshra.s32 %v3917, 16
    %v3920 = vcvt.s32.f32 %v3918
    %v3921 = vcvt.s32.f32 %v3919
    %3922 = vmin.xlane.f32.xlu0 %v3921
    %v3923 = vpop.xlane.xlu0 %3922
    %vm3924 = vcmp.eq.f32.partialorder %v3921, %v3923
    %v3925 = vsel %vm3924, %v3920, inf
    %3926 = vmin.xlane.f32.xlu0 %v3925
    %v3927 = vpop.xlane.xlu0 %3926
    %v3928 = vcvt.f32.s32 %v3927
    %v3929 = vcvt.f32.s32 %v3923
    %v3930 = vshll.u32 %v3929, 16
    %v3931 = vadd.s32 %v3930, %v3928
    %v3932 = vsel %vm261, %v3916, 2147483647
    %v3933 = vand.u32 %v3932, 65535
    %v3934 = vshra.s32 %v3932, 16
    %v3935 = vcvt.s32.f32 %v3933
    %v3936 = vcvt.s32.f32 %v3934
    %3937 = vmin.xlane.f32.xlu0 %v3936
    %v3938 = vpop.xlane.xlu0 %3937
    %vm3939 = vcmp.eq.f32.partialorder %v3936, %v3938
    %v3940 = vsel %vm3939, %v3935, inf
    %3941 = vmin.xlane.f32.xlu0 %v3940
    %v3942 = vpop.xlane.xlu0 %3941
    %v3943 = vcvt.f32.s32 %v3942
    %v3944 = vcvt.f32.s32 %v3938
    %v3945 = vshll.u32 %v3944, 16
    %v3946 = vadd.s32 %v3945, %v3943
    %vm3947 = vcmp.eq.s32.totalorder %v124, %v3931
    %vm3948 = vcmp.eq.s32.totalorder %v124, %v3946
    %v3949 = vsel %vm3947, 1, 0
    %v3950 = vsel %vm3948, 1, 0
    %v3951 = vcvt.s32.f32 %v3949
    %v3952 = vcvt.s32.f32 %v3950
    %v3953 = vmul.f32 %v3951, %v3840
    %v3954 = vmul.f32 %v3952, %v3840
    %v3955 = vsel %vm257, %v3953, 0.0
    %3956 = vadd.xlane.f32.xlu0 %v3955
    %v3957 = vpop.xlane.xlu0 %3956
    %v3958 = vsel %vm261, %v3954, 0.0
    %3959 = vadd.xlane.f32.xlu0 %v3958
    %v3960 = vpop.xlane.xlu0 %3959
    %v3961 = vsel %vm3947, -1e+30, %v3905
    %v3962 = vsel %vm3948, -1e+30, %v3906
    %v3963 = vsel %vm257, %v3961, -inf
    %3964 = vmax.xlane.f32.xlu0 %v3963
    %v3965 = vpop.xlane.xlu0 %3964
    %v3966 = vsel %vm261, %v3962, -inf
    %3967 = vmax.xlane.f32.xlu0 %v3966
    %v3968 = vpop.xlane.xlu0 %3967
    %vm3969 = vcmp.eq.f32.partialorder %v3961, %v3965
    %vm3970 = vcmp.eq.f32.partialorder %v3962, %v3968
    %v3971 = vsel %vm3969, %v124, 9
    %v3972 = vsel %vm3970, %v124, 9
    %v3973 = vsel %vm257, %v3971, 2147483647
    %v3974 = vand.u32 %v3973, 65535
    %v3975 = vshra.s32 %v3973, 16
    %v3976 = vcvt.s32.f32 %v3974
    %v3977 = vcvt.s32.f32 %v3975
    %3978 = vmin.xlane.f32.xlu0 %v3977
    %v3979 = vpop.xlane.xlu0 %3978
    %vm3980 = vcmp.eq.f32.partialorder %v3977, %v3979
    %v3981 = vsel %vm3980, %v3976, inf
    %3982 = vmin.xlane.f32.xlu0 %v3981
    %v3983 = vpop.xlane.xlu0 %3982
    %v3984 = vcvt.f32.s32 %v3983
    %v3985 = vcvt.f32.s32 %v3979
    %v3986 = vshll.u32 %v3985, 16
    %v3987 = vadd.s32 %v3986, %v3984
    %v3988 = vsel %vm261, %v3972, 2147483647
    %v3989 = vand.u32 %v3988, 65535
    %v3990 = vshra.s32 %v3988, 16
    %v3991 = vcvt.s32.f32 %v3989
    %v3992 = vcvt.s32.f32 %v3990
    %3993 = vmin.xlane.f32.xlu0 %v3992
    %v3994 = vpop.xlane.xlu0 %3993
    %vm3995 = vcmp.eq.f32.partialorder %v3992, %v3994
    %v3996 = vsel %vm3995, %v3991, inf
    %3997 = vmin.xlane.f32.xlu0 %v3996
    %v3998 = vpop.xlane.xlu0 %3997
    %v3999 = vcvt.f32.s32 %v3998
    %v4000 = vcvt.f32.s32 %v3994
    %v4001 = vshll.u32 %v4000, 16
    %v4002 = vadd.s32 %v4001, %v3999
    %vm4003 = vcmp.eq.s32.totalorder %v124, %v3987
    %vm4004 = vcmp.eq.s32.totalorder %v124, %v4002
    %v4005 = vsel %vm4003, 1, 0
    %v4006 = vsel %vm4004, 1, 0
    %v4007 = vcvt.s32.f32 %v4005
    %v4008 = vcvt.s32.f32 %v4006
    %v4009 = vmul.f32 %v4007, %v3840
    %v4010 = vmul.f32 %v4008, %v3840
    %v4011 = vsel %vm257, %v4009, 0.0
    %4012 = vadd.xlane.f32.xlu0 %v4011
    %v4013 = vpop.xlane.xlu0 %4012
    %v4014 = vsel %vm261, %v4010, 0.0
    %4015 = vadd.xlane.f32.xlu0 %v4014
    %v4016 = vpop.xlane.xlu0 %4015
    %v4017 = vsel %vm4003, -1e+30, %v3961
    %v4018 = vsel %vm4004, -1e+30, %v3962
    %v4019 = vsel %vm257, %v4017, -inf
    %4020 = vmax.xlane.f32.xlu0 %v4019
    %v4021 = vpop.xlane.xlu0 %4020
    %v4022 = vsel %vm261, %v4018, -inf
    %4023 = vmax.xlane.f32.xlu0 %v4022
    %v4024 = vpop.xlane.xlu0 %4023
    %vm4025 = vcmp.eq.f32.partialorder %v4017, %v4021
    %vm4026 = vcmp.eq.f32.partialorder %v4018, %v4024
    %v4027 = vsel %vm4025, %v124, 9
    %v4028 = vsel %vm4026, %v124, 9
    %v4029 = vsel %vm257, %v4027, 2147483647
    %v4030 = vand.u32 %v4029, 65535
    %v4031 = vshra.s32 %v4029, 16
    %v4032 = vcvt.s32.f32 %v4030
    %v4033 = vcvt.s32.f32 %v4031
    %4034 = vmin.xlane.f32.xlu0 %v4033
    %v4035 = vpop.xlane.xlu0 %4034
    %vm4036 = vcmp.eq.f32.partialorder %v4033, %v4035
    %v4037 = vsel %vm4036, %v4032, inf
    %4038 = vmin.xlane.f32.xlu0 %v4037
    %v4039 = vpop.xlane.xlu0 %4038
    %v4040 = vcvt.f32.s32 %v4039
    %v4041 = vcvt.f32.s32 %v4035
    %v4042 = vshll.u32 %v4041, 16
    %v4043 = vadd.s32 %v4042, %v4040
    %v4044 = vsel %vm261, %v4028, 2147483647
    %v4045 = vand.u32 %v4044, 65535
    %v4046 = vshra.s32 %v4044, 16
    %v4047 = vcvt.s32.f32 %v4045
    %v4048 = vcvt.s32.f32 %v4046
    %4049 = vmin.xlane.f32.xlu0 %v4048
    %v4050 = vpop.xlane.xlu0 %4049
    %vm4051 = vcmp.eq.f32.partialorder %v4048, %v4050
    %v4052 = vsel %vm4051, %v4047, inf
    %4053 = vmin.xlane.f32.xlu0 %v4052
    %v4054 = vpop.xlane.xlu0 %4053
    %v4055 = vcvt.f32.s32 %v4054
    %v4056 = vcvt.f32.s32 %v4050
    %v4057 = vshll.u32 %v4056, 16
    %v4058 = vadd.s32 %v4057, %v4055
    %vm4059 = vcmp.eq.s32.totalorder %v124, %v4043
    %vm4060 = vcmp.eq.s32.totalorder %v124, %v4058
    %v4061 = vsel %vm4059, 1, 0
    %v4062 = vsel %vm4060, 1, 0
    %v4063 = vcvt.s32.f32 %v4061
    %v4064 = vcvt.s32.f32 %v4062
    %v4065 = vmul.f32 %v4063, %v3840
    %v4066 = vmul.f32 %v4064, %v3840
    %v4067 = vsel %vm257, %v4065, 0.0
    %4068 = vadd.xlane.f32.xlu0 %v4067
    %v4069 = vpop.xlane.xlu0 %4068
    %v4070 = vsel %vm261, %v4066, 0.0
    %4071 = vadd.xlane.f32.xlu0 %v4070
    %v4072 = vpop.xlane.xlu0 %4071
    %v4073 = vsel %vm4059, -1e+30, %v4017
    %v4074 = vsel %vm4060, -1e+30, %v4018
    %v4075 = vsel %vm257, %v4073, -inf
    %4076 = vmax.xlane.f32.xlu0 %v4075
    %v4077 = vpop.xlane.xlu0 %4076
    %v4078 = vsel %vm261, %v4074, -inf
    %4079 = vmax.xlane.f32.xlu0 %v4078
    %v4080 = vpop.xlane.xlu0 %4079
    %vm4081 = vcmp.eq.f32.partialorder %v4073, %v4077
    %vm4082 = vcmp.eq.f32.partialorder %v4074, %v4080
    %v4083 = vsel %vm4081, %v124, 9
    %v4084 = vsel %vm4082, %v124, 9
    %v4085 = vsel %vm257, %v4083, 2147483647
    %v4086 = vand.u32 %v4085, 65535
    %v4087 = vshra.s32 %v4085, 16
    %v4088 = vcvt.s32.f32 %v4086
    %v4089 = vcvt.s32.f32 %v4087
    %4090 = vmin.xlane.f32.xlu0 %v4089
    %v4091 = vpop.xlane.xlu0 %4090
    %vm4092 = vcmp.eq.f32.partialorder %v4089, %v4091
    %v4093 = vsel %vm4092, %v4088, inf
    %4094 = vmin.xlane.f32.xlu0 %v4093
    %v4095 = vpop.xlane.xlu0 %4094
    %v4096 = vcvt.f32.s32 %v4095
    %v4097 = vcvt.f32.s32 %v4091
    %v4098 = vshll.u32 %v4097, 16
    %v4099 = vadd.s32 %v4098, %v4096
    %v4100 = vsel %vm261, %v4084, 2147483647
    %v4101 = vand.u32 %v4100, 65535
    %v4102 = vshra.s32 %v4100, 16
    %v4103 = vcvt.s32.f32 %v4101
    %v4104 = vcvt.s32.f32 %v4102
    %4105 = vmin.xlane.f32.xlu0 %v4104
    %v4106 = vpop.xlane.xlu0 %4105
    %vm4107 = vcmp.eq.f32.partialorder %v4104, %v4106
    %v4108 = vsel %vm4107, %v4103, inf
    %4109 = vmin.xlane.f32.xlu0 %v4108
    %v4110 = vpop.xlane.xlu0 %4109
    %v4111 = vcvt.f32.s32 %v4110
    %v4112 = vcvt.f32.s32 %v4106
    %v4113 = vshll.u32 %v4112, 16
    %v4114 = vadd.s32 %v4113, %v4111
    %vm4115 = vcmp.eq.s32.totalorder %v124, %v4099
    %vm4116 = vcmp.eq.s32.totalorder %v124, %v4114
    %v4117 = vsel %vm4115, 1, 0
    %v4118 = vsel %vm4116, 1, 0
    %v4119 = vcvt.s32.f32 %v4117
    %v4120 = vcvt.s32.f32 %v4118
    %v4121 = vmul.f32 %v4119, %v3840
    %v4122 = vmul.f32 %v4120, %v3840
    %v4123 = vsel %vm257, %v4121, 0.0
    %4124 = vadd.xlane.f32.xlu0 %v4123
    %v4125 = vpop.xlane.xlu0 %4124
    %v4126 = vsel %vm261, %v4122, 0.0
    %4127 = vadd.xlane.f32.xlu0 %v4126
    %v4128 = vpop.xlane.xlu0 %4127
    %v4129 = vsel %vm4115, -1e+30, %v4073
    %v4130 = vsel %vm4116, -1e+30, %v4074
    %v4131 = vsel %vm257, %v4129, -inf
    %4132 = vmax.xlane.f32.xlu0 %v4131
    %v4133 = vpop.xlane.xlu0 %4132
    %v4134 = vsel %vm261, %v4130, -inf
    %4135 = vmax.xlane.f32.xlu0 %v4134
    %v4136 = vpop.xlane.xlu0 %4135
    %vm4137 = vcmp.eq.f32.partialorder %v4129, %v4133
    %vm4138 = vcmp.eq.f32.partialorder %v4130, %v4136
    %v4139 = vsel %vm4137, %v124, 9
    %v4140 = vsel %vm4138, %v124, 9
    %v4141 = vsel %vm257, %v4139, 2147483647
    %v4142 = vand.u32 %v4141, 65535
    %v4143 = vshra.s32 %v4141, 16
    %v4144 = vcvt.s32.f32 %v4142
    %v4145 = vcvt.s32.f32 %v4143
    %4146 = vmin.xlane.f32.xlu0 %v4145
    %v4147 = vpop.xlane.xlu0 %4146
    %vm4148 = vcmp.eq.f32.partialorder %v4145, %v4147
    %v4149 = vsel %vm4148, %v4144, inf
    %4150 = vmin.xlane.f32.xlu0 %v4149
    %v4151 = vpop.xlane.xlu0 %4150
    %v4152 = vcvt.f32.s32 %v4151
    %v4153 = vcvt.f32.s32 %v4147
    %v4154 = vshll.u32 %v4153, 16
    %v4155 = vadd.s32 %v4154, %v4152
    %v4156 = vsel %vm261, %v4140, 2147483647
    %v4157 = vand.u32 %v4156, 65535
    %v4158 = vshra.s32 %v4156, 16
    %v4159 = vcvt.s32.f32 %v4157
    %v4160 = vcvt.s32.f32 %v4158
    %4161 = vmin.xlane.f32.xlu0 %v4160
    %v4162 = vpop.xlane.xlu0 %4161
    %vm4163 = vcmp.eq.f32.partialorder %v4160, %v4162
    %v4164 = vsel %vm4163, %v4159, inf
    %4165 = vmin.xlane.f32.xlu0 %v4164
    %v4166 = vpop.xlane.xlu0 %4165
    %v4167 = vcvt.f32.s32 %v4166
    %v4168 = vcvt.f32.s32 %v4162
    %v4169 = vshll.u32 %v4168, 16
    %v4170 = vadd.s32 %v4169, %v4167
    %vm4171 = vcmp.eq.s32.totalorder %v124, %v4155
    %vm4172 = vcmp.eq.s32.totalorder %v124, %v4170
    %v4173 = vsel %vm4171, 1, 0
    %v4174 = vsel %vm4172, 1, 0
    %v4175 = vcvt.s32.f32 %v4173
    %v4176 = vcvt.s32.f32 %v4174
    %v4177 = vmul.f32 %v4175, %v3840
    %v4178 = vmul.f32 %v4176, %v3840
    %v4179 = vsel %vm257, %v4177, 0.0
    %4180 = vadd.xlane.f32.xlu0 %v4179
    %v4181 = vpop.xlane.xlu0 %4180
    %v4182 = vsel %vm261, %v4178, 0.0
    %4183 = vadd.xlane.f32.xlu0 %v4182
    %v4184 = vpop.xlane.xlu0 %4183
    %v4185 = vsel %vm4171, -1e+30, %v4129
    %v4186 = vsel %vm4172, -1e+30, %v4130
    %v4187 = vsel %vm257, %v4185, -inf
    %4188 = vmax.xlane.f32.xlu0 %v4187
    %v4189 = vpop.xlane.xlu0 %4188
    %v4190 = vsel %vm261, %v4186, -inf
    %4191 = vmax.xlane.f32.xlu0 %v4190
    %v4192 = vpop.xlane.xlu0 %4191
    %vm4193 = vcmp.eq.f32.partialorder %v4185, %v4189
    %vm4194 = vcmp.eq.f32.partialorder %v4186, %v4192
    %v4195 = vsel %vm4193, %v124, 9
    %v4196 = vsel %vm4194, %v124, 9
    %v4197 = vsel %vm257, %v4195, 2147483647
    %v4198 = vand.u32 %v4197, 65535
    %v4199 = vshra.s32 %v4197, 16
    %v4200 = vcvt.s32.f32 %v4198
    %v4201 = vcvt.s32.f32 %v4199
    %4202 = vmin.xlane.f32.xlu0 %v4201
    %v4203 = vpop.xlane.xlu0 %4202
    %vm4204 = vcmp.eq.f32.partialorder %v4201, %v4203
    %v4205 = vsel %vm4204, %v4200, inf
    %4206 = vmin.xlane.f32.xlu0 %v4205
    %v4207 = vpop.xlane.xlu0 %4206
    %v4208 = vcvt.f32.s32 %v4207
    %v4209 = vcvt.f32.s32 %v4203
    %v4210 = vshll.u32 %v4209, 16
    %v4211 = vadd.s32 %v4210, %v4208
    %v4212 = vsel %vm261, %v4196, 2147483647
    %v4213 = vand.u32 %v4212, 65535
    %v4214 = vshra.s32 %v4212, 16
    %v4215 = vcvt.s32.f32 %v4213
    %v4216 = vcvt.s32.f32 %v4214
    %4217 = vmin.xlane.f32.xlu0 %v4216
    %v4218 = vpop.xlane.xlu0 %4217
    %vm4219 = vcmp.eq.f32.partialorder %v4216, %v4218
    %v4220 = vsel %vm4219, %v4215, inf
    %4221 = vmin.xlane.f32.xlu0 %v4220
    %v4222 = vpop.xlane.xlu0 %4221
    %v4223 = vcvt.f32.s32 %v4222
    %v4224 = vcvt.f32.s32 %v4218
    %v4225 = vshll.u32 %v4224, 16
    %v4226 = vadd.s32 %v4225, %v4223
    %vm4227 = vcmp.eq.s32.totalorder %v124, %v4211
    %vm4228 = vcmp.eq.s32.totalorder %v124, %v4226
    %v4229 = vsel %vm4227, 1, 0
    %v4230 = vsel %vm4228, 1, 0
    %v4231 = vcvt.s32.f32 %v4229
    %v4232 = vcvt.s32.f32 %v4230
    %v4233 = vmul.f32 %v4231, %v3840
    %v4234 = vmul.f32 %v4232, %v3840
    %v4235 = vsel %vm257, %v4233, 0.0
    %4236 = vadd.xlane.f32.xlu0 %v4235
    %v4237 = vpop.xlane.xlu0 %4236
    %v4238 = vsel %vm261, %v4234, 0.0
    %4239 = vadd.xlane.f32.xlu0 %v4238
    %v4240 = vpop.xlane.xlu0 %4239
    %v4241 = vsel %vm709, %v3793, %v3853
    %v4242 = vsel %vm709, %v3796, %v3856
    %v4243 = vsel %vm712, %v4241, %v3909
    %v4244 = vsel %vm712, %v4242, %v3912
    %v4245 = vsel %vm715, %v4243, %v3965
    %v4246 = vsel %vm715, %v4244, %v3968
    %v4247 = vsel %vm718, %v4245, %v4021
    %v4248 = vsel %vm718, %v4246, %v4024
    %v4249 = vsel %vm721, %v4247, %v4077
    %v4250 = vsel %vm721, %v4248, %v4080
    %v4251 = vsel %vm724, %v4249, %v4133
    %v4252 = vsel %vm724, %v4250, %v4136
    %v4253 = vsel %vm727, %v4251, %v4189
    %v4254 = vsel %vm727, %v4252, %v4192
    %v4255 = vsel %vm709, %v3845, %v3901
    %v4256 = vsel %vm709, %v3848, %v3904
    %v4257 = vsel %vm712, %v4255, %v3957
    %v4258 = vsel %vm712, %v4256, %v3960
    %v4259 = vsel %vm715, %v4257, %v4013
    %v4260 = vsel %vm715, %v4258, %v4016
    %v4261 = vsel %vm718, %v4259, %v4069
    %v4262 = vsel %vm718, %v4260, %v4072
    %v4263 = vsel %vm721, %v4261, %v4125
    %v4264 = vsel %vm721, %v4262, %v4128
    %v4265 = vsel %vm724, %v4263, %v4181
    %v4266 = vsel %vm724, %v4264, %v4184
    %v4267 = vsel %vm727, %v4265, %v4237
    %v4268 = vsel %vm727, %v4266, %v4240
    %4271 = vrot.lane.b32.xlu0 %v4253, 1
    %v4272 = vpop.permute.xlu0 %4271
    %4273 = vrot.lane.b32.xlu0 %v4254, 1
    %v4274 = vpop.permute.xlu0 %4273
    %4279 = vrot.lane.b32.xlu0 %v4267, 9
    %v4280 = vpop.permute.xlu0 %4279
    %4281 = vrot.lane.b32.xlu0 %v4268, 9
    %v4282 = vpop.permute.xlu0 %4281
    %v4285 = vsel %vm709, %v3781, %v4272
    %v4286 = vsel %vm709, %v3786, %v4274
    %v4287 = vsel %vm257, %v4285, %v4280
    %v4288 = vsel %vm257, %v4286, %v4282
    %v4289 = vsel %vm766, %v4287, 0.0
    %4290 = vadd.xlane.f32.xlu0 %v4289
    %v4291 = vpop.xlane.xlu0 %4290
    %v4292 = vsel %vm770, %v4288, 0.0
    %4293 = vadd.xlane.f32.xlu0 %v4292
    %v4294 = vpop.xlane.xlu0 %4293
    %v4295 = vmul.f32 %v4291, 0.05882353
    %v4296 = vmul.f32 %v4294, 0.05882353
    %v4297 = vmul.f32 %v4287, %v4287
    %v4298 = vmul.f32 %v4288, %v4288
    %v4299 = vsel %vm766, %v4297, 0.0
    %4300 = vadd.xlane.f32.xlu0 %v4299
    %v4301 = vpop.xlane.xlu0 %4300
    %v4302 = vsel %vm770, %v4298, 0.0
    %4303 = vadd.xlane.f32.xlu0 %v4302
    %v4304 = vpop.xlane.xlu0 %4303
    %v4305 = vmul.f32 %v4301, 0.05882353
    %v4306 = vmul.f32 %v4304, 0.05882353
    %v4307 = vmul.f32 %v4295, %v4295
    %v4308 = vmul.f32 %v4296, %v4296
    %v4309 = vsub.f32 %v4305, %v4307
    %v4310 = vsub.f32 %v4306, %v4308
    %v4311 = vmax.f32 %v4309, 0.0
    %v4312 = vmax.f32 %v4310, 0.0
    %v4313 = vsub.f32 %v4287, %v4295
    %v4314 = vsub.f32 %v4288, %v4296
    %v4315 = vadd.f32 %v4311, 1e-05
    %v4316 = vadd.f32 %v4312, 1e-05
    %v4317 = vrsqrt.pop %v4315
    %v4318 = vrsqrt.pop %v4316
    %v4319 = vmul.f32 %v4313, %v4317
    %v4320 = vmul.f32 %v4314, %v4318
    %v4321 = vmul.f32 %v4319, %v800
    %v4322 = vmul.f32 %v4320, %v800
    %v4323 = vadd.f32 %v4321, %v803
    %v4324 = vadd.f32 %v4322, %v803
    %v4325 = vpack.c.bf16 %v4324, %v4323
    %v4327 = vsel %vm766, %v4325, 0
    %4329 = vmatprep.subr.bf16.mxu0 %v832
    %4330 = vmatpush1.bf16.msra.mxu0 %v831
    %4331 = vmatprep.subr.bf16.mxu0 %v846
    %4332 = vmatpush1.bf16.msra.mxu0 %v843
    %4333 = vmatprep.subr.bf16.mxu0 0
    %4334 = vmatpush1.bf16.msra.mxu0 0
    %4335 = vmatprep.subr.bf16.mxu0 0
    %4336 = vmatpush1.bf16.msra.mxu0 0
    %4337 = vmatprep.subr.bf16.mxu0 0
    %4338 = vmatpush1.bf16.msra.mxu0 0
    %4339 = vmatprep.subr.bf16.mxu0 0
    %4340 = vmatpush1.bf16.msra.mxu0 0
    %4341 = vmatprep.subr.bf16.mxu0 0
    %4342 = vmatpush1.bf16.msra.mxu0 0
    %4343 = vmatprep.subr.bf16.mxu0 0
    %4344 = vmatpush1.bf16.msra.mxu0 0
    %4345 = vmatprep.subr.bf16.mxu0 0
    %4346 = vmatpush1.bf16.msra.mxu0 0
    %4347 = vmatprep.subr.bf16.mxu0 0
    %4348 = vmatpush1.bf16.msra.mxu0 0
    %4349 = vmatprep.subr.bf16.mxu0 0
    %4350 = vmatpush1.bf16.msra.mxu0 0
    %4351 = vmatprep.subr.bf16.mxu0 0
    %4352 = vmatpush1.bf16.msra.mxu0 0
    %4353 = vmatprep.subr.bf16.mxu0 0
    %4354 = vmatpush1.bf16.msra.mxu0 0
    %4355 = vmatprep.subr.bf16.mxu0 0
    %4356 = vmatpush1.bf16.msra.mxu0 0
    %4357 = vmatprep.subr.bf16.mxu0 0
    %4358 = vmatpush1.bf16.msra.mxu0 0
    %4359 = vmatprep.subr.bf16.mxu0 0
    %4360 = vmatpush1.bf16.msra.mxu0 0
    %4361 = vmatprep.mubr.bf16.mxu0 0
    %4362 = vmatmul.mubr.bf16.gmra.mrb[0].mxu0 %v4327
    %v4363 = vpop.f32.mrb[0].mxu0
    %v4364 = vadd.f32 %v815, %v4363
    %v4365 = vpop.f32.mrb[0].mxu0
    %v4366 = vadd.f32 %v819, %v4365
    %v4367 = vpop.f32.mrb[0].mxu0
    %v4368 = vadd.f32 %v815, %v4367
    %v4369 = vpop.f32.mrb[0].mxu0
    %v4370 = vadd.f32 %v819, %v4369
    %4371 = vdwg.mxu0
    %v4372 = vmax.f32 %v4364, 0.0
    %v4373 = vmax.f32 %v4366, 0.0
    %v4374 = vmax.f32 %v4368, 0.0
    %v4375 = vmax.f32 %v4370, 0.0
    %v4376 = vadd.f32 %v4372, %v4373
    %4377 = vadd.xlane.f32.xlu0 %v4376
    %v4378 = vpop.xlane.xlu0 %4377
    %v4379 = vsel %vm142, %v4374, 0.0
    %v4380 = vsel %vm142, %v4375, 0.0
    %v4381 = vadd.f32 %v4379, %v4380
    %4382 = vadd.xlane.f32.xlu0 %v4381
    %v4383 = vpop.xlane.xlu0 %4382
    %v4384 = vmul.f32 %v4378, 0.00390625
    %v4385 = vmul.f32 %v4383, 0.00390625
    %v4386 = vmul.f32 %v4372, %v4372
    %v4387 = vmul.f32 %v4373, %v4373
    %v4388 = vmul.f32 %v4374, %v4374
    %v4389 = vmul.f32 %v4375, %v4375
    %v4390 = vadd.f32 %v4386, %v4387
    %4391 = vadd.xlane.f32.xlu0 %v4390
    %v4392 = vpop.xlane.xlu0 %4391
    %v4393 = vsel %vm142, %v4388, 0.0
    %v4394 = vsel %vm142, %v4389, 0.0
    %v4395 = vadd.f32 %v4393, %v4394
    %4396 = vadd.xlane.f32.xlu0 %v4395
    %v4397 = vpop.xlane.xlu0 %4396
    %v4398 = vmul.f32 %v4392, 0.00390625
    %v4399 = vmul.f32 %v4397, 0.00390625
    %v4400 = vmul.f32 %v4384, %v4384
    %v4401 = vmul.f32 %v4385, %v4385
    %v4402 = vsub.f32 %v4398, %v4400
    %v4403 = vsub.f32 %v4399, %v4401
    %v4404 = vmax.f32 %v4402, 0.0
    %v4405 = vmax.f32 %v4403, 0.0
    %v4406 = vsub.f32 %v4372, %v4384
    %v4407 = vsub.f32 %v4373, %v4384
    %v4408 = vsub.f32 %v4374, %v4385
    %v4409 = vsub.f32 %v4375, %v4385
    %v4410 = vadd.f32 %v4404, 1e-05
    %v4411 = vadd.f32 %v4405, 1e-05
    %v4412 = vrsqrt.pop %v4410
    %v4413 = vrsqrt.pop %v4411
    %v4414 = vmul.f32 %v4406, %v4412
    %v4415 = vmul.f32 %v4407, %v4412
    %v4416 = vmul.f32 %v4408, %v4413
    %v4417 = vmul.f32 %v4409, %v4413
    %v4418 = vmul.f32 %v4414, %v939
    %v4419 = vmul.f32 %v4415, %v939
    %v4420 = vmul.f32 %v4416, %v939
    %v4421 = vmul.f32 %v4417, %v939
    %v4422 = vadd.f32 %v4418, %v944
    %v4423 = vadd.f32 %v4419, %v944
    %v4424 = vadd.f32 %v4420, %v944
    %v4425 = vadd.f32 %v4421, %v944
    %v4426 = vpack.c.bf16 %v4424, %v4422
    %v4427 = vpack.c.bf16 %v4425, %v4423
    %4428 = vmatprep.subr.bf16.mxu0 %v1092
    %4429 = vmatpush1.bf16.msra.mxu0 %v1091
    %4430 = vmatprep.subr.bf16.mxu0 %v1094
    %4431 = vmatpush1.bf16.msra.mxu0 %v1093
    %4432 = vmatprep.subr.bf16.mxu0 %v1096
    %4433 = vmatpush1.bf16.msra.mxu0 %v1095
    %4434 = vmatprep.subr.bf16.mxu0 %v1098
    %4435 = vmatpush1.bf16.msra.mxu0 %v1097
    %4436 = vmatprep.subr.bf16.mxu0 %v1100
    %4437 = vmatpush1.bf16.msra.mxu0 %v1099
    %4438 = vmatprep.subr.bf16.mxu0 %v1102
    %4439 = vmatpush1.bf16.msra.mxu0 %v1101
    %4440 = vmatprep.subr.bf16.mxu0 %v1104
    %4441 = vmatpush1.bf16.msra.mxu0 %v1103
    %4442 = vmatprep.subr.bf16.mxu0 %v1106
    %4443 = vmatpush1.bf16.msra.mxu0 %v1105
    %4444 = vmatprep.subr.bf16.mxu0 %v1108
    %4445 = vmatpush1.bf16.msra.mxu0 %v1107
    %4446 = vmatprep.subr.bf16.mxu0 %v1110
    %4447 = vmatpush1.bf16.msra.mxu0 %v1109
    %4448 = vmatprep.subr.bf16.mxu0 %v1112
    %4449 = vmatpush1.bf16.msra.mxu0 %v1111
    %4450 = vmatprep.subr.bf16.mxu0 %v1114
    %4451 = vmatpush1.bf16.msra.mxu0 %v1113
    %4452 = vmatprep.subr.bf16.mxu0 %v1116
    %4453 = vmatpush1.bf16.msra.mxu0 %v1115
    %4454 = vmatprep.subr.bf16.mxu0 %v1118
    %4455 = vmatpush1.bf16.msra.mxu0 %v1117
    %4456 = vmatprep.subr.bf16.mxu0 %v1120
    %4457 = vmatpush1.bf16.msra.mxu0 %v1119
    %4458 = vmatprep.subr.bf16.mxu0 %v1122
    %4459 = vmatpush1.bf16.msra.mxu0 %v1121
    %4460 = vmatprep.mubr.bf16.mxu0 %v4427
    %4461 = vmatmul.mubr.bf16.gmra.mrb[0].mxu0 %v4426
    %v4462 = vpop.f32.mrb[0].mxu0
    %v4463 = vadd.f32 %v988, %v4462
    %v4464 = vpop.f32.mrb[0].mxu0
    %v4465 = vadd.f32 %v992, %v4464
    %v4466 = vpop.f32.mrb[0].mxu0
    %v4467 = vadd.f32 %v988, %v4466
    %v4468 = vpop.f32.mrb[0].mxu0
    %v4469 = vadd.f32 %v992, %v4468
    %4470 = vdwg.mxu0
    %v4471 = vmax.f32 %v4463, 0.0
    %v4472 = vmax.f32 %v4465, 0.0
    %v4473 = vmax.f32 %v4467, 0.0
    %v4474 = vmax.f32 %v4469, 0.0
    %v4475 = vadd.f32 %v4471, %v4472
    %4476 = vadd.xlane.f32.xlu0 %v4475
    %v4477 = vpop.xlane.xlu0 %4476
    %v4478 = vsel %vm142, %v4473, 0.0
    %v4479 = vsel %vm142, %v4474, 0.0
    %v4480 = vadd.f32 %v4478, %v4479
    %4481 = vadd.xlane.f32.xlu0 %v4480
    %v4482 = vpop.xlane.xlu0 %4481
    %v4483 = vmul.f32 %v4477, 0.00390625
    %v4484 = vmul.f32 %v4482, 0.00390625
    %v4485 = vmul.f32 %v4471, %v4471
    %v4486 = vmul.f32 %v4472, %v4472
    %v4487 = vmul.f32 %v4473, %v4473
    %v4488 = vmul.f32 %v4474, %v4474
    %v4489 = vadd.f32 %v4485, %v4486
    %4490 = vadd.xlane.f32.xlu0 %v4489
    %v4491 = vpop.xlane.xlu0 %4490
    %v4492 = vsel %vm142, %v4487, 0.0
    %v4493 = vsel %vm142, %v4488, 0.0
    %v4494 = vadd.f32 %v4492, %v4493
    %4495 = vadd.xlane.f32.xlu0 %v4494
    %v4496 = vpop.xlane.xlu0 %4495
    %v4497 = vmul.f32 %v4491, 0.00390625
    %v4498 = vmul.f32 %v4496, 0.00390625
    %v4499 = vmul.f32 %v4483, %v4483
    %v4500 = vmul.f32 %v4484, %v4484
    %v4501 = vsub.f32 %v4497, %v4499
    %v4502 = vsub.f32 %v4498, %v4500
    %v4503 = vmax.f32 %v4501, 0.0
    %v4504 = vmax.f32 %v4502, 0.0
    %v4505 = vsub.f32 %v4471, %v4483
    %v4506 = vsub.f32 %v4472, %v4483
    %v4507 = vsub.f32 %v4473, %v4484
    %v4508 = vsub.f32 %v4474, %v4484
    %v4509 = vadd.f32 %v4503, 1e-05
    %v4510 = vadd.f32 %v4504, 1e-05
    %v4511 = vrsqrt.pop %v4509
    %v4512 = vrsqrt.pop %v4510
    %v4513 = vmul.f32 %v4505, %v4511
    %v4514 = vmul.f32 %v4506, %v4511
    %v4515 = vmul.f32 %v4507, %v4512
    %v4516 = vmul.f32 %v4508, %v4512
    %v4517 = vmul.f32 %v4513, %v1246
    %v4518 = vmul.f32 %v4514, %v1246
    %v4519 = vmul.f32 %v4515, %v1246
    %v4520 = vmul.f32 %v4516, %v1246
    %v4521 = vadd.f32 %v4517, %v1251
    %v4522 = vadd.f32 %v4518, %v1251
    %v4523 = vadd.f32 %v4519, %v1251
    %v4524 = vadd.f32 %v4520, %v1251
    %v4525 = vpack.c.bf16 %v4523, %v4521
    %v4526 = vpack.c.bf16 %v4524, %v4522
    %4527 = vmatprep.subr.bf16.mxu0 0
    %4528 = vmatpush1.bf16.msra.mxu0 %v1361
    %4529 = vmatprep.subr.bf16.mxu0 0
    %4530 = vmatpush1.bf16.msra.mxu0 %v1362
    %4531 = vmatprep.subr.bf16.mxu0 0
    %4532 = vmatpush1.bf16.msra.mxu0 %v1363
    %4533 = vmatprep.subr.bf16.mxu0 0
    %4534 = vmatpush1.bf16.msra.mxu0 %v1364
    %4535 = vmatprep.subr.bf16.mxu0 0
    %4536 = vmatpush1.bf16.msra.mxu0 %v1365
    %4537 = vmatprep.subr.bf16.mxu0 0
    %4538 = vmatpush1.bf16.msra.mxu0 %v1366
    %4539 = vmatprep.subr.bf16.mxu0 0
    %4540 = vmatpush1.bf16.msra.mxu0 %v1367
    %4541 = vmatprep.subr.bf16.mxu0 0
    %4542 = vmatpush1.bf16.msra.mxu0 %v1368
    %4543 = vmatprep.subr.bf16.mxu0 0
    %4544 = vmatpush1.bf16.msra.mxu0 %v1369
    %4545 = vmatprep.subr.bf16.mxu0 0
    %4546 = vmatpush1.bf16.msra.mxu0 %v1370
    %4547 = vmatprep.subr.bf16.mxu0 0
    %4548 = vmatpush1.bf16.msra.mxu0 %v1371
    %4549 = vmatprep.subr.bf16.mxu0 0
    %4550 = vmatpush1.bf16.msra.mxu0 %v1372
    %4551 = vmatprep.subr.bf16.mxu0 0
    %4552 = vmatpush1.bf16.msra.mxu0 %v1373
    %4553 = vmatprep.subr.bf16.mxu0 0
    %4554 = vmatpush1.bf16.msra.mxu0 %v1374
    %4555 = vmatprep.subr.bf16.mxu0 0
    %4556 = vmatpush1.bf16.msra.mxu0 %v1375
    %4557 = vmatprep.subr.bf16.mxu0 0
    %4558 = vmatpush1.bf16.msra.mxu0 %v1376
    %4559 = vmatprep.mubr.bf16.mxu0 %v4526
    %4560 = vmatmul.mubr.bf16.gmra.mrb[0].mxu0 %v4525
    %v4561 = vpop.f32.mrb[0].mxu0
    %v4562 = vadd.f32 %v1295, %v4561
    %v4563 = vpop.f32.mrb[0].mxu0
    %v4564 = vpop.f32.mrb[0].mxu0
    %v4565 = vadd.f32 %v1295, %v4564
    %v4566 = vpop.f32.mrb[0].mxu0
    %4567 = vdwg.mxu0
    %4569 = vset.pattern.permute.xlu0 0
    %4570 = vperm.xlu0 %4569, %v4562
    %v4571 = vpop.permute.xlu0 %4570
    %4574 = vset.pattern.permute.xlu0 0
    %4575 = vperm.xlu0 %4574, %v4565
    %v4576 = vpop.permute.xlu0 %4575
    %v4578 = vmul.f32 %v4571, %v130
    %v4579 = vmul.f32 %v4576, %v130
    %4580 = vset.pattern.permute.xlu0 1
    %4581 = vperm.xlu0 %4580, %v4562
    %v4582 = vpop.permute.xlu0 %4581
    %4584 = vset.pattern.permute.xlu0 1
    %4585 = vperm.xlu0 %4584, %v4565
    %v4586 = vpop.permute.xlu0 %4585
    %v4588 = vmul.f32 %v4582, %v3835
    %v4589 = vmul.f32 %v4586, %v3836
    %v4590 = vadd.f32 %v4578, %v4588
    %v4591 = vadd.f32 %v4579, %v4589
    %4592 = vset.pattern.permute.xlu0 9
    %4593 = vperm.xlu0 %4592, %v4562
    %v4594 = vpop.permute.xlu0 %4593
    %4596 = vset.pattern.permute.xlu0 9
    %4597 = vperm.xlu0 %4596, %v4565
    %v4598 = vpop.permute.xlu0 %4597
    %v4600 = vmul.f32 %v4594, %v3835
    %v4601 = vmul.f32 %v4598, %v3836
    %v4602 = vsel %vm257, %v4600, 0.0
    %v4603 = vsel %vm261, %v4601, 0.0
    %v4604 = vadd.f32 %v4602, %v4603
    %v4605 = vrot.slane %v4604, 4
    %v4606 = vadd.f32 %v4604, %v4605
    %v4607 = vrot.slane %v4606, 2
    %v4608 = vadd.f32 %v4606, %v4607
    %v4609 = vrot.slane %v4608, 1
    %v4610 = vadd.f32 %v4608, %v4609
    %v4611 = vadd.f32 %v4610, 0.0
    %4612 = vset.pattern.permute.xlu0 2
    %4613 = vperm.xlu0 %4612, %v4562
    %v4614 = vpop.permute.xlu0 %4613
    %4616 = vset.pattern.permute.xlu0 2
    %4617 = vperm.xlu0 %4616, %v4565
    %v4618 = vpop.permute.xlu0 %4617
    %v4620 = vmul.f32 %v4614, %v3895
    %v4621 = vmul.f32 %v4618, %v3896
    %v4622 = vadd.f32 %v4590, %v4620
    %v4623 = vadd.f32 %v4591, %v4621
    %4624 = vset.pattern.permute.xlu0 10
    %4625 = vperm.xlu0 %4624, %v4562
    %v4626 = vpop.permute.xlu0 %4625
    %4628 = vset.pattern.permute.xlu0 10
    %4629 = vperm.xlu0 %4628, %v4565
    %v4630 = vpop.permute.xlu0 %4629
    %v4632 = vmul.f32 %v4626, %v3895
    %v4633 = vmul.f32 %v4630, %v3896
    %v4634 = vsel %vm257, %v4632, 0.0
    %v4635 = vsel %vm261, %v4633, 0.0
    %v4636 = vadd.f32 %v4634, %v4635
    %v4637 = vrot.slane %v4636, 4
    %v4638 = vadd.f32 %v4636, %v4637
    %v4639 = vrot.slane %v4638, 2
    %v4640 = vadd.f32 %v4638, %v4639
    %v4641 = vrot.slane %v4640, 1
    %v4642 = vadd.f32 %v4640, %v4641
    %v4643 = vadd.f32 %v4611, %v4642
    %4644 = vset.pattern.permute.xlu0 3
    %4645 = vperm.xlu0 %4644, %v4562
    %v4646 = vpop.permute.xlu0 %4645
    %4648 = vset.pattern.permute.xlu0 3
    %4649 = vperm.xlu0 %4648, %v4565
    %v4650 = vpop.permute.xlu0 %4649
    %v4652 = vmul.f32 %v4646, %v3951
    %v4653 = vmul.f32 %v4650, %v3952
    %v4654 = vadd.f32 %v4622, %v4652
    %v4655 = vadd.f32 %v4623, %v4653
    %4656 = vset.pattern.permute.xlu0 11
    %4657 = vperm.xlu0 %4656, %v4562
    %v4658 = vpop.permute.xlu0 %4657
    %4660 = vset.pattern.permute.xlu0 11
    %4661 = vperm.xlu0 %4660, %v4565
    %v4662 = vpop.permute.xlu0 %4661
    %v4664 = vmul.f32 %v4658, %v3951
    %v4665 = vmul.f32 %v4662, %v3952
    %v4666 = vsel %vm257, %v4664, 0.0
    %v4667 = vsel %vm261, %v4665, 0.0
    %v4668 = vadd.f32 %v4666, %v4667
    %v4669 = vrot.slane %v4668, 4
    %v4670 = vadd.f32 %v4668, %v4669
    %v4671 = vrot.slane %v4670, 2
    %v4672 = vadd.f32 %v4670, %v4671
    %v4673 = vrot.slane %v4672, 1
    %v4674 = vadd.f32 %v4672, %v4673
    %v4675 = vadd.f32 %v4643, %v4674
    %4676 = vset.pattern.permute.xlu0 4
    %4677 = vperm.xlu0 %4676, %v4562
    %v4678 = vpop.permute.xlu0 %4677
    %4680 = vset.pattern.permute.xlu0 4
    %4681 = vperm.xlu0 %4680, %v4565
    %v4682 = vpop.permute.xlu0 %4681
    %v4684 = vmul.f32 %v4678, %v4007
    %v4685 = vmul.f32 %v4682, %v4008
    %v4686 = vadd.f32 %v4654, %v4684
    %v4687 = vadd.f32 %v4655, %v4685
    %4688 = vset.pattern.permute.xlu0 12
    %4689 = vperm.xlu0 %4688, %v4562
    %v4690 = vpop.permute.xlu0 %4689
    %4692 = vset.pattern.permute.xlu0 12
    %4693 = vperm.xlu0 %4692, %v4565
    %v4694 = vpop.permute.xlu0 %4693
    %v4696 = vmul.f32 %v4690, %v4007
    %v4697 = vmul.f32 %v4694, %v4008
    %v4698 = vsel %vm257, %v4696, 0.0
    %v4699 = vsel %vm261, %v4697, 0.0
    %v4700 = vadd.f32 %v4698, %v4699
    %v4701 = vrot.slane %v4700, 4
    %v4702 = vadd.f32 %v4700, %v4701
    %v4703 = vrot.slane %v4702, 2
    %v4704 = vadd.f32 %v4702, %v4703
    %v4705 = vrot.slane %v4704, 1
    %v4706 = vadd.f32 %v4704, %v4705
    %v4707 = vadd.f32 %v4675, %v4706
    %4708 = vset.pattern.permute.xlu0 5
    %4709 = vperm.xlu0 %4708, %v4562
    %v4710 = vpop.permute.xlu0 %4709
    %4712 = vset.pattern.permute.xlu0 5
    %4713 = vperm.xlu0 %4712, %v4565
    %v4714 = vpop.permute.xlu0 %4713
    %v4716 = vmul.f32 %v4710, %v4063
    %v4717 = vmul.f32 %v4714, %v4064
    %v4718 = vadd.f32 %v4686, %v4716
    %v4719 = vadd.f32 %v4687, %v4717
    %4720 = vset.pattern.permute.xlu0 13
    %4721 = vperm.xlu0 %4720, %v4562
    %v4722 = vpop.permute.xlu0 %4721
    %4724 = vset.pattern.permute.xlu0 13
    %4725 = vperm.xlu0 %4724, %v4565
    %v4726 = vpop.permute.xlu0 %4725
    %v4728 = vmul.f32 %v4722, %v4063
    %v4729 = vmul.f32 %v4726, %v4064
    %v4730 = vsel %vm257, %v4728, 0.0
    %v4731 = vsel %vm261, %v4729, 0.0
    %v4732 = vadd.f32 %v4730, %v4731
    %v4733 = vrot.slane %v4732, 4
    %v4734 = vadd.f32 %v4732, %v4733
    %v4735 = vrot.slane %v4734, 2
    %v4736 = vadd.f32 %v4734, %v4735
    %v4737 = vrot.slane %v4736, 1
    %v4738 = vadd.f32 %v4736, %v4737
    %v4739 = vadd.f32 %v4707, %v4738
    %4740 = vset.pattern.permute.xlu0 6
    %4741 = vperm.xlu0 %4740, %v4562
    %v4742 = vpop.permute.xlu0 %4741
    %4744 = vset.pattern.permute.xlu0 6
    %4745 = vperm.xlu0 %4744, %v4565
    %v4746 = vpop.permute.xlu0 %4745
    %v4748 = vmul.f32 %v4742, %v4119
    %v4749 = vmul.f32 %v4746, %v4120
    %v4750 = vadd.f32 %v4718, %v4748
    %v4751 = vadd.f32 %v4719, %v4749
    %4752 = vset.pattern.permute.xlu0 14
    %4753 = vperm.xlu0 %4752, %v4562
    %v4754 = vpop.permute.xlu0 %4753
    %4756 = vset.pattern.permute.xlu0 14
    %4757 = vperm.xlu0 %4756, %v4565
    %v4758 = vpop.permute.xlu0 %4757
    %v4760 = vmul.f32 %v4754, %v4119
    %v4761 = vmul.f32 %v4758, %v4120
    %v4762 = vsel %vm257, %v4760, 0.0
    %v4763 = vsel %vm261, %v4761, 0.0
    %v4764 = vadd.f32 %v4762, %v4763
    %v4765 = vrot.slane %v4764, 4
    %v4766 = vadd.f32 %v4764, %v4765
    %v4767 = vrot.slane %v4766, 2
    %v4768 = vadd.f32 %v4766, %v4767
    %v4769 = vrot.slane %v4768, 1
    %v4770 = vadd.f32 %v4768, %v4769
    %v4771 = vadd.f32 %v4739, %v4770
    %4772 = vset.pattern.permute.xlu0 7
    %4773 = vperm.xlu0 %4772, %v4562
    %v4774 = vpop.permute.xlu0 %4773
    %4776 = vset.pattern.permute.xlu0 7
    %4777 = vperm.xlu0 %4776, %v4565
    %v4778 = vpop.permute.xlu0 %4777
    %v4780 = vmul.f32 %v4774, %v4175
    %v4781 = vmul.f32 %v4778, %v4176
    %v4782 = vadd.f32 %v4750, %v4780
    %v4783 = vadd.f32 %v4751, %v4781
    %4784 = vset.pattern.permute.xlu0 15
    %4785 = vperm.xlu0 %4784, %v4562
    %v4786 = vpop.permute.xlu0 %4785
    %4788 = vset.pattern.permute.xlu0 15
    %4789 = vperm.xlu0 %4788, %v4565
    %v4790 = vpop.permute.xlu0 %4789
    %v4792 = vmul.f32 %v4786, %v4175
    %v4793 = vmul.f32 %v4790, %v4176
    %v4794 = vsel %vm257, %v4792, 0.0
    %v4795 = vsel %vm261, %v4793, 0.0
    %v4796 = vadd.f32 %v4794, %v4795
    %v4797 = vrot.slane %v4796, 4
    %v4798 = vadd.f32 %v4796, %v4797
    %v4799 = vrot.slane %v4798, 2
    %v4800 = vadd.f32 %v4798, %v4799
    %v4801 = vrot.slane %v4800, 1
    %v4802 = vadd.f32 %v4800, %v4801
    %v4803 = vadd.f32 %v4771, %v4802
    %4804 = vset.pattern.permute.xlu0 8
    %4805 = vperm.xlu0 %4804, %v4562
    %v4806 = vpop.permute.xlu0 %4805
    %4808 = vset.pattern.permute.xlu0 8
    %4809 = vperm.xlu0 %4808, %v4565
    %v4810 = vpop.permute.xlu0 %4809
    %v4812 = vmul.f32 %v4806, %v4231
    %v4813 = vmul.f32 %v4810, %v4232
    %v4814 = vadd.f32 %v4782, %v4812
    %v4815 = vadd.f32 %v4783, %v4813
    %4816 = vset.pattern.permute.xlu0 16
    %4817 = vperm.xlu0 %4816, %v4562
    %v4818 = vpop.permute.xlu0 %4817
    %4820 = vset.pattern.permute.xlu0 16
    %4821 = vperm.xlu0 %4820, %v4565
    %v4822 = vpop.permute.xlu0 %4821
    %v4824 = vmul.f32 %v4818, %v4231
    %v4825 = vmul.f32 %v4822, %v4232
    %v4826 = vsel %vm257, %v4824, 0.0
    %v4827 = vsel %vm261, %v4825, 0.0
    %v4828 = vadd.f32 %v4826, %v4827
    %v4829 = vrot.slane %v4828, 4
    %v4830 = vadd.f32 %v4828, %v4829
    %v4831 = vrot.slane %v4830, 2
    %v4832 = vadd.f32 %v4830, %v4831
    %v4833 = vrot.slane %v4832, 1
    %v4834 = vadd.f32 %v4832, %v4833
    %v4835 = vadd.f32 %v4803, %v4834
    %v4836 = vmul.f32 %v135, %v4835
    %v4837 = vmul.f32 %v136, %v4835
    %v4838 = vadd.f32 %v4814, %v4836
    %v4839 = vadd.f32 %v4815, %v4837
    %4840 = vxpose.xlu0.b32.start [1/16] %v4838, 128
    %4841 = vxpose.xlu0.b32.cont [2/16] %v4839, 128
    %4842 = vxpose.xlu0.b32.cont [3/16] 0.0, 128
    %4843 = vxpose.xlu0.b32.cont [4/16] 0.0, 128
    %4844 = vxpose.xlu0.b32.cont [5/16] 0.0, 128
    %4845 = vxpose.xlu0.b32.cont [6/16] 0.0, 128
    %4846 = vxpose.xlu0.b32.cont [7/16] 0.0, 128
    %4847 = vxpose.xlu0.b32.cont [8/16] 0.0, 128
    %4848 = vxpose.xlu0.b32.cont [9/16] 0.0, 128
    %4849 = vxpose.xlu0.b32.cont [10/16] 0.0, 128
    %4850 = vxpose.xlu0.b32.cont [11/16] 0.0, 128
    %4851 = vxpose.xlu0.b32.cont [12/16] 0.0, 128
    %4852 = vxpose.xlu0.b32.cont [13/16] 0.0, 128
    %4853 = vxpose.xlu0.b32.cont [14/16] 0.0, 128
    %4854 = vxpose.xlu0.b32.cont [15/16] 0.0, 128
    %4855 = vxpose.xlu0.b32.end [16/16] 0.0, 128
    %v4856 = vpop.trf.xlu0
    %v4857 = vpop.trf.xlu0
    %v4858 = vpop.trf.xlu0
    %v4859 = vpop.trf.xlu0
    %v4860 = vpop.trf.xlu0
    %v4861 = vpop.trf.xlu0
    %v4862 = vpop.trf.xlu0
    %v4863 = vpop.trf.xlu0
    %v4864 = vpop.trf.xlu0
    %v4865 = vpop.trf.xlu0
    %v4866 = vpop.trf.xlu0
    %v4867 = vpop.trf.xlu0
    %v4868 = vpop.trf.xlu0
    %v4869 = vpop.trf.xlu0
    %v4870 = vpop.trf.xlu0
    %v4871 = vpop.trf.xlu0
    %v4873 = vsel %vm257, %v4856, 0
    %v4876 = vsel %vm257, %v4857, 0
    %v4878 = vsel %vm142, %v3707, 0
    %4880 = vmatprep.subr.mxu0 0.0
    %4881 = vmatpush1.msra.mxu0 %v3705
    %4882 = vmatprep.subr.mxu0 0.0
    %4883 = vmatpush1.msra.mxu0 %v4878
    %4884 = vmatprep.subr.mxu0 0.0
    %4885 = vmatpush1.msra.mxu0 0.0
    %4886 = vmatprep.subr.mxu0 0.0
    %4887 = vmatpush1.msra.mxu0 0.0
    %4888 = vmatprep.subr.mxu0 0.0
    %4889 = vmatpush1.msra.mxu0 0.0
    %4890 = vmatprep.subr.mxu0 0.0
    %4891 = vmatpush1.msra.mxu0 0.0
    %4892 = vmatprep.subr.mxu0 0.0
    %4893 = vmatpush1.msra.mxu0 0.0
    %4894 = vmatprep.subr.mxu0 0.0
    %4895 = vmatpush1.msra.mxu0 0.0
    %4896 = vmatprep.subr.mxu0 0.0
    %4897 = vmatpush1.msra.mxu0 0.0
    %4898 = vmatprep.subr.mxu0 0.0
    %4899 = vmatpush1.msra.mxu0 0.0
    %4900 = vmatprep.subr.mxu0 0.0
    %4901 = vmatpush1.msra.mxu0 0.0
    %4902 = vmatprep.subr.mxu0 0.0
    %4903 = vmatpush1.msra.mxu0 0.0
    %4904 = vmatprep.subr.mxu0 0.0
    %4905 = vmatpush1.msra.mxu0 0.0
    %4906 = vmatprep.subr.mxu0 0.0
    %4907 = vmatpush1.msra.mxu0 0.0
    %4908 = vmatprep.subr.mxu0 0.0
    %4909 = vmatpush1.msra.mxu0 0.0
    %4910 = vmatprep.subr.mxu0 0.0
    %4911 = vmatpush1.msra.mxu0 0.0
    %4912 = vmatprep.subr.mxu0 0.0
    %4913 = vmatpush1.msra.mxu0 0.0
    %4914 = vmatprep.subr.mxu0 0.0
    %4915 = vmatpush1.msra.mxu0 0.0
    %4916 = vmatprep.subr.mxu0 0.0
    %4917 = vmatpush1.msra.mxu0 0.0
    %4918 = vmatprep.subr.mxu0 0.0
    %4919 = vmatpush1.msra.mxu0 0.0
    %4920 = vmatprep.subr.mxu0 0.0
    %4921 = vmatpush1.msra.mxu0 0.0
    %4922 = vmatprep.subr.mxu0 0.0
    %4923 = vmatpush1.msra.mxu0 0.0
    %4924 = vmatprep.subr.mxu0 0.0
    %4925 = vmatpush1.msra.mxu0 0.0
    %4926 = vmatprep.subr.mxu0 0.0
    %4927 = vmatpush1.msra.mxu0 0.0
    %4928 = vmatprep.subr.mxu0 0.0
    %4929 = vmatpush1.msra.mxu0 0.0
    %4930 = vmatprep.subr.mxu0 0.0
    %4931 = vmatpush1.msra.mxu0 0.0
    %4932 = vmatprep.subr.mxu0 0.0
    %4933 = vmatpush1.msra.mxu0 0.0
    %4934 = vmatprep.subr.mxu0 0.0
    %4935 = vmatpush1.msra.mxu0 0.0
    %4936 = vmatprep.subr.mxu0 0.0
    %4937 = vmatpush1.msra.mxu0 0.0
    %4938 = vmatprep.subr.mxu0 0.0
    %4939 = vmatpush1.msra.mxu0 0.0
    %4940 = vmatprep.subr.mxu0 0.0
    %4941 = vmatpush1.msra.mxu0 0.0
    %4942 = vmatprep.subr.mxu0 0.0
    %4943 = vmatpush1.msra.mxu0 0.0
    %4944 = vmatprep.mubr.f32.mxu0 0.0
    %4945 = vmatmul.mubr.f32.gmra.mrb[0].mxu0 %v4873
    %v4946 = vpop.f32.mrb[0].mxu0
    %v4947 = vadd.f32 0.0, %v4946
    %v4948 = vpop.f32.mrb[0].mxu0
    %4949 = vmatprep.mubr.f32.mxu0 0.0
    %4950 = vmatmul.mubr.f32.gmra.mrb[0].mxu0 %v4876
    %v4951 = vpop.f32.mrb[0].mxu0
    %v4952 = vpop.f32.mrb[0].mxu0
    %4953 = vdwg.mxu0
    %v4955 = vsel %vm257, %v4838, 0
    %v4958 = vsel %vm257, %v4839, 0
    %4960 = vmatprep.subr.mxu0 0.0
    %4961 = vmatpush1.msra.mxu0 %v3705
    %4962 = vmatprep.subr.mxu0 0.0
    %4963 = vmatpush1.msra.mxu0 %v4878
    %4964 = vmatprep.subr.mxu0 0.0
    %4965 = vmatpush1.msra.mxu0 0.0
    %4966 = vmatprep.subr.mxu0 0.0
    %4967 = vmatpush1.msra.mxu0 0.0
    %4968 = vmatprep.subr.mxu0 0.0
    %4969 = vmatpush1.msra.mxu0 0.0
    %4970 = vmatprep.subr.mxu0 0.0
    %4971 = vmatpush1.msra.mxu0 0.0
    %4972 = vmatprep.subr.mxu0 0.0
    %4973 = vmatpush1.msra.mxu0 0.0
    %4974 = vmatprep.subr.mxu0 0.0
    %4975 = vmatpush1.msra.mxu0 0.0
    %4976 = vmatprep.subr.mxu0 0.0
    %4977 = vmatpush1.msra.mxu0 0.0
    %4978 = vmatprep.subr.mxu0 0.0
    %4979 = vmatpush1.msra.mxu0 0.0
    %4980 = vmatprep.subr.mxu0 0.0
    %4981 = vmatpush1.msra.mxu0 0.0
    %4982 = vmatprep.subr.mxu0 0.0
    %4983 = vmatpush1.msra.mxu0 0.0
    %4984 = vmatprep.subr.mxu0 0.0
    %4985 = vmatpush1.msra.mxu0 0.0
    %4986 = vmatprep.subr.mxu0 0.0
    %4987 = vmatpush1.msra.mxu0 0.0
    %4988 = vmatprep.subr.mxu0 0.0
    %4989 = vmatpush1.msra.mxu0 0.0
    %4990 = vmatprep.subr.mxu0 0.0
    %4991 = vmatpush1.msra.mxu0 0.0
    %4992 = vmatprep.subr.mxu0 0.0
    %4993 = vmatpush1.msra.mxu0 0.0
    %4994 = vmatprep.subr.mxu0 0.0
    %4995 = vmatpush1.msra.mxu0 0.0
    %4996 = vmatprep.subr.mxu0 0.0
    %4997 = vmatpush1.msra.mxu0 0.0
    %4998 = vmatprep.subr.mxu0 0.0
    %4999 = vmatpush1.msra.mxu0 0.0
    %5000 = vmatprep.subr.mxu0 0.0
    %5001 = vmatpush1.msra.mxu0 0.0
    %5002 = vmatprep.subr.mxu0 0.0
    %5003 = vmatpush1.msra.mxu0 0.0
    %5004 = vmatprep.subr.mxu0 0.0
    %5005 = vmatpush1.msra.mxu0 0.0
    %5006 = vmatprep.subr.mxu0 0.0
    %5007 = vmatpush1.msra.mxu0 0.0
    %5008 = vmatprep.subr.mxu0 0.0
    %5009 = vmatpush1.msra.mxu0 0.0
    %5010 = vmatprep.subr.mxu0 0.0
    %5011 = vmatpush1.msra.mxu0 0.0
    %5012 = vmatprep.subr.mxu0 0.0
    %5013 = vmatpush1.msra.mxu0 0.0
    %5014 = vmatprep.subr.mxu0 0.0
    %5015 = vmatpush1.msra.mxu0 0.0
    %5016 = vmatprep.subr.mxu0 0.0
    %5017 = vmatpush1.msra.mxu0 0.0
    %5018 = vmatprep.subr.mxu0 0.0
    %5019 = vmatpush1.msra.mxu0 0.0
    %5020 = vmatprep.subr.mxu0 0.0
    %5021 = vmatpush1.msra.mxu0 0.0
    %5022 = vmatprep.subr.mxu0 0.0
    %5023 = vmatpush1.msra.mxu0 0.0
    %5024 = vmatprep.mubr.f32.mxu0 0.0
    %5025 = vmatmul.mubr.f32.gmra.mrb[0].mxu0 %v4955
    %v5026 = vpop.f32.mrb[0].mxu0
    %v5027 = vadd.f32 %v4947, %v5026
    %v5028 = vpop.f32.mrb[0].mxu0
    %5029 = vmatprep.mubr.f32.mxu0 0.0
    %5030 = vmatmul.mubr.f32.gmra.mrb[0].mxu0 %v4958
    %v5031 = vpop.f32.mrb[0].mxu0
    %v5032 = vpop.f32.mrb[0].mxu0
    %5033 = vdwg.mxu0
    %v5034 = vmul.f32 1.0, %v3704
    %v5035 = vmul.f32 %v5027, %v3679
    %v5036 = vsel %vm146, %v5035, 0.0
    %5037 = vadd.xlane.f32.xlu0 %v5036
    %v5038 = vpop.xlane.xlu0 %5037
    %vm5039 = vcmp.gt.f32.partialorder %v3694, 1e-12
    %v5040 = vsel %vm5039, %v5034, 0.0
    %v5041 = vmul.f32 %v5027, %v5034
    %v5042 = vmul.f32 %v5038, %v5034
    %v5043 = vmul.f32 %v5042, %v5034
    %v5044 = vmul.f32 %v5043, %v5040
    %v5045 = vmul.f32 %v3679, %v5044
    %v5046 = vsub.f32 %v5041, %v5045
    %v5047 = vmul.f32 %v5046, 0.001
    %v5048 = vsub.f32 %v1914, %v5047
    %v5049 = vsel %vm142, %v5048, %v3677
    %v5050 = vmul.f32 %v5049, %v5049
    %v5051 = vsel %vm146, %v5050, 0.0
    %5052 = vadd.xlane.f32.xlu0 %v5051
    %v5053 = vpop.xlane.xlu0 %5052
    %v5054 = vrsqrt.pop %v5053
    %v5055 = vmul.f32 %v5053, %v5054
    %vm5056 = vcmp.eq.f32.partialorder %v5053, inf
    %v5057 = vsel %vm5056, %v5053, %v5055
    %vm5058 = vcmp.eq.f32.partialorder %v5053, 0.0
    %v5059 = vand.u32 %v5053, 2147483648
    %v5060 = vsel %vm5058, %v5059, %v5057
    %v5061 = vmax.f32 %v5060, 1e-12
    %v5062 = vrcp.pop %v5061
    %v5063 = vmul.f32 %v5049, %v5062
    %v5065 = vsel %vm146, %v5063, 0
    %5067 = vmatprep.subr.mxu0 0.0
    %5068 = vmatpush1.xpose.msra.mxu0 %v5065
    %5069 = vmatprep.subr.mxu0 0.0
    %5070 = vmatpush1.xpose.msra.mxu0 %v3712
    %5071 = vmatprep.subr.mxu0 0.0
    %5072 = vmatpush1.xpose.msra.mxu0 0.0
    %5073 = vmatprep.subr.mxu0 0.0
    %5074 = vmatpush1.xpose.msra.mxu0 0.0
    %5075 = vmatprep.subr.mxu0 0.0
    %5076 = vmatpush1.xpose.msra.mxu0 0.0
    %5077 = vmatprep.subr.mxu0 0.0
    %5078 = vmatpush1.xpose.msra.mxu0 0.0
    %5079 = vmatprep.subr.mxu0 0.0
    %5080 = vmatpush1.xpose.msra.mxu0 0.0
    %5081 = vmatprep.subr.mxu0 0.0
    %5082 = vmatpush1.xpose.msra.mxu0 0.0
    %5083 = vmatprep.subr.mxu0 0.0
    %5084 = vmatpush1.xpose.msra.mxu0 0.0
    %5085 = vmatprep.subr.mxu0 0.0
    %5086 = vmatpush1.xpose.msra.mxu0 0.0
    %5087 = vmatprep.subr.mxu0 0.0
    %5088 = vmatpush1.xpose.msra.mxu0 0.0
    %5089 = vmatprep.subr.mxu0 0.0
    %5090 = vmatpush1.xpose.msra.mxu0 0.0
    %5091 = vmatprep.subr.mxu0 0.0
    %5092 = vmatpush1.xpose.msra.mxu0 0.0
    %5093 = vmatprep.subr.mxu0 0.0
    %5094 = vmatpush1.xpose.msra.mxu0 0.0
    %5095 = vmatprep.subr.mxu0 0.0
    %5096 = vmatpush1.xpose.msra.mxu0 0.0
    %5097 = vmatprep.subr.mxu0 0.0
    %5098 = vmatpush1.xpose.msra.mxu0 0.0
    %5099 = vmatprep.subr.mxu0 0.0
    %5100 = vmatpush1.xpose.msra.mxu0 0.0
    %5101 = vmatprep.subr.mxu0 0.0
    %5102 = vmatpush1.xpose.msra.mxu0 0.0
    %5103 = vmatprep.subr.mxu0 0.0
    %5104 = vmatpush1.xpose.msra.mxu0 0.0
    %5105 = vmatprep.subr.mxu0 0.0
    %5106 = vmatpush1.xpose.msra.mxu0 0.0
    %5107 = vmatprep.subr.mxu0 0.0
    %5108 = vmatpush1.xpose.msra.mxu0 0.0
    %5109 = vmatprep.subr.mxu0 0.0
    %5110 = vmatpush1.xpose.msra.mxu0 0.0
    %5111 = vmatprep.subr.mxu0 0.0
    %5112 = vmatpush1.xpose.msra.mxu0 0.0
    %5113 = vmatprep.subr.mxu0 0.0
    %5114 = vmatpush1.xpose.msra.mxu0 0.0
    %5115 = vmatprep.subr.mxu0 0.0
    %5116 = vmatpush1.xpose.msra.mxu0 0.0
    %5117 = vmatprep.subr.mxu0 0.0
    %5118 = vmatpush1.xpose.msra.mxu0 0.0
    %5119 = vmatprep.subr.mxu0 0.0
    %5120 = vmatpush1.xpose.msra.mxu0 0.0
    %5121 = vmatprep.subr.mxu0 0.0
    %5122 = vmatpush1.xpose.msra.mxu0 0.0
    %5123 = vmatprep.subr.mxu0 0.0
    %5124 = vmatpush1.xpose.msra.mxu0 0.0
    %5125 = vmatprep.subr.mxu0 0.0
    %5126 = vmatpush1.xpose.msra.mxu0 0.0
    %5127 = vmatprep.subr.mxu0 0.0
    %5128 = vmatpush1.xpose.msra.mxu0 0.0
    %5129 = vmatprep.subr.mxu0 0.0
    %5130 = vmatpush1.xpose.msra.mxu0 0.0
    %5131 = vmatprep.mubr.f32.mxu0 0.0
    %5132 = vmatmul.mubr.f32.gmra.mrb[0].mxu0 %v5065
    %v5133 = vpop.f32.mrb[0].mxu0
    %v5134 = vadd.f32 0.0, %v5133
    %v5135 = vpop.f32.mrb[0].mxu0
    %5136 = vmatprep.mubr.f32.mxu0 0.0
    %5137 = vmatmul.mubr.f32.gmra.mrb[0].mxu0 %v3712
    %v5138 = vpop.f32.mrb[0].mxu0
    %v5139 = vadd.f32 0.0, %v5138
    %v5140 = vpop.f32.mrb[0].mxu0
    %5141 = vdwg.mxu0
    %v5142 = vsel %vm128, -1e+30, %v5134
    %v5143 = vsel %vm128, -1e+30, %v5139
    %v5144 = vsel %vm257, %v5142, -inf
    %5145 = vmax.xlane.f32.xlu0 %v5144
    %v5146 = vpop.xlane.xlu0 %5145
    %v5147 = vsel %vm261, %v5143, -inf
    %5148 = vmax.xlane.f32.xlu0 %v5147
    %v5149 = vpop.xlane.xlu0 %5148
    %vm5150 = vcmp.eq.f32.partialorder %v5142, %v5146
    %vm5151 = vcmp.eq.f32.partialorder %v5143, %v5149
    %v5152 = vsel %vm5150, %v124, 9
    %v5153 = vsel %vm5151, %v124, 9
    %v5154 = vsel %vm257, %v5152, 2147483647
    %v5155 = vand.u32 %v5154, 65535
    %v5156 = vshra.s32 %v5154, 16
    %v5157 = vcvt.s32.f32 %v5155
    %v5158 = vcvt.s32.f32 %v5156
    %5159 = vmin.xlane.f32.xlu0 %v5158
    %v5160 = vpop.xlane.xlu0 %5159
    %vm5161 = vcmp.eq.f32.partialorder %v5158, %v5160
    %v5162 = vsel %vm5161, %v5157, inf
    %5163 = vmin.xlane.f32.xlu0 %v5162
    %v5164 = vpop.xlane.xlu0 %5163
    %v5165 = vcvt.f32.s32 %v5164
    %v5166 = vcvt.f32.s32 %v5160
    %v5167 = vshll.u32 %v5166, 16
    %v5168 = vadd.s32 %v5167, %v5165
    %v5169 = vsel %vm261, %v5153, 2147483647
    %v5170 = vand.u32 %v5169, 65535
    %v5171 = vshra.s32 %v5169, 16
    %v5172 = vcvt.s32.f32 %v5170
    %v5173 = vcvt.s32.f32 %v5171
    %5174 = vmin.xlane.f32.xlu0 %v5173
    %v5175 = vpop.xlane.xlu0 %5174
    %vm5176 = vcmp.eq.f32.partialorder %v5173, %v5175
    %v5177 = vsel %vm5176, %v5172, inf
    %5178 = vmin.xlane.f32.xlu0 %v5177
    %v5179 = vpop.xlane.xlu0 %5178
    %v5180 = vcvt.f32.s32 %v5179
    %v5181 = vcvt.f32.s32 %v5175
    %v5182 = vshll.u32 %v5181, 16
    %v5183 = vadd.s32 %v5182, %v5180
    %vm5184 = vcmp.eq.s32.totalorder %v124, %v5168
    %vm5185 = vcmp.eq.s32.totalorder %v124, %v5183
    %v5186 = vsel %vm5184, 1, 0
    %v5187 = vsel %vm5185, 1, 0
    %v5188 = vcvt.s32.f32 %v5186
    %v5189 = vcvt.s32.f32 %v5187
    %v5190 = vlaneseq
    %v5191 = vshrl.u32 %v5190, 7
    %v5192 = vsub.s32 0, %v5191
    %v5193 = vrot.slane %v5134, %v5192
    %v5194 = vmul.f32 %v5188, %v5193
    %v5195 = vmul.f32 %v5189, %v5193
    %v5196 = vsel %vm257, %v5194, 0.0
    %5197 = vadd.xlane.f32.xlu0 %v5196
    %v5198 = vpop.xlane.xlu0 %5197
    %v5199 = vsel %vm261, %v5195, 0.0
    %5200 = vadd.xlane.f32.xlu0 %v5199
    %v5201 = vpop.xlane.xlu0 %5200
    %v5202 = vsel %vm5184, -1e+30, %v5142
    %v5203 = vsel %vm5185, -1e+30, %v5143
    %v5204 = vsel %vm257, %v5202, -inf
    %5205 = vmax.xlane.f32.xlu0 %v5204
    %v5206 = vpop.xlane.xlu0 %5205
    %v5207 = vsel %vm261, %v5203, -inf
    %5208 = vmax.xlane.f32.xlu0 %v5207
    %v5209 = vpop.xlane.xlu0 %5208
    %vm5210 = vcmp.eq.f32.partialorder %v5202, %v5206
    %vm5211 = vcmp.eq.f32.partialorder %v5203, %v5209
    %v5212 = vsel %vm5210, %v124, 9
    %v5213 = vsel %vm5211, %v124, 9
    %v5214 = vsel %vm257, %v5212, 2147483647
    %v5215 = vand.u32 %v5214, 65535
    %v5216 = vshra.s32 %v5214, 16
    %v5217 = vcvt.s32.f32 %v5215
    %v5218 = vcvt.s32.f32 %v5216
    %5219 = vmin.xlane.f32.xlu0 %v5218
    %v5220 = vpop.xlane.xlu0 %5219
    %vm5221 = vcmp.eq.f32.partialorder %v5218, %v5220
    %v5222 = vsel %vm5221, %v5217, inf
    %5223 = vmin.xlane.f32.xlu0 %v5222
    %v5224 = vpop.xlane.xlu0 %5223
    %v5225 = vcvt.f32.s32 %v5224
    %v5226 = vcvt.f32.s32 %v5220
    %v5227 = vshll.u32 %v5226, 16
    %v5228 = vadd.s32 %v5227, %v5225
    %v5229 = vsel %vm261, %v5213, 2147483647
    %v5230 = vand.u32 %v5229, 65535
    %v5231 = vshra.s32 %v5229, 16
    %v5232 = vcvt.s32.f32 %v5230
    %v5233 = vcvt.s32.f32 %v5231
    %5234 = vmin.xlane.f32.xlu0 %v5233
    %v5235 = vpop.xlane.xlu0 %5234
    %vm5236 = vcmp.eq.f32.partialorder %v5233, %v5235
    %v5237 = vsel %vm5236, %v5232, inf
    %5238 = vmin.xlane.f32.xlu0 %v5237
    %v5239 = vpop.xlane.xlu0 %5238
    %v5240 = vcvt.f32.s32 %v5239
    %v5241 = vcvt.f32.s32 %v5235
    %v5242 = vshll.u32 %v5241, 16
    %v5243 = vadd.s32 %v5242, %v5240
    %vm5244 = vcmp.eq.s32.totalorder %v124, %v5228
    %vm5245 = vcmp.eq.s32.totalorder %v124, %v5243
    %v5246 = vsel %vm5244, 1, 0
    %v5247 = vsel %vm5245, 1, 0
    %v5248 = vcvt.s32.f32 %v5246
    %v5249 = vcvt.s32.f32 %v5247
    %v5250 = vmul.f32 %v5248, %v5193
    %v5251 = vmul.f32 %v5249, %v5193
    %v5252 = vsel %vm257, %v5250, 0.0
    %5253 = vadd.xlane.f32.xlu0 %v5252
    %v5254 = vpop.xlane.xlu0 %5253
    %v5255 = vsel %vm261, %v5251, 0.0
    %5256 = vadd.xlane.f32.xlu0 %v5255
    %v5257 = vpop.xlane.xlu0 %5256
    %v5258 = vsel %vm5244, -1e+30, %v5202
    %v5259 = vsel %vm5245, -1e+30, %v5203
    %v5260 = vsel %vm257, %v5258, -inf
    %5261 = vmax.xlane.f32.xlu0 %v5260
    %v5262 = vpop.xlane.xlu0 %5261
    %v5263 = vsel %vm261, %v5259, -inf
    %5264 = vmax.xlane.f32.xlu0 %v5263
    %v5265 = vpop.xlane.xlu0 %5264
    %vm5266 = vcmp.eq.f32.partialorder %v5258, %v5262
    %vm5267 = vcmp.eq.f32.partialorder %v5259, %v5265
    %v5268 = vsel %vm5266, %v124, 9
    %v5269 = vsel %vm5267, %v124, 9
    %v5270 = vsel %vm257, %v5268, 2147483647
    %v5271 = vand.u32 %v5270, 65535
    %v5272 = vshra.s32 %v5270, 16
    %v5273 = vcvt.s32.f32 %v5271
    %v5274 = vcvt.s32.f32 %v5272
    %5275 = vmin.xlane.f32.xlu0 %v5274
    %v5276 = vpop.xlane.xlu0 %5275
    %vm5277 = vcmp.eq.f32.partialorder %v5274, %v5276
    %v5278 = vsel %vm5277, %v5273, inf
    %5279 = vmin.xlane.f32.xlu0 %v5278
    %v5280 = vpop.xlane.xlu0 %5279
    %v5281 = vcvt.f32.s32 %v5280
    %v5282 = vcvt.f32.s32 %v5276
    %v5283 = vshll.u32 %v5282, 16
    %v5284 = vadd.s32 %v5283, %v5281
    %v5285 = vsel %vm261, %v5269, 2147483647
    %v5286 = vand.u32 %v5285, 65535
    %v5287 = vshra.s32 %v5285, 16
    %v5288 = vcvt.s32.f32 %v5286
    %v5289 = vcvt.s32.f32 %v5287
    %5290 = vmin.xlane.f32.xlu0 %v5289
    %v5291 = vpop.xlane.xlu0 %5290
    %vm5292 = vcmp.eq.f32.partialorder %v5289, %v5291
    %v5293 = vsel %vm5292, %v5288, inf
    %5294 = vmin.xlane.f32.xlu0 %v5293
    %v5295 = vpop.xlane.xlu0 %5294
    %v5296 = vcvt.f32.s32 %v5295
    %v5297 = vcvt.f32.s32 %v5291
    %v5298 = vshll.u32 %v5297, 16
    %v5299 = vadd.s32 %v5298, %v5296
    %vm5300 = vcmp.eq.s32.totalorder %v124, %v5284
    %vm5301 = vcmp.eq.s32.totalorder %v124, %v5299
    %v5302 = vsel %vm5300, 1, 0
    %v5303 = vsel %vm5301, 1, 0
    %v5304 = vcvt.s32.f32 %v5302
    %v5305 = vcvt.s32.f32 %v5303
    %v5306 = vmul.f32 %v5304, %v5193
    %v5307 = vmul.f32 %v5305, %v5193
    %v5308 = vsel %vm257, %v5306, 0.0
    %5309 = vadd.xlane.f32.xlu0 %v5308
    %v5310 = vpop.xlane.xlu0 %5309
    %v5311 = vsel %vm261, %v5307, 0.0
    %5312 = vadd.xlane.f32.xlu0 %v5311
    %v5313 = vpop.xlane.xlu0 %5312
    %v5314 = vsel %vm5300, -1e+30, %v5258
    %v5315 = vsel %vm5301, -1e+30, %v5259
    %v5316 = vsel %vm257, %v5314, -inf
    %5317 = vmax.xlane.f32.xlu0 %v5316
    %v5318 = vpop.xlane.xlu0 %5317
    %v5319 = vsel %vm261, %v5315, -inf
    %5320 = vmax.xlane.f32.xlu0 %v5319
    %v5321 = vpop.xlane.xlu0 %5320
    %vm5322 = vcmp.eq.f32.partialorder %v5314, %v5318
    %vm5323 = vcmp.eq.f32.partialorder %v5315, %v5321
    %v5324 = vsel %vm5322, %v124, 9
    %v5325 = vsel %vm5323, %v124, 9
    %v5326 = vsel %vm257, %v5324, 2147483647
    %v5327 = vand.u32 %v5326, 65535
    %v5328 = vshra.s32 %v5326, 16
    %v5329 = vcvt.s32.f32 %v5327
    %v5330 = vcvt.s32.f32 %v5328
    %5331 = vmin.xlane.f32.xlu0 %v5330
    %v5332 = vpop.xlane.xlu0 %5331
    %vm5333 = vcmp.eq.f32.partialorder %v5330, %v5332
    %v5334 = vsel %vm5333, %v5329, inf
    %5335 = vmin.xlane.f32.xlu0 %v5334
    %v5336 = vpop.xlane.xlu0 %5335
    %v5337 = vcvt.f32.s32 %v5336
    %v5338 = vcvt.f32.s32 %v5332
    %v5339 = vshll.u32 %v5338, 16
    %v5340 = vadd.s32 %v5339, %v5337
    %v5341 = vsel %vm261, %v5325, 2147483647
    %v5342 = vand.u32 %v5341, 65535
    %v5343 = vshra.s32 %v5341, 16
    %v5344 = vcvt.s32.f32 %v5342
    %v5345 = vcvt.s32.f32 %v5343
    %5346 = vmin.xlane.f32.xlu0 %v5345
    %v5347 = vpop.xlane.xlu0 %5346
    %vm5348 = vcmp.eq.f32.partialorder %v5345, %v5347
    %v5349 = vsel %vm5348, %v5344, inf
    %5350 = vmin.xlane.f32.xlu0 %v5349
    %v5351 = vpop.xlane.xlu0 %5350
    %v5352 = vcvt.f32.s32 %v5351
    %v5353 = vcvt.f32.s32 %v5347
    %v5354 = vshll.u32 %v5353, 16
    %v5355 = vadd.s32 %v5354, %v5352
    %vm5356 = vcmp.eq.s32.totalorder %v124, %v5340
    %vm5357 = vcmp.eq.s32.totalorder %v124, %v5355
    %v5358 = vsel %vm5356, 1, 0
    %v5359 = vsel %vm5357, 1, 0
    %v5360 = vcvt.s32.f32 %v5358
    %v5361 = vcvt.s32.f32 %v5359
    %v5362 = vmul.f32 %v5360, %v5193
    %v5363 = vmul.f32 %v5361, %v5193
    %v5364 = vsel %vm257, %v5362, 0.0
    %5365 = vadd.xlane.f32.xlu0 %v5364
    %v5366 = vpop.xlane.xlu0 %5365
    %v5367 = vsel %vm261, %v5363, 0.0
    %5368 = vadd.xlane.f32.xlu0 %v5367
    %v5369 = vpop.xlane.xlu0 %5368
    %v5370 = vsel %vm5356, -1e+30, %v5314
    %v5371 = vsel %vm5357, -1e+30, %v5315
    %v5372 = vsel %vm257, %v5370, -inf
    %5373 = vmax.xlane.f32.xlu0 %v5372
    %v5374 = vpop.xlane.xlu0 %5373
    %v5375 = vsel %vm261, %v5371, -inf
    %5376 = vmax.xlane.f32.xlu0 %v5375
    %v5377 = vpop.xlane.xlu0 %5376
    %vm5378 = vcmp.eq.f32.partialorder %v5370, %v5374
    %vm5379 = vcmp.eq.f32.partialorder %v5371, %v5377
    %v5380 = vsel %vm5378, %v124, 9
    %v5381 = vsel %vm5379, %v124, 9
    %v5382 = vsel %vm257, %v5380, 2147483647
    %v5383 = vand.u32 %v5382, 65535
    %v5384 = vshra.s32 %v5382, 16
    %v5385 = vcvt.s32.f32 %v5383
    %v5386 = vcvt.s32.f32 %v5384
    %5387 = vmin.xlane.f32.xlu0 %v5386
    %v5388 = vpop.xlane.xlu0 %5387
    %vm5389 = vcmp.eq.f32.partialorder %v5386, %v5388
    %v5390 = vsel %vm5389, %v5385, inf
    %5391 = vmin.xlane.f32.xlu0 %v5390
    %v5392 = vpop.xlane.xlu0 %5391
    %v5393 = vcvt.f32.s32 %v5392
    %v5394 = vcvt.f32.s32 %v5388
    %v5395 = vshll.u32 %v5394, 16
    %v5396 = vadd.s32 %v5395, %v5393
    %v5397 = vsel %vm261, %v5381, 2147483647
    %v5398 = vand.u32 %v5397, 65535
    %v5399 = vshra.s32 %v5397, 16
    %v5400 = vcvt.s32.f32 %v5398
    %v5401 = vcvt.s32.f32 %v5399
    %5402 = vmin.xlane.f32.xlu0 %v5401
    %v5403 = vpop.xlane.xlu0 %5402
    %vm5404 = vcmp.eq.f32.partialorder %v5401, %v5403
    %v5405 = vsel %vm5404, %v5400, inf
    %5406 = vmin.xlane.f32.xlu0 %v5405
    %v5407 = vpop.xlane.xlu0 %5406
    %v5408 = vcvt.f32.s32 %v5407
    %v5409 = vcvt.f32.s32 %v5403
    %v5410 = vshll.u32 %v5409, 16
    %v5411 = vadd.s32 %v5410, %v5408
    %vm5412 = vcmp.eq.s32.totalorder %v124, %v5396
    %vm5413 = vcmp.eq.s32.totalorder %v124, %v5411
    %v5414 = vsel %vm5412, 1, 0
    %v5415 = vsel %vm5413, 1, 0
    %v5416 = vcvt.s32.f32 %v5414
    %v5417 = vcvt.s32.f32 %v5415
    %v5418 = vmul.f32 %v5416, %v5193
    %v5419 = vmul.f32 %v5417, %v5193
    %v5420 = vsel %vm257, %v5418, 0.0
    %5421 = vadd.xlane.f32.xlu0 %v5420
    %v5422 = vpop.xlane.xlu0 %5421
    %v5423 = vsel %vm261, %v5419, 0.0
    %5424 = vadd.xlane.f32.xlu0 %v5423
    %v5425 = vpop.xlane.xlu0 %5424
    %v5426 = vsel %vm5412, -1e+30, %v5370
    %v5427 = vsel %vm5413, -1e+30, %v5371
    %v5428 = vsel %vm257, %v5426, -inf
    %5429 = vmax.xlane.f32.xlu0 %v5428
    %v5430 = vpop.xlane.xlu0 %5429
    %v5431 = vsel %vm261, %v5427, -inf
    %5432 = vmax.xlane.f32.xlu0 %v5431
    %v5433 = vpop.xlane.xlu0 %5432
    %vm5434 = vcmp.eq.f32.partialorder %v5426, %v5430
    %vm5435 = vcmp.eq.f32.partialorder %v5427, %v5433
    %v5436 = vsel %vm5434, %v124, 9
    %v5437 = vsel %vm5435, %v124, 9
    %v5438 = vsel %vm257, %v5436, 2147483647
    %v5439 = vand.u32 %v5438, 65535
    %v5440 = vshra.s32 %v5438, 16
    %v5441 = vcvt.s32.f32 %v5439
    %v5442 = vcvt.s32.f32 %v5440
    %5443 = vmin.xlane.f32.xlu0 %v5442
    %v5444 = vpop.xlane.xlu0 %5443
    %vm5445 = vcmp.eq.f32.partialorder %v5442, %v5444
    %v5446 = vsel %vm5445, %v5441, inf
    %5447 = vmin.xlane.f32.xlu0 %v5446
    %v5448 = vpop.xlane.xlu0 %5447
    %v5449 = vcvt.f32.s32 %v5448
    %v5450 = vcvt.f32.s32 %v5444
    %v5451 = vshll.u32 %v5450, 16
    %v5452 = vadd.s32 %v5451, %v5449
    %v5453 = vsel %vm261, %v5437, 2147483647
    %v5454 = vand.u32 %v5453, 65535
    %v5455 = vshra.s32 %v5453, 16
    %v5456 = vcvt.s32.f32 %v5454
    %v5457 = vcvt.s32.f32 %v5455
    %5458 = vmin.xlane.f32.xlu0 %v5457
    %v5459 = vpop.xlane.xlu0 %5458
    %vm5460 = vcmp.eq.f32.partialorder %v5457, %v5459
    %v5461 = vsel %vm5460, %v5456, inf
    %5462 = vmin.xlane.f32.xlu0 %v5461
    %v5463 = vpop.xlane.xlu0 %5462
    %v5464 = vcvt.f32.s32 %v5463
    %v5465 = vcvt.f32.s32 %v5459
    %v5466 = vshll.u32 %v5465, 16
    %v5467 = vadd.s32 %v5466, %v5464
    %vm5468 = vcmp.eq.s32.totalorder %v124, %v5452
    %vm5469 = vcmp.eq.s32.totalorder %v124, %v5467
    %v5470 = vsel %vm5468, 1, 0
    %v5471 = vsel %vm5469, 1, 0
    %v5472 = vcvt.s32.f32 %v5470
    %v5473 = vcvt.s32.f32 %v5471
    %v5474 = vmul.f32 %v5472, %v5193
    %v5475 = vmul.f32 %v5473, %v5193
    %v5476 = vsel %vm257, %v5474, 0.0
    %5477 = vadd.xlane.f32.xlu0 %v5476
    %v5478 = vpop.xlane.xlu0 %5477
    %v5479 = vsel %vm261, %v5475, 0.0
    %5480 = vadd.xlane.f32.xlu0 %v5479
    %v5481 = vpop.xlane.xlu0 %5480
    %v5482 = vsel %vm5468, -1e+30, %v5426
    %v5483 = vsel %vm5469, -1e+30, %v5427
    %v5484 = vsel %vm257, %v5482, -inf
    %5485 = vmax.xlane.f32.xlu0 %v5484
    %v5486 = vpop.xlane.xlu0 %5485
    %v5487 = vsel %vm261, %v5483, -inf
    %5488 = vmax.xlane.f32.xlu0 %v5487
    %v5489 = vpop.xlane.xlu0 %5488
    %vm5490 = vcmp.eq.f32.partialorder %v5482, %v5486
    %vm5491 = vcmp.eq.f32.partialorder %v5483, %v5489
    %v5492 = vsel %vm5490, %v124, 9
    %v5493 = vsel %vm5491, %v124, 9
    %v5494 = vsel %vm257, %v5492, 2147483647
    %v5495 = vand.u32 %v5494, 65535
    %v5496 = vshra.s32 %v5494, 16
    %v5497 = vcvt.s32.f32 %v5495
    %v5498 = vcvt.s32.f32 %v5496
    %5499 = vmin.xlane.f32.xlu0 %v5498
    %v5500 = vpop.xlane.xlu0 %5499
    %vm5501 = vcmp.eq.f32.partialorder %v5498, %v5500
    %v5502 = vsel %vm5501, %v5497, inf
    %5503 = vmin.xlane.f32.xlu0 %v5502
    %v5504 = vpop.xlane.xlu0 %5503
    %v5505 = vcvt.f32.s32 %v5504
    %v5506 = vcvt.f32.s32 %v5500
    %v5507 = vshll.u32 %v5506, 16
    %v5508 = vadd.s32 %v5507, %v5505
    %v5509 = vsel %vm261, %v5493, 2147483647
    %v5510 = vand.u32 %v5509, 65535
    %v5511 = vshra.s32 %v5509, 16
    %v5512 = vcvt.s32.f32 %v5510
    %v5513 = vcvt.s32.f32 %v5511
    %5514 = vmin.xlane.f32.xlu0 %v5513
    %v5515 = vpop.xlane.xlu0 %5514
    %vm5516 = vcmp.eq.f32.partialorder %v5513, %v5515
    %v5517 = vsel %vm5516, %v5512, inf
    %5518 = vmin.xlane.f32.xlu0 %v5517
    %v5519 = vpop.xlane.xlu0 %5518
    %v5520 = vcvt.f32.s32 %v5519
    %v5521 = vcvt.f32.s32 %v5515
    %v5522 = vshll.u32 %v5521, 16
    %v5523 = vadd.s32 %v5522, %v5520
    %vm5524 = vcmp.eq.s32.totalorder %v124, %v5508
    %vm5525 = vcmp.eq.s32.totalorder %v124, %v5523
    %v5526 = vsel %vm5524, 1, 0
    %v5527 = vsel %vm5525, 1, 0
    %v5528 = vcvt.s32.f32 %v5526
    %v5529 = vcvt.s32.f32 %v5527
    %v5530 = vmul.f32 %v5528, %v5193
    %v5531 = vmul.f32 %v5529, %v5193
    %v5532 = vsel %vm257, %v5530, 0.0
    %5533 = vadd.xlane.f32.xlu0 %v5532
    %v5534 = vpop.xlane.xlu0 %5533
    %v5535 = vsel %vm261, %v5531, 0.0
    %5536 = vadd.xlane.f32.xlu0 %v5535
    %v5537 = vpop.xlane.xlu0 %5536
    %v5538 = vsel %vm5524, -1e+30, %v5482
    %v5539 = vsel %vm5525, -1e+30, %v5483
    %v5540 = vsel %vm257, %v5538, -inf
    %5541 = vmax.xlane.f32.xlu0 %v5540
    %v5542 = vpop.xlane.xlu0 %5541
    %v5543 = vsel %vm261, %v5539, -inf
    %5544 = vmax.xlane.f32.xlu0 %v5543
    %v5545 = vpop.xlane.xlu0 %5544
    %vm5546 = vcmp.eq.f32.partialorder %v5538, %v5542
    %vm5547 = vcmp.eq.f32.partialorder %v5539, %v5545
    %v5548 = vsel %vm5546, %v124, 9
    %v5549 = vsel %vm5547, %v124, 9
    %v5550 = vsel %vm257, %v5548, 2147483647
    %v5551 = vand.u32 %v5550, 65535
    %v5552 = vshra.s32 %v5550, 16
    %v5553 = vcvt.s32.f32 %v5551
    %v5554 = vcvt.s32.f32 %v5552
    %5555 = vmin.xlane.f32.xlu0 %v5554
    %v5556 = vpop.xlane.xlu0 %5555
    %vm5557 = vcmp.eq.f32.partialorder %v5554, %v5556
    %v5558 = vsel %vm5557, %v5553, inf
    %5559 = vmin.xlane.f32.xlu0 %v5558
    %v5560 = vpop.xlane.xlu0 %5559
    %v5561 = vcvt.f32.s32 %v5560
    %v5562 = vcvt.f32.s32 %v5556
    %v5563 = vshll.u32 %v5562, 16
    %v5564 = vadd.s32 %v5563, %v5561
    %v5565 = vsel %vm261, %v5549, 2147483647
    %v5566 = vand.u32 %v5565, 65535
    %v5567 = vshra.s32 %v5565, 16
    %v5568 = vcvt.s32.f32 %v5566
    %v5569 = vcvt.s32.f32 %v5567
    %5570 = vmin.xlane.f32.xlu0 %v5569
    %v5571 = vpop.xlane.xlu0 %5570
    %vm5572 = vcmp.eq.f32.partialorder %v5569, %v5571
    %v5573 = vsel %vm5572, %v5568, inf
    %5574 = vmin.xlane.f32.xlu0 %v5573
    %v5575 = vpop.xlane.xlu0 %5574
    %v5576 = vcvt.f32.s32 %v5575
    %v5577 = vcvt.f32.s32 %v5571
    %v5578 = vshll.u32 %v5577, 16
    %v5579 = vadd.s32 %v5578, %v5576
    %vm5580 = vcmp.eq.s32.totalorder %v124, %v5564
    %vm5581 = vcmp.eq.s32.totalorder %v124, %v5579
    %v5582 = vsel %vm5580, 1, 0
    %v5583 = vsel %vm5581, 1, 0
    %v5584 = vcvt.s32.f32 %v5582
    %v5585 = vcvt.s32.f32 %v5583
    %v5586 = vmul.f32 %v5584, %v5193
    %v5587 = vmul.f32 %v5585, %v5193
    %v5588 = vsel %vm257, %v5586, 0.0
    %5589 = vadd.xlane.f32.xlu0 %v5588
    %v5590 = vpop.xlane.xlu0 %5589
    %v5591 = vsel %vm261, %v5587, 0.0
    %5592 = vadd.xlane.f32.xlu0 %v5591
    %v5593 = vpop.xlane.xlu0 %5592
    %v5594 = vsel %vm709, %v5146, %v5206
    %v5595 = vsel %vm709, %v5149, %v5209
    %v5596 = vsel %vm712, %v5594, %v5262
    %v5597 = vsel %vm712, %v5595, %v5265
    %v5598 = vsel %vm715, %v5596, %v5318
    %v5599 = vsel %vm715, %v5597, %v5321
    %v5600 = vsel %vm718, %v5598, %v5374
    %v5601 = vsel %vm718, %v5599, %v5377
    %v5602 = vsel %vm721, %v5600, %v5430
    %v5603 = vsel %vm721, %v5601, %v5433
    %v5604 = vsel %vm724, %v5602, %v5486
    %v5605 = vsel %vm724, %v5603, %v5489
    %v5606 = vsel %vm727, %v5604, %v5542
    %v5607 = vsel %vm727, %v5605, %v5545
    %v5608 = vsel %vm709, %v5198, %v5254
    %v5609 = vsel %vm709, %v5201, %v5257
    %v5610 = vsel %vm712, %v5608, %v5310
    %v5611 = vsel %vm712, %v5609, %v5313
    %v5612 = vsel %vm715, %v5610, %v5366
    %v5613 = vsel %vm715, %v5611, %v5369
    %v5614 = vsel %vm718, %v5612, %v5422
    %v5615 = vsel %vm718, %v5613, %v5425
    %v5616 = vsel %vm721, %v5614, %v5478
    %v5617 = vsel %vm721, %v5615, %v5481
    %v5618 = vsel %vm724, %v5616, %v5534
    %v5619 = vsel %vm724, %v5617, %v5537
    %v5620 = vsel %vm727, %v5618, %v5590
    %v5621 = vsel %vm727, %v5619, %v5593
    %5624 = vrot.lane.b32.xlu0 %v5606, 1
    %v5625 = vpop.permute.xlu0 %5624
    %5626 = vrot.lane.b32.xlu0 %v5607, 1
    %v5627 = vpop.permute.xlu0 %5626
    %5632 = vrot.lane.b32.xlu0 %v5620, 9
    %v5633 = vpop.permute.xlu0 %5632
    %5634 = vrot.lane.b32.xlu0 %v5621, 9
    %v5635 = vpop.permute.xlu0 %5634
    %v5638 = vsel %vm709, %v5134, %v5625
    %v5639 = vsel %vm709, %v5139, %v5627
    %v5640 = vsel %vm257, %v5638, %v5633
    %v5641 = vsel %vm257, %v5639, %v5635
    %v5642 = vsel %vm766, %v5640, 0.0
    %5643 = vadd.xlane.f32.xlu0 %v5642
    %v5644 = vpop.xlane.xlu0 %5643
    %v5645 = vsel %vm770, %v5641, 0.0
    %5646 = vadd.xlane.f32.xlu0 %v5645
    %v5647 = vpop.xlane.xlu0 %5646
    %v5648 = vmul.f32 %v5644, 0.05882353
    %v5649 = vmul.f32 %v5647, 0.05882353
    %v5650 = vmul.f32 %v5640, %v5640
    %v5651 = vmul.f32 %v5641, %v5641
    %v5652 = vsel %vm766, %v5650, 0.0
    %5653 = vadd.xlane.f32.xlu0 %v5652
    %v5654 = vpop.xlane.xlu0 %5653
    %v5655 = vsel %vm770, %v5651, 0.0
    %5656 = vadd.xlane.f32.xlu0 %v5655
    %v5657 = vpop.xlane.xlu0 %5656
    %v5658 = vmul.f32 %v5654, 0.05882353
    %v5659 = vmul.f32 %v5657, 0.05882353
    %v5660 = vmul.f32 %v5648, %v5648
    %v5661 = vmul.f32 %v5649, %v5649
    %v5662 = vsub.f32 %v5658, %v5660
    %v5663 = vsub.f32 %v5659, %v5661
    %v5664 = vmax.f32 %v5662, 0.0
    %v5665 = vmax.f32 %v5663, 0.0
    %v5666 = vsub.f32 %v5640, %v5648
    %v5667 = vsub.f32 %v5641, %v5649
    %v5668 = vadd.f32 %v5664, 1e-05
    %v5669 = vadd.f32 %v5665, 1e-05
    %v5670 = vrsqrt.pop %v5668
    %v5671 = vrsqrt.pop %v5669
    %v5672 = vmul.f32 %v5666, %v5670
    %v5673 = vmul.f32 %v5667, %v5671
    %v5674 = vmul.f32 %v5672, %v2542
    %v5675 = vmul.f32 %v5673, %v2542
    %v5676 = vadd.f32 %v5674, %v2545
    %v5677 = vadd.f32 %v5675, %v2545
    %v5678 = vpack.c.bf16 %v5677, %v5676
    %v5680 = vsel %vm766, %v5678, 0
    %5682 = vmatprep.subr.bf16.mxu0 %v2574
    %5683 = vmatpush1.bf16.msra.mxu0 %v2573
    %5684 = vmatprep.subr.bf16.mxu0 %v2586
    %5685 = vmatpush1.bf16.msra.mxu0 %v2583
    %5686 = vmatprep.subr.bf16.mxu0 0
    %5687 = vmatpush1.bf16.msra.mxu0 0
    %5688 = vmatprep.subr.bf16.mxu0 0
    %5689 = vmatpush1.bf16.msra.mxu0 0
    %5690 = vmatprep.subr.bf16.mxu0 0
    %5691 = vmatpush1.bf16.msra.mxu0 0
    %5692 = vmatprep.subr.bf16.mxu0 0
    %5693 = vmatpush1.bf16.msra.mxu0 0
    %5694 = vmatprep.subr.bf16.mxu0 0
    %5695 = vmatpush1.bf16.msra.mxu0 0
    %5696 = vmatprep.subr.bf16.mxu0 0
    %5697 = vmatpush1.bf16.msra.mxu0 0
    %5698 = vmatprep.subr.bf16.mxu0 0
    %5699 = vmatpush1.bf16.msra.mxu0 0
    %5700 = vmatprep.subr.bf16.mxu0 0
    %5701 = vmatpush1.bf16.msra.mxu0 0
    %5702 = vmatprep.subr.bf16.mxu0 0
    %5703 = vmatpush1.bf16.msra.mxu0 0
    %5704 = vmatprep.subr.bf16.mxu0 0
    %5705 = vmatpush1.bf16.msra.mxu0 0
    %5706 = vmatprep.subr.bf16.mxu0 0
    %5707 = vmatpush1.bf16.msra.mxu0 0
    %5708 = vmatprep.subr.bf16.mxu0 0
    %5709 = vmatpush1.bf16.msra.mxu0 0
    %5710 = vmatprep.subr.bf16.mxu0 0
    %5711 = vmatpush1.bf16.msra.mxu0 0
    %5712 = vmatprep.subr.bf16.mxu0 0
    %5713 = vmatpush1.bf16.msra.mxu0 0
    %5714 = vmatprep.mubr.bf16.mxu0 0
    %5715 = vmatmul.mubr.bf16.gmra.mrb[0].mxu0 %v5680
    %v5716 = vpop.f32.mrb[0].mxu0
    %v5717 = vadd.f32 %v2557, %v5716
    %v5718 = vpop.f32.mrb[0].mxu0
    %v5719 = vadd.f32 %v2561, %v5718
    %v5720 = vpop.f32.mrb[0].mxu0
    %v5721 = vadd.f32 %v2557, %v5720
    %v5722 = vpop.f32.mrb[0].mxu0
    %v5723 = vadd.f32 %v2561, %v5722
    %5724 = vdwg.mxu0
    %v5725 = vmax.f32 %v5717, 0.0
    %v5726 = vmax.f32 %v5719, 0.0
    %v5727 = vmax.f32 %v5721, 0.0
    %v5728 = vmax.f32 %v5723, 0.0
    %v5729 = vadd.f32 %v5725, %v5726
    %5730 = vadd.xlane.f32.xlu0 %v5729
    %v5731 = vpop.xlane.xlu0 %5730
    %v5732 = vsel %vm142, %v5727, 0.0
    %v5733 = vsel %vm142, %v5728, 0.0
    %v5734 = vadd.f32 %v5732, %v5733
    %5735 = vadd.xlane.f32.xlu0 %v5734
    %v5736 = vpop.xlane.xlu0 %5735
    %v5737 = vmul.f32 %v5731, 0.00390625
    %v5738 = vmul.f32 %v5736, 0.00390625
    %v5739 = vmul.f32 %v5725, %v5725
    %v5740 = vmul.f32 %v5726, %v5726
    %v5741 = vmul.f32 %v5727, %v5727
    %v5742 = vmul.f32 %v5728, %v5728
    %v5743 = vadd.f32 %v5739, %v5740
    %5744 = vadd.xlane.f32.xlu0 %v5743
    %v5745 = vpop.xlane.xlu0 %5744
    %v5746 = vsel %vm142, %v5741, 0.0
    %v5747 = vsel %vm142, %v5742, 0.0
    %v5748 = vadd.f32 %v5746, %v5747
    %5749 = vadd.xlane.f32.xlu0 %v5748
    %v5750 = vpop.xlane.xlu0 %5749
    %v5751 = vmul.f32 %v5745, 0.00390625
    %v5752 = vmul.f32 %v5750, 0.00390625
    %v5753 = vmul.f32 %v5737, %v5737
    %v5754 = vmul.f32 %v5738, %v5738
    %v5755 = vsub.f32 %v5751, %v5753
    %v5756 = vsub.f32 %v5752, %v5754
    %v5757 = vmax.f32 %v5755, 0.0
    %v5758 = vmax.f32 %v5756, 0.0
    %v5759 = vsub.f32 %v5725, %v5737
    %v5760 = vsub.f32 %v5726, %v5737
    %v5761 = vsub.f32 %v5727, %v5738
    %v5762 = vsub.f32 %v5728, %v5738
    %v5763 = vadd.f32 %v5757, 1e-05
    %v5764 = vadd.f32 %v5758, 1e-05
    %v5765 = vrsqrt.pop %v5763
    %v5766 = vrsqrt.pop %v5764
    %v5767 = vmul.f32 %v5759, %v5765
    %v5768 = vmul.f32 %v5760, %v5765
    %v5769 = vmul.f32 %v5761, %v5766
    %v5770 = vmul.f32 %v5762, %v5766
    %v5771 = vmul.f32 %v5767, %v2679
    %v5772 = vmul.f32 %v5768, %v2679
    %v5773 = vmul.f32 %v5769, %v2679
    %v5774 = vmul.f32 %v5770, %v2679
    %v5775 = vadd.f32 %v5771, %v2684
    %v5776 = vadd.f32 %v5772, %v2684
    %v5777 = vadd.f32 %v5773, %v2684
    %v5778 = vadd.f32 %v5774, %v2684
    %v5779 = vpack.c.bf16 %v5777, %v5775
    %v5780 = vpack.c.bf16 %v5778, %v5776
    %5781 = vmatprep.subr.bf16.mxu0 %v2832
    %5782 = vmatpush1.bf16.msra.mxu0 %v2831
    %5783 = vmatprep.subr.bf16.mxu0 %v2834
    %5784 = vmatpush1.bf16.msra.mxu0 %v2833
    %5785 = vmatprep.subr.bf16.mxu0 %v2836
    %5786 = vmatpush1.bf16.msra.mxu0 %v2835
    %5787 = vmatprep.subr.bf16.mxu0 %v2838
    %5788 = vmatpush1.bf16.msra.mxu0 %v2837
    %5789 = vmatprep.subr.bf16.mxu0 %v2840
    %5790 = vmatpush1.bf16.msra.mxu0 %v2839
    %5791 = vmatprep.subr.bf16.mxu0 %v2842
    %5792 = vmatpush1.bf16.msra.mxu0 %v2841
    %5793 = vmatprep.subr.bf16.mxu0 %v2844
    %5794 = vmatpush1.bf16.msra.mxu0 %v2843
    %5795 = vmatprep.subr.bf16.mxu0 %v2846
    %5796 = vmatpush1.bf16.msra.mxu0 %v2845
    %5797 = vmatprep.subr.bf16.mxu0 %v2848
    %5798 = vmatpush1.bf16.msra.mxu0 %v2847
    %5799 = vmatprep.subr.bf16.mxu0 %v2850
    %5800 = vmatpush1.bf16.msra.mxu0 %v2849
    %5801 = vmatprep.subr.bf16.mxu0 %v2852
    %5802 = vmatpush1.bf16.msra.mxu0 %v2851
    %5803 = vmatprep.subr.bf16.mxu0 %v2854
    %5804 = vmatpush1.bf16.msra.mxu0 %v2853
    %5805 = vmatprep.subr.bf16.mxu0 %v2856
    %5806 = vmatpush1.bf16.msra.mxu0 %v2855
    %5807 = vmatprep.subr.bf16.mxu0 %v2858
    %5808 = vmatpush1.bf16.msra.mxu0 %v2857
    %5809 = vmatprep.subr.bf16.mxu0 %v2860
    %5810 = vmatpush1.bf16.msra.mxu0 %v2859
    %5811 = vmatprep.subr.bf16.mxu0 %v2862
    %5812 = vmatpush1.bf16.msra.mxu0 %v2861
    %5813 = vmatprep.mubr.bf16.mxu0 %v5780
    %5814 = vmatmul.mubr.bf16.gmra.mrb[0].mxu0 %v5779
    %v5815 = vpop.f32.mrb[0].mxu0
    %v5816 = vadd.f32 %v2728, %v5815
    %v5817 = vpop.f32.mrb[0].mxu0
    %v5818 = vadd.f32 %v2732, %v5817
    %v5819 = vpop.f32.mrb[0].mxu0
    %v5820 = vadd.f32 %v2728, %v5819
    %v5821 = vpop.f32.mrb[0].mxu0
    %v5822 = vadd.f32 %v2732, %v5821
    %5823 = vdwg.mxu0
    %v5824 = vmax.f32 %v5816, 0.0
    %v5825 = vmax.f32 %v5818, 0.0
    %v5826 = vmax.f32 %v5820, 0.0
    %v5827 = vmax.f32 %v5822, 0.0
    %v5828 = vadd.f32 %v5824, %v5825
    %5829 = vadd.xlane.f32.xlu0 %v5828
    %v5830 = vpop.xlane.xlu0 %5829
    %v5831 = vsel %vm142, %v5826, 0.0
    %v5832 = vsel %vm142, %v5827, 0.0
    %v5833 = vadd.f32 %v5831, %v5832
    %5834 = vadd.xlane.f32.xlu0 %v5833
    %v5835 = vpop.xlane.xlu0 %5834
    %v5836 = vmul.f32 %v5830, 0.00390625
    %v5837 = vmul.f32 %v5835, 0.00390625
    %v5838 = vmul.f32 %v5824, %v5824
    %v5839 = vmul.f32 %v5825, %v5825
    %v5840 = vmul.f32 %v5826, %v5826
    %v5841 = vmul.f32 %v5827, %v5827
    %v5842 = vadd.f32 %v5838, %v5839
    %5843 = vadd.xlane.f32.xlu0 %v5842
    %v5844 = vpop.xlane.xlu0 %5843
    %v5845 = vsel %vm142, %v5840, 0.0
    %v5846 = vsel %vm142, %v5841, 0.0
    %v5847 = vadd.f32 %v5845, %v5846
    %5848 = vadd.xlane.f32.xlu0 %v5847
    %v5849 = vpop.xlane.xlu0 %5848
    %v5850 = vmul.f32 %v5844, 0.00390625
    %v5851 = vmul.f32 %v5849, 0.00390625
    %v5852 = vmul.f32 %v5836, %v5836
    %v5853 = vmul.f32 %v5837, %v5837
    %v5854 = vsub.f32 %v5850, %v5852
    %v5855 = vsub.f32 %v5851, %v5853
    %v5856 = vmax.f32 %v5854, 0.0
    %v5857 = vmax.f32 %v5855, 0.0
    %v5858 = vsub.f32 %v5824, %v5836
    %v5859 = vsub.f32 %v5825, %v5836
    %v5860 = vsub.f32 %v5826, %v5837
    %v5861 = vsub.f32 %v5827, %v5837
    %v5862 = vadd.f32 %v5856, 1e-05
    %v5863 = vadd.f32 %v5857, 1e-05
    %v5864 = vrsqrt.pop %v5862
    %v5865 = vrsqrt.pop %v5863
    %v5866 = vmul.f32 %v5858, %v5864
    %v5867 = vmul.f32 %v5859, %v5864
    %v5868 = vmul.f32 %v5860, %v5865
    %v5869 = vmul.f32 %v5861, %v5865
    %v5870 = vmul.f32 %v5866, %v2986
    %v5871 = vmul.f32 %v5867, %v2986
    %v5872 = vmul.f32 %v5868, %v2986
    %v5873 = vmul.f32 %v5869, %v2986
    %v5874 = vadd.f32 %v5870, %v2991
    %v5875 = vadd.f32 %v5871, %v2991
    %v5876 = vadd.f32 %v5872, %v2991
    %v5877 = vadd.f32 %v5873, %v2991
    %v5878 = vpack.c.bf16 %v5876, %v5874
    %v5879 = vpack.c.bf16 %v5877, %v5875
    %5880 = vmatprep.subr.bf16.mxu0 0
    %5881 = vmatpush1.bf16.msra.mxu0 %v3101
    %5882 = vmatprep.subr.bf16.mxu0 0
    %5883 = vmatpush1.bf16.msra.mxu0 %v3102
    %5884 = vmatprep.subr.bf16.mxu0 0
    %5885 = vmatpush1.bf16.msra.mxu0 %v3103
    %5886 = vmatprep.subr.bf16.mxu0 0
    %5887 = vmatpush1.bf16.msra.mxu0 %v3104
    %5888 = vmatprep.subr.bf16.mxu0 0
    %5889 = vmatpush1.bf16.msra.mxu0 %v3105
    %5890 = vmatprep.subr.bf16.mxu0 0
    %5891 = vmatpush1.bf16.msra.mxu0 %v3106
    %5892 = vmatprep.subr.bf16.mxu0 0
    %5893 = vmatpush1.bf16.msra.mxu0 %v3107
    %5894 = vmatprep.subr.bf16.mxu0 0
    %5895 = vmatpush1.bf16.msra.mxu0 %v3108
    %5896 = vmatprep.subr.bf16.mxu0 0
    %5897 = vmatpush1.bf16.msra.mxu0 %v3109
    %5898 = vmatprep.subr.bf16.mxu0 0
    %5899 = vmatpush1.bf16.msra.mxu0 %v3110
    %5900 = vmatprep.subr.bf16.mxu0 0
    %5901 = vmatpush1.bf16.msra.mxu0 %v3111
    %5902 = vmatprep.subr.bf16.mxu0 0
    %5903 = vmatpush1.bf16.msra.mxu0 %v3112
    %5904 = vmatprep.subr.bf16.mxu0 0
    %5905 = vmatpush1.bf16.msra.mxu0 %v3113
    %5906 = vmatprep.subr.bf16.mxu0 0
    %5907 = vmatpush1.bf16.msra.mxu0 %v3114
    %5908 = vmatprep.subr.bf16.mxu0 0
    %5909 = vmatpush1.bf16.msra.mxu0 %v3115
    %5910 = vmatprep.subr.bf16.mxu0 0
    %5911 = vmatpush1.bf16.msra.mxu0 %v3116
    %5912 = vmatprep.mubr.bf16.mxu0 %v5879
    %5913 = vmatmul.mubr.bf16.gmra.mrb[0].mxu0 %v5878
    %v5914 = vpop.f32.mrb[0].mxu0
    %v5915 = vadd.f32 %v3035, %v5914
    %v5916 = vpop.f32.mrb[0].mxu0
    %v5917 = vpop.f32.mrb[0].mxu0
    %v5918 = vadd.f32 %v3035, %v5917
    %v5919 = vpop.f32.mrb[0].mxu0
    %5920 = vdwg.mxu0
    %5922 = vset.pattern.permute.xlu0 0
    %5923 = vperm.xlu0 %5922, %v5915
    %v5924 = vpop.permute.xlu0 %5923
    %5927 = vset.pattern.permute.xlu0 0
    %5928 = vperm.xlu0 %5927, %v5918
    %v5929 = vpop.permute.xlu0 %5928
    %v5931 = vmul.f32 %v5924, %v130
    %v5932 = vmul.f32 %v5929, %v130
    %5933 = vset.pattern.permute.xlu0 1
    %5934 = vperm.xlu0 %5933, %v5915
    %v5935 = vpop.permute.xlu0 %5934
    %5937 = vset.pattern.permute.xlu0 1
    %5938 = vperm.xlu0 %5937, %v5918
    %v5939 = vpop.permute.xlu0 %5938
    %v5941 = vmul.f32 %v5935, %v5188
    %v5942 = vmul.f32 %v5939, %v5189
    %v5943 = vadd.f32 %v5931, %v5941
    %v5944 = vadd.f32 %v5932, %v5942
    %5945 = vset.pattern.permute.xlu0 9
    %5946 = vperm.xlu0 %5945, %v5915
    %v5947 = vpop.permute.xlu0 %5946
    %5949 = vset.pattern.permute.xlu0 9
    %5950 = vperm.xlu0 %5949, %v5918
    %v5951 = vpop.permute.xlu0 %5950
    %v5953 = vmul.f32 %v5947, %v5188
    %v5954 = vmul.f32 %v5951, %v5189
    %v5955 = vsel %vm257, %v5953, 0.0
    %v5956 = vsel %vm261, %v5954, 0.0
    %v5957 = vadd.f32 %v5955, %v5956
    %v5958 = vrot.slane %v5957, 4
    %v5959 = vadd.f32 %v5957, %v5958
    %v5960 = vrot.slane %v5959, 2
    %v5961 = vadd.f32 %v5959, %v5960
    %v5962 = vrot.slane %v5961, 1
    %v5963 = vadd.f32 %v5961, %v5962
    %v5964 = vadd.f32 %v5963, 0.0
    %5965 = vset.pattern.permute.xlu0 2
    %5966 = vperm.xlu0 %5965, %v5915
    %v5967 = vpop.permute.xlu0 %5966
    %5969 = vset.pattern.permute.xlu0 2
    %5970 = vperm.xlu0 %5969, %v5918
    %v5971 = vpop.permute.xlu0 %5970
    %v5973 = vmul.f32 %v5967, %v5248
    %v5974 = vmul.f32 %v5971, %v5249
    %v5975 = vadd.f32 %v5943, %v5973
    %v5976 = vadd.f32 %v5944, %v5974
    %5977 = vset.pattern.permute.xlu0 10
    %5978 = vperm.xlu0 %5977, %v5915
    %v5979 = vpop.permute.xlu0 %5978
    %5981 = vset.pattern.permute.xlu0 10
    %5982 = vperm.xlu0 %5981, %v5918
    %v5983 = vpop.permute.xlu0 %5982
    %v5985 = vmul.f32 %v5979, %v5248
    %v5986 = vmul.f32 %v5983, %v5249
    %v5987 = vsel %vm257, %v5985, 0.0
    %v5988 = vsel %vm261, %v5986, 0.0
    %v5989 = vadd.f32 %v5987, %v5988
    %v5990 = vrot.slane %v5989, 4
    %v5991 = vadd.f32 %v5989, %v5990
    %v5992 = vrot.slane %v5991, 2
    %v5993 = vadd.f32 %v5991, %v5992
    %v5994 = vrot.slane %v5993, 1
    %v5995 = vadd.f32 %v5993, %v5994
    %v5996 = vadd.f32 %v5964, %v5995
    %5997 = vset.pattern.permute.xlu0 3
    %5998 = vperm.xlu0 %5997, %v5915
    %v5999 = vpop.permute.xlu0 %5998
    %6001 = vset.pattern.permute.xlu0 3
    %6002 = vperm.xlu0 %6001, %v5918
    %v6003 = vpop.permute.xlu0 %6002
    %v6005 = vmul.f32 %v5999, %v5304
    %v6006 = vmul.f32 %v6003, %v5305
    %v6007 = vadd.f32 %v5975, %v6005
    %v6008 = vadd.f32 %v5976, %v6006
    %6009 = vset.pattern.permute.xlu0 11
    %6010 = vperm.xlu0 %6009, %v5915
    %v6011 = vpop.permute.xlu0 %6010
    %6013 = vset.pattern.permute.xlu0 11
    %6014 = vperm.xlu0 %6013, %v5918
    %v6015 = vpop.permute.xlu0 %6014
    %v6017 = vmul.f32 %v6011, %v5304
    %v6018 = vmul.f32 %v6015, %v5305
    %v6019 = vsel %vm257, %v6017, 0.0
    %v6020 = vsel %vm261, %v6018, 0.0
    %v6021 = vadd.f32 %v6019, %v6020
    %v6022 = vrot.slane %v6021, 4
    %v6023 = vadd.f32 %v6021, %v6022
    %v6024 = vrot.slane %v6023, 2
    %v6025 = vadd.f32 %v6023, %v6024
    %v6026 = vrot.slane %v6025, 1
    %v6027 = vadd.f32 %v6025, %v6026
    %v6028 = vadd.f32 %v5996, %v6027
    %6029 = vset.pattern.permute.xlu0 4
    %6030 = vperm.xlu0 %6029, %v5915
    %v6031 = vpop.permute.xlu0 %6030
    %6033 = vset.pattern.permute.xlu0 4
    %6034 = vperm.xlu0 %6033, %v5918
    %v6035 = vpop.permute.xlu0 %6034
    %v6037 = vmul.f32 %v6031, %v5360
    %v6038 = vmul.f32 %v6035, %v5361
    %v6039 = vadd.f32 %v6007, %v6037
    %v6040 = vadd.f32 %v6008, %v6038
    %6041 = vset.pattern.permute.xlu0 12
    %6042 = vperm.xlu0 %6041, %v5915
    %v6043 = vpop.permute.xlu0 %6042
    %6045 = vset.pattern.permute.xlu0 12
    %6046 = vperm.xlu0 %6045, %v5918
    %v6047 = vpop.permute.xlu0 %6046
    %v6049 = vmul.f32 %v6043, %v5360
    %v6050 = vmul.f32 %v6047, %v5361
    %v6051 = vsel %vm257, %v6049, 0.0
    %v6052 = vsel %vm261, %v6050, 0.0
    %v6053 = vadd.f32 %v6051, %v6052
    %v6054 = vrot.slane %v6053, 4
    %v6055 = vadd.f32 %v6053, %v6054
    %v6056 = vrot.slane %v6055, 2
    %v6057 = vadd.f32 %v6055, %v6056
    %v6058 = vrot.slane %v6057, 1
    %v6059 = vadd.f32 %v6057, %v6058
    %v6060 = vadd.f32 %v6028, %v6059
    %6061 = vset.pattern.permute.xlu0 5
    %6062 = vperm.xlu0 %6061, %v5915
    %v6063 = vpop.permute.xlu0 %6062
    %6065 = vset.pattern.permute.xlu0 5
    %6066 = vperm.xlu0 %6065, %v5918
    %v6067 = vpop.permute.xlu0 %6066
    %v6069 = vmul.f32 %v6063, %v5416
    %v6070 = vmul.f32 %v6067, %v5417
    %v6071 = vadd.f32 %v6039, %v6069
    %v6072 = vadd.f32 %v6040, %v6070
    %6073 = vset.pattern.permute.xlu0 13
    %6074 = vperm.xlu0 %6073, %v5915
    %v6075 = vpop.permute.xlu0 %6074
    %6077 = vset.pattern.permute.xlu0 13
    %6078 = vperm.xlu0 %6077, %v5918
    %v6079 = vpop.permute.xlu0 %6078
    %v6081 = vmul.f32 %v6075, %v5416
    %v6082 = vmul.f32 %v6079, %v5417
    %v6083 = vsel %vm257, %v6081, 0.0
    %v6084 = vsel %vm261, %v6082, 0.0
    %v6085 = vadd.f32 %v6083, %v6084
    %v6086 = vrot.slane %v6085, 4
    %v6087 = vadd.f32 %v6085, %v6086
    %v6088 = vrot.slane %v6087, 2
    %v6089 = vadd.f32 %v6087, %v6088
    %v6090 = vrot.slane %v6089, 1
    %v6091 = vadd.f32 %v6089, %v6090
    %v6092 = vadd.f32 %v6060, %v6091
    %6093 = vset.pattern.permute.xlu0 6
    %6094 = vperm.xlu0 %6093, %v5915
    %v6095 = vpop.permute.xlu0 %6094
    %6097 = vset.pattern.permute.xlu0 6
    %6098 = vperm.xlu0 %6097, %v5918
    %v6099 = vpop.permute.xlu0 %6098
    %v6101 = vmul.f32 %v6095, %v5472
    %v6102 = vmul.f32 %v6099, %v5473
    %v6103 = vadd.f32 %v6071, %v6101
    %v6104 = vadd.f32 %v6072, %v6102
    %6105 = vset.pattern.permute.xlu0 14
    %6106 = vperm.xlu0 %6105, %v5915
    %v6107 = vpop.permute.xlu0 %6106
    %6109 = vset.pattern.permute.xlu0 14
    %6110 = vperm.xlu0 %6109, %v5918
    %v6111 = vpop.permute.xlu0 %6110
    %v6113 = vmul.f32 %v6107, %v5472
    %v6114 = vmul.f32 %v6111, %v5473
    %v6115 = vsel %vm257, %v6113, 0.0
    %v6116 = vsel %vm261, %v6114, 0.0
    %v6117 = vadd.f32 %v6115, %v6116
    %v6118 = vrot.slane %v6117, 4
    %v6119 = vadd.f32 %v6117, %v6118
    %v6120 = vrot.slane %v6119, 2
    %v6121 = vadd.f32 %v6119, %v6120
    %v6122 = vrot.slane %v6121, 1
    %v6123 = vadd.f32 %v6121, %v6122
    %v6124 = vadd.f32 %v6092, %v6123
    %6125 = vset.pattern.permute.xlu0 7
    %6126 = vperm.xlu0 %6125, %v5915
    %v6127 = vpop.permute.xlu0 %6126
    %6129 = vset.pattern.permute.xlu0 7
    %6130 = vperm.xlu0 %6129, %v5918
    %v6131 = vpop.permute.xlu0 %6130
    %v6133 = vmul.f32 %v6127, %v5528
    %v6134 = vmul.f32 %v6131, %v5529
    %v6135 = vadd.f32 %v6103, %v6133
    %v6136 = vadd.f32 %v6104, %v6134
    %6137 = vset.pattern.permute.xlu0 15
    %6138 = vperm.xlu0 %6137, %v5915
    %v6139 = vpop.permute.xlu0 %6138
    %6141 = vset.pattern.permute.xlu0 15
    %6142 = vperm.xlu0 %6141, %v5918
    %v6143 = vpop.permute.xlu0 %6142
    %v6145 = vmul.f32 %v6139, %v5528
    %v6146 = vmul.f32 %v6143, %v5529
    %v6147 = vsel %vm257, %v6145, 0.0
    %v6148 = vsel %vm261, %v6146, 0.0
    %v6149 = vadd.f32 %v6147, %v6148
    %v6150 = vrot.slane %v6149, 4
    %v6151 = vadd.f32 %v6149, %v6150
    %v6152 = vrot.slane %v6151, 2
    %v6153 = vadd.f32 %v6151, %v6152
    %v6154 = vrot.slane %v6153, 1
    %v6155 = vadd.f32 %v6153, %v6154
    %v6156 = vadd.f32 %v6124, %v6155
    %6157 = vset.pattern.permute.xlu0 8
    %6158 = vperm.xlu0 %6157, %v5915
    %v6159 = vpop.permute.xlu0 %6158
    %6161 = vset.pattern.permute.xlu0 8
    %6162 = vperm.xlu0 %6161, %v5918
    %v6163 = vpop.permute.xlu0 %6162
    %v6165 = vmul.f32 %v6159, %v5584
    %v6166 = vmul.f32 %v6163, %v5585
    %v6167 = vadd.f32 %v6135, %v6165
    %v6168 = vadd.f32 %v6136, %v6166
    %6169 = vset.pattern.permute.xlu0 16
    %6170 = vperm.xlu0 %6169, %v5915
    %v6171 = vpop.permute.xlu0 %6170
    %6173 = vset.pattern.permute.xlu0 16
    %6174 = vperm.xlu0 %6173, %v5918
    %v6175 = vpop.permute.xlu0 %6174
    %v6177 = vmul.f32 %v6171, %v5584
    %v6178 = vmul.f32 %v6175, %v5585
    %v6179 = vsel %vm257, %v6177, 0.0
    %v6180 = vsel %vm261, %v6178, 0.0
    %v6181 = vadd.f32 %v6179, %v6180
    %v6182 = vrot.slane %v6181, 4
    %v6183 = vadd.f32 %v6181, %v6182
    %v6184 = vrot.slane %v6183, 2
    %v6185 = vadd.f32 %v6183, %v6184
    %v6186 = vrot.slane %v6185, 1
    %v6187 = vadd.f32 %v6185, %v6186
    %v6188 = vadd.f32 %v6156, %v6187
    %v6189 = vmul.f32 %v135, %v6188
    %v6190 = vmul.f32 %v136, %v6188
    %v6191 = vadd.f32 %v6167, %v6189
    %v6192 = vadd.f32 %v6168, %v6190
    %6193 = vxpose.xlu0.b32.start [1/16] %v6191, 128
    %6194 = vxpose.xlu0.b32.cont [2/16] %v6192, 128
    %6195 = vxpose.xlu0.b32.cont [3/16] 0.0, 128
    %6196 = vxpose.xlu0.b32.cont [4/16] 0.0, 128
    %6197 = vxpose.xlu0.b32.cont [5/16] 0.0, 128
    %6198 = vxpose.xlu0.b32.cont [6/16] 0.0, 128
    %6199 = vxpose.xlu0.b32.cont [7/16] 0.0, 128
    %6200 = vxpose.xlu0.b32.cont [8/16] 0.0, 128
    %6201 = vxpose.xlu0.b32.cont [9/16] 0.0, 128
    %6202 = vxpose.xlu0.b32.cont [10/16] 0.0, 128
    %6203 = vxpose.xlu0.b32.cont [11/16] 0.0, 128
    %6204 = vxpose.xlu0.b32.cont [12/16] 0.0, 128
    %6205 = vxpose.xlu0.b32.cont [13/16] 0.0, 128
    %6206 = vxpose.xlu0.b32.cont [14/16] 0.0, 128
    %6207 = vxpose.xlu0.b32.cont [15/16] 0.0, 128
    %6208 = vxpose.xlu0.b32.end [16/16] 0.0, 128
    %v6209 = vpop.trf.xlu0
    %v6210 = vpop.trf.xlu0
    %v6211 = vpop.trf.xlu0
    %v6212 = vpop.trf.xlu0
    %v6213 = vpop.trf.xlu0
    %v6214 = vpop.trf.xlu0
    %v6215 = vpop.trf.xlu0
    %v6216 = vpop.trf.xlu0
    %v6217 = vpop.trf.xlu0
    %v6218 = vpop.trf.xlu0
    %v6219 = vpop.trf.xlu0
    %v6220 = vpop.trf.xlu0
    %v6221 = vpop.trf.xlu0
    %v6222 = vpop.trf.xlu0
    %v6223 = vpop.trf.xlu0
    %v6224 = vpop.trf.xlu0
    %v6226 = vsel %vm257, %v6209, 0
    %v6229 = vsel %vm257, %v6210, 0
    %6231 = vmatprep.subr.mxu0 0.0
    %6232 = vmatpush1.msra.mxu0 %v5063
    %6233 = vmatprep.subr.mxu0 0.0
    %6234 = vmatpush1.msra.mxu0 %v4878
    %6235 = vmatprep.subr.mxu0 0.0
    %6236 = vmatpush1.msra.mxu0 0.0
    %6237 = vmatprep.subr.mxu0 0.0
    %6238 = vmatpush1.msra.mxu0 0.0
    %6239 = vmatprep.subr.mxu0 0.0
    %6240 = vmatpush1.msra.mxu0 0.0
    %6241 = vmatprep.subr.mxu0 0.0
    %6242 = vmatpush1.msra.mxu0 0.0
    %6243 = vmatprep.subr.mxu0 0.0
    %6244 = vmatpush1.msra.mxu0 0.0
    %6245 = vmatprep.subr.mxu0 0.0
    %6246 = vmatpush1.msra.mxu0 0.0
    %6247 = vmatprep.subr.mxu0 0.0
    %6248 = vmatpush1.msra.mxu0 0.0
    %6249 = vmatprep.subr.mxu0 0.0
    %6250 = vmatpush1.msra.mxu0 0.0
    %6251 = vmatprep.subr.mxu0 0.0
    %6252 = vmatpush1.msra.mxu0 0.0
    %6253 = vmatprep.subr.mxu0 0.0
    %6254 = vmatpush1.msra.mxu0 0.0
    %6255 = vmatprep.subr.mxu0 0.0
    %6256 = vmatpush1.msra.mxu0 0.0
    %6257 = vmatprep.subr.mxu0 0.0
    %6258 = vmatpush1.msra.mxu0 0.0
    %6259 = vmatprep.subr.mxu0 0.0
    %6260 = vmatpush1.msra.mxu0 0.0
    %6261 = vmatprep.subr.mxu0 0.0
    %6262 = vmatpush1.msra.mxu0 0.0
    %6263 = vmatprep.subr.mxu0 0.0
    %6264 = vmatpush1.msra.mxu0 0.0
    %6265 = vmatprep.subr.mxu0 0.0
    %6266 = vmatpush1.msra.mxu0 0.0
    %6267 = vmatprep.subr.mxu0 0.0
    %6268 = vmatpush1.msra.mxu0 0.0
    %6269 = vmatprep.subr.mxu0 0.0
    %6270 = vmatpush1.msra.mxu0 0.0
    %6271 = vmatprep.subr.mxu0 0.0
    %6272 = vmatpush1.msra.mxu0 0.0
    %6273 = vmatprep.subr.mxu0 0.0
    %6274 = vmatpush1.msra.mxu0 0.0
    %6275 = vmatprep.subr.mxu0 0.0
    %6276 = vmatpush1.msra.mxu0 0.0
    %6277 = vmatprep.subr.mxu0 0.0
    %6278 = vmatpush1.msra.mxu0 0.0
    %6279 = vmatprep.subr.mxu0 0.0
    %6280 = vmatpush1.msra.mxu0 0.0
    %6281 = vmatprep.subr.mxu0 0.0
    %6282 = vmatpush1.msra.mxu0 0.0
    %6283 = vmatprep.subr.mxu0 0.0
    %6284 = vmatpush1.msra.mxu0 0.0
    %6285 = vmatprep.subr.mxu0 0.0
    %6286 = vmatpush1.msra.mxu0 0.0
    %6287 = vmatprep.subr.mxu0 0.0
    %6288 = vmatpush1.msra.mxu0 0.0
    %6289 = vmatprep.subr.mxu0 0.0
    %6290 = vmatpush1.msra.mxu0 0.0
    %6291 = vmatprep.subr.mxu0 0.0
    %6292 = vmatpush1.msra.mxu0 0.0
    %6293 = vmatprep.subr.mxu0 0.0
    %6294 = vmatpush1.msra.mxu0 0.0
    %6295 = vmatprep.mubr.f32.mxu0 0.0
    %6296 = vmatmul.mubr.f32.gmra.mrb[0].mxu0 %v6226
    %v6297 = vpop.f32.mrb[0].mxu0
    %v6298 = vadd.f32 0.0, %v6297
    %v6299 = vpop.f32.mrb[0].mxu0
    %6300 = vmatprep.mubr.f32.mxu0 0.0
    %6301 = vmatmul.mubr.f32.gmra.mrb[0].mxu0 %v6229
    %v6302 = vpop.f32.mrb[0].mxu0
    %v6303 = vadd.f32 0.0, %v6302
    %v6304 = vpop.f32.mrb[0].mxu0
    %6305 = vdwg.mxu0
    %v6307 = vsel %vm257, %v6191, 0
    %v6310 = vsel %vm257, %v6192, 0
    %6312 = vmatprep.subr.mxu0 0.0
    %6313 = vmatpush1.msra.mxu0 %v5063
    %6314 = vmatprep.subr.mxu0 0.0
    %6315 = vmatpush1.msra.mxu0 %v4878
    %6316 = vmatprep.subr.mxu0 0.0
    %6317 = vmatpush1.msra.mxu0 0.0
    %6318 = vmatprep.subr.mxu0 0.0
    %6319 = vmatpush1.msra.mxu0 0.0
    %6320 = vmatprep.subr.mxu0 0.0
    %6321 = vmatpush1.msra.mxu0 0.0
    %6322 = vmatprep.subr.mxu0 0.0
    %6323 = vmatpush1.msra.mxu0 0.0
    %6324 = vmatprep.subr.mxu0 0.0
    %6325 = vmatpush1.msra.mxu0 0.0
    %6326 = vmatprep.subr.mxu0 0.0
    %6327 = vmatpush1.msra.mxu0 0.0
    %6328 = vmatprep.subr.mxu0 0.0
    %6329 = vmatpush1.msra.mxu0 0.0
    %6330 = vmatprep.subr.mxu0 0.0
    %6331 = vmatpush1.msra.mxu0 0.0
    %6332 = vmatprep.subr.mxu0 0.0
    %6333 = vmatpush1.msra.mxu0 0.0
    %6334 = vmatprep.subr.mxu0 0.0
    %6335 = vmatpush1.msra.mxu0 0.0
    %6336 = vmatprep.subr.mxu0 0.0
    %6337 = vmatpush1.msra.mxu0 0.0
    %6338 = vmatprep.subr.mxu0 0.0
    %6339 = vmatpush1.msra.mxu0 0.0
    %6340 = vmatprep.subr.mxu0 0.0
    %6341 = vmatpush1.msra.mxu0 0.0
    %6342 = vmatprep.subr.mxu0 0.0
    %6343 = vmatpush1.msra.mxu0 0.0
    %6344 = vmatprep.subr.mxu0 0.0
    %6345 = vmatpush1.msra.mxu0 0.0
    %6346 = vmatprep.subr.mxu0 0.0
    %6347 = vmatpush1.msra.mxu0 0.0
    %6348 = vmatprep.subr.mxu0 0.0
    %6349 = vmatpush1.msra.mxu0 0.0
    %6350 = vmatprep.subr.mxu0 0.0
    %6351 = vmatpush1.msra.mxu0 0.0
    %6352 = vmatprep.subr.mxu0 0.0
    %6353 = vmatpush1.msra.mxu0 0.0
    %6354 = vmatprep.subr.mxu0 0.0
    %6355 = vmatpush1.msra.mxu0 0.0
    %6356 = vmatprep.subr.mxu0 0.0
    %6357 = vmatpush1.msra.mxu0 0.0
    %6358 = vmatprep.subr.mxu0 0.0
    %6359 = vmatpush1.msra.mxu0 0.0
    %6360 = vmatprep.subr.mxu0 0.0
    %6361 = vmatpush1.msra.mxu0 0.0
    %6362 = vmatprep.subr.mxu0 0.0
    %6363 = vmatpush1.msra.mxu0 0.0
    %6364 = vmatprep.subr.mxu0 0.0
    %6365 = vmatpush1.msra.mxu0 0.0
    %6366 = vmatprep.subr.mxu0 0.0
    %6367 = vmatpush1.msra.mxu0 0.0
    %6368 = vmatprep.subr.mxu0 0.0
    %6369 = vmatpush1.msra.mxu0 0.0
    %6370 = vmatprep.subr.mxu0 0.0
    %6371 = vmatpush1.msra.mxu0 0.0
    %6372 = vmatprep.subr.mxu0 0.0
    %6373 = vmatpush1.msra.mxu0 0.0
    %6374 = vmatprep.subr.mxu0 0.0
    %6375 = vmatpush1.msra.mxu0 0.0
    %6376 = vmatprep.mubr.f32.mxu0 0.0
    %6377 = vmatmul.mubr.f32.gmra.mrb[0].mxu0 %v6307
    %v6378 = vpop.f32.mrb[0].mxu0
    %v6379 = vadd.f32 %v6298, %v6378
    %v6380 = vpop.f32.mrb[0].mxu0
    %6381 = vmatprep.mubr.f32.mxu0 0.0
    %6382 = vmatmul.mubr.f32.gmra.mrb[0].mxu0 %v6310
    %v6383 = vpop.f32.mrb[0].mxu0
    %v6384 = vadd.f32 %v6303, %v6383
    %v6385 = vpop.f32.mrb[0].mxu0
    %6386 = vdwg.mxu0
    %v6387 = vmul.f32 1.0, %v5062
    %v6388 = vmul.f32 1.0, %v3706
    %v6389 = vmul.f32 %v6379, %v5049
    %v6390 = vmul.f32 %v6384, %v3677
    %v6391 = vsel %vm146, %v6389, 0.0
    %6392 = vadd.xlane.f32.xlu0 %v6391
    %v6393 = vpop.xlane.xlu0 %6392
    %v6394 = vsel %vm150, %v6390, 0.0
    %6395 = vadd.xlane.f32.xlu0 %v6394
    %v6396 = vpop.xlane.xlu0 %6395
    %vm6397 = vcmp.gt.f32.partialorder %v5060, 1e-12
    %vm6398 = vcmp.gt.f32.partialorder %v3701, 1e-12
    %v6399 = vsel %vm6397, %v6387, 0.0
    %v6400 = vsel %vm6398, %v6388, 0.0
    %v6401 = vmul.f32 %v6379, %v6387
    %v6402 = vmul.f32 %v6384, %v6388
    %v6403 = vmul.f32 %v6393, %v6387
    %v6404 = vmul.f32 %v6396, %v6388
    %v6405 = vmul.f32 %v6403, %v6387
    %v6406 = vmul.f32 %v6404, %v6388
    %v6407 = vmul.f32 %v6405, %v6399
    %v6408 = vmul.f32 %v6406, %v6400
    %v6409 = vmul.f32 %v5049, %v6407
    %v6410 = vmul.f32 %v3677, %v6408
    %v6411 = vsub.f32 %v6401, %v6409
    %v6412 = vsub.f32 %v6402, %v6410
    %v6413 = vmul.f32 %v6411, 0.001
    %v6414 = vmul.f32 %v6412, 0.001
    %v6417 = vrot.slane %v6413, 1
    %v6418 = vrot.slane %v6414, 1
    %v6419 = vsel %vm3670, %v6417, %v6418
    %v6421 = vsub.f32 %v3675, %v6419
    %v6422 = vmul.f32 %v5048, %v5048
    %v6423 = vsel %vm150, %v6422, 0.0
    %6424 = vadd.xlane.f32.xlu0 %v6423
    %v6425 = vpop.xlane.xlu0 %6424
    %v6426 = vrsqrt.pop %v6425
    %v6427 = vmul.f32 %v6425, %v6426
    %vm6428 = vcmp.eq.f32.partialorder %v6425, inf
    %v6429 = vsel %vm6428, %v6425, %v6427
    %vm6430 = vcmp.eq.f32.partialorder %v6425, 0.0
    %v6431 = vand.u32 %v6425, 2147483648
    %v6432 = vsel %vm6430, %v6431, %v6429
    %v6433 = vmax.f32 %v6432, 1e-12
    %v6434 = vrcp.pop %v6433
    %v6435 = vmul.f32 %v5048, %v6434
    %v6436 = vmul.f32 %v6421, %v6421
    %v6437 = vsel %vm146, %v6436, 0.0
    %6438 = vadd.xlane.f32.xlu0 %v6437
    %v6439 = vpop.xlane.xlu0 %6438
    %v6440 = vrsqrt.pop %v6439
    %v6441 = vmul.f32 %v6439, %v6440
    %vm6442 = vcmp.eq.f32.partialorder %v6439, inf
    %v6443 = vsel %vm6442, %v6439, %v6441
    %vm6444 = vcmp.eq.f32.partialorder %v6439, 0.0
    %v6445 = vand.u32 %v6439, 2147483648
    %v6446 = vsel %vm6444, %v6445, %v6443
    %v6447 = vmax.f32 %v6446, 1e-12
    %v6448 = vrcp.pop %v6447
    %v6449 = vmul.f32 %v6421, %v6448
    %v6451 = vsel %vm146, %v6435, 0
    %v6454 = vsel %vm146, %v6449, 0
    %6456 = vmatprep.subr.mxu0 0.0
    %6457 = vmatpush1.xpose.msra.mxu0 %v6454
    %6458 = vmatprep.subr.mxu0 0.0
    %6459 = vmatpush1.xpose.msra.mxu0 0.0
    %6460 = vmatprep.subr.mxu0 0.0
    %6461 = vmatpush1.xpose.msra.mxu0 0.0
    %6462 = vmatprep.subr.mxu0 0.0
    %6463 = vmatpush1.xpose.msra.mxu0 0.0
    %6464 = vmatprep.subr.mxu0 0.0
    %6465 = vmatpush1.xpose.msra.mxu0 0.0
    %6466 = vmatprep.subr.mxu0 0.0
    %6467 = vmatpush1.xpose.msra.mxu0 0.0
    %6468 = vmatprep.subr.mxu0 0.0
    %6469 = vmatpush1.xpose.msra.mxu0 0.0
    %6470 = vmatprep.subr.mxu0 0.0
    %6471 = vmatpush1.xpose.msra.mxu0 0.0
    %6472 = vmatprep.subr.mxu0 0.0
    %6473 = vmatpush1.xpose.msra.mxu0 0.0
    %6474 = vmatprep.subr.mxu0 0.0
    %6475 = vmatpush1.xpose.msra.mxu0 0.0
    %6476 = vmatprep.subr.mxu0 0.0
    %6477 = vmatpush1.xpose.msra.mxu0 0.0
    %6478 = vmatprep.subr.mxu0 0.0
    %6479 = vmatpush1.xpose.msra.mxu0 0.0
    %6480 = vmatprep.subr.mxu0 0.0
    %6481 = vmatpush1.xpose.msra.mxu0 0.0
    %6482 = vmatprep.subr.mxu0 0.0
    %6483 = vmatpush1.xpose.msra.mxu0 0.0
    %6484 = vmatprep.subr.mxu0 0.0
    %6485 = vmatpush1.xpose.msra.mxu0 0.0
    %6486 = vmatprep.subr.mxu0 0.0
    %6487 = vmatpush1.xpose.msra.mxu0 0.0
    %6488 = vmatprep.subr.mxu0 0.0
    %6489 = vmatpush1.xpose.msra.mxu0 0.0
    %6490 = vmatprep.subr.mxu0 0.0
    %6491 = vmatpush1.xpose.msra.mxu0 0.0
    %6492 = vmatprep.subr.mxu0 0.0
    %6493 = vmatpush1.xpose.msra.mxu0 0.0
    %6494 = vmatprep.subr.mxu0 0.0
    %6495 = vmatpush1.xpose.msra.mxu0 0.0
    %6496 = vmatprep.subr.mxu0 0.0
    %6497 = vmatpush1.xpose.msra.mxu0 0.0
    %6498 = vmatprep.subr.mxu0 0.0
    %6499 = vmatpush1.xpose.msra.mxu0 0.0
    %6500 = vmatprep.subr.mxu0 0.0
    %6501 = vmatpush1.xpose.msra.mxu0 0.0
    %6502 = vmatprep.subr.mxu0 0.0
    %6503 = vmatpush1.xpose.msra.mxu0 0.0
    %6504 = vmatprep.subr.mxu0 0.0
    %6505 = vmatpush1.xpose.msra.mxu0 0.0
    %6506 = vmatprep.subr.mxu0 0.0
    %6507 = vmatpush1.xpose.msra.mxu0 0.0
    %6508 = vmatprep.subr.mxu0 0.0
    %6509 = vmatpush1.xpose.msra.mxu0 0.0
    %6510 = vmatprep.subr.mxu0 0.0
    %6511 = vmatpush1.xpose.msra.mxu0 0.0
    %6512 = vmatprep.subr.mxu0 0.0
    %6513 = vmatpush1.xpose.msra.mxu0 0.0
    %6514 = vmatprep.subr.mxu0 0.0
    %6515 = vmatpush1.xpose.msra.mxu0 0.0
    %6516 = vmatprep.subr.mxu0 0.0
    %6517 = vmatpush1.xpose.msra.mxu0 0.0
    %6518 = vmatprep.subr.mxu0 0.0
    %6519 = vmatpush1.xpose.msra.mxu0 0.0
    %6520 = vmatprep.mubr.f32.mxu0 0.0
    %6521 = vmatmul.mubr.f32.gmra.mrb[0].mxu0 %v6451
    %v6522 = vpop.f32.mrb[0].mxu0
    %v6523 = vadd.f32 0.0, %v6522
    %v6524 = vpop.f32.mrb[0].mxu0
    %6525 = vdwg.mxu0
    %vm6526 = vcmask 57344
    %6527 = vst.msk [vmem:[#allocation12] sm:$0x1] %vm6526, %v6523
    // Predicated region
    $region94: #{forward.1} parent=1 // pred_check
      _
    $region95: #{forward.1} parent=1 // pred_check_branch
      %6529 = sbr.rel (0) target = $region97
    $region96: #{forward.1} parent=1 // pred_region
      %s6531 = ssub.s32 16, 16
      %6532 = vsyncadd [#allocation4], %s6531
      %s6534 = sshll.u32 [#allocation12], 4
      %s6535 = int_to_ptr.vmem [resolvable:$true] %s6534
      %6537 = dma.vmem_to_hbm [thread:$0]  %s6535, 16, %s18, [#allocation4]
    $region97: #{forward.1} parent=1 // pred_fallthru
      _
    // Predicated region
    $region98: #{forward.1} parent=1 // pred_check
      _
    $region99: #{forward.1} parent=1 // pred_check_branch
      %6539 = sbr.rel (0) target = $region101
    $region100: #{forward.1} parent=1 // pred_region
      %6540 = dma.done [#allocation4], 16
    $region101: #{forward.1} parent=1 // pred_fallthru
      _
    %6541 = vsyncpa [#allocation3], 1
    %6542 = vsyncpa [#allocation4], 1
    %6543 = vsyncpa [#allocation5], 1
    %6544 = vsyncpa [#allocation7], 1
    %6545 = vsyncpa [#allocation11], 1

</llo_original>
